<compile_context>
chip_gen: v7x
topology: tpu7x:2x2x1
jax: 0.10.0
libtpu: 0.0.40
codegen_flags: <defaults>
</compile_context>

<pallas_src>
import jax
import jax.numpy as jnp
from jax import lax
from jax.experimental import pallas as pl
from jax.experimental.pallas import tpu as pltpu

H = 32          # hidden size
S = 8           # input sequence length
V = 64          # vocabulary size
MAX_LEN = 10    # greedy decode length (max_length)
SOS_TOKEN = 1
OUT_LANES = 128  # lane-padded output width (sliced to MAX_LEN on host)

VMEM_SPEC = pl.BlockSpec(memory_space=pltpu.MemorySpace.VMEM)

# bf16 weight slab layout (width 8H = 256 lanes; row offsets all % 16 == 0)
_R_WH_ENC = 0      # (2H, 8H) block-diag [Wh_fwd | Wh_bwd]
_R_EWX_FB = 64     # (V, 8H)  emb @ [Wx_fwd | Wx_bwd]   (gather fused in)
_R_EWX_D = 128     # (V, 4H)  emb @ Wx_dec
_R_WH_DEC = 192    # (H, 4H)
_R_WC = 224        # (2H, H)  concat linear
_R_WO = 288        # (H, V)   output projection
_W_ROWS = 320

# f32 bias slab layout (width 8H = 256 lanes; row offsets all % 8 == 0)
_R_B_ENC = 0       # (1, 8H)
_R_B_DEC = 8       # (1, 4H)
_R_BC = 16         # (1, H)
_R_BO = 24         # (1, V)
_B_ROWS = 32


def _gru_gates(g, h):
    """g: (1,4H) pre-activations laid out [r | z | n_x | n_h]; h: (1,H) prev hidden."""
    r = jax.nn.sigmoid(g[:, :H])
    z = jax.nn.sigmoid(g[:, H:2 * H])
    n = jnp.tanh(g[:, 2 * H:3 * H] + r * g[:, 3 * H:4 * H])
    return (1.0 - z) * n + z * h


# ------------------------- fused encoder+decoder kernel ----------------------
def greedy_search_kernel(seq_ref, w_ref, b_ref, tokens_ref, scores_ref):
    f32, bf16 = jnp.float32, jnp.bfloat16

    # deterministic padding in the lane-padded outputs
    tokens_ref[...] = jnp.zeros((1, OUT_LANES), jnp.int32)
    scores_ref[...] = jnp.zeros((1, OUT_LANES), f32)

    # ---- loop-invariant weight views (traced/loaded once) ----
    wh_enc = w_ref[_R_WH_ENC:_R_WH_ENC + 2 * H, :]          # (64, 256) bf16
    ewx_fb = w_ref[_R_EWX_FB:_R_EWX_FB + V, :]              # (64, 256) bf16
    ewx_d = w_ref[_R_EWX_D:_R_EWX_D + V, 0:4 * H]           # (64, 128) bf16
    wh_dec = w_ref[_R_WH_DEC:_R_WH_DEC + H, 0:4 * H]        # (32, 128) bf16
    wc = w_ref[_R_WC:_R_WC + 2 * H, 0:H]                    # (64, 32)  bf16
    wo = w_ref[_R_WO:_R_WO + H, 0:V]                        # (32, 64)  bf16
    b_enc = b_ref[_R_B_ENC:_R_B_ENC + 1, :]                 # (1, 256) f32
    b_dec = b_ref[_R_B_DEC:_R_B_DEC + 1, 0:4 * H]           # (1, 128) f32
    bc = b_ref[_R_BC:_R_BC + 1, 0:H]                        # (1, 32)  f32
    bo = b_ref[_R_BO:_R_BO + 1, 0:V]                        # (1, 64)  f32

    lane_v = lax.broadcasted_iota(jnp.int32, (1, V), 1)     # vocab lane ids

    # ---- encoder input-gate contributions for ALL steps, both directions:
    # embedding gather + input projection fused into ONE matmul off the chain.
    onehot = (seq_ref[...] == lane_v).astype(bf16)                      # (S, V)
    xg_all = jnp.dot(onehot, ewx_fb, preferred_element_type=f32)        # (S, 8H)

    # ---- bidirectional encoder GRU: fwd/bwd fused in one hidden matmul/step
    h_f = jnp.zeros((1, H), f32)
    h_b = jnp.zeros((1, H), f32)
    fwd = [None] * S
    bwd = [None] * S
    for t in range(S):
        hh = jnp.concatenate([h_f, h_b], axis=1).astype(bf16)           # (1, 2H)
        hg = jnp.dot(hh, wh_enc, preferred_element_type=f32) + b_enc    # (1, 8H)
        g_f = hg[:, :4 * H] + xg_all[t:t + 1, :4 * H]
        g_b = hg[:, 4 * H:] + xg_all[S - 1 - t:S - t, 4 * H:]
        h_f = _gru_gates(g_f, h_f)
        h_b = _gru_gates(g_b, h_b)
        fwd[t] = h_f
        bwd[S - 1 - t] = h_b
    # encoder outputs = fwd output + bwd output per original time index
    enc = jnp.concatenate([fwd[t] + bwd[t] for t in range(S)], axis=0)  # (S, H)
    enc_bf = enc.astype(bf16)
    enc_t_bf = enc.T.astype(bf16)                                       # (H, S)

    # decoder_hidden = encoder_hidden[:n_layers] (n_layers=1) -> final fwd hidden
    h = h_f

    # ---- greedy decode, fully unrolled; feedback uses the argmax mask directly
    mask_bf = (lane_v == SOS_TOKEN).astype(bf16)                        # SOS one-hot
    for i in range(MAX_LEN):
        # GRU step: gather + input projection fused (mask @ (emb @ Wx_dec))
        xg = jnp.dot(mask_bf, ewx_d, preferred_element_type=f32)        # (1, 4H)
        hg = jnp.dot(h.astype(bf16), wh_dec, preferred_element_type=f32)
        h = _gru_gates(xg + hg + b_dec, h)                              # (1, H)

        # Luong "dot" attention on the MXU (exact softmax divide)
        e = jnp.dot(h.astype(bf16), enc_t_bf, preferred_element_type=f32)  # (1, S)
        pexp = jnp.exp(e - jnp.max(e, axis=-1, keepdims=True))
        p_bf = (pexp / jnp.sum(pexp, axis=-1, keepdims=True)).astype(bf16)
        context = jnp.dot(p_bf, enc_bf, preferred_element_type=f32)        # (1, H)

        # concat linear + tanh, then output projection (softmax divide skipped:
        # argmax(logits) == argmax(softmax), max prob recovered from the logsumexp)
        cat = jnp.concatenate([h, context], axis=1).astype(bf16)        # (1, 2H)
        concat_out = jnp.tanh(jnp.dot(cat, wc, preferred_element_type=f32) + bc)
        logits = jnp.dot(concat_out.astype(bf16), wo,
                         preferred_element_type=f32) + bo               # (1, V)

        m = jnp.max(logits, axis=-1, keepdims=True)                     # (1, 1)
        mask = logits == m                                              # (1, V)
        # integer argmax + max softmax prob: only feed the output stores,
        # off the token-feedback critical path.
        tok = jnp.min(jnp.where(mask, lane_v, V), axis=-1, keepdims=True)
        score = 1.0 / jnp.sum(jnp.exp(logits - m), axis=-1, keepdims=True)
        tokens_ref[:, i:i + 1] = tok
        scores_ref[:, i:i + 1] = score

        # next-step gather LHS: the argmax mask itself (no one-hot round trip).
        # TODO(synk): on an exact f32 logit tie this sums the tied embedding rows
        # instead of torch's first-index tie-break (vanishingly rare).
        mask_bf = mask.astype(bf16)


# --------------------------------- glue -------------------------------------
def _split3(a):
    return a[:, :H], a[:, H:2 * H], a[:, 2 * H:]


def _pack_dir(wih, whh, bih, bhh):
    """4H repack of one GRU direction: Wx (H,4H), Wh (H,4H), b (1,4H), layout [r|z|n_x|n_h]."""
    wir, wiz, win = _split3(wih)
    whr, whz, whn = _split3(whh)
    bir, biz, bin_ = _split3(bih)
    bhr, bhz, bhn = _split3(bhh)
    zero = jnp.zeros((H, H), jnp.float32)
    wx = jnp.concatenate([wir, wiz, win, zero], axis=1)
    wh = jnp.concatenate([whr, whz, zero, whn], axis=1)
    b = jnp.concatenate([bir + bhr, biz + bhz, bin_, bhn], axis=1)
    return wx, wh, b


def _pad(a, rows, cols):
    return jnp.pad(a, ((0, rows - a.shape[0]), (0, cols - a.shape[1])))


def pack_params(params):
    """Fold embedding into the GRU input projections and pack into two slabs."""
    emb, enc_f, enc_b, dec_gru, (wc, bc), (wo, bo) = params
    wx_f, wh_f, b_f = _pack_dir(*enc_f)
    wx_b, wh_b, b_b = _pack_dir(*enc_b)
    wx_d, wh_d, b_d = _pack_dir(*dec_gru)
    z = jnp.zeros((H, 4 * H), jnp.float32)
    wh_enc = jnp.concatenate(
        [jnp.concatenate([wh_f, z], axis=1),
         jnp.concatenate([z, wh_b], axis=1)], axis=0)                   # (2H, 8H)
    ewx_fb = jnp.concatenate([emb @ wx_f, emb @ wx_b], axis=1)          # (V, 8H)
    ewx_d = emb @ wx_d                                                  # (V, 4H)

    w_slab = jnp.concatenate([
        wh_enc,                        # rows   0: 64
        ewx_fb,                        # rows  64:128
        _pad(ewx_d, V, 8 * H),         # rows 128:192
        _pad(wh_d, H, 8 * H),          # rows 192:224
        _pad(wc, 2 * H, 8 * H),        # rows 224:288
        _pad(wo, H, 8 * H),            # rows 288:320
    ], axis=0).astype(jnp.bfloat16)
    assert w_slab.shape == (_W_ROWS, 8 * H)

    b_slab = jnp.zeros((_B_ROWS, 8 * H), jnp.float32)
    b_slab = b_slab.at[_R_B_ENC, :].set(jnp.concatenate([b_f, b_b], axis=1)[0])
    b_slab = b_slab.at[_R_B_DEC, :4 * H].set(b_d[0])
    b_slab = b_slab.at[_R_BC, :H].set(bc[0])
    b_slab = b_slab.at[_R_BO, :V].set(bo[0])
    return w_slab, b_slab


def init_params(key):
    ks = jax.random.split(key, 17)
    s = 1.0 / float(jnp.sqrt(H))

    def u(k, shape):
        return jax.random.uniform(k, shape, jnp.float32, -s, s)

    emb = jax.random.normal(ks[0], (V, H), jnp.float32) * 0.1
    # encoder bidirectional GRU (forward / backward), weights as (in, 3H), gates [r|z|n]
    enc_f = (u(ks[1], (H, 3 * H)), u(ks[2], (H, 3 * H)),
             u(ks[3], (1, 3 * H)), u(ks[4], (1, 3 * H)))
    enc_b = (u(ks[5], (H, 3 * H)), u(ks[6], (H, 3 * H)),
             u(ks[7], (1, 3 * H)), u(ks[8], (1, 3 * H)))
    # decoder GRU
    dec_gru = (u(ks[9], (H, 3 * H)), u(ks[10], (H, 3 * H)),
               u(ks[11], (1, 3 * H)), u(ks[12], (1, 3 * H)))
    # concat linear (2H -> H) and output linear (H -> V)
    wc, bc = u(ks[13], (2 * H, H)), u(ks[14], (1, H))
    wo, bo = u(ks[15], (H, V)), u(ks[16], (1, V))
    return emb, enc_f, enc_b, dec_gru, (wc, bc), (wo, bo)


def greedy_search_decode(input_seq, input_length, max_length, params):
    """input_seq: (S, 1) int32; returns (all_tokens (max_length,), all_scores (max_length,))."""
    assert max_length == MAX_LEN
    # TODO(synk): input_length only affects pack_padded_sequence in torch; this
    # version assumes a full-length (unpadded) input sequence.
    del input_length
    w_slab, b_slab = pack_params(params)
    seq = input_seq.reshape(S, 1).astype(jnp.int32)

    tokens, scores = pl.pallas_call(
        greedy_search_kernel,
        out_shape=(jax.ShapeDtypeStruct((1, OUT_LANES), jnp.int32),
                   jax.ShapeDtypeStruct((1, OUT_LANES), jnp.float32)),
        in_specs=[VMEM_SPEC, VMEM_SPEC, VMEM_SPEC],
        out_specs=(VMEM_SPEC, VMEM_SPEC),
    )(seq, w_slab, b_slab)
    return tokens[0, :MAX_LEN], scores[0, :MAX_LEN]


if __name__ == "__main__":
    key = jax.random.PRNGKey(0)
    pkey, dkey = jax.random.split(key)
    params = init_params(pkey)
    input_seq = jax.random.randint(dkey, (S, 1), 2, V, dtype=jnp.int32)
    input_length = jnp.array([S], jnp.int32)

    all_tokens, all_scores = greedy_search_decode(input_seq, input_length,
                                                  MAX_LEN, params)
    jax.block_until_ready((all_tokens, all_scores))
    assert all_tokens.shape == (MAX_LEN,) and all_scores.shape == (MAX_LEN,)
    assert all_tokens.dtype == jnp.int32 and all_scores.dtype == jnp.float32
    print("KERNEL_OK")
</pallas_src>

<mosaic_0001>
module attributes {stable_mosaic.version = 11 : i64} {
  func.func @greedy_search_kernel(%arg0: memref<8x1xi32, #tpu.memory_space<vmem>>, %arg1: memref<320x256xbf16, #tpu.memory_space<vmem>>, %arg2: memref<32x256xf32, #tpu.memory_space<vmem>>, %arg3: memref<1x128xi32, #tpu.memory_space<vmem>>, %arg4: memref<1x128xf32, #tpu.memory_space<vmem>>) attributes {dimension_semantics = [], scalar_prefetch = 0 : i64, scratch_operands = 0 : i64, tpu.core_type = #tpu.core_type<tc>} {
    %c0_i32 = arith.constant 0 : i32
    %0 = vector.broadcast %c0_i32 : i32 to vector<1x128xi32>
    %c0 = arith.constant 0 : index
    %c0_0 = arith.constant 0 : index
    %1 = vector.load %arg3[%c0, %c0_0] : memref<1x128xi32, #tpu.memory_space<vmem>>, vector<1x128xi32>
    tpu.vector_store %arg3[%c0, %c0_0], %0 {strides = array<i32>} : memref<1x128xi32, #tpu.memory_space<vmem>>, vector<1x128xi32>,
    %cst = arith.constant 0.000000e+00 : f32
    %2 = vector.broadcast %cst : f32 to vector<1x128xf32>
    %c0_1 = arith.constant 0 : index
    %c0_2 = arith.constant 0 : index
    %3 = vector.load %arg4[%c0_1, %c0_2] : memref<1x128xf32, #tpu.memory_space<vmem>>, vector<1x128xf32>
    tpu.vector_store %arg4[%c0_1, %c0_2], %2 {strides = array<i32>} : memref<1x128xf32, #tpu.memory_space<vmem>>, vector<1x128xf32>,
    %c0_3 = arith.constant 0 : index
    %c0_4 = arith.constant 0 : index
    %4 = vector.load %arg1[%c0_3, %c0_4] : memref<320x256xbf16, #tpu.memory_space<vmem>>, vector<64x256xbf16>
    %c64 = arith.constant 64 : index
    %c0_5 = arith.constant 0 : index
    %5 = vector.load %arg1[%c64, %c0_5] : memref<320x256xbf16, #tpu.memory_space<vmem>>, vector<64x256xbf16>
    %c128 = arith.constant 128 : index
    %c0_6 = arith.constant 0 : index
    %6 = vector.load %arg1[%c128, %c0_6] : memref<320x256xbf16, #tpu.memory_space<vmem>>, vector<64x128xbf16>
    %c192 = arith.constant 192 : index
    %c0_7 = arith.constant 0 : index
    %7 = vector.load %arg1[%c192, %c0_7] : memref<320x256xbf16, #tpu.memory_space<vmem>>, vector<32x128xbf16>
    %c224 = arith.constant 224 : index
    %c0_8 = arith.constant 0 : index
    %8 = vector.load %arg1[%c224, %c0_8] : memref<320x256xbf16, #tpu.memory_space<vmem>>, vector<64x32xbf16>
    %c288 = arith.constant 288 : index
    %c0_9 = arith.constant 0 : index
    %9 = vector.load %arg1[%c288, %c0_9] : memref<320x256xbf16, #tpu.memory_space<vmem>>, vector<32x64xbf16>
    %c0_10 = arith.constant 0 : index
    %c0_11 = arith.constant 0 : index
    %10 = vector.load %arg2[%c0_10, %c0_11] : memref<32x256xf32, #tpu.memory_space<vmem>>, vector<1x256xf32>
    %c8 = arith.constant 8 : index
    %c0_12 = arith.constant 0 : index
    %11 = vector.load %arg2[%c8, %c0_12] : memref<32x256xf32, #tpu.memory_space<vmem>>, vector<1x128xf32>
    %c16 = arith.constant 16 : index
    %c0_13 = arith.constant 0 : index
    %12 = vector.load %arg2[%c16, %c0_13] : memref<32x256xf32, #tpu.memory_space<vmem>>, vector<1x32xf32>
    %c24 = arith.constant 24 : index
    %c0_14 = arith.constant 0 : index
    %13 = vector.load %arg2[%c24, %c0_14] : memref<32x256xf32, #tpu.memory_space<vmem>>, vector<1x64xf32>
    %14 = tpu.iota {dimensions = array<i32: 1>} : vector<1x64xi32>
    %c0_15 = arith.constant 0 : index
    %c0_16 = arith.constant 0 : index
    %15 = vector.load %arg0[%c0_15, %c0_16] : memref<8x1xi32, #tpu.memory_space<vmem>>, vector<8x1xi32>
    %16 = vector.broadcast %15 : vector<8x1xi32> to vector<8x64xi32>
    %17 = vector.broadcast %14 : vector<1x64xi32> to vector<8x64xi32>
    %18 = arith.cmpi eq, %16, %17 : vector<8x64xi32>
    %19 = arith.extui %18 : vector<8x64xi1> to vector<8x64xi32>
    %20 = arith.sitofp %19 : vector<8x64xi32> to vector<8x64xf32>
    %21 = arith.truncf %20 : vector<8x64xf32> to vector<8x64xbf16>
    %cst_17 = arith.constant dense<0.000000e+00> : vector<8x256xf32>
    %22 = tpu.matmul %21, %5, %cst_17 {dimension_numbers = #tpu.dot_dimension_numbers<[1], [0], [0], [1], [0, 0, 1, 1], [], []>} : vector<8x64xbf16>, vector<64x256xbf16>, vector<8x256xf32> -> vector<8x256xf32>
    %cst_18 = arith.constant 0.000000e+00 : f32
    %23 = vector.broadcast %cst_18 : f32 to vector<1x32xf32>
    %cst_19 = arith.constant 0.000000e+00 : f32
    %24 = vector.broadcast %cst_19 : f32 to vector<1x32xf32>
    %25 = tpu.concatenate %23, %24 in 1 : vector<1x32xf32>, vector<1x32xf32> -> vector<1x64xf32>
    %26 = arith.truncf %25 : vector<1x64xf32> to vector<1x64xbf16>
    %cst_20 = arith.constant dense<0.000000e+00> : vector<1x256xf32>
    %27 = tpu.matmul %26, %4, %cst_20 {dimension_numbers = #tpu.dot_dimension_numbers<[1], [0], [0], [1], [0, 0, 1, 1], [], []>} : vector<1x64xbf16>, vector<64x256xbf16>, vector<1x256xf32> -> vector<1x256xf32>
    %28 = arith.addf %27, %10 : vector<1x256xf32>
    %29 = vector.extract_strided_slice %28 {offsets = [0, 0], sizes = [1, 128], strides = [1, 1]} : vector<1x256xf32> to vector<1x128xf32>
    %30 = vector.extract_strided_slice %22 {offsets = [0, 0], sizes = [1, 128], strides = [1, 1]} : vector<8x256xf32> to vector<1x128xf32>
    %31 = arith.addf %29, %30 : vector<1x128xf32>
    %32 = vector.extract_strided_slice %28 {offsets = [0, 128], sizes = [1, 128], strides = [1, 1]} : vector<1x256xf32> to vector<1x128xf32>
    %33 = vector.extract_strided_slice %22 {offsets = [7, 128], sizes = [1, 128], strides = [1, 1]} : vector<8x256xf32> to vector<1x128xf32>
    %34 = arith.addf %32, %33 : vector<1x128xf32>
    %35 = vector.extract_strided_slice %31 {offsets = [0, 0], sizes = [1, 32], strides = [1, 1]} : vector<1x128xf32> to vector<1x32xf32>
    %36 = arith.negf %35 : vector<1x32xf32>
    %37 = math.exp %36 : vector<1x32xf32>
    %cst_21 = arith.constant 1.000000e+00 : f32
    %38 = vector.broadcast %cst_21 : f32 to vector<1x32xf32>
    %39 = arith.addf %38, %37 : vector<1x32xf32>
    %40 = arith.divf %38, %39 : vector<1x32xf32>
    %41 = vector.extract_strided_slice %31 {offsets = [0, 32], sizes = [1, 32], strides = [1, 1]} : vector<1x128xf32> to vector<1x32xf32>
    %42 = arith.negf %41 : vector<1x32xf32>
    %43 = math.exp %42 : vector<1x32xf32>
    %cst_22 = arith.constant 1.000000e+00 : f32
    %44 = vector.broadcast %cst_22 : f32 to vector<1x32xf32>
    %45 = arith.addf %44, %43 : vector<1x32xf32>
    %46 = arith.divf %44, %45 : vector<1x32xf32>
    %47 = vector.extract_strided_slice %31 {offsets = [0, 64], sizes = [1, 32], strides = [1, 1]} : vector<1x128xf32> to vector<1x32xf32>
    %48 = vector.extract_strided_slice %31 {offsets = [0, 96], sizes = [1, 32], strides = [1, 1]} : vector<1x128xf32> to vector<1x32xf32>
    %49 = arith.mulf %40, %48 : vector<1x32xf32>
    %50 = arith.addf %47, %49 : vector<1x32xf32>
    %51 = math.tanh %50 : vector<1x32xf32>
    %cst_23 = arith.constant 1.000000e+00 : f32
    %52 = vector.broadcast %cst_23 : f32 to vector<1x32xf32>
    %53 = arith.subf %52, %46 : vector<1x32xf32>
    %54 = arith.mulf %53, %51 : vector<1x32xf32>
    %55 = arith.mulf %46, %23 : vector<1x32xf32>
    %56 = arith.addf %54, %55 : vector<1x32xf32>
    %57 = vector.extract_strided_slice %34 {offsets = [0, 0], sizes = [1, 32], strides = [1, 1]} : vector<1x128xf32> to vector<1x32xf32>
    %58 = arith.negf %57 : vector<1x32xf32>
    %59 = math.exp %58 : vector<1x32xf32>
    %cst_24 = arith.constant 1.000000e+00 : f32
    %60 = vector.broadcast %cst_24 : f32 to vector<1x32xf32>
    %61 = arith.addf %60, %59 : vector<1x32xf32>
    %62 = arith.divf %60, %61 : vector<1x32xf32>
    %63 = vector.extract_strided_slice %34 {offsets = [0, 32], sizes = [1, 32], strides = [1, 1]} : vector<1x128xf32> to vector<1x32xf32>
    %64 = arith.negf %63 : vector<1x32xf32>
    %65 = math.exp %64 : vector<1x32xf32>
    %cst_25 = arith.constant 1.000000e+00 : f32
    %66 = vector.broadcast %cst_25 : f32 to vector<1x32xf32>
    %67 = arith.addf %66, %65 : vector<1x32xf32>
    %68 = arith.divf %66, %67 : vector<1x32xf32>
    %69 = vector.extract_strided_slice %34 {offsets = [0, 64], sizes = [1, 32], strides = [1, 1]} : vector<1x128xf32> to vector<1x32xf32>
    %70 = vector.extract_strided_slice %34 {offsets = [0, 96], sizes = [1, 32], strides = [1, 1]} : vector<1x128xf32> to vector<1x32xf32>
    %71 = arith.mulf %62, %70 : vector<1x32xf32>
    %72 = arith.addf %69, %71 : vector<1x32xf32>
    %73 = math.tanh %72 : vector<1x32xf32>
    %cst_26 = arith.constant 1.000000e+00 : f32
    %74 = vector.broadcast %cst_26 : f32 to vector<1x32xf32>
    %75 = arith.subf %74, %68 : vector<1x32xf32>
    %76 = arith.mulf %75, %73 : vector<1x32xf32>
    %77 = arith.mulf %68, %24 : vector<1x32xf32>
    %78 = arith.addf %76, %77 : vector<1x32xf32>
    %79 = tpu.concatenate %56, %78 in 1 : vector<1x32xf32>, vector<1x32xf32> -> vector<1x64xf32>
    %80 = arith.truncf %79 : vector<1x64xf32> to vector<1x64xbf16>
    %cst_27 = arith.constant dense<0.000000e+00> : vector<1x256xf32>
    %81 = tpu.matmul %80, %4, %cst_27 {dimension_numbers = #tpu.dot_dimension_numbers<[1], [0], [0], [1], [0, 0, 1, 1], [], []>} : vector<1x64xbf16>, vector<64x256xbf16>, vector<1x256xf32> -> vector<1x256xf32>
    %82 = arith.addf %81, %10 : vector<1x256xf32>
    %83 = vector.extract_strided_slice %82 {offsets = [0, 0], sizes = [1, 128], strides = [1, 1]} : vector<1x256xf32> to vector<1x128xf32>
    %84 = vector.extract_strided_slice %22 {offsets = [1, 0], sizes = [1, 128], strides = [1, 1]} : vector<8x256xf32> to vector<1x128xf32>
    %85 = arith.addf %83, %84 : vector<1x128xf32>
    %86 = vector.extract_strided_slice %82 {offsets = [0, 128], sizes = [1, 128], strides = [1, 1]} : vector<1x256xf32> to vector<1x128xf32>
    %87 = vector.extract_strided_slice %22 {offsets = [6, 128], sizes = [1, 128], strides = [1, 1]} : vector<8x256xf32> to vector<1x128xf32>
    %88 = arith.addf %86, %87 : vector<1x128xf32>
    %89 = vector.extract_strided_slice %85 {offsets = [0, 0], sizes = [1, 32], strides = [1, 1]} : vector<1x128xf32> to vector<1x32xf32>
    %90 = arith.negf %89 : vector<1x32xf32>
    %91 = math.exp %90 : vector<1x32xf32>
    %cst_28 = arith.constant 1.000000e+00 : f32
    %92 = vector.broadcast %cst_28 : f32 to vector<1x32xf32>
    %93 = arith.addf %92, %91 : vector<1x32xf32>
    %94 = arith.divf %92, %93 : vector<1x32xf32>
    %95 = vector.extract_strided_slice %85 {offsets = [0, 32], sizes = [1, 32], strides = [1, 1]} : vector<1x128xf32> to vector<1x32xf32>
    %96 = arith.negf %95 : vector<1x32xf32>
    %97 = math.exp %96 : vector<1x32xf32>
    %cst_29 = arith.constant 1.000000e+00 : f32
    %98 = vector.broadcast %cst_29 : f32 to vector<1x32xf32>
    %99 = arith.addf %98, %97 : vector<1x32xf32>
    %100 = arith.divf %98, %99 : vector<1x32xf32>
    %101 = vector.extract_strided_slice %85 {offsets = [0, 64], sizes = [1, 32], strides = [1, 1]} : vector<1x128xf32> to vector<1x32xf32>
    %102 = vector.extract_strided_slice %85 {offsets = [0, 96], sizes = [1, 32], strides = [1, 1]} : vector<1x128xf32> to vector<1x32xf32>
    %103 = arith.mulf %94, %102 : vector<1x32xf32>
    %104 = arith.addf %101, %103 : vector<1x32xf32>
    %105 = math.tanh %104 : vector<1x32xf32>
    %cst_30 = arith.constant 1.000000e+00 : f32
    %106 = vector.broadcast %cst_30 : f32 to vector<1x32xf32>
    %107 = arith.subf %106, %100 : vector<1x32xf32>
    %108 = arith.mulf %107, %105 : vector<1x32xf32>
    %109 = arith.mulf %100, %56 : vector<1x32xf32>
    %110 = arith.addf %108, %109 : vector<1x32xf32>
    %111 = vector.extract_strided_slice %88 {offsets = [0, 0], sizes = [1, 32], strides = [1, 1]} : vector<1x128xf32> to vector<1x32xf32>
    %112 = arith.negf %111 : vector<1x32xf32>
    %113 = math.exp %112 : vector<1x32xf32>
    %cst_31 = arith.constant 1.000000e+00 : f32
    %114 = vector.broadcast %cst_31 : f32 to vector<1x32xf32>
    %115 = arith.addf %114, %113 : vector<1x32xf32>
    %116 = arith.divf %114, %115 : vector<1x32xf32>
    %117 = vector.extract_strided_slice %88 {offsets = [0, 32], sizes = [1, 32], strides = [1, 1]} : vector<1x128xf32> to vector<1x32xf32>
    %118 = arith.negf %117 : vector<1x32xf32>
    %119 = math.exp %118 : vector<1x32xf32>
    %cst_32 = arith.constant 1.000000e+00 : f32
    %120 = vector.broadcast %cst_32 : f32 to vector<1x32xf32>
    %121 = arith.addf %120, %119 : vector<1x32xf32>
    %122 = arith.divf %120, %121 : vector<1x32xf32>
    %123 = vector.extract_strided_slice %88 {offsets = [0, 64], sizes = [1, 32], strides = [1, 1]} : vector<1x128xf32> to vector<1x32xf32>
    %124 = vector.extract_strided_slice %88 {offsets = [0, 96], sizes = [1, 32], strides = [1, 1]} : vector<1x128xf32> to vector<1x32xf32>
    %125 = arith.mulf %116, %124 : vector<1x32xf32>
    %126 = arith.addf %123, %125 : vector<1x32xf32>
    %127 = math.tanh %126 : vector<1x32xf32>
    %cst_33 = arith.constant 1.000000e+00 : f32
    %128 = vector.broadcast %cst_33 : f32 to vector<1x32xf32>
    %129 = arith.subf %128, %122 : vector<1x32xf32>
    %130 = arith.mulf %129, %127 : vector<1x32xf32>
    %131 = arith.mulf %122, %78 : vector<1x32xf32>
    %132 = arith.addf %130, %131 : vector<1x32xf32>
    %133 = tpu.concatenate %110, %132 in 1 : vector<1x32xf32>, vector<1x32xf32> -> vector<1x64xf32>
    %134 = arith.truncf %133 : vector<1x64xf32> to vector<1x64xbf16>
    %cst_34 = arith.constant dense<0.000000e+00> : vector<1x256xf32>
    %135 = tpu.matmul %134, %4, %cst_34 {dimension_numbers = #tpu.dot_dimension_numbers<[1], [0], [0], [1], [0, 0, 1, 1], [], []>} : vector<1x64xbf16>, vector<64x256xbf16>, vector<1x256xf32> -> vector<1x256xf32>
    %136 = arith.addf %135, %10 : vector<1x256xf32>
    %137 = vector.extract_strided_slice %136 {offsets = [0, 0], sizes = [1, 128], strides = [1, 1]} : vector<1x256xf32> to vector<1x128xf32>
    %138 = vector.extract_strided_slice %22 {offsets = [2, 0], sizes = [1, 128], strides = [1, 1]} : vector<8x256xf32> to vector<1x128xf32>
    %139 = arith.addf %137, %138 : vector<1x128xf32>
    %140 = vector.extract_strided_slice %136 {offsets = [0, 128], sizes = [1, 128], strides = [1, 1]} : vector<1x256xf32> to vector<1x128xf32>
    %141 = vector.extract_strided_slice %22 {offsets = [5, 128], sizes = [1, 128], strides = [1, 1]} : vector<8x256xf32> to vector<1x128xf32>
    %142 = arith.addf %140, %141 : vector<1x128xf32>
    %143 = vector.extract_strided_slice %139 {offsets = [0, 0], sizes = [1, 32], strides = [1, 1]} : vector<1x128xf32> to vector<1x32xf32>
    %144 = arith.negf %143 : vector<1x32xf32>
    %145 = math.exp %144 : vector<1x32xf32>
    %cst_35 = arith.constant 1.000000e+00 : f32
    %146 = vector.broadcast %cst_35 : f32 to vector<1x32xf32>
    %147 = arith.addf %146, %145 : vector<1x32xf32>
    %148 = arith.divf %146, %147 : vector<1x32xf32>
    %149 = vector.extract_strided_slice %139 {offsets = [0, 32], sizes = [1, 32], strides = [1, 1]} : vector<1x128xf32> to vector<1x32xf32>
    %150 = arith.negf %149 : vector<1x32xf32>
    %151 = math.exp %150 : vector<1x32xf32>
    %cst_36 = arith.constant 1.000000e+00 : f32
    %152 = vector.broadcast %cst_36 : f32 to vector<1x32xf32>
    %153 = arith.addf %152, %151 : vector<1x32xf32>
    %154 = arith.divf %152, %153 : vector<1x32xf32>
    %155 = vector.extract_strided_slice %139 {offsets = [0, 64], sizes = [1, 32], strides = [1, 1]} : vector<1x128xf32> to vector<1x32xf32>
    %156 = vector.extract_strided_slice %139 {offsets = [0, 96], sizes = [1, 32], strides = [1, 1]} : vector<1x128xf32> to vector<1x32xf32>
    %157 = arith.mulf %148, %156 : vector<1x32xf32>
    %158 = arith.addf %155, %157 : vector<1x32xf32>
    %159 = math.tanh %158 : vector<1x32xf32>
    %cst_37 = arith.constant 1.000000e+00 : f32
    %160 = vector.broadcast %cst_37 : f32 to vector<1x32xf32>
    %161 = arith.subf %160, %154 : vector<1x32xf32>
    %162 = arith.mulf %161, %159 : vector<1x32xf32>
    %163 = arith.mulf %154, %110 : vector<1x32xf32>
    %164 = arith.addf %162, %163 : vector<1x32xf32>
    %165 = vector.extract_strided_slice %142 {offsets = [0, 0], sizes = [1, 32], strides = [1, 1]} : vector<1x128xf32> to vector<1x32xf32>
    %166 = arith.negf %165 : vector<1x32xf32>
    %167 = math.exp %166 : vector<1x32xf32>
    %cst_38 = arith.constant 1.000000e+00 : f32
    %168 = vector.broadcast %cst_38 : f32 to vector<1x32xf32>
    %169 = arith.addf %168, %167 : vector<1x32xf32>
    %170 = arith.divf %168, %169 : vector<1x32xf32>
    %171 = vector.extract_strided_slice %142 {offsets = [0, 32], sizes = [1, 32], strides = [1, 1]} : vector<1x128xf32> to vector<1x32xf32>
    %172 = arith.negf %171 : vector<1x32xf32>
    %173 = math.exp %172 : vector<1x32xf32>
    %cst_39 = arith.constant 1.000000e+00 : f32
    %174 = vector.broadcast %cst_39 : f32 to vector<1x32xf32>
    %175 = arith.addf %174, %173 : vector<1x32xf32>
    %176 = arith.divf %174, %175 : vector<1x32xf32>
    %177 = vector.extract_strided_slice %142 {offsets = [0, 64], sizes = [1, 32], strides = [1, 1]} : vector<1x128xf32> to vector<1x32xf32>
    %178 = vector.extract_strided_slice %142 {offsets = [0, 96], sizes = [1, 32], strides = [1, 1]} : vector<1x128xf32> to vector<1x32xf32>
    %179 = arith.mulf %170, %178 : vector<1x32xf32>
    %180 = arith.addf %177, %179 : vector<1x32xf32>
    %181 = math.tanh %180 : vector<1x32xf32>
    %cst_40 = arith.constant 1.000000e+00 : f32
    %182 = vector.broadcast %cst_40 : f32 to vector<1x32xf32>
    %183 = arith.subf %182, %176 : vector<1x32xf32>
    %184 = arith.mulf %183, %181 : vector<1x32xf32>
    %185 = arith.mulf %176, %132 : vector<1x32xf32>
    %186 = arith.addf %184, %185 : vector<1x32xf32>
    %187 = tpu.concatenate %164, %186 in 1 : vector<1x32xf32>, vector<1x32xf32> -> vector<1x64xf32>
    %188 = arith.truncf %187 : vector<1x64xf32> to vector<1x64xbf16>
    %cst_41 = arith.constant dense<0.000000e+00> : vector<1x256xf32>
    %189 = tpu.matmul %188, %4, %cst_41 {dimension_numbers = #tpu.dot_dimension_numbers<[1], [0], [0], [1], [0, 0, 1, 1], [], []>} : vector<1x64xbf16>, vector<64x256xbf16>, vector<1x256xf32> -> vector<1x256xf32>
    %190 = arith.addf %189, %10 : vector<1x256xf32>
    %191 = vector.extract_strided_slice %190 {offsets = [0, 0], sizes = [1, 128], strides = [1, 1]} : vector<1x256xf32> to vector<1x128xf32>
    %192 = vector.extract_strided_slice %22 {offsets = [3, 0], sizes = [1, 128], strides = [1, 1]} : vector<8x256xf32> to vector<1x128xf32>
    %193 = arith.addf %191, %192 : vector<1x128xf32>
    %194 = vector.extract_strided_slice %190 {offsets = [0, 128], sizes = [1, 128], strides = [1, 1]} : vector<1x256xf32> to vector<1x128xf32>
    %195 = vector.extract_strided_slice %22 {offsets = [4, 128], sizes = [1, 128], strides = [1, 1]} : vector<8x256xf32> to vector<1x128xf32>
    %196 = arith.addf %194, %195 : vector<1x128xf32>
    %197 = vector.extract_strided_slice %193 {offsets = [0, 0], sizes = [1, 32], strides = [1, 1]} : vector<1x128xf32> to vector<1x32xf32>
    %198 = arith.negf %197 : vector<1x32xf32>
    %199 = math.exp %198 : vector<1x32xf32>
    %cst_42 = arith.constant 1.000000e+00 : f32
    %200 = vector.broadcast %cst_42 : f32 to vector<1x32xf32>
    %201 = arith.addf %200, %199 : vector<1x32xf32>
    %202 = arith.divf %200, %201 : vector<1x32xf32>
    %203 = vector.extract_strided_slice %193 {offsets = [0, 32], sizes = [1, 32], strides = [1, 1]} : vector<1x128xf32> to vector<1x32xf32>
    %204 = arith.negf %203 : vector<1x32xf32>
    %205 = math.exp %204 : vector<1x32xf32>
    %cst_43 = arith.constant 1.000000e+00 : f32
    %206 = vector.broadcast %cst_43 : f32 to vector<1x32xf32>
    %207 = arith.addf %206, %205 : vector<1x32xf32>
    %208 = arith.divf %206, %207 : vector<1x32xf32>
    %209 = vector.extract_strided_slice %193 {offsets = [0, 64], sizes = [1, 32], strides = [1, 1]} : vector<1x128xf32> to vector<1x32xf32>
    %210 = vector.extract_strided_slice %193 {offsets = [0, 96], sizes = [1, 32], strides = [1, 1]} : vector<1x128xf32> to vector<1x32xf32>
    %211 = arith.mulf %202, %210 : vector<1x32xf32>
    %212 = arith.addf %209, %211 : vector<1x32xf32>
    %213 = math.tanh %212 : vector<1x32xf32>
    %cst_44 = arith.constant 1.000000e+00 : f32
    %214 = vector.broadcast %cst_44 : f32 to vector<1x32xf32>
    %215 = arith.subf %214, %208 : vector<1x32xf32>
    %216 = arith.mulf %215, %213 : vector<1x32xf32>
    %217 = arith.mulf %208, %164 : vector<1x32xf32>
    %218 = arith.addf %216, %217 : vector<1x32xf32>
    %219 = vector.extract_strided_slice %196 {offsets = [0, 0], sizes = [1, 32], strides = [1, 1]} : vector<1x128xf32> to vector<1x32xf32>
    %220 = arith.negf %219 : vector<1x32xf32>
    %221 = math.exp %220 : vector<1x32xf32>
    %cst_45 = arith.constant 1.000000e+00 : f32
    %222 = vector.broadcast %cst_45 : f32 to vector<1x32xf32>
    %223 = arith.addf %222, %221 : vector<1x32xf32>
    %224 = arith.divf %222, %223 : vector<1x32xf32>
    %225 = vector.extract_strided_slice %196 {offsets = [0, 32], sizes = [1, 32], strides = [1, 1]} : vector<1x128xf32> to vector<1x32xf32>
    %226 = arith.negf %225 : vector<1x32xf32>
    %227 = math.exp %226 : vector<1x32xf32>
    %cst_46 = arith.constant 1.000000e+00 : f32
    %228 = vector.broadcast %cst_46 : f32 to vector<1x32xf32>
    %229 = arith.addf %228, %227 : vector<1x32xf32>
    %230 = arith.divf %228, %229 : vector<1x32xf32>
    %231 = vector.extract_strided_slice %196 {offsets = [0, 64], sizes = [1, 32], strides = [1, 1]} : vector<1x128xf32> to vector<1x32xf32>
    %232 = vector.extract_strided_slice %196 {offsets = [0, 96], sizes = [1, 32], strides = [1, 1]} : vector<1x128xf32> to vector<1x32xf32>
    %233 = arith.mulf %224, %232 : vector<1x32xf32>
    %234 = arith.addf %231, %233 : vector<1x32xf32>
    %235 = math.tanh %234 : vector<1x32xf32>
    %cst_47 = arith.constant 1.000000e+00 : f32
    %236 = vector.broadcast %cst_47 : f32 to vector<1x32xf32>
    %237 = arith.subf %236, %230 : vector<1x32xf32>
    %238 = arith.mulf %237, %235 : vector<1x32xf32>
    %239 = arith.mulf %230, %186 : vector<1x32xf32>
    %240 = arith.addf %238, %239 : vector<1x32xf32>
    %241 = tpu.concatenate %218, %240 in 1 : vector<1x32xf32>, vector<1x32xf32> -> vector<1x64xf32>
    %242 = arith.truncf %241 : vector<1x64xf32> to vector<1x64xbf16>
    %cst_48 = arith.constant dense<0.000000e+00> : vector<1x256xf32>
    %243 = tpu.matmul %242, %4, %cst_48 {dimension_numbers = #tpu.dot_dimension_numbers<[1], [0], [0], [1], [0, 0, 1, 1], [], []>} : vector<1x64xbf16>, vector<64x256xbf16>, vector<1x256xf32> -> vector<1x256xf32>
    %244 = arith.addf %243, %10 : vector<1x256xf32>
    %245 = vector.extract_strided_slice %244 {offsets = [0, 0], sizes = [1, 128], strides = [1, 1]} : vector<1x256xf32> to vector<1x128xf32>
    %246 = vector.extract_strided_slice %22 {offsets = [4, 0], sizes = [1, 128], strides = [1, 1]} : vector<8x256xf32> to vector<1x128xf32>
    %247 = arith.addf %245, %246 : vector<1x128xf32>
    %248 = vector.extract_strided_slice %244 {offsets = [0, 128], sizes = [1, 128], strides = [1, 1]} : vector<1x256xf32> to vector<1x128xf32>
    %249 = vector.extract_strided_slice %22 {offsets = [3, 128], sizes = [1, 128], strides = [1, 1]} : vector<8x256xf32> to vector<1x128xf32>
    %250 = arith.addf %248, %249 : vector<1x128xf32>
    %251 = vector.extract_strided_slice %247 {offsets = [0, 0], sizes = [1, 32], strides = [1, 1]} : vector<1x128xf32> to vector<1x32xf32>
    %252 = arith.negf %251 : vector<1x32xf32>
    %253 = math.exp %252 : vector<1x32xf32>
    %cst_49 = arith.constant 1.000000e+00 : f32
    %254 = vector.broadcast %cst_49 : f32 to vector<1x32xf32>
    %255 = arith.addf %254, %253 : vector<1x32xf32>
    %256 = arith.divf %254, %255 : vector<1x32xf32>
    %257 = vector.extract_strided_slice %247 {offsets = [0, 32], sizes = [1, 32], strides = [1, 1]} : vector<1x128xf32> to vector<1x32xf32>
    %258 = arith.negf %257 : vector<1x32xf32>
    %259 = math.exp %258 : vector<1x32xf32>
    %cst_50 = arith.constant 1.000000e+00 : f32
    %260 = vector.broadcast %cst_50 : f32 to vector<1x32xf32>
    %261 = arith.addf %260, %259 : vector<1x32xf32>
    %262 = arith.divf %260, %261 : vector<1x32xf32>
    %263 = vector.extract_strided_slice %247 {offsets = [0, 64], sizes = [1, 32], strides = [1, 1]} : vector<1x128xf32> to vector<1x32xf32>
    %264 = vector.extract_strided_slice %247 {offsets = [0, 96], sizes = [1, 32], strides = [1, 1]} : vector<1x128xf32> to vector<1x32xf32>
    %265 = arith.mulf %256, %264 : vector<1x32xf32>
    %266 = arith.addf %263, %265 : vector<1x32xf32>
    %267 = math.tanh %266 : vector<1x32xf32>
    %cst_51 = arith.constant 1.000000e+00 : f32
    %268 = vector.broadcast %cst_51 : f32 to vector<1x32xf32>
    %269 = arith.subf %268, %262 : vector<1x32xf32>
    %270 = arith.mulf %269, %267 : vector<1x32xf32>
    %271 = arith.mulf %262, %218 : vector<1x32xf32>
    %272 = arith.addf %270, %271 : vector<1x32xf32>
    %273 = vector.extract_strided_slice %250 {offsets = [0, 0], sizes = [1, 32], strides = [1, 1]} : vector<1x128xf32> to vector<1x32xf32>
    %274 = arith.negf %273 : vector<1x32xf32>
    %275 = math.exp %274 : vector<1x32xf32>
    %cst_52 = arith.constant 1.000000e+00 : f32
    %276 = vector.broadcast %cst_52 : f32 to vector<1x32xf32>
    %277 = arith.addf %276, %275 : vector<1x32xf32>
    %278 = arith.divf %276, %277 : vector<1x32xf32>
    %279 = vector.extract_strided_slice %250 {offsets = [0, 32], sizes = [1, 32], strides = [1, 1]} : vector<1x128xf32> to vector<1x32xf32>
    %280 = arith.negf %279 : vector<1x32xf32>
    %281 = math.exp %280 : vector<1x32xf32>
    %cst_53 = arith.constant 1.000000e+00 : f32
    %282 = vector.broadcast %cst_53 : f32 to vector<1x32xf32>
    %283 = arith.addf %282, %281 : vector<1x32xf32>
    %284 = arith.divf %282, %283 : vector<1x32xf32>
    %285 = vector.extract_strided_slice %250 {offsets = [0, 64], sizes = [1, 32], strides = [1, 1]} : vector<1x128xf32> to vector<1x32xf32>
    %286 = vector.extract_strided_slice %250 {offsets = [0, 96], sizes = [1, 32], strides = [1, 1]} : vector<1x128xf32> to vector<1x32xf32>
    %287 = arith.mulf %278, %286 : vector<1x32xf32>
    %288 = arith.addf %285, %287 : vector<1x32xf32>
    %289 = math.tanh %288 : vector<1x32xf32>
    %cst_54 = arith.constant 1.000000e+00 : f32
    %290 = vector.broadcast %cst_54 : f32 to vector<1x32xf32>
    %291 = arith.subf %290, %284 : vector<1x32xf32>
    %292 = arith.mulf %291, %289 : vector<1x32xf32>
    %293 = arith.mulf %284, %240 : vector<1x32xf32>
    %294 = arith.addf %292, %293 : vector<1x32xf32>
    %295 = tpu.concatenate %272, %294 in 1 : vector<1x32xf32>, vector<1x32xf32> -> vector<1x64xf32>
    %296 = arith.truncf %295 : vector<1x64xf32> to vector<1x64xbf16>
    %cst_55 = arith.constant dense<0.000000e+00> : vector<1x256xf32>
    %297 = tpu.matmul %296, %4, %cst_55 {dimension_numbers = #tpu.dot_dimension_numbers<[1], [0], [0], [1], [0, 0, 1, 1], [], []>} : vector<1x64xbf16>, vector<64x256xbf16>, vector<1x256xf32> -> vector<1x256xf32>
    %298 = arith.addf %297, %10 : vector<1x256xf32>
    %299 = vector.extract_strided_slice %298 {offsets = [0, 0], sizes = [1, 128], strides = [1, 1]} : vector<1x256xf32> to vector<1x128xf32>
    %300 = vector.extract_strided_slice %22 {offsets = [5, 0], sizes = [1, 128], strides = [1, 1]} : vector<8x256xf32> to vector<1x128xf32>
    %301 = arith.addf %299, %300 : vector<1x128xf32>
    %302 = vector.extract_strided_slice %298 {offsets = [0, 128], sizes = [1, 128], strides = [1, 1]} : vector<1x256xf32> to vector<1x128xf32>
    %303 = vector.extract_strided_slice %22 {offsets = [2, 128], sizes = [1, 128], strides = [1, 1]} : vector<8x256xf32> to vector<1x128xf32>
    %304 = arith.addf %302, %303 : vector<1x128xf32>
    %305 = vector.extract_strided_slice %301 {offsets = [0, 0], sizes = [1, 32], strides = [1, 1]} : vector<1x128xf32> to vector<1x32xf32>
    %306 = arith.negf %305 : vector<1x32xf32>
    %307 = math.exp %306 : vector<1x32xf32>
    %cst_56 = arith.constant 1.000000e+00 : f32
    %308 = vector.broadcast %cst_56 : f32 to vector<1x32xf32>
    %309 = arith.addf %308, %307 : vector<1x32xf32>
    %310 = arith.divf %308, %309 : vector<1x32xf32>
    %311 = vector.extract_strided_slice %301 {offsets = [0, 32], sizes = [1, 32], strides = [1, 1]} : vector<1x128xf32> to vector<1x32xf32>
    %312 = arith.negf %311 : vector<1x32xf32>
    %313 = math.exp %312 : vector<1x32xf32>
    %cst_57 = arith.constant 1.000000e+00 : f32
    %314 = vector.broadcast %cst_57 : f32 to vector<1x32xf32>
    %315 = arith.addf %314, %313 : vector<1x32xf32>
    %316 = arith.divf %314, %315 : vector<1x32xf32>
    %317 = vector.extract_strided_slice %301 {offsets = [0, 64], sizes = [1, 32], strides = [1, 1]} : vector<1x128xf32> to vector<1x32xf32>
    %318 = vector.extract_strided_slice %301 {offsets = [0, 96], sizes = [1, 32], strides = [1, 1]} : vector<1x128xf32> to vector<1x32xf32>
    %319 = arith.mulf %310, %318 : vector<1x32xf32>
    %320 = arith.addf %317, %319 : vector<1x32xf32>
    %321 = math.tanh %320 : vector<1x32xf32>
    %cst_58 = arith.constant 1.000000e+00 : f32
    %322 = vector.broadcast %cst_58 : f32 to vector<1x32xf32>
    %323 = arith.subf %322, %316 : vector<1x32xf32>
    %324 = arith.mulf %323, %321 : vector<1x32xf32>
    %325 = arith.mulf %316, %272 : vector<1x32xf32>
    %326 = arith.addf %324, %325 : vector<1x32xf32>
    %327 = vector.extract_strided_slice %304 {offsets = [0, 0], sizes = [1, 32], strides = [1, 1]} : vector<1x128xf32> to vector<1x32xf32>
    %328 = arith.negf %327 : vector<1x32xf32>
    %329 = math.exp %328 : vector<1x32xf32>
    %cst_59 = arith.constant 1.000000e+00 : f32
    %330 = vector.broadcast %cst_59 : f32 to vector<1x32xf32>
    %331 = arith.addf %330, %329 : vector<1x32xf32>
    %332 = arith.divf %330, %331 : vector<1x32xf32>
    %333 = vector.extract_strided_slice %304 {offsets = [0, 32], sizes = [1, 32], strides = [1, 1]} : vector<1x128xf32> to vector<1x32xf32>
    %334 = arith.negf %333 : vector<1x32xf32>
    %335 = math.exp %334 : vector<1x32xf32>
    %cst_60 = arith.constant 1.000000e+00 : f32
    %336 = vector.broadcast %cst_60 : f32 to vector<1x32xf32>
    %337 = arith.addf %336, %335 : vector<1x32xf32>
    %338 = arith.divf %336, %337 : vector<1x32xf32>
    %339 = vector.extract_strided_slice %304 {offsets = [0, 64], sizes = [1, 32], strides = [1, 1]} : vector<1x128xf32> to vector<1x32xf32>
    %340 = vector.extract_strided_slice %304 {offsets = [0, 96], sizes = [1, 32], strides = [1, 1]} : vector<1x128xf32> to vector<1x32xf32>
    %341 = arith.mulf %332, %340 : vector<1x32xf32>
    %342 = arith.addf %339, %341 : vector<1x32xf32>
    %343 = math.tanh %342 : vector<1x32xf32>
    %cst_61 = arith.constant 1.000000e+00 : f32
    %344 = vector.broadcast %cst_61 : f32 to vector<1x32xf32>
    %345 = arith.subf %344, %338 : vector<1x32xf32>
    %346 = arith.mulf %345, %343 : vector<1x32xf32>
    %347 = arith.mulf %338, %294 : vector<1x32xf32>
    %348 = arith.addf %346, %347 : vector<1x32xf32>
    %349 = tpu.concatenate %326, %348 in 1 : vector<1x32xf32>, vector<1x32xf32> -> vector<1x64xf32>
    %350 = arith.truncf %349 : vector<1x64xf32> to vector<1x64xbf16>
    %cst_62 = arith.constant dense<0.000000e+00> : vector<1x256xf32>
    %351 = tpu.matmul %350, %4, %cst_62 {dimension_numbers = #tpu.dot_dimension_numbers<[1], [0], [0], [1], [0, 0, 1, 1], [], []>} : vector<1x64xbf16>, vector<64x256xbf16>, vector<1x256xf32> -> vector<1x256xf32>
    %352 = arith.addf %351, %10 : vector<1x256xf32>
    %353 = vector.extract_strided_slice %352 {offsets = [0, 0], sizes = [1, 128], strides = [1, 1]} : vector<1x256xf32> to vector<1x128xf32>
    %354 = vector.extract_strided_slice %22 {offsets = [6, 0], sizes = [1, 128], strides = [1, 1]} : vector<8x256xf32> to vector<1x128xf32>
    %355 = arith.addf %353, %354 : vector<1x128xf32>
    %356 = vector.extract_strided_slice %352 {offsets = [0, 128], sizes = [1, 128], strides = [1, 1]} : vector<1x256xf32> to vector<1x128xf32>
    %357 = vector.extract_strided_slice %22 {offsets = [1, 128], sizes = [1, 128], strides = [1, 1]} : vector<8x256xf32> to vector<1x128xf32>
    %358 = arith.addf %356, %357 : vector<1x128xf32>
    %359 = vector.extract_strided_slice %355 {offsets = [0, 0], sizes = [1, 32], strides = [1, 1]} : vector<1x128xf32> to vector<1x32xf32>
    %360 = arith.negf %359 : vector<1x32xf32>
    %361 = math.exp %360 : vector<1x32xf32>
    %cst_63 = arith.constant 1.000000e+00 : f32
    %362 = vector.broadcast %cst_63 : f32 to vector<1x32xf32>
    %363 = arith.addf %362, %361 : vector<1x32xf32>
    %364 = arith.divf %362, %363 : vector<1x32xf32>
    %365 = vector.extract_strided_slice %355 {offsets = [0, 32], sizes = [1, 32], strides = [1, 1]} : vector<1x128xf32> to vector<1x32xf32>
    %366 = arith.negf %365 : vector<1x32xf32>
    %367 = math.exp %366 : vector<1x32xf32>
    %cst_64 = arith.constant 1.000000e+00 : f32
    %368 = vector.broadcast %cst_64 : f32 to vector<1x32xf32>
    %369 = arith.addf %368, %367 : vector<1x32xf32>
    %370 = arith.divf %368, %369 : vector<1x32xf32>
    %371 = vector.extract_strided_slice %355 {offsets = [0, 64], sizes = [1, 32], strides = [1, 1]} : vector<1x128xf32> to vector<1x32xf32>
    %372 = vector.extract_strided_slice %355 {offsets = [0, 96], sizes = [1, 32], strides = [1, 1]} : vector<1x128xf32> to vector<1x32xf32>
    %373 = arith.mulf %364, %372 : vector<1x32xf32>
    %374 = arith.addf %371, %373 : vector<1x32xf32>
    %375 = math.tanh %374 : vector<1x32xf32>
    %cst_65 = arith.constant 1.000000e+00 : f32
    %376 = vector.broadcast %cst_65 : f32 to vector<1x32xf32>
    %377 = arith.subf %376, %370 : vector<1x32xf32>
    %378 = arith.mulf %377, %375 : vector<1x32xf32>
    %379 = arith.mulf %370, %326 : vector<1x32xf32>
    %380 = arith.addf %378, %379 : vector<1x32xf32>
    %381 = vector.extract_strided_slice %358 {offsets = [0, 0], sizes = [1, 32], strides = [1, 1]} : vector<1x128xf32> to vector<1x32xf32>
    %382 = arith.negf %381 : vector<1x32xf32>
    %383 = math.exp %382 : vector<1x32xf32>
    %cst_66 = arith.constant 1.000000e+00 : f32
    %384 = vector.broadcast %cst_66 : f32 to vector<1x32xf32>
    %385 = arith.addf %384, %383 : vector<1x32xf32>
    %386 = arith.divf %384, %385 : vector<1x32xf32>
    %387 = vector.extract_strided_slice %358 {offsets = [0, 32], sizes = [1, 32], strides = [1, 1]} : vector<1x128xf32> to vector<1x32xf32>
    %388 = arith.negf %387 : vector<1x32xf32>
    %389 = math.exp %388 : vector<1x32xf32>
    %cst_67 = arith.constant 1.000000e+00 : f32
    %390 = vector.broadcast %cst_67 : f32 to vector<1x32xf32>
    %391 = arith.addf %390, %389 : vector<1x32xf32>
    %392 = arith.divf %390, %391 : vector<1x32xf32>
    %393 = vector.extract_strided_slice %358 {offsets = [0, 64], sizes = [1, 32], strides = [1, 1]} : vector<1x128xf32> to vector<1x32xf32>
    %394 = vector.extract_strided_slice %358 {offsets = [0, 96], sizes = [1, 32], strides = [1, 1]} : vector<1x128xf32> to vector<1x32xf32>
    %395 = arith.mulf %386, %394 : vector<1x32xf32>
    %396 = arith.addf %393, %395 : vector<1x32xf32>
    %397 = math.tanh %396 : vector<1x32xf32>
    %cst_68 = arith.constant 1.000000e+00 : f32
    %398 = vector.broadcast %cst_68 : f32 to vector<1x32xf32>
    %399 = arith.subf %398, %392 : vector<1x32xf32>
    %400 = arith.mulf %399, %397 : vector<1x32xf32>
    %401 = arith.mulf %392, %348 : vector<1x32xf32>
    %402 = arith.addf %400, %401 : vector<1x32xf32>
    %403 = tpu.concatenate %380, %402 in 1 : vector<1x32xf32>, vector<1x32xf32> -> vector<1x64xf32>
    %404 = arith.truncf %403 : vector<1x64xf32> to vector<1x64xbf16>
    %cst_69 = arith.constant dense<0.000000e+00> : vector<1x256xf32>
    %405 = tpu.matmul %404, %4, %cst_69 {dimension_numbers = #tpu.dot_dimension_numbers<[1], [0], [0], [1], [0, 0, 1, 1], [], []>} : vector<1x64xbf16>, vector<64x256xbf16>, vector<1x256xf32> -> vector<1x256xf32>
    %406 = arith.addf %405, %10 : vector<1x256xf32>
    %407 = vector.extract_strided_slice %406 {offsets = [0, 0], sizes = [1, 128], strides = [1, 1]} : vector<1x256xf32> to vector<1x128xf32>
    %408 = vector.extract_strided_slice %22 {offsets = [7, 0], sizes = [1, 128], strides = [1, 1]} : vector<8x256xf32> to vector<1x128xf32>
    %409 = arith.addf %407, %408 : vector<1x128xf32>
    %410 = vector.extract_strided_slice %406 {offsets = [0, 128], sizes = [1, 128], strides = [1, 1]} : vector<1x256xf32> to vector<1x128xf32>
    %411 = vector.extract_strided_slice %22 {offsets = [0, 128], sizes = [1, 128], strides = [1, 1]} : vector<8x256xf32> to vector<1x128xf32>
    %412 = arith.addf %410, %411 : vector<1x128xf32>
    %413 = vector.extract_strided_slice %409 {offsets = [0, 0], sizes = [1, 32], strides = [1, 1]} : vector<1x128xf32> to vector<1x32xf32>
    %414 = arith.negf %413 : vector<1x32xf32>
    %415 = math.exp %414 : vector<1x32xf32>
    %cst_70 = arith.constant 1.000000e+00 : f32
    %416 = vector.broadcast %cst_70 : f32 to vector<1x32xf32>
    %417 = arith.addf %416, %415 : vector<1x32xf32>
    %418 = arith.divf %416, %417 : vector<1x32xf32>
    %419 = vector.extract_strided_slice %409 {offsets = [0, 32], sizes = [1, 32], strides = [1, 1]} : vector<1x128xf32> to vector<1x32xf32>
    %420 = arith.negf %419 : vector<1x32xf32>
    %421 = math.exp %420 : vector<1x32xf32>
    %cst_71 = arith.constant 1.000000e+00 : f32
    %422 = vector.broadcast %cst_71 : f32 to vector<1x32xf32>
    %423 = arith.addf %422, %421 : vector<1x32xf32>
    %424 = arith.divf %422, %423 : vector<1x32xf32>
    %425 = vector.extract_strided_slice %409 {offsets = [0, 64], sizes = [1, 32], strides = [1, 1]} : vector<1x128xf32> to vector<1x32xf32>
    %426 = vector.extract_strided_slice %409 {offsets = [0, 96], sizes = [1, 32], strides = [1, 1]} : vector<1x128xf32> to vector<1x32xf32>
    %427 = arith.mulf %418, %426 : vector<1x32xf32>
    %428 = arith.addf %425, %427 : vector<1x32xf32>
    %429 = math.tanh %428 : vector<1x32xf32>
    %cst_72 = arith.constant 1.000000e+00 : f32
    %430 = vector.broadcast %cst_72 : f32 to vector<1x32xf32>
    %431 = arith.subf %430, %424 : vector<1x32xf32>
    %432 = arith.mulf %431, %429 : vector<1x32xf32>
    %433 = arith.mulf %424, %380 : vector<1x32xf32>
    %434 = arith.addf %432, %433 : vector<1x32xf32>
    %435 = vector.extract_strided_slice %412 {offsets = [0, 0], sizes = [1, 32], strides = [1, 1]} : vector<1x128xf32> to vector<1x32xf32>
    %436 = arith.negf %435 : vector<1x32xf32>
    %437 = math.exp %436 : vector<1x32xf32>
    %cst_73 = arith.constant 1.000000e+00 : f32
    %438 = vector.broadcast %cst_73 : f32 to vector<1x32xf32>
    %439 = arith.addf %438, %437 : vector<1x32xf32>
    %440 = arith.divf %438, %439 : vector<1x32xf32>
    %441 = vector.extract_strided_slice %412 {offsets = [0, 32], sizes = [1, 32], strides = [1, 1]} : vector<1x128xf32> to vector<1x32xf32>
    %442 = arith.negf %441 : vector<1x32xf32>
    %443 = math.exp %442 : vector<1x32xf32>
    %cst_74 = arith.constant 1.000000e+00 : f32
    %444 = vector.broadcast %cst_74 : f32 to vector<1x32xf32>
    %445 = arith.addf %444, %443 : vector<1x32xf32>
    %446 = arith.divf %444, %445 : vector<1x32xf32>
    %447 = vector.extract_strided_slice %412 {offsets = [0, 64], sizes = [1, 32], strides = [1, 1]} : vector<1x128xf32> to vector<1x32xf32>
    %448 = vector.extract_strided_slice %412 {offsets = [0, 96], sizes = [1, 32], strides = [1, 1]} : vector<1x128xf32> to vector<1x32xf32>
    %449 = arith.mulf %440, %448 : vector<1x32xf32>
    %450 = arith.addf %447, %449 : vector<1x32xf32>
    %451 = math.tanh %450 : vector<1x32xf32>
    %cst_75 = arith.constant 1.000000e+00 : f32
    %452 = vector.broadcast %cst_75 : f32 to vector<1x32xf32>
    %453 = arith.subf %452, %446 : vector<1x32xf32>
    %454 = arith.mulf %453, %451 : vector<1x32xf32>
    %455 = arith.mulf %446, %402 : vector<1x32xf32>
    %456 = arith.addf %454, %455 : vector<1x32xf32>
    %457 = arith.addf %56, %456 : vector<1x32xf32>
    %458 = arith.addf %110, %402 : vector<1x32xf32>
    %459 = arith.addf %164, %348 : vector<1x32xf32>
    %460 = arith.addf %218, %294 : vector<1x32xf32>
    %461 = arith.addf %272, %240 : vector<1x32xf32>
    %462 = arith.addf %326, %186 : vector<1x32xf32>
    %463 = arith.addf %380, %132 : vector<1x32xf32>
    %464 = arith.addf %434, %78 : vector<1x32xf32>
    %465 = tpu.concatenate %457, %458, %459, %460, %461, %462, %463, %464 in 0 : vector<1x32xf32>, vector<1x32xf32>, vector<1x32xf32>, vector<1x32xf32>, vector<1x32xf32>, vector<1x32xf32>, vector<1x32xf32>, vector<1x32xf32> -> vector<8x32xf32>
    %466 = arith.truncf %465 : vector<8x32xf32> to vector<8x32xbf16>
    %467 = tpu.transpose %465, [1, 0] : vector<8x32xf32> -> vector<32x8xf32>
    %468 = arith.truncf %467 : vector<32x8xf32> to vector<32x8xbf16>
    %c1_i32 = arith.constant 1 : i32
    %469 = vector.broadcast %c1_i32 : i32 to vector<1x64xi32>
    %470 = arith.cmpi eq, %14, %469 : vector<1x64xi32>
    %471 = arith.extui %470 : vector<1x64xi1> to vector<1x64xi32>
    %472 = arith.sitofp %471 : vector<1x64xi32> to vector<1x64xf32>
    %473 = arith.truncf %472 : vector<1x64xf32> to vector<1x64xbf16>
    %cst_76 = arith.constant dense<0.000000e+00> : vector<1x128xf32>
    %474 = tpu.matmul %473, %6, %cst_76 {dimension_numbers = #tpu.dot_dimension_numbers<[1], [0], [0], [1], [0, 0, 1, 1], [], []>} : vector<1x64xbf16>, vector<64x128xbf16>, vector<1x128xf32> -> vector<1x128xf32>
    %475 = arith.truncf %434 : vector<1x32xf32> to vector<1x32xbf16>
    %cst_77 = arith.constant dense<0.000000e+00> : vector<1x128xf32>
    %476 = tpu.matmul %475, %7, %cst_77 {dimension_numbers = #tpu.dot_dimension_numbers<[1], [0], [0], [1], [0, 0, 1, 1], [], []>} : vector<1x32xbf16>, vector<32x128xbf16>, vector<1x128xf32> -> vector<1x128xf32>
    %477 = arith.addf %474, %476 : vector<1x128xf32>
    %478 = arith.addf %477, %11 : vector<1x128xf32>
    %479 = vector.extract_strided_slice %478 {offsets = [0, 0], sizes = [1, 32], strides = [1, 1]} : vector<1x128xf32> to vector<1x32xf32>
    %480 = arith.negf %479 : vector<1x32xf32>
    %481 = math.exp %480 : vector<1x32xf32>
    %cst_78 = arith.constant 1.000000e+00 : f32
    %482 = vector.broadcast %cst_78 : f32 to vector<1x32xf32>
    %483 = arith.addf %482, %481 : vector<1x32xf32>
    %484 = arith.divf %482, %483 : vector<1x32xf32>
    %485 = vector.extract_strided_slice %478 {offsets = [0, 32], sizes = [1, 32], strides = [1, 1]} : vector<1x128xf32> to vector<1x32xf32>
    %486 = arith.negf %485 : vector<1x32xf32>
    %487 = math.exp %486 : vector<1x32xf32>
    %cst_79 = arith.constant 1.000000e+00 : f32
    %488 = vector.broadcast %cst_79 : f32 to vector<1x32xf32>
    %489 = arith.addf %488, %487 : vector<1x32xf32>
    %490 = arith.divf %488, %489 : vector<1x32xf32>
    %491 = vector.extract_strided_slice %478 {offsets = [0, 64], sizes = [1, 32], strides = [1, 1]} : vector<1x128xf32> to vector<1x32xf32>
    %492 = vector.extract_strided_slice %478 {offsets = [0, 96], sizes = [1, 32], strides = [1, 1]} : vector<1x128xf32> to vector<1x32xf32>
    %493 = arith.mulf %484, %492 : vector<1x32xf32>
    %494 = arith.addf %491, %493 : vector<1x32xf32>
    %495 = math.tanh %494 : vector<1x32xf32>
    %cst_80 = arith.constant 1.000000e+00 : f32
    %496 = vector.broadcast %cst_80 : f32 to vector<1x32xf32>
    %497 = arith.subf %496, %490 : vector<1x32xf32>
    %498 = arith.mulf %497, %495 : vector<1x32xf32>
    %499 = arith.mulf %490, %434 : vector<1x32xf32>
    %500 = arith.addf %498, %499 : vector<1x32xf32>
    %501 = arith.truncf %500 : vector<1x32xf32> to vector<1x32xbf16>
    %cst_81 = arith.constant dense<0.000000e+00> : vector<1x8xf32>
    %502 = tpu.matmul %501, %468, %cst_81 {dimension_numbers = #tpu.dot_dimension_numbers<[1], [0], [0], [1], [0, 0, 1, 1], [], []>} : vector<1x32xbf16>, vector<32x8xbf16>, vector<1x8xf32> -> vector<1x8xf32>
    %cst_82 = arith.constant dense<0xFF800000> : vector<1xf32>
    %503 = vector.multi_reduction <maximumf>, %502, %cst_82 [1] : vector<1x8xf32> to vector<1xf32>
    %504 = vector.shape_cast %503 : vector<1xf32> to vector<1x1xf32>
    %505 = vector.broadcast %504 : vector<1x1xf32> to vector<1x8xf32>
    %506 = arith.subf %502, %505 : vector<1x8xf32>
    %507 = math.exp %506 : vector<1x8xf32>
    %cst_83 = arith.constant dense<0.000000e+00> : vector<1xf32>
    %508 = vector.multi_reduction <add>, %507, %cst_83 [1] : vector<1x8xf32> to vector<1xf32>
    %509 = vector.shape_cast %508 : vector<1xf32> to vector<1x1xf32>
    %510 = vector.broadcast %509 : vector<1x1xf32> to vector<1x8xf32>
    %511 = arith.divf %507, %510 : vector<1x8xf32>
    %512 = arith.truncf %511 : vector<1x8xf32> to vector<1x8xbf16>
    %cst_84 = arith.constant dense<0.000000e+00> : vector<1x32xf32>
    %513 = tpu.matmul %512, %466, %cst_84 {dimension_numbers = #tpu.dot_dimension_numbers<[1], [0], [0], [1], [0, 0, 1, 1], [], []>} : vector<1x8xbf16>, vector<8x32xbf16>, vector<1x32xf32> -> vector<1x32xf32>
    %514 = tpu.concatenate %500, %513 in 1 : vector<1x32xf32>, vector<1x32xf32> -> vector<1x64xf32>
    %515 = arith.truncf %514 : vector<1x64xf32> to vector<1x64xbf16>
    %cst_85 = arith.constant dense<0.000000e+00> : vector<1x32xf32>
    %516 = tpu.matmul %515, %8, %cst_85 {dimension_numbers = #tpu.dot_dimension_numbers<[1], [0], [0], [1], [0, 0, 1, 1], [], []>} : vector<1x64xbf16>, vector<64x32xbf16>, vector<1x32xf32> -> vector<1x32xf32>
    %517 = arith.addf %516, %12 : vector<1x32xf32>
    %518 = math.tanh %517 : vector<1x32xf32>
    %519 = arith.truncf %518 : vector<1x32xf32> to vector<1x32xbf16>
    %cst_86 = arith.constant dense<0.000000e+00> : vector<1x64xf32>
    %520 = tpu.matmul %519, %9, %cst_86 {dimension_numbers = #tpu.dot_dimension_numbers<[1], [0], [0], [1], [0, 0, 1, 1], [], []>} : vector<1x32xbf16>, vector<32x64xbf16>, vector<1x64xf32> -> vector<1x64xf32>
    %521 = arith.addf %520, %13 : vector<1x64xf32>
    %cst_87 = arith.constant dense<0xFF800000> : vector<1xf32>
    %522 = vector.multi_reduction <maximumf>, %521, %cst_87 [1] : vector<1x64xf32> to vector<1xf32>
    %523 = vector.shape_cast %522 : vector<1xf32> to vector<1x1xf32>
    %524 = vector.broadcast %523 : vector<1x1xf32> to vector<1x64xf32>
    %525 = arith.cmpf oeq, %521, %524 : vector<1x64xf32>
    %c64_i32 = arith.constant 64 : i32
    %526 = vector.broadcast %c64_i32 : i32 to vector<1x64xi32>
    %527 = arith.select %525, %14, %526 : vector<1x64xi1>, vector<1x64xi32>
    %cst_88 = arith.constant dense<2147483647> : vector<1xi32>
    %528 = vector.multi_reduction <minsi>, %527, %cst_88 [1] : vector<1x64xi32> to vector<1xi32>
    %529 = vector.shape_cast %528 : vector<1xi32> to vector<1x1xi32>
    %530 = vector.broadcast %523 : vector<1x1xf32> to vector<1x64xf32>
    %531 = arith.subf %521, %530 : vector<1x64xf32>
    %532 = math.exp %531 : vector<1x64xf32>
    %cst_89 = arith.constant dense<0.000000e+00> : vector<1xf32>
    %533 = vector.multi_reduction <add>, %532, %cst_89 [1] : vector<1x64xf32> to vector<1xf32>
    %534 = vector.shape_cast %533 : vector<1xf32> to vector<1x1xf32>
    %cst_90 = arith.constant 1.000000e+00 : f32
    %535 = vector.broadcast %cst_90 : f32 to vector<1x1xf32>
    %536 = arith.divf %535, %534 : vector<1x1xf32>
    %c0_91 = arith.constant 0 : index
    %c0_92 = arith.constant 0 : index
    %537 = vector.load %arg3[%c0_91, %c0_92] : memref<1x128xi32, #tpu.memory_space<vmem>>, vector<1x1xi32>
    tpu.vector_store %arg3[%c0_91, %c0_92], %529 {strides = array<i32>} : memref<1x128xi32, #tpu.memory_space<vmem>>, vector<1x1xi32>,
    %c0_93 = arith.constant 0 : index
    %c0_94 = arith.constant 0 : index
    %538 = vector.load %arg4[%c0_93, %c0_94] : memref<1x128xf32, #tpu.memory_space<vmem>>, vector<1x1xf32>
    tpu.vector_store %arg4[%c0_93, %c0_94], %536 {strides = array<i32>} : memref<1x128xf32, #tpu.memory_space<vmem>>, vector<1x1xf32>,
    %539 = arith.extui %525 : vector<1x64xi1> to vector<1x64xi32>
    %540 = arith.sitofp %539 : vector<1x64xi32> to vector<1x64xf32>
    %541 = arith.truncf %540 : vector<1x64xf32> to vector<1x64xbf16>
    %cst_95 = arith.constant dense<0.000000e+00> : vector<1x128xf32>
    %542 = tpu.matmul %541, %6, %cst_95 {dimension_numbers = #tpu.dot_dimension_numbers<[1], [0], [0], [1], [0, 0, 1, 1], [], []>} : vector<1x64xbf16>, vector<64x128xbf16>, vector<1x128xf32> -> vector<1x128xf32>
    %543 = arith.truncf %500 : vector<1x32xf32> to vector<1x32xbf16>
    %cst_96 = arith.constant dense<0.000000e+00> : vector<1x128xf32>
    %544 = tpu.matmul %543, %7, %cst_96 {dimension_numbers = #tpu.dot_dimension_numbers<[1], [0], [0], [1], [0, 0, 1, 1], [], []>} : vector<1x32xbf16>, vector<32x128xbf16>, vector<1x128xf32> -> vector<1x128xf32>
    %545 = arith.addf %542, %544 : vector<1x128xf32>
    %546 = arith.addf %545, %11 : vector<1x128xf32>
    %547 = vector.extract_strided_slice %546 {offsets = [0, 0], sizes = [1, 32], strides = [1, 1]} : vector<1x128xf32> to vector<1x32xf32>
    %548 = arith.negf %547 : vector<1x32xf32>
    %549 = math.exp %548 : vector<1x32xf32>
    %cst_97 = arith.constant 1.000000e+00 : f32
    %550 = vector.broadcast %cst_97 : f32 to vector<1x32xf32>
    %551 = arith.addf %550, %549 : vector<1x32xf32>
    %552 = arith.divf %550, %551 : vector<1x32xf32>
    %553 = vector.extract_strided_slice %546 {offsets = [0, 32], sizes = [1, 32], strides = [1, 1]} : vector<1x128xf32> to vector<1x32xf32>
    %554 = arith.negf %553 : vector<1x32xf32>
    %555 = math.exp %554 : vector<1x32xf32>
    %cst_98 = arith.constant 1.000000e+00 : f32
    %556 = vector.broadcast %cst_98 : f32 to vector<1x32xf32>
    %557 = arith.addf %556, %555 : vector<1x32xf32>
    %558 = arith.divf %556, %557 : vector<1x32xf32>
    %559 = vector.extract_strided_slice %546 {offsets = [0, 64], sizes = [1, 32], strides = [1, 1]} : vector<1x128xf32> to vector<1x32xf32>
    %560 = vector.extract_strided_slice %546 {offsets = [0, 96], sizes = [1, 32], strides = [1, 1]} : vector<1x128xf32> to vector<1x32xf32>
    %561 = arith.mulf %552, %560 : vector<1x32xf32>
    %562 = arith.addf %559, %561 : vector<1x32xf32>
    %563 = math.tanh %562 : vector<1x32xf32>
    %cst_99 = arith.constant 1.000000e+00 : f32
    %564 = vector.broadcast %cst_99 : f32 to vector<1x32xf32>
    %565 = arith.subf %564, %558 : vector<1x32xf32>
    %566 = arith.mulf %565, %563 : vector<1x32xf32>
    %567 = arith.mulf %558, %500 : vector<1x32xf32>
    %568 = arith.addf %566, %567 : vector<1x32xf32>
    %569 = arith.truncf %568 : vector<1x32xf32> to vector<1x32xbf16>
    %cst_100 = arith.constant dense<0.000000e+00> : vector<1x8xf32>
    %570 = tpu.matmul %569, %468, %cst_100 {dimension_numbers = #tpu.dot_dimension_numbers<[1], [0], [0], [1], [0, 0, 1, 1], [], []>} : vector<1x32xbf16>, vector<32x8xbf16>, vector<1x8xf32> -> vector<1x8xf32>
    %cst_101 = arith.constant dense<0xFF800000> : vector<1xf32>
    %571 = vector.multi_reduction <maximumf>, %570, %cst_101 [1] : vector<1x8xf32> to vector<1xf32>
    %572 = vector.shape_cast %571 : vector<1xf32> to vector<1x1xf32>
    %573 = vector.broadcast %572 : vector<1x1xf32> to vector<1x8xf32>
    %574 = arith.subf %570, %573 : vector<1x8xf32>
    %575 = math.exp %574 : vector<1x8xf32>
    %cst_102 = arith.constant dense<0.000000e+00> : vector<1xf32>
    %576 = vector.multi_reduction <add>, %575, %cst_102 [1] : vector<1x8xf32> to vector<1xf32>
    %577 = vector.shape_cast %576 : vector<1xf32> to vector<1x1xf32>
    %578 = vector.broadcast %577 : vector<1x1xf32> to vector<1x8xf32>
    %579 = arith.divf %575, %578 : vector<1x8xf32>
    %580 = arith.truncf %579 : vector<1x8xf32> to vector<1x8xbf16>
    %cst_103 = arith.constant dense<0.000000e+00> : vector<1x32xf32>
    %581 = tpu.matmul %580, %466, %cst_103 {dimension_numbers = #tpu.dot_dimension_numbers<[1], [0], [0], [1], [0, 0, 1, 1], [], []>} : vector<1x8xbf16>, vector<8x32xbf16>, vector<1x32xf32> -> vector<1x32xf32>
    %582 = tpu.concatenate %568, %581 in 1 : vector<1x32xf32>, vector<1x32xf32> -> vector<1x64xf32>
    %583 = arith.truncf %582 : vector<1x64xf32> to vector<1x64xbf16>
    %cst_104 = arith.constant dense<0.000000e+00> : vector<1x32xf32>
    %584 = tpu.matmul %583, %8, %cst_104 {dimension_numbers = #tpu.dot_dimension_numbers<[1], [0], [0], [1], [0, 0, 1, 1], [], []>} : vector<1x64xbf16>, vector<64x32xbf16>, vector<1x32xf32> -> vector<1x32xf32>
    %585 = arith.addf %584, %12 : vector<1x32xf32>
    %586 = math.tanh %585 : vector<1x32xf32>
    %587 = arith.truncf %586 : vector<1x32xf32> to vector<1x32xbf16>
    %cst_105 = arith.constant dense<0.000000e+00> : vector<1x64xf32>
    %588 = tpu.matmul %587, %9, %cst_105 {dimension_numbers = #tpu.dot_dimension_numbers<[1], [0], [0], [1], [0, 0, 1, 1], [], []>} : vector<1x32xbf16>, vector<32x64xbf16>, vector<1x64xf32> -> vector<1x64xf32>
    %589 = arith.addf %588, %13 : vector<1x64xf32>
    %cst_106 = arith.constant dense<0xFF800000> : vector<1xf32>
    %590 = vector.multi_reduction <maximumf>, %589, %cst_106 [1] : vector<1x64xf32> to vector<1xf32>
    %591 = vector.shape_cast %590 : vector<1xf32> to vector<1x1xf32>
    %592 = vector.broadcast %591 : vector<1x1xf32> to vector<1x64xf32>
    %593 = arith.cmpf oeq, %589, %592 : vector<1x64xf32>
    %c64_i32_107 = arith.constant 64 : i32
    %594 = vector.broadcast %c64_i32_107 : i32 to vector<1x64xi32>
    %595 = arith.select %593, %14, %594 : vector<1x64xi1>, vector<1x64xi32>
    %cst_108 = arith.constant dense<2147483647> : vector<1xi32>
    %596 = vector.multi_reduction <minsi>, %595, %cst_108 [1] : vector<1x64xi32> to vector<1xi32>
    %597 = vector.shape_cast %596 : vector<1xi32> to vector<1x1xi32>
    %598 = vector.broadcast %591 : vector<1x1xf32> to vector<1x64xf32>
    %599 = arith.subf %589, %598 : vector<1x64xf32>
    %600 = math.exp %599 : vector<1x64xf32>
    %cst_109 = arith.constant dense<0.000000e+00> : vector<1xf32>
    %601 = vector.multi_reduction <add>, %600, %cst_109 [1] : vector<1x64xf32> to vector<1xf32>
    %602 = vector.shape_cast %601 : vector<1xf32> to vector<1x1xf32>
    %cst_110 = arith.constant 1.000000e+00 : f32
    %603 = vector.broadcast %cst_110 : f32 to vector<1x1xf32>
    %604 = arith.divf %603, %602 : vector<1x1xf32>
    %c0_111 = arith.constant 0 : index
    %c1 = arith.constant 1 : index
    %605 = vector.load %arg3[%c0_111, %c1] : memref<1x128xi32, #tpu.memory_space<vmem>>, vector<1x1xi32>
    tpu.vector_store %arg3[%c0_111, %c1], %597 {strides = array<i32>} : memref<1x128xi32, #tpu.memory_space<vmem>>, vector<1x1xi32>,
    %c0_112 = arith.constant 0 : index
    %c1_113 = arith.constant 1 : index
    %606 = vector.load %arg4[%c0_112, %c1_113] : memref<1x128xf32, #tpu.memory_space<vmem>>, vector<1x1xf32>
    tpu.vector_store %arg4[%c0_112, %c1_113], %604 {strides = array<i32>} : memref<1x128xf32, #tpu.memory_space<vmem>>, vector<1x1xf32>,
    %607 = arith.extui %593 : vector<1x64xi1> to vector<1x64xi32>
    %608 = arith.sitofp %607 : vector<1x64xi32> to vector<1x64xf32>
    %609 = arith.truncf %608 : vector<1x64xf32> to vector<1x64xbf16>
    %cst_114 = arith.constant dense<0.000000e+00> : vector<1x128xf32>
    %610 = tpu.matmul %609, %6, %cst_114 {dimension_numbers = #tpu.dot_dimension_numbers<[1], [0], [0], [1], [0, 0, 1, 1], [], []>} : vector<1x64xbf16>, vector<64x128xbf16>, vector<1x128xf32> -> vector<1x128xf32>
    %611 = arith.truncf %568 : vector<1x32xf32> to vector<1x32xbf16>
    %cst_115 = arith.constant dense<0.000000e+00> : vector<1x128xf32>
    %612 = tpu.matmul %611, %7, %cst_115 {dimension_numbers = #tpu.dot_dimension_numbers<[1], [0], [0], [1], [0, 0, 1, 1], [], []>} : vector<1x32xbf16>, vector<32x128xbf16>, vector<1x128xf32> -> vector<1x128xf32>
    %613 = arith.addf %610, %612 : vector<1x128xf32>
    %614 = arith.addf %613, %11 : vector<1x128xf32>
    %615 = vector.extract_strided_slice %614 {offsets = [0, 0], sizes = [1, 32], strides = [1, 1]} : vector<1x128xf32> to vector<1x32xf32>
    %616 = arith.negf %615 : vector<1x32xf32>
    %617 = math.exp %616 : vector<1x32xf32>
    %cst_116 = arith.constant 1.000000e+00 : f32
    %618 = vector.broadcast %cst_116 : f32 to vector<1x32xf32>
    %619 = arith.addf %618, %617 : vector<1x32xf32>
    %620 = arith.divf %618, %619 : vector<1x32xf32>
    %621 = vector.extract_strided_slice %614 {offsets = [0, 32], sizes = [1, 32], strides = [1, 1]} : vector<1x128xf32> to vector<1x32xf32>
    %622 = arith.negf %621 : vector<1x32xf32>
    %623 = math.exp %622 : vector<1x32xf32>
    %cst_117 = arith.constant 1.000000e+00 : f32
    %624 = vector.broadcast %cst_117 : f32 to vector<1x32xf32>
    %625 = arith.addf %624, %623 : vector<1x32xf32>
    %626 = arith.divf %624, %625 : vector<1x32xf32>
    %627 = vector.extract_strided_slice %614 {offsets = [0, 64], sizes = [1, 32], strides = [1, 1]} : vector<1x128xf32> to vector<1x32xf32>
    %628 = vector.extract_strided_slice %614 {offsets = [0, 96], sizes = [1, 32], strides = [1, 1]} : vector<1x128xf32> to vector<1x32xf32>
    %629 = arith.mulf %620, %628 : vector<1x32xf32>
    %630 = arith.addf %627, %629 : vector<1x32xf32>
    %631 = math.tanh %630 : vector<1x32xf32>
    %cst_118 = arith.constant 1.000000e+00 : f32
    %632 = vector.broadcast %cst_118 : f32 to vector<1x32xf32>
    %633 = arith.subf %632, %626 : vector<1x32xf32>
    %634 = arith.mulf %633, %631 : vector<1x32xf32>
    %635 = arith.mulf %626, %568 : vector<1x32xf32>
    %636 = arith.addf %634, %635 : vector<1x32xf32>
    %637 = arith.truncf %636 : vector<1x32xf32> to vector<1x32xbf16>
    %cst_119 = arith.constant dense<0.000000e+00> : vector<1x8xf32>
    %638 = tpu.matmul %637, %468, %cst_119 {dimension_numbers = #tpu.dot_dimension_numbers<[1], [0], [0], [1], [0, 0, 1, 1], [], []>} : vector<1x32xbf16>, vector<32x8xbf16>, vector<1x8xf32> -> vector<1x8xf32>
    %cst_120 = arith.constant dense<0xFF800000> : vector<1xf32>
    %639 = vector.multi_reduction <maximumf>, %638, %cst_120 [1] : vector<1x8xf32> to vector<1xf32>
    %640 = vector.shape_cast %639 : vector<1xf32> to vector<1x1xf32>
    %641 = vector.broadcast %640 : vector<1x1xf32> to vector<1x8xf32>
    %642 = arith.subf %638, %641 : vector<1x8xf32>
    %643 = math.exp %642 : vector<1x8xf32>
    %cst_121 = arith.constant dense<0.000000e+00> : vector<1xf32>
    %644 = vector.multi_reduction <add>, %643, %cst_121 [1] : vector<1x8xf32> to vector<1xf32>
    %645 = vector.shape_cast %644 : vector<1xf32> to vector<1x1xf32>
    %646 = vector.broadcast %645 : vector<1x1xf32> to vector<1x8xf32>
    %647 = arith.divf %643, %646 : vector<1x8xf32>
    %648 = arith.truncf %647 : vector<1x8xf32> to vector<1x8xbf16>
    %cst_122 = arith.constant dense<0.000000e+00> : vector<1x32xf32>
    %649 = tpu.matmul %648, %466, %cst_122 {dimension_numbers = #tpu.dot_dimension_numbers<[1], [0], [0], [1], [0, 0, 1, 1], [], []>} : vector<1x8xbf16>, vector<8x32xbf16>, vector<1x32xf32> -> vector<1x32xf32>
    %650 = tpu.concatenate %636, %649 in 1 : vector<1x32xf32>, vector<1x32xf32> -> vector<1x64xf32>
    %651 = arith.truncf %650 : vector<1x64xf32> to vector<1x64xbf16>
    %cst_123 = arith.constant dense<0.000000e+00> : vector<1x32xf32>
    %652 = tpu.matmul %651, %8, %cst_123 {dimension_numbers = #tpu.dot_dimension_numbers<[1], [0], [0], [1], [0, 0, 1, 1], [], []>} : vector<1x64xbf16>, vector<64x32xbf16>, vector<1x32xf32> -> vector<1x32xf32>
    %653 = arith.addf %652, %12 : vector<1x32xf32>
    %654 = math.tanh %653 : vector<1x32xf32>
    %655 = arith.truncf %654 : vector<1x32xf32> to vector<1x32xbf16>
    %cst_124 = arith.constant dense<0.000000e+00> : vector<1x64xf32>
    %656 = tpu.matmul %655, %9, %cst_124 {dimension_numbers = #tpu.dot_dimension_numbers<[1], [0], [0], [1], [0, 0, 1, 1], [], []>} : vector<1x32xbf16>, vector<32x64xbf16>, vector<1x64xf32> -> vector<1x64xf32>
    %657 = arith.addf %656, %13 : vector<1x64xf32>
    %cst_125 = arith.constant dense<0xFF800000> : vector<1xf32>
    %658 = vector.multi_reduction <maximumf>, %657, %cst_125 [1] : vector<1x64xf32> to vector<1xf32>
    %659 = vector.shape_cast %658 : vector<1xf32> to vector<1x1xf32>
    %660 = vector.broadcast %659 : vector<1x1xf32> to vector<1x64xf32>
    %661 = arith.cmpf oeq, %657, %660 : vector<1x64xf32>
    %c64_i32_126 = arith.constant 64 : i32
    %662 = vector.broadcast %c64_i32_126 : i32 to vector<1x64xi32>
    %663 = arith.select %661, %14, %662 : vector<1x64xi1>, vector<1x64xi32>
    %cst_127 = arith.constant dense<2147483647> : vector<1xi32>
    %664 = vector.multi_reduction <minsi>, %663, %cst_127 [1] : vector<1x64xi32> to vector<1xi32>
    %665 = vector.shape_cast %664 : vector<1xi32> to vector<1x1xi32>
    %666 = vector.broadcast %659 : vector<1x1xf32> to vector<1x64xf32>
    %667 = arith.subf %657, %666 : vector<1x64xf32>
    %668 = math.exp %667 : vector<1x64xf32>
    %cst_128 = arith.constant dense<0.000000e+00> : vector<1xf32>
    %669 = vector.multi_reduction <add>, %668, %cst_128 [1] : vector<1x64xf32> to vector<1xf32>
    %670 = vector.shape_cast %669 : vector<1xf32> to vector<1x1xf32>
    %cst_129 = arith.constant 1.000000e+00 : f32
    %671 = vector.broadcast %cst_129 : f32 to vector<1x1xf32>
    %672 = arith.divf %671, %670 : vector<1x1xf32>
    %c0_130 = arith.constant 0 : index
    %c2 = arith.constant 2 : index
    %673 = vector.load %arg3[%c0_130, %c2] : memref<1x128xi32, #tpu.memory_space<vmem>>, vector<1x1xi32>
    tpu.vector_store %arg3[%c0_130, %c2], %665 {strides = array<i32>} : memref<1x128xi32, #tpu.memory_space<vmem>>, vector<1x1xi32>,
    %c0_131 = arith.constant 0 : index
    %c2_132 = arith.constant 2 : index
    %674 = vector.load %arg4[%c0_131, %c2_132] : memref<1x128xf32, #tpu.memory_space<vmem>>, vector<1x1xf32>
    tpu.vector_store %arg4[%c0_131, %c2_132], %672 {strides = array<i32>} : memref<1x128xf32, #tpu.memory_space<vmem>>, vector<1x1xf32>,
    %675 = arith.extui %661 : vector<1x64xi1> to vector<1x64xi32>
    %676 = arith.sitofp %675 : vector<1x64xi32> to vector<1x64xf32>
    %677 = arith.truncf %676 : vector<1x64xf32> to vector<1x64xbf16>
    %cst_133 = arith.constant dense<0.000000e+00> : vector<1x128xf32>
    %678 = tpu.matmul %677, %6, %cst_133 {dimension_numbers = #tpu.dot_dimension_numbers<[1], [0], [0], [1], [0, 0, 1, 1], [], []>} : vector<1x64xbf16>, vector<64x128xbf16>, vector<1x128xf32> -> vector<1x128xf32>
    %679 = arith.truncf %636 : vector<1x32xf32> to vector<1x32xbf16>
    %cst_134 = arith.constant dense<0.000000e+00> : vector<1x128xf32>
    %680 = tpu.matmul %679, %7, %cst_134 {dimension_numbers = #tpu.dot_dimension_numbers<[1], [0], [0], [1], [0, 0, 1, 1], [], []>} : vector<1x32xbf16>, vector<32x128xbf16>, vector<1x128xf32> -> vector<1x128xf32>
    %681 = arith.addf %678, %680 : vector<1x128xf32>
    %682 = arith.addf %681, %11 : vector<1x128xf32>
    %683 = vector.extract_strided_slice %682 {offsets = [0, 0], sizes = [1, 32], strides = [1, 1]} : vector<1x128xf32> to vector<1x32xf32>
    %684 = arith.negf %683 : vector<1x32xf32>
    %685 = math.exp %684 : vector<1x32xf32>
    %cst_135 = arith.constant 1.000000e+00 : f32
    %686 = vector.broadcast %cst_135 : f32 to vector<1x32xf32>
    %687 = arith.addf %686, %685 : vector<1x32xf32>
    %688 = arith.divf %686, %687 : vector<1x32xf32>
    %689 = vector.extract_strided_slice %682 {offsets = [0, 32], sizes = [1, 32], strides = [1, 1]} : vector<1x128xf32> to vector<1x32xf32>
    %690 = arith.negf %689 : vector<1x32xf32>
    %691 = math.exp %690 : vector<1x32xf32>
    %cst_136 = arith.constant 1.000000e+00 : f32
    %692 = vector.broadcast %cst_136 : f32 to vector<1x32xf32>
    %693 = arith.addf %692, %691 : vector<1x32xf32>
    %694 = arith.divf %692, %693 : vector<1x32xf32>
    %695 = vector.extract_strided_slice %682 {offsets = [0, 64], sizes = [1, 32], strides = [1, 1]} : vector<1x128xf32> to vector<1x32xf32>
    %696 = vector.extract_strided_slice %682 {offsets = [0, 96], sizes = [1, 32], strides = [1, 1]} : vector<1x128xf32> to vector<1x32xf32>
    %697 = arith.mulf %688, %696 : vector<1x32xf32>
    %698 = arith.addf %695, %697 : vector<1x32xf32>
    %699 = math.tanh %698 : vector<1x32xf32>
    %cst_137 = arith.constant 1.000000e+00 : f32
    %700 = vector.broadcast %cst_137 : f32 to vector<1x32xf32>
    %701 = arith.subf %700, %694 : vector<1x32xf32>
    %702 = arith.mulf %701, %699 : vector<1x32xf32>
    %703 = arith.mulf %694, %636 : vector<1x32xf32>
    %704 = arith.addf %702, %703 : vector<1x32xf32>
    %705 = arith.truncf %704 : vector<1x32xf32> to vector<1x32xbf16>
    %cst_138 = arith.constant dense<0.000000e+00> : vector<1x8xf32>
    %706 = tpu.matmul %705, %468, %cst_138 {dimension_numbers = #tpu.dot_dimension_numbers<[1], [0], [0], [1], [0, 0, 1, 1], [], []>} : vector<1x32xbf16>, vector<32x8xbf16>, vector<1x8xf32> -> vector<1x8xf32>
    %cst_139 = arith.constant dense<0xFF800000> : vector<1xf32>
    %707 = vector.multi_reduction <maximumf>, %706, %cst_139 [1] : vector<1x8xf32> to vector<1xf32>
    %708 = vector.shape_cast %707 : vector<1xf32> to vector<1x1xf32>
    %709 = vector.broadcast %708 : vector<1x1xf32> to vector<1x8xf32>
    %710 = arith.subf %706, %709 : vector<1x8xf32>
    %711 = math.exp %710 : vector<1x8xf32>
    %cst_140 = arith.constant dense<0.000000e+00> : vector<1xf32>
    %712 = vector.multi_reduction <add>, %711, %cst_140 [1] : vector<1x8xf32> to vector<1xf32>
    %713 = vector.shape_cast %712 : vector<1xf32> to vector<1x1xf32>
    %714 = vector.broadcast %713 : vector<1x1xf32> to vector<1x8xf32>
    %715 = arith.divf %711, %714 : vector<1x8xf32>
    %716 = arith.truncf %715 : vector<1x8xf32> to vector<1x8xbf16>
    %cst_141 = arith.constant dense<0.000000e+00> : vector<1x32xf32>
    %717 = tpu.matmul %716, %466, %cst_141 {dimension_numbers = #tpu.dot_dimension_numbers<[1], [0], [0], [1], [0, 0, 1, 1], [], []>} : vector<1x8xbf16>, vector<8x32xbf16>, vector<1x32xf32> -> vector<1x32xf32>
    %718 = tpu.concatenate %704, %717 in 1 : vector<1x32xf32>, vector<1x32xf32> -> vector<1x64xf32>
    %719 = arith.truncf %718 : vector<1x64xf32> to vector<1x64xbf16>
    %cst_142 = arith.constant dense<0.000000e+00> : vector<1x32xf32>
    %720 = tpu.matmul %719, %8, %cst_142 {dimension_numbers = #tpu.dot_dimension_numbers<[1], [0], [0], [1], [0, 0, 1, 1], [], []>} : vector<1x64xbf16>, vector<64x32xbf16>, vector<1x32xf32> -> vector<1x32xf32>
    %721 = arith.addf %720, %12 : vector<1x32xf32>
    %722 = math.tanh %721 : vector<1x32xf32>
    %723 = arith.truncf %722 : vector<1x32xf32> to vector<1x32xbf16>
    %cst_143 = arith.constant dense<0.000000e+00> : vector<1x64xf32>
    %724 = tpu.matmul %723, %9, %cst_143 {dimension_numbers = #tpu.dot_dimension_numbers<[1], [0], [0], [1], [0, 0, 1, 1], [], []>} : vector<1x32xbf16>, vector<32x64xbf16>, vector<1x64xf32> -> vector<1x64xf32>
    %725 = arith.addf %724, %13 : vector<1x64xf32>
    %cst_144 = arith.constant dense<0xFF800000> : vector<1xf32>
    %726 = vector.multi_reduction <maximumf>, %725, %cst_144 [1] : vector<1x64xf32> to vector<1xf32>
    %727 = vector.shape_cast %726 : vector<1xf32> to vector<1x1xf32>
    %728 = vector.broadcast %727 : vector<1x1xf32> to vector<1x64xf32>
    %729 = arith.cmpf oeq, %725, %728 : vector<1x64xf32>
    %c64_i32_145 = arith.constant 64 : i32
    %730 = vector.broadcast %c64_i32_145 : i32 to vector<1x64xi32>
    %731 = arith.select %729, %14, %730 : vector<1x64xi1>, vector<1x64xi32>
    %cst_146 = arith.constant dense<2147483647> : vector<1xi32>
    %732 = vector.multi_reduction <minsi>, %731, %cst_146 [1] : vector<1x64xi32> to vector<1xi32>
    %733 = vector.shape_cast %732 : vector<1xi32> to vector<1x1xi32>
    %734 = vector.broadcast %727 : vector<1x1xf32> to vector<1x64xf32>
    %735 = arith.subf %725, %734 : vector<1x64xf32>
    %736 = math.exp %735 : vector<1x64xf32>
    %cst_147 = arith.constant dense<0.000000e+00> : vector<1xf32>
    %737 = vector.multi_reduction <add>, %736, %cst_147 [1] : vector<1x64xf32> to vector<1xf32>
    %738 = vector.shape_cast %737 : vector<1xf32> to vector<1x1xf32>
    %cst_148 = arith.constant 1.000000e+00 : f32
    %739 = vector.broadcast %cst_148 : f32 to vector<1x1xf32>
    %740 = arith.divf %739, %738 : vector<1x1xf32>
    %c0_149 = arith.constant 0 : index
    %c3 = arith.constant 3 : index
    %741 = vector.load %arg3[%c0_149, %c3] : memref<1x128xi32, #tpu.memory_space<vmem>>, vector<1x1xi32>
    tpu.vector_store %arg3[%c0_149, %c3], %733 {strides = array<i32>} : memref<1x128xi32, #tpu.memory_space<vmem>>, vector<1x1xi32>,
    %c0_150 = arith.constant 0 : index
    %c3_151 = arith.constant 3 : index
    %742 = vector.load %arg4[%c0_150, %c3_151] : memref<1x128xf32, #tpu.memory_space<vmem>>, vector<1x1xf32>
    tpu.vector_store %arg4[%c0_150, %c3_151], %740 {strides = array<i32>} : memref<1x128xf32, #tpu.memory_space<vmem>>, vector<1x1xf32>,
    %743 = arith.extui %729 : vector<1x64xi1> to vector<1x64xi32>
    %744 = arith.sitofp %743 : vector<1x64xi32> to vector<1x64xf32>
    %745 = arith.truncf %744 : vector<1x64xf32> to vector<1x64xbf16>
    %cst_152 = arith.constant dense<0.000000e+00> : vector<1x128xf32>
    %746 = tpu.matmul %745, %6, %cst_152 {dimension_numbers = #tpu.dot_dimension_numbers<[1], [0], [0], [1], [0, 0, 1, 1], [], []>} : vector<1x64xbf16>, vector<64x128xbf16>, vector<1x128xf32> -> vector<1x128xf32>
    %747 = arith.truncf %704 : vector<1x32xf32> to vector<1x32xbf16>
    %cst_153 = arith.constant dense<0.000000e+00> : vector<1x128xf32>
    %748 = tpu.matmul %747, %7, %cst_153 {dimension_numbers = #tpu.dot_dimension_numbers<[1], [0], [0], [1], [0, 0, 1, 1], [], []>} : vector<1x32xbf16>, vector<32x128xbf16>, vector<1x128xf32> -> vector<1x128xf32>
    %749 = arith.addf %746, %748 : vector<1x128xf32>
    %750 = arith.addf %749, %11 : vector<1x128xf32>
    %751 = vector.extract_strided_slice %750 {offsets = [0, 0], sizes = [1, 32], strides = [1, 1]} : vector<1x128xf32> to vector<1x32xf32>
    %752 = arith.negf %751 : vector<1x32xf32>
    %753 = math.exp %752 : vector<1x32xf32>
    %cst_154 = arith.constant 1.000000e+00 : f32
    %754 = vector.broadcast %cst_154 : f32 to vector<1x32xf32>
    %755 = arith.addf %754, %753 : vector<1x32xf32>
    %756 = arith.divf %754, %755 : vector<1x32xf32>
    %757 = vector.extract_strided_slice %750 {offsets = [0, 32], sizes = [1, 32], strides = [1, 1]} : vector<1x128xf32> to vector<1x32xf32>
    %758 = arith.negf %757 : vector<1x32xf32>
    %759 = math.exp %758 : vector<1x32xf32>
    %cst_155 = arith.constant 1.000000e+00 : f32
    %760 = vector.broadcast %cst_155 : f32 to vector<1x32xf32>
    %761 = arith.addf %760, %759 : vector<1x32xf32>
    %762 = arith.divf %760, %761 : vector<1x32xf32>
    %763 = vector.extract_strided_slice %750 {offsets = [0, 64], sizes = [1, 32], strides = [1, 1]} : vector<1x128xf32> to vector<1x32xf32>
    %764 = vector.extract_strided_slice %750 {offsets = [0, 96], sizes = [1, 32], strides = [1, 1]} : vector<1x128xf32> to vector<1x32xf32>
    %765 = arith.mulf %756, %764 : vector<1x32xf32>
    %766 = arith.addf %763, %765 : vector<1x32xf32>
    %767 = math.tanh %766 : vector<1x32xf32>
    %cst_156 = arith.constant 1.000000e+00 : f32
    %768 = vector.broadcast %cst_156 : f32 to vector<1x32xf32>
    %769 = arith.subf %768, %762 : vector<1x32xf32>
    %770 = arith.mulf %769, %767 : vector<1x32xf32>
    %771 = arith.mulf %762, %704 : vector<1x32xf32>
    %772 = arith.addf %770, %771 : vector<1x32xf32>
    %773 = arith.truncf %772 : vector<1x32xf32> to vector<1x32xbf16>
    %cst_157 = arith.constant dense<0.000000e+00> : vector<1x8xf32>
    %774 = tpu.matmul %773, %468, %cst_157 {dimension_numbers = #tpu.dot_dimension_numbers<[1], [0], [0], [1], [0, 0, 1, 1], [], []>} : vector<1x32xbf16>, vector<32x8xbf16>, vector<1x8xf32> -> vector<1x8xf32>
    %cst_158 = arith.constant dense<0xFF800000> : vector<1xf32>
    %775 = vector.multi_reduction <maximumf>, %774, %cst_158 [1] : vector<1x8xf32> to vector<1xf32>
    %776 = vector.shape_cast %775 : vector<1xf32> to vector<1x1xf32>
    %777 = vector.broadcast %776 : vector<1x1xf32> to vector<1x8xf32>
    %778 = arith.subf %774, %777 : vector<1x8xf32>
    %779 = math.exp %778 : vector<1x8xf32>
    %cst_159 = arith.constant dense<0.000000e+00> : vector<1xf32>
    %780 = vector.multi_reduction <add>, %779, %cst_159 [1] : vector<1x8xf32> to vector<1xf32>
    %781 = vector.shape_cast %780 : vector<1xf32> to vector<1x1xf32>
    %782 = vector.broadcast %781 : vector<1x1xf32> to vector<1x8xf32>
    %783 = arith.divf %779, %782 : vector<1x8xf32>
    %784 = arith.truncf %783 : vector<1x8xf32> to vector<1x8xbf16>
    %cst_160 = arith.constant dense<0.000000e+00> : vector<1x32xf32>
    %785 = tpu.matmul %784, %466, %cst_160 {dimension_numbers = #tpu.dot_dimension_numbers<[1], [0], [0], [1], [0, 0, 1, 1], [], []>} : vector<1x8xbf16>, vector<8x32xbf16>, vector<1x32xf32> -> vector<1x32xf32>
    %786 = tpu.concatenate %772, %785 in 1 : vector<1x32xf32>, vector<1x32xf32> -> vector<1x64xf32>
    %787 = arith.truncf %786 : vector<1x64xf32> to vector<1x64xbf16>
    %cst_161 = arith.constant dense<0.000000e+00> : vector<1x32xf32>
    %788 = tpu.matmul %787, %8, %cst_161 {dimension_numbers = #tpu.dot_dimension_numbers<[1], [0], [0], [1], [0, 0, 1, 1], [], []>} : vector<1x64xbf16>, vector<64x32xbf16>, vector<1x32xf32> -> vector<1x32xf32>
    %789 = arith.addf %788, %12 : vector<1x32xf32>
    %790 = math.tanh %789 : vector<1x32xf32>
    %791 = arith.truncf %790 : vector<1x32xf32> to vector<1x32xbf16>
    %cst_162 = arith.constant dense<0.000000e+00> : vector<1x64xf32>
    %792 = tpu.matmul %791, %9, %cst_162 {dimension_numbers = #tpu.dot_dimension_numbers<[1], [0], [0], [1], [0, 0, 1, 1], [], []>} : vector<1x32xbf16>, vector<32x64xbf16>, vector<1x64xf32> -> vector<1x64xf32>
    %793 = arith.addf %792, %13 : vector<1x64xf32>
    %cst_163 = arith.constant dense<0xFF800000> : vector<1xf32>
    %794 = vector.multi_reduction <maximumf>, %793, %cst_163 [1] : vector<1x64xf32> to vector<1xf32>
    %795 = vector.shape_cast %794 : vector<1xf32> to vector<1x1xf32>
    %796 = vector.broadcast %795 : vector<1x1xf32> to vector<1x64xf32>
    %797 = arith.cmpf oeq, %793, %796 : vector<1x64xf32>
    %c64_i32_164 = arith.constant 64 : i32
    %798 = vector.broadcast %c64_i32_164 : i32 to vector<1x64xi32>
    %799 = arith.select %797, %14, %798 : vector<1x64xi1>, vector<1x64xi32>
    %cst_165 = arith.constant dense<2147483647> : vector<1xi32>
    %800 = vector.multi_reduction <minsi>, %799, %cst_165 [1] : vector<1x64xi32> to vector<1xi32>
    %801 = vector.shape_cast %800 : vector<1xi32> to vector<1x1xi32>
    %802 = vector.broadcast %795 : vector<1x1xf32> to vector<1x64xf32>
    %803 = arith.subf %793, %802 : vector<1x64xf32>
    %804 = math.exp %803 : vector<1x64xf32>
    %cst_166 = arith.constant dense<0.000000e+00> : vector<1xf32>
    %805 = vector.multi_reduction <add>, %804, %cst_166 [1] : vector<1x64xf32> to vector<1xf32>
    %806 = vector.shape_cast %805 : vector<1xf32> to vector<1x1xf32>
    %cst_167 = arith.constant 1.000000e+00 : f32
    %807 = vector.broadcast %cst_167 : f32 to vector<1x1xf32>
    %808 = arith.divf %807, %806 : vector<1x1xf32>
    %c0_168 = arith.constant 0 : index
    %c4 = arith.constant 4 : index
    %809 = vector.load %arg3[%c0_168, %c4] : memref<1x128xi32, #tpu.memory_space<vmem>>, vector<1x1xi32>
    tpu.vector_store %arg3[%c0_168, %c4], %801 {strides = array<i32>} : memref<1x128xi32, #tpu.memory_space<vmem>>, vector<1x1xi32>,
    %c0_169 = arith.constant 0 : index
    %c4_170 = arith.constant 4 : index
    %810 = vector.load %arg4[%c0_169, %c4_170] : memref<1x128xf32, #tpu.memory_space<vmem>>, vector<1x1xf32>
    tpu.vector_store %arg4[%c0_169, %c4_170], %808 {strides = array<i32>} : memref<1x128xf32, #tpu.memory_space<vmem>>, vector<1x1xf32>,
    %811 = arith.extui %797 : vector<1x64xi1> to vector<1x64xi32>
    %812 = arith.sitofp %811 : vector<1x64xi32> to vector<1x64xf32>
    %813 = arith.truncf %812 : vector<1x64xf32> to vector<1x64xbf16>
    %cst_171 = arith.constant dense<0.000000e+00> : vector<1x128xf32>
    %814 = tpu.matmul %813, %6, %cst_171 {dimension_numbers = #tpu.dot_dimension_numbers<[1], [0], [0], [1], [0, 0, 1, 1], [], []>} : vector<1x64xbf16>, vector<64x128xbf16>, vector<1x128xf32> -> vector<1x128xf32>
    %815 = arith.truncf %772 : vector<1x32xf32> to vector<1x32xbf16>
    %cst_172 = arith.constant dense<0.000000e+00> : vector<1x128xf32>
    %816 = tpu.matmul %815, %7, %cst_172 {dimension_numbers = #tpu.dot_dimension_numbers<[1], [0], [0], [1], [0, 0, 1, 1], [], []>} : vector<1x32xbf16>, vector<32x128xbf16>, vector<1x128xf32> -> vector<1x128xf32>
    %817 = arith.addf %814, %816 : vector<1x128xf32>
    %818 = arith.addf %817, %11 : vector<1x128xf32>
    %819 = vector.extract_strided_slice %818 {offsets = [0, 0], sizes = [1, 32], strides = [1, 1]} : vector<1x128xf32> to vector<1x32xf32>
    %820 = arith.negf %819 : vector<1x32xf32>
    %821 = math.exp %820 : vector<1x32xf32>
    %cst_173 = arith.constant 1.000000e+00 : f32
    %822 = vector.broadcast %cst_173 : f32 to vector<1x32xf32>
    %823 = arith.addf %822, %821 : vector<1x32xf32>
    %824 = arith.divf %822, %823 : vector<1x32xf32>
    %825 = vector.extract_strided_slice %818 {offsets = [0, 32], sizes = [1, 32], strides = [1, 1]} : vector<1x128xf32> to vector<1x32xf32>
    %826 = arith.negf %825 : vector<1x32xf32>
    %827 = math.exp %826 : vector<1x32xf32>
    %cst_174 = arith.constant 1.000000e+00 : f32
    %828 = vector.broadcast %cst_174 : f32 to vector<1x32xf32>
    %829 = arith.addf %828, %827 : vector<1x32xf32>
    %830 = arith.divf %828, %829 : vector<1x32xf32>
    %831 = vector.extract_strided_slice %818 {offsets = [0, 64], sizes = [1, 32], strides = [1, 1]} : vector<1x128xf32> to vector<1x32xf32>
    %832 = vector.extract_strided_slice %818 {offsets = [0, 96], sizes = [1, 32], strides = [1, 1]} : vector<1x128xf32> to vector<1x32xf32>
    %833 = arith.mulf %824, %832 : vector<1x32xf32>
    %834 = arith.addf %831, %833 : vector<1x32xf32>
    %835 = math.tanh %834 : vector<1x32xf32>
    %cst_175 = arith.constant 1.000000e+00 : f32
    %836 = vector.broadcast %cst_175 : f32 to vector<1x32xf32>
    %837 = arith.subf %836, %830 : vector<1x32xf32>
    %838 = arith.mulf %837, %835 : vector<1x32xf32>
    %839 = arith.mulf %830, %772 : vector<1x32xf32>
    %840 = arith.addf %838, %839 : vector<1x32xf32>
    %841 = arith.truncf %840 : vector<1x32xf32> to vector<1x32xbf16>
    %cst_176 = arith.constant dense<0.000000e+00> : vector<1x8xf32>
    %842 = tpu.matmul %841, %468, %cst_176 {dimension_numbers = #tpu.dot_dimension_numbers<[1], [0], [0], [1], [0, 0, 1, 1], [], []>} : vector<1x32xbf16>, vector<32x8xbf16>, vector<1x8xf32> -> vector<1x8xf32>
    %cst_177 = arith.constant dense<0xFF800000> : vector<1xf32>
    %843 = vector.multi_reduction <maximumf>, %842, %cst_177 [1] : vector<1x8xf32> to vector<1xf32>
    %844 = vector.shape_cast %843 : vector<1xf32> to vector<1x1xf32>
    %845 = vector.broadcast %844 : vector<1x1xf32> to vector<1x8xf32>
    %846 = arith.subf %842, %845 : vector<1x8xf32>
    %847 = math.exp %846 : vector<1x8xf32>
    %cst_178 = arith.constant dense<0.000000e+00> : vector<1xf32>
    %848 = vector.multi_reduction <add>, %847, %cst_178 [1] : vector<1x8xf32> to vector<1xf32>
    %849 = vector.shape_cast %848 : vector<1xf32> to vector<1x1xf32>
    %850 = vector.broadcast %849 : vector<1x1xf32> to vector<1x8xf32>
    %851 = arith.divf %847, %850 : vector<1x8xf32>
    %852 = arith.truncf %851 : vector<1x8xf32> to vector<1x8xbf16>
    %cst_179 = arith.constant dense<0.000000e+00> : vector<1x32xf32>
    %853 = tpu.matmul %852, %466, %cst_179 {dimension_numbers = #tpu.dot_dimension_numbers<[1], [0], [0], [1], [0, 0, 1, 1], [], []>} : vector<1x8xbf16>, vector<8x32xbf16>, vector<1x32xf32> -> vector<1x32xf32>
    %854 = tpu.concatenate %840, %853 in 1 : vector<1x32xf32>, vector<1x32xf32> -> vector<1x64xf32>
    %855 = arith.truncf %854 : vector<1x64xf32> to vector<1x64xbf16>
    %cst_180 = arith.constant dense<0.000000e+00> : vector<1x32xf32>
    %856 = tpu.matmul %855, %8, %cst_180 {dimension_numbers = #tpu.dot_dimension_numbers<[1], [0], [0], [1], [0, 0, 1, 1], [], []>} : vector<1x64xbf16>, vector<64x32xbf16>, vector<1x32xf32> -> vector<1x32xf32>
    %857 = arith.addf %856, %12 : vector<1x32xf32>
    %858 = math.tanh %857 : vector<1x32xf32>
    %859 = arith.truncf %858 : vector<1x32xf32> to vector<1x32xbf16>
    %cst_181 = arith.constant dense<0.000000e+00> : vector<1x64xf32>
    %860 = tpu.matmul %859, %9, %cst_181 {dimension_numbers = #tpu.dot_dimension_numbers<[1], [0], [0], [1], [0, 0, 1, 1], [], []>} : vector<1x32xbf16>, vector<32x64xbf16>, vector<1x64xf32> -> vector<1x64xf32>
    %861 = arith.addf %860, %13 : vector<1x64xf32>
    %cst_182 = arith.constant dense<0xFF800000> : vector<1xf32>
    %862 = vector.multi_reduction <maximumf>, %861, %cst_182 [1] : vector<1x64xf32> to vector<1xf32>
    %863 = vector.shape_cast %862 : vector<1xf32> to vector<1x1xf32>
    %864 = vector.broadcast %863 : vector<1x1xf32> to vector<1x64xf32>
    %865 = arith.cmpf oeq, %861, %864 : vector<1x64xf32>
    %c64_i32_183 = arith.constant 64 : i32
    %866 = vector.broadcast %c64_i32_183 : i32 to vector<1x64xi32>
    %867 = arith.select %865, %14, %866 : vector<1x64xi1>, vector<1x64xi32>
    %cst_184 = arith.constant dense<2147483647> : vector<1xi32>
    %868 = vector.multi_reduction <minsi>, %867, %cst_184 [1] : vector<1x64xi32> to vector<1xi32>
    %869 = vector.shape_cast %868 : vector<1xi32> to vector<1x1xi32>
    %870 = vector.broadcast %863 : vector<1x1xf32> to vector<1x64xf32>
    %871 = arith.subf %861, %870 : vector<1x64xf32>
    %872 = math.exp %871 : vector<1x64xf32>
    %cst_185 = arith.constant dense<0.000000e+00> : vector<1xf32>
    %873 = vector.multi_reduction <add>, %872, %cst_185 [1] : vector<1x64xf32> to vector<1xf32>
    %874 = vector.shape_cast %873 : vector<1xf32> to vector<1x1xf32>
    %cst_186 = arith.constant 1.000000e+00 : f32
    %875 = vector.broadcast %cst_186 : f32 to vector<1x1xf32>
    %876 = arith.divf %875, %874 : vector<1x1xf32>
    %c0_187 = arith.constant 0 : index
    %c5 = arith.constant 5 : index
    %877 = vector.load %arg3[%c0_187, %c5] : memref<1x128xi32, #tpu.memory_space<vmem>>, vector<1x1xi32>
    tpu.vector_store %arg3[%c0_187, %c5], %869 {strides = array<i32>} : memref<1x128xi32, #tpu.memory_space<vmem>>, vector<1x1xi32>,
    %c0_188 = arith.constant 0 : index
    %c5_189 = arith.constant 5 : index
    %878 = vector.load %arg4[%c0_188, %c5_189] : memref<1x128xf32, #tpu.memory_space<vmem>>, vector<1x1xf32>
    tpu.vector_store %arg4[%c0_188, %c5_189], %876 {strides = array<i32>} : memref<1x128xf32, #tpu.memory_space<vmem>>, vector<1x1xf32>,
    %879 = arith.extui %865 : vector<1x64xi1> to vector<1x64xi32>
    %880 = arith.sitofp %879 : vector<1x64xi32> to vector<1x64xf32>
    %881 = arith.truncf %880 : vector<1x64xf32> to vector<1x64xbf16>
    %cst_190 = arith.constant dense<0.000000e+00> : vector<1x128xf32>
    %882 = tpu.matmul %881, %6, %cst_190 {dimension_numbers = #tpu.dot_dimension_numbers<[1], [0], [0], [1], [0, 0, 1, 1], [], []>} : vector<1x64xbf16>, vector<64x128xbf16>, vector<1x128xf32> -> vector<1x128xf32>
    %883 = arith.truncf %840 : vector<1x32xf32> to vector<1x32xbf16>
    %cst_191 = arith.constant dense<0.000000e+00> : vector<1x128xf32>
    %884 = tpu.matmul %883, %7, %cst_191 {dimension_numbers = #tpu.dot_dimension_numbers<[1], [0], [0], [1], [0, 0, 1, 1], [], []>} : vector<1x32xbf16>, vector<32x128xbf16>, vector<1x128xf32> -> vector<1x128xf32>
    %885 = arith.addf %882, %884 : vector<1x128xf32>
    %886 = arith.addf %885, %11 : vector<1x128xf32>
    %887 = vector.extract_strided_slice %886 {offsets = [0, 0], sizes = [1, 32], strides = [1, 1]} : vector<1x128xf32> to vector<1x32xf32>
    %888 = arith.negf %887 : vector<1x32xf32>
    %889 = math.exp %888 : vector<1x32xf32>
    %cst_192 = arith.constant 1.000000e+00 : f32
    %890 = vector.broadcast %cst_192 : f32 to vector<1x32xf32>
    %891 = arith.addf %890, %889 : vector<1x32xf32>
    %892 = arith.divf %890, %891 : vector<1x32xf32>
    %893 = vector.extract_strided_slice %886 {offsets = [0, 32], sizes = [1, 32], strides = [1, 1]} : vector<1x128xf32> to vector<1x32xf32>
    %894 = arith.negf %893 : vector<1x32xf32>
    %895 = math.exp %894 : vector<1x32xf32>
    %cst_193 = arith.constant 1.000000e+00 : f32
    %896 = vector.broadcast %cst_193 : f32 to vector<1x32xf32>
    %897 = arith.addf %896, %895 : vector<1x32xf32>
    %898 = arith.divf %896, %897 : vector<1x32xf32>
    %899 = vector.extract_strided_slice %886 {offsets = [0, 64], sizes = [1, 32], strides = [1, 1]} : vector<1x128xf32> to vector<1x32xf32>
    %900 = vector.extract_strided_slice %886 {offsets = [0, 96], sizes = [1, 32], strides = [1, 1]} : vector<1x128xf32> to vector<1x32xf32>
    %901 = arith.mulf %892, %900 : vector<1x32xf32>
    %902 = arith.addf %899, %901 : vector<1x32xf32>
    %903 = math.tanh %902 : vector<1x32xf32>
    %cst_194 = arith.constant 1.000000e+00 : f32
    %904 = vector.broadcast %cst_194 : f32 to vector<1x32xf32>
    %905 = arith.subf %904, %898 : vector<1x32xf32>
    %906 = arith.mulf %905, %903 : vector<1x32xf32>
    %907 = arith.mulf %898, %840 : vector<1x32xf32>
    %908 = arith.addf %906, %907 : vector<1x32xf32>
    %909 = arith.truncf %908 : vector<1x32xf32> to vector<1x32xbf16>
    %cst_195 = arith.constant dense<0.000000e+00> : vector<1x8xf32>
    %910 = tpu.matmul %909, %468, %cst_195 {dimension_numbers = #tpu.dot_dimension_numbers<[1], [0], [0], [1], [0, 0, 1, 1], [], []>} : vector<1x32xbf16>, vector<32x8xbf16>, vector<1x8xf32> -> vector<1x8xf32>
    %cst_196 = arith.constant dense<0xFF800000> : vector<1xf32>
    %911 = vector.multi_reduction <maximumf>, %910, %cst_196 [1] : vector<1x8xf32> to vector<1xf32>
    %912 = vector.shape_cast %911 : vector<1xf32> to vector<1x1xf32>
    %913 = vector.broadcast %912 : vector<1x1xf32> to vector<1x8xf32>
    %914 = arith.subf %910, %913 : vector<1x8xf32>
    %915 = math.exp %914 : vector<1x8xf32>
    %cst_197 = arith.constant dense<0.000000e+00> : vector<1xf32>
    %916 = vector.multi_reduction <add>, %915, %cst_197 [1] : vector<1x8xf32> to vector<1xf32>
    %917 = vector.shape_cast %916 : vector<1xf32> to vector<1x1xf32>
    %918 = vector.broadcast %917 : vector<1x1xf32> to vector<1x8xf32>
    %919 = arith.divf %915, %918 : vector<1x8xf32>
    %920 = arith.truncf %919 : vector<1x8xf32> to vector<1x8xbf16>
    %cst_198 = arith.constant dense<0.000000e+00> : vector<1x32xf32>
    %921 = tpu.matmul %920, %466, %cst_198 {dimension_numbers = #tpu.dot_dimension_numbers<[1], [0], [0], [1], [0, 0, 1, 1], [], []>} : vector<1x8xbf16>, vector<8x32xbf16>, vector<1x32xf32> -> vector<1x32xf32>
    %922 = tpu.concatenate %908, %921 in 1 : vector<1x32xf32>, vector<1x32xf32> -> vector<1x64xf32>
    %923 = arith.truncf %922 : vector<1x64xf32> to vector<1x64xbf16>
    %cst_199 = arith.constant dense<0.000000e+00> : vector<1x32xf32>
    %924 = tpu.matmul %923, %8, %cst_199 {dimension_numbers = #tpu.dot_dimension_numbers<[1], [0], [0], [1], [0, 0, 1, 1], [], []>} : vector<1x64xbf16>, vector<64x32xbf16>, vector<1x32xf32> -> vector<1x32xf32>
    %925 = arith.addf %924, %12 : vector<1x32xf32>
    %926 = math.tanh %925 : vector<1x32xf32>
    %927 = arith.truncf %926 : vector<1x32xf32> to vector<1x32xbf16>
    %cst_200 = arith.constant dense<0.000000e+00> : vector<1x64xf32>
    %928 = tpu.matmul %927, %9, %cst_200 {dimension_numbers = #tpu.dot_dimension_numbers<[1], [0], [0], [1], [0, 0, 1, 1], [], []>} : vector<1x32xbf16>, vector<32x64xbf16>, vector<1x64xf32> -> vector<1x64xf32>
    %929 = arith.addf %928, %13 : vector<1x64xf32>
    %cst_201 = arith.constant dense<0xFF800000> : vector<1xf32>
    %930 = vector.multi_reduction <maximumf>, %929, %cst_201 [1] : vector<1x64xf32> to vector<1xf32>
    %931 = vector.shape_cast %930 : vector<1xf32> to vector<1x1xf32>
    %932 = vector.broadcast %931 : vector<1x1xf32> to vector<1x64xf32>
    %933 = arith.cmpf oeq, %929, %932 : vector<1x64xf32>
    %c64_i32_202 = arith.constant 64 : i32
    %934 = vector.broadcast %c64_i32_202 : i32 to vector<1x64xi32>
    %935 = arith.select %933, %14, %934 : vector<1x64xi1>, vector<1x64xi32>
    %cst_203 = arith.constant dense<2147483647> : vector<1xi32>
    %936 = vector.multi_reduction <minsi>, %935, %cst_203 [1] : vector<1x64xi32> to vector<1xi32>
    %937 = vector.shape_cast %936 : vector<1xi32> to vector<1x1xi32>
    %938 = vector.broadcast %931 : vector<1x1xf32> to vector<1x64xf32>
    %939 = arith.subf %929, %938 : vector<1x64xf32>
    %940 = math.exp %939 : vector<1x64xf32>
    %cst_204 = arith.constant dense<0.000000e+00> : vector<1xf32>
    %941 = vector.multi_reduction <add>, %940, %cst_204 [1] : vector<1x64xf32> to vector<1xf32>
    %942 = vector.shape_cast %941 : vector<1xf32> to vector<1x1xf32>
    %cst_205 = arith.constant 1.000000e+00 : f32
    %943 = vector.broadcast %cst_205 : f32 to vector<1x1xf32>
    %944 = arith.divf %943, %942 : vector<1x1xf32>
    %c0_206 = arith.constant 0 : index
    %c6 = arith.constant 6 : index
    %945 = vector.load %arg3[%c0_206, %c6] : memref<1x128xi32, #tpu.memory_space<vmem>>, vector<1x1xi32>
    tpu.vector_store %arg3[%c0_206, %c6], %937 {strides = array<i32>} : memref<1x128xi32, #tpu.memory_space<vmem>>, vector<1x1xi32>,
    %c0_207 = arith.constant 0 : index
    %c6_208 = arith.constant 6 : index
    %946 = vector.load %arg4[%c0_207, %c6_208] : memref<1x128xf32, #tpu.memory_space<vmem>>, vector<1x1xf32>
    tpu.vector_store %arg4[%c0_207, %c6_208], %944 {strides = array<i32>} : memref<1x128xf32, #tpu.memory_space<vmem>>, vector<1x1xf32>,
    %947 = arith.extui %933 : vector<1x64xi1> to vector<1x64xi32>
    %948 = arith.sitofp %947 : vector<1x64xi32> to vector<1x64xf32>
    %949 = arith.truncf %948 : vector<1x64xf32> to vector<1x64xbf16>
    %cst_209 = arith.constant dense<0.000000e+00> : vector<1x128xf32>
    %950 = tpu.matmul %949, %6, %cst_209 {dimension_numbers = #tpu.dot_dimension_numbers<[1], [0], [0], [1], [0, 0, 1, 1], [], []>} : vector<1x64xbf16>, vector<64x128xbf16>, vector<1x128xf32> -> vector<1x128xf32>
    %951 = arith.truncf %908 : vector<1x32xf32> to vector<1x32xbf16>
    %cst_210 = arith.constant dense<0.000000e+00> : vector<1x128xf32>
    %952 = tpu.matmul %951, %7, %cst_210 {dimension_numbers = #tpu.dot_dimension_numbers<[1], [0], [0], [1], [0, 0, 1, 1], [], []>} : vector<1x32xbf16>, vector<32x128xbf16>, vector<1x128xf32> -> vector<1x128xf32>
    %953 = arith.addf %950, %952 : vector<1x128xf32>
    %954 = arith.addf %953, %11 : vector<1x128xf32>
    %955 = vector.extract_strided_slice %954 {offsets = [0, 0], sizes = [1, 32], strides = [1, 1]} : vector<1x128xf32> to vector<1x32xf32>
    %956 = arith.negf %955 : vector<1x32xf32>
    %957 = math.exp %956 : vector<1x32xf32>
    %cst_211 = arith.constant 1.000000e+00 : f32
    %958 = vector.broadcast %cst_211 : f32 to vector<1x32xf32>
    %959 = arith.addf %958, %957 : vector<1x32xf32>
    %960 = arith.divf %958, %959 : vector<1x32xf32>
    %961 = vector.extract_strided_slice %954 {offsets = [0, 32], sizes = [1, 32], strides = [1, 1]} : vector<1x128xf32> to vector<1x32xf32>
    %962 = arith.negf %961 : vector<1x32xf32>
    %963 = math.exp %962 : vector<1x32xf32>
    %cst_212 = arith.constant 1.000000e+00 : f32
    %964 = vector.broadcast %cst_212 : f32 to vector<1x32xf32>
    %965 = arith.addf %964, %963 : vector<1x32xf32>
    %966 = arith.divf %964, %965 : vector<1x32xf32>
    %967 = vector.extract_strided_slice %954 {offsets = [0, 64], sizes = [1, 32], strides = [1, 1]} : vector<1x128xf32> to vector<1x32xf32>
    %968 = vector.extract_strided_slice %954 {offsets = [0, 96], sizes = [1, 32], strides = [1, 1]} : vector<1x128xf32> to vector<1x32xf32>
    %969 = arith.mulf %960, %968 : vector<1x32xf32>
    %970 = arith.addf %967, %969 : vector<1x32xf32>
    %971 = math.tanh %970 : vector<1x32xf32>
    %cst_213 = arith.constant 1.000000e+00 : f32
    %972 = vector.broadcast %cst_213 : f32 to vector<1x32xf32>
    %973 = arith.subf %972, %966 : vector<1x32xf32>
    %974 = arith.mulf %973, %971 : vector<1x32xf32>
    %975 = arith.mulf %966, %908 : vector<1x32xf32>
    %976 = arith.addf %974, %975 : vector<1x32xf32>
    %977 = arith.truncf %976 : vector<1x32xf32> to vector<1x32xbf16>
    %cst_214 = arith.constant dense<0.000000e+00> : vector<1x8xf32>
    %978 = tpu.matmul %977, %468, %cst_214 {dimension_numbers = #tpu.dot_dimension_numbers<[1], [0], [0], [1], [0, 0, 1, 1], [], []>} : vector<1x32xbf16>, vector<32x8xbf16>, vector<1x8xf32> -> vector<1x8xf32>
    %cst_215 = arith.constant dense<0xFF800000> : vector<1xf32>
    %979 = vector.multi_reduction <maximumf>, %978, %cst_215 [1] : vector<1x8xf32> to vector<1xf32>
    %980 = vector.shape_cast %979 : vector<1xf32> to vector<1x1xf32>
    %981 = vector.broadcast %980 : vector<1x1xf32> to vector<1x8xf32>
    %982 = arith.subf %978, %981 : vector<1x8xf32>
    %983 = math.exp %982 : vector<1x8xf32>
    %cst_216 = arith.constant dense<0.000000e+00> : vector<1xf32>
    %984 = vector.multi_reduction <add>, %983, %cst_216 [1] : vector<1x8xf32> to vector<1xf32>
    %985 = vector.shape_cast %984 : vector<1xf32> to vector<1x1xf32>
    %986 = vector.broadcast %985 : vector<1x1xf32> to vector<1x8xf32>
    %987 = arith.divf %983, %986 : vector<1x8xf32>
    %988 = arith.truncf %987 : vector<1x8xf32> to vector<1x8xbf16>
    %cst_217 = arith.constant dense<0.000000e+00> : vector<1x32xf32>
    %989 = tpu.matmul %988, %466, %cst_217 {dimension_numbers = #tpu.dot_dimension_numbers<[1], [0], [0], [1], [0, 0, 1, 1], [], []>} : vector<1x8xbf16>, vector<8x32xbf16>, vector<1x32xf32> -> vector<1x32xf32>
    %990 = tpu.concatenate %976, %989 in 1 : vector<1x32xf32>, vector<1x32xf32> -> vector<1x64xf32>
    %991 = arith.truncf %990 : vector<1x64xf32> to vector<1x64xbf16>
    %cst_218 = arith.constant dense<0.000000e+00> : vector<1x32xf32>
    %992 = tpu.matmul %991, %8, %cst_218 {dimension_numbers = #tpu.dot_dimension_numbers<[1], [0], [0], [1], [0, 0, 1, 1], [], []>} : vector<1x64xbf16>, vector<64x32xbf16>, vector<1x32xf32> -> vector<1x32xf32>
    %993 = arith.addf %992, %12 : vector<1x32xf32>
    %994 = math.tanh %993 : vector<1x32xf32>
    %995 = arith.truncf %994 : vector<1x32xf32> to vector<1x32xbf16>
    %cst_219 = arith.constant dense<0.000000e+00> : vector<1x64xf32>
    %996 = tpu.matmul %995, %9, %cst_219 {dimension_numbers = #tpu.dot_dimension_numbers<[1], [0], [0], [1], [0, 0, 1, 1], [], []>} : vector<1x32xbf16>, vector<32x64xbf16>, vector<1x64xf32> -> vector<1x64xf32>
    %997 = arith.addf %996, %13 : vector<1x64xf32>
    %cst_220 = arith.constant dense<0xFF800000> : vector<1xf32>
    %998 = vector.multi_reduction <maximumf>, %997, %cst_220 [1] : vector<1x64xf32> to vector<1xf32>
    %999 = vector.shape_cast %998 : vector<1xf32> to vector<1x1xf32>
    %1000 = vector.broadcast %999 : vector<1x1xf32> to vector<1x64xf32>
    %1001 = arith.cmpf oeq, %997, %1000 : vector<1x64xf32>
    %c64_i32_221 = arith.constant 64 : i32
    %1002 = vector.broadcast %c64_i32_221 : i32 to vector<1x64xi32>
    %1003 = arith.select %1001, %14, %1002 : vector<1x64xi1>, vector<1x64xi32>
    %cst_222 = arith.constant dense<2147483647> : vector<1xi32>
    %1004 = vector.multi_reduction <minsi>, %1003, %cst_222 [1] : vector<1x64xi32> to vector<1xi32>
    %1005 = vector.shape_cast %1004 : vector<1xi32> to vector<1x1xi32>
    %1006 = vector.broadcast %999 : vector<1x1xf32> to vector<1x64xf32>
    %1007 = arith.subf %997, %1006 : vector<1x64xf32>
    %1008 = math.exp %1007 : vector<1x64xf32>
    %cst_223 = arith.constant dense<0.000000e+00> : vector<1xf32>
    %1009 = vector.multi_reduction <add>, %1008, %cst_223 [1] : vector<1x64xf32> to vector<1xf32>
    %1010 = vector.shape_cast %1009 : vector<1xf32> to vector<1x1xf32>
    %cst_224 = arith.constant 1.000000e+00 : f32
    %1011 = vector.broadcast %cst_224 : f32 to vector<1x1xf32>
    %1012 = arith.divf %1011, %1010 : vector<1x1xf32>
    %c0_225 = arith.constant 0 : index
    %c7 = arith.constant 7 : index
    %1013 = vector.load %arg3[%c0_225, %c7] : memref<1x128xi32, #tpu.memory_space<vmem>>, vector<1x1xi32>
    tpu.vector_store %arg3[%c0_225, %c7], %1005 {strides = array<i32>} : memref<1x128xi32, #tpu.memory_space<vmem>>, vector<1x1xi32>,
    %c0_226 = arith.constant 0 : index
    %c7_227 = arith.constant 7 : index
    %1014 = vector.load %arg4[%c0_226, %c7_227] : memref<1x128xf32, #tpu.memory_space<vmem>>, vector<1x1xf32>
    tpu.vector_store %arg4[%c0_226, %c7_227], %1012 {strides = array<i32>} : memref<1x128xf32, #tpu.memory_space<vmem>>, vector<1x1xf32>,
    %1015 = arith.extui %1001 : vector<1x64xi1> to vector<1x64xi32>
    %1016 = arith.sitofp %1015 : vector<1x64xi32> to vector<1x64xf32>
    %1017 = arith.truncf %1016 : vector<1x64xf32> to vector<1x64xbf16>
    %cst_228 = arith.constant dense<0.000000e+00> : vector<1x128xf32>
    %1018 = tpu.matmul %1017, %6, %cst_228 {dimension_numbers = #tpu.dot_dimension_numbers<[1], [0], [0], [1], [0, 0, 1, 1], [], []>} : vector<1x64xbf16>, vector<64x128xbf16>, vector<1x128xf32> -> vector<1x128xf32>
    %1019 = arith.truncf %976 : vector<1x32xf32> to vector<1x32xbf16>
    %cst_229 = arith.constant dense<0.000000e+00> : vector<1x128xf32>
    %1020 = tpu.matmul %1019, %7, %cst_229 {dimension_numbers = #tpu.dot_dimension_numbers<[1], [0], [0], [1], [0, 0, 1, 1], [], []>} : vector<1x32xbf16>, vector<32x128xbf16>, vector<1x128xf32> -> vector<1x128xf32>
    %1021 = arith.addf %1018, %1020 : vector<1x128xf32>
    %1022 = arith.addf %1021, %11 : vector<1x128xf32>
    %1023 = vector.extract_strided_slice %1022 {offsets = [0, 0], sizes = [1, 32], strides = [1, 1]} : vector<1x128xf32> to vector<1x32xf32>
    %1024 = arith.negf %1023 : vector<1x32xf32>
    %1025 = math.exp %1024 : vector<1x32xf32>
    %cst_230 = arith.constant 1.000000e+00 : f32
    %1026 = vector.broadcast %cst_230 : f32 to vector<1x32xf32>
    %1027 = arith.addf %1026, %1025 : vector<1x32xf32>
    %1028 = arith.divf %1026, %1027 : vector<1x32xf32>
    %1029 = vector.extract_strided_slice %1022 {offsets = [0, 32], sizes = [1, 32], strides = [1, 1]} : vector<1x128xf32> to vector<1x32xf32>
    %1030 = arith.negf %1029 : vector<1x32xf32>
    %1031 = math.exp %1030 : vector<1x32xf32>
    %cst_231 = arith.constant 1.000000e+00 : f32
    %1032 = vector.broadcast %cst_231 : f32 to vector<1x32xf32>
    %1033 = arith.addf %1032, %1031 : vector<1x32xf32>
    %1034 = arith.divf %1032, %1033 : vector<1x32xf32>
    %1035 = vector.extract_strided_slice %1022 {offsets = [0, 64], sizes = [1, 32], strides = [1, 1]} : vector<1x128xf32> to vector<1x32xf32>
    %1036 = vector.extract_strided_slice %1022 {offsets = [0, 96], sizes = [1, 32], strides = [1, 1]} : vector<1x128xf32> to vector<1x32xf32>
    %1037 = arith.mulf %1028, %1036 : vector<1x32xf32>
    %1038 = arith.addf %1035, %1037 : vector<1x32xf32>
    %1039 = math.tanh %1038 : vector<1x32xf32>
    %cst_232 = arith.constant 1.000000e+00 : f32
    %1040 = vector.broadcast %cst_232 : f32 to vector<1x32xf32>
    %1041 = arith.subf %1040, %1034 : vector<1x32xf32>
    %1042 = arith.mulf %1041, %1039 : vector<1x32xf32>
    %1043 = arith.mulf %1034, %976 : vector<1x32xf32>
    %1044 = arith.addf %1042, %1043 : vector<1x32xf32>
    %1045 = arith.truncf %1044 : vector<1x32xf32> to vector<1x32xbf16>
    %cst_233 = arith.constant dense<0.000000e+00> : vector<1x8xf32>
    %1046 = tpu.matmul %1045, %468, %cst_233 {dimension_numbers = #tpu.dot_dimension_numbers<[1], [0], [0], [1], [0, 0, 1, 1], [], []>} : vector<1x32xbf16>, vector<32x8xbf16>, vector<1x8xf32> -> vector<1x8xf32>
    %cst_234 = arith.constant dense<0xFF800000> : vector<1xf32>
    %1047 = vector.multi_reduction <maximumf>, %1046, %cst_234 [1] : vector<1x8xf32> to vector<1xf32>
    %1048 = vector.shape_cast %1047 : vector<1xf32> to vector<1x1xf32>
    %1049 = vector.broadcast %1048 : vector<1x1xf32> to vector<1x8xf32>
    %1050 = arith.subf %1046, %1049 : vector<1x8xf32>
    %1051 = math.exp %1050 : vector<1x8xf32>
    %cst_235 = arith.constant dense<0.000000e+00> : vector<1xf32>
    %1052 = vector.multi_reduction <add>, %1051, %cst_235 [1] : vector<1x8xf32> to vector<1xf32>
    %1053 = vector.shape_cast %1052 : vector<1xf32> to vector<1x1xf32>
    %1054 = vector.broadcast %1053 : vector<1x1xf32> to vector<1x8xf32>
    %1055 = arith.divf %1051, %1054 : vector<1x8xf32>
    %1056 = arith.truncf %1055 : vector<1x8xf32> to vector<1x8xbf16>
    %cst_236 = arith.constant dense<0.000000e+00> : vector<1x32xf32>
    %1057 = tpu.matmul %1056, %466, %cst_236 {dimension_numbers = #tpu.dot_dimension_numbers<[1], [0], [0], [1], [0, 0, 1, 1], [], []>} : vector<1x8xbf16>, vector<8x32xbf16>, vector<1x32xf32> -> vector<1x32xf32>
    %1058 = tpu.concatenate %1044, %1057 in 1 : vector<1x32xf32>, vector<1x32xf32> -> vector<1x64xf32>
    %1059 = arith.truncf %1058 : vector<1x64xf32> to vector<1x64xbf16>
    %cst_237 = arith.constant dense<0.000000e+00> : vector<1x32xf32>
    %1060 = tpu.matmul %1059, %8, %cst_237 {dimension_numbers = #tpu.dot_dimension_numbers<[1], [0], [0], [1], [0, 0, 1, 1], [], []>} : vector<1x64xbf16>, vector<64x32xbf16>, vector<1x32xf32> -> vector<1x32xf32>
    %1061 = arith.addf %1060, %12 : vector<1x32xf32>
    %1062 = math.tanh %1061 : vector<1x32xf32>
    %1063 = arith.truncf %1062 : vector<1x32xf32> to vector<1x32xbf16>
    %cst_238 = arith.constant dense<0.000000e+00> : vector<1x64xf32>
    %1064 = tpu.matmul %1063, %9, %cst_238 {dimension_numbers = #tpu.dot_dimension_numbers<[1], [0], [0], [1], [0, 0, 1, 1], [], []>} : vector<1x32xbf16>, vector<32x64xbf16>, vector<1x64xf32> -> vector<1x64xf32>
    %1065 = arith.addf %1064, %13 : vector<1x64xf32>
    %cst_239 = arith.constant dense<0xFF800000> : vector<1xf32>
    %1066 = vector.multi_reduction <maximumf>, %1065, %cst_239 [1] : vector<1x64xf32> to vector<1xf32>
    %1067 = vector.shape_cast %1066 : vector<1xf32> to vector<1x1xf32>
    %1068 = vector.broadcast %1067 : vector<1x1xf32> to vector<1x64xf32>
    %1069 = arith.cmpf oeq, %1065, %1068 : vector<1x64xf32>
    %c64_i32_240 = arith.constant 64 : i32
    %1070 = vector.broadcast %c64_i32_240 : i32 to vector<1x64xi32>
    %1071 = arith.select %1069, %14, %1070 : vector<1x64xi1>, vector<1x64xi32>
    %cst_241 = arith.constant dense<2147483647> : vector<1xi32>
    %1072 = vector.multi_reduction <minsi>, %1071, %cst_241 [1] : vector<1x64xi32> to vector<1xi32>
    %1073 = vector.shape_cast %1072 : vector<1xi32> to vector<1x1xi32>
    %1074 = vector.broadcast %1067 : vector<1x1xf32> to vector<1x64xf32>
    %1075 = arith.subf %1065, %1074 : vector<1x64xf32>
    %1076 = math.exp %1075 : vector<1x64xf32>
    %cst_242 = arith.constant dense<0.000000e+00> : vector<1xf32>
    %1077 = vector.multi_reduction <add>, %1076, %cst_242 [1] : vector<1x64xf32> to vector<1xf32>
    %1078 = vector.shape_cast %1077 : vector<1xf32> to vector<1x1xf32>
    %cst_243 = arith.constant 1.000000e+00 : f32
    %1079 = vector.broadcast %cst_243 : f32 to vector<1x1xf32>
    %1080 = arith.divf %1079, %1078 : vector<1x1xf32>
    %c0_244 = arith.constant 0 : index
    %c8_245 = arith.constant 8 : index
    %1081 = vector.load %arg3[%c0_244, %c8_245] : memref<1x128xi32, #tpu.memory_space<vmem>>, vector<1x1xi32>
    tpu.vector_store %arg3[%c0_244, %c8_245], %1073 {strides = array<i32>} : memref<1x128xi32, #tpu.memory_space<vmem>>, vector<1x1xi32>,
    %c0_246 = arith.constant 0 : index
    %c8_247 = arith.constant 8 : index
    %1082 = vector.load %arg4[%c0_246, %c8_247] : memref<1x128xf32, #tpu.memory_space<vmem>>, vector<1x1xf32>
    tpu.vector_store %arg4[%c0_246, %c8_247], %1080 {strides = array<i32>} : memref<1x128xf32, #tpu.memory_space<vmem>>, vector<1x1xf32>,
    %1083 = arith.extui %1069 : vector<1x64xi1> to vector<1x64xi32>
    %1084 = arith.sitofp %1083 : vector<1x64xi32> to vector<1x64xf32>
    %1085 = arith.truncf %1084 : vector<1x64xf32> to vector<1x64xbf16>
    %cst_248 = arith.constant dense<0.000000e+00> : vector<1x128xf32>
    %1086 = tpu.matmul %1085, %6, %cst_248 {dimension_numbers = #tpu.dot_dimension_numbers<[1], [0], [0], [1], [0, 0, 1, 1], [], []>} : vector<1x64xbf16>, vector<64x128xbf16>, vector<1x128xf32> -> vector<1x128xf32>
    %1087 = arith.truncf %1044 : vector<1x32xf32> to vector<1x32xbf16>
    %cst_249 = arith.constant dense<0.000000e+00> : vector<1x128xf32>
    %1088 = tpu.matmul %1087, %7, %cst_249 {dimension_numbers = #tpu.dot_dimension_numbers<[1], [0], [0], [1], [0, 0, 1, 1], [], []>} : vector<1x32xbf16>, vector<32x128xbf16>, vector<1x128xf32> -> vector<1x128xf32>
    %1089 = arith.addf %1086, %1088 : vector<1x128xf32>
    %1090 = arith.addf %1089, %11 : vector<1x128xf32>
    %1091 = vector.extract_strided_slice %1090 {offsets = [0, 0], sizes = [1, 32], strides = [1, 1]} : vector<1x128xf32> to vector<1x32xf32>
    %1092 = arith.negf %1091 : vector<1x32xf32>
    %1093 = math.exp %1092 : vector<1x32xf32>
    %cst_250 = arith.constant 1.000000e+00 : f32
    %1094 = vector.broadcast %cst_250 : f32 to vector<1x32xf32>
    %1095 = arith.addf %1094, %1093 : vector<1x32xf32>
    %1096 = arith.divf %1094, %1095 : vector<1x32xf32>
    %1097 = vector.extract_strided_slice %1090 {offsets = [0, 32], sizes = [1, 32], strides = [1, 1]} : vector<1x128xf32> to vector<1x32xf32>
    %1098 = arith.negf %1097 : vector<1x32xf32>
    %1099 = math.exp %1098 : vector<1x32xf32>
    %cst_251 = arith.constant 1.000000e+00 : f32
    %1100 = vector.broadcast %cst_251 : f32 to vector<1x32xf32>
    %1101 = arith.addf %1100, %1099 : vector<1x32xf32>
    %1102 = arith.divf %1100, %1101 : vector<1x32xf32>
    %1103 = vector.extract_strided_slice %1090 {offsets = [0, 64], sizes = [1, 32], strides = [1, 1]} : vector<1x128xf32> to vector<1x32xf32>
    %1104 = vector.extract_strided_slice %1090 {offsets = [0, 96], sizes = [1, 32], strides = [1, 1]} : vector<1x128xf32> to vector<1x32xf32>
    %1105 = arith.mulf %1096, %1104 : vector<1x32xf32>
    %1106 = arith.addf %1103, %1105 : vector<1x32xf32>
    %1107 = math.tanh %1106 : vector<1x32xf32>
    %cst_252 = arith.constant 1.000000e+00 : f32
    %1108 = vector.broadcast %cst_252 : f32 to vector<1x32xf32>
    %1109 = arith.subf %1108, %1102 : vector<1x32xf32>
    %1110 = arith.mulf %1109, %1107 : vector<1x32xf32>
    %1111 = arith.mulf %1102, %1044 : vector<1x32xf32>
    %1112 = arith.addf %1110, %1111 : vector<1x32xf32>
    %1113 = arith.truncf %1112 : vector<1x32xf32> to vector<1x32xbf16>
    %cst_253 = arith.constant dense<0.000000e+00> : vector<1x8xf32>
    %1114 = tpu.matmul %1113, %468, %cst_253 {dimension_numbers = #tpu.dot_dimension_numbers<[1], [0], [0], [1], [0, 0, 1, 1], [], []>} : vector<1x32xbf16>, vector<32x8xbf16>, vector<1x8xf32> -> vector<1x8xf32>
    %cst_254 = arith.constant dense<0xFF800000> : vector<1xf32>
    %1115 = vector.multi_reduction <maximumf>, %1114, %cst_254 [1] : vector<1x8xf32> to vector<1xf32>
    %1116 = vector.shape_cast %1115 : vector<1xf32> to vector<1x1xf32>
    %1117 = vector.broadcast %1116 : vector<1x1xf32> to vector<1x8xf32>
    %1118 = arith.subf %1114, %1117 : vector<1x8xf32>
    %1119 = math.exp %1118 : vector<1x8xf32>
    %cst_255 = arith.constant dense<0.000000e+00> : vector<1xf32>
    %1120 = vector.multi_reduction <add>, %1119, %cst_255 [1] : vector<1x8xf32> to vector<1xf32>
    %1121 = vector.shape_cast %1120 : vector<1xf32> to vector<1x1xf32>
    %1122 = vector.broadcast %1121 : vector<1x1xf32> to vector<1x8xf32>
    %1123 = arith.divf %1119, %1122 : vector<1x8xf32>
    %1124 = arith.truncf %1123 : vector<1x8xf32> to vector<1x8xbf16>
    %cst_256 = arith.constant dense<0.000000e+00> : vector<1x32xf32>
    %1125 = tpu.matmul %1124, %466, %cst_256 {dimension_numbers = #tpu.dot_dimension_numbers<[1], [0], [0], [1], [0, 0, 1, 1], [], []>} : vector<1x8xbf16>, vector<8x32xbf16>, vector<1x32xf32> -> vector<1x32xf32>
    %1126 = tpu.concatenate %1112, %1125 in 1 : vector<1x32xf32>, vector<1x32xf32> -> vector<1x64xf32>
    %1127 = arith.truncf %1126 : vector<1x64xf32> to vector<1x64xbf16>
    %cst_257 = arith.constant dense<0.000000e+00> : vector<1x32xf32>
    %1128 = tpu.matmul %1127, %8, %cst_257 {dimension_numbers = #tpu.dot_dimension_numbers<[1], [0], [0], [1], [0, 0, 1, 1], [], []>} : vector<1x64xbf16>, vector<64x32xbf16>, vector<1x32xf32> -> vector<1x32xf32>
    %1129 = arith.addf %1128, %12 : vector<1x32xf32>
    %1130 = math.tanh %1129 : vector<1x32xf32>
    %1131 = arith.truncf %1130 : vector<1x32xf32> to vector<1x32xbf16>
    %cst_258 = arith.constant dense<0.000000e+00> : vector<1x64xf32>
    %1132 = tpu.matmul %1131, %9, %cst_258 {dimension_numbers = #tpu.dot_dimension_numbers<[1], [0], [0], [1], [0, 0, 1, 1], [], []>} : vector<1x32xbf16>, vector<32x64xbf16>, vector<1x64xf32> -> vector<1x64xf32>
    %1133 = arith.addf %1132, %13 : vector<1x64xf32>
    %cst_259 = arith.constant dense<0xFF800000> : vector<1xf32>
    %1134 = vector.multi_reduction <maximumf>, %1133, %cst_259 [1] : vector<1x64xf32> to vector<1xf32>
    %1135 = vector.shape_cast %1134 : vector<1xf32> to vector<1x1xf32>
    %1136 = vector.broadcast %1135 : vector<1x1xf32> to vector<1x64xf32>
    %1137 = arith.cmpf oeq, %1133, %1136 : vector<1x64xf32>
    %c64_i32_260 = arith.constant 64 : i32
    %1138 = vector.broadcast %c64_i32_260 : i32 to vector<1x64xi32>
    %1139 = arith.select %1137, %14, %1138 : vector<1x64xi1>, vector<1x64xi32>
    %cst_261 = arith.constant dense<2147483647> : vector<1xi32>
    %1140 = vector.multi_reduction <minsi>, %1139, %cst_261 [1] : vector<1x64xi32> to vector<1xi32>
    %1141 = vector.shape_cast %1140 : vector<1xi32> to vector<1x1xi32>
    %1142 = vector.broadcast %1135 : vector<1x1xf32> to vector<1x64xf32>
    %1143 = arith.subf %1133, %1142 : vector<1x64xf32>
    %1144 = math.exp %1143 : vector<1x64xf32>
    %cst_262 = arith.constant dense<0.000000e+00> : vector<1xf32>
    %1145 = vector.multi_reduction <add>, %1144, %cst_262 [1] : vector<1x64xf32> to vector<1xf32>
    %1146 = vector.shape_cast %1145 : vector<1xf32> to vector<1x1xf32>
    %cst_263 = arith.constant 1.000000e+00 : f32
    %1147 = vector.broadcast %cst_263 : f32 to vector<1x1xf32>
    %1148 = arith.divf %1147, %1146 : vector<1x1xf32>
    %c0_264 = arith.constant 0 : index
    %c9 = arith.constant 9 : index
    %1149 = vector.load %arg3[%c0_264, %c9] : memref<1x128xi32, #tpu.memory_space<vmem>>, vector<1x1xi32>
    tpu.vector_store %arg3[%c0_264, %c9], %1141 {strides = array<i32>} : memref<1x128xi32, #tpu.memory_space<vmem>>, vector<1x1xi32>,
    %c0_265 = arith.constant 0 : index
    %c9_266 = arith.constant 9 : index
    %1150 = vector.load %arg4[%c0_265, %c9_266] : memref<1x128xf32, #tpu.memory_space<vmem>>, vector<1x1xf32>
    tpu.vector_store %arg4[%c0_265, %c9_266], %1148 {strides = array<i32>} : memref<1x128xf32, #tpu.memory_space<vmem>>, vector<1x1xf32>,
    return
  }
}

</mosaic_0001>

<llo_original>
// kernel: tpu_custom_call.1
$region0: #{tpu_custom_call.1}
  #allocation0 [shape = 'u32[]', space=smem, size = 0x4, offset = 0x4, fixed_abs, tag = 'smem constant byte address 0x4 - core index']
  #allocation1 [shape = 'u32[144,128]{1,0:T(1,128)}', space=vmem, size = 0x12000, scoped, tag = 'internal scratch']
  %s0 = inlined_call_operand.vmem [shape: s32[8,1], index: 0, kind: input, shape index: {}]
  %s1 = inlined_call_operand.hbm [shape: bf16[320,256], index: 1, kind: input, shape index: {}]
  %s2 = inlined_call_operand.hbm [shape: f32[32,256], index: 2, kind: input, shape index: {}]
  %s3 = inlined_call_operand.hbm [shape: s32[1,128], index: 3, kind: output, shape index: {0}]
  %s4 = inlined_call_operand.hbm [shape: f32[1,128], index: 4, kind: output, shape index: {1}]
  %5 = xla_tuple %s3, %s4
  %s6 = sld [smem:[#allocation0]]
  $region38: #{tpu_custom_call.1} parent=0
    _
  %s8 = ssub.s32 1, %s6
  %s9 = scalar_select 0, %s8, %s6
  $region1: #{tpu_custom_call.1} parent=0
    #allocation2 [shape = 'u8[163840]{0}', space=vmem, size = 0x28000, scoped, tag = 'input window, operand 1, single buffered']
    #allocation3 [shape = 's32[1]{0}', space=sflag, size = 0x4, scoped, tag = 'scoped memory for tpu_custom_call.1']
    #allocation4 [shape = 's32[1]{0}', space=sflag, size = 0x4, scoped, tag = 'scoped memory for tpu_custom_call.1']
    #allocation5 [shape = 'u8[32768]{0}', space=vmem, size = 0x8000, scoped, tag = 'input window, operand 2, single buffered']
    #allocation6 [shape = 's32[1]{0}', space=sflag, size = 0x4, scoped, tag = 'scoped memory for tpu_custom_call.1']
    #allocation7 [shape = 'u8[512]{0}', space=vmem, size = 0x400, scoped, tag = 'output window, operand 0, single buffered']
    #allocation8 [shape = 'u8[512]{0}', space=vmem, size = 0x400, scoped, tag = 'output window, operand 1, single buffered']
    #allocation9 [shape = 's32[1]{0}', space=sflag, size = 0x4, scoped, tag = 'scoped memory for tpu_custom_call.1']
    %10 = vsyncpa [#allocation3], 0
    %11 = vsyncpa [#allocation6], 0
    %12 = vsyncpa [#allocation4], 0
    %13 = vsyncpa [#allocation9], 0
    // Predicated region
    $region2: #{tpu_custom_call.1} parent=1 // pred_check
      _
    $region3: #{tpu_custom_call.1} parent=1 // pred_check_branch
      %15 = sbr.rel (0) target = $region5
    $region4: #{tpu_custom_call.1} parent=1 // pred_region
      _
    $region5: #{tpu_custom_call.1} parent=1 // pred_fallthru
      _
    // Predicated region
    $region6: #{tpu_custom_call.1} parent=1 // pred_check
      _
    $region7: #{tpu_custom_call.1} parent=1 // pred_check_branch
      %17 = sbr.rel (0) target = $region9
    $region8: #{tpu_custom_call.1} parent=1 // pred_region
      %s19 = ssub.s32 5120, 5120
      %20 = vsyncadd [#allocation3], %s19
      %s21 = sshll.u32 [#allocation2], 4
      %s22 = int_to_ptr.vmem [resolvable:$true] %s21
      %27 = dma.hbm_to_vmem [thread:$0]  %s1, 5120, %s22, [#allocation3], 128, 128, 8
    $region9: #{tpu_custom_call.1} parent=1 // pred_fallthru
      _
    // Predicated region
    $region10: #{tpu_custom_call.1} parent=1 // pred_check
      _
    $region11: #{tpu_custom_call.1} parent=1 // pred_check_branch
      %29 = sbr.rel (0) target = $region13
    $region12: #{tpu_custom_call.1} parent=1 // pred_region
      %s31 = ssub.s32 1024, 1024
      %32 = vsyncadd [#allocation6], %s31
      %s33 = sshll.u32 [#allocation5], 4
      %s34 = int_to_ptr.vmem [resolvable:$true] %s33
      %39 = dma.hbm_to_vmem [thread:$0]  %s2, 1024, %s34, [#allocation6], 256, 256, 16
    $region13: #{tpu_custom_call.1} parent=1 // pred_fallthru
      _
    // Predicated region
    $region14: #{tpu_custom_call.1} parent=1 // pred_check
      _
    $region15: #{tpu_custom_call.1} parent=1 // pred_check_branch
      %41 = sbr.rel (0) target = $region17
    $region16: #{tpu_custom_call.1} parent=1 // pred_region
      %42 = dma.done [#allocation3], 5120
    $region17: #{tpu_custom_call.1} parent=1 // pred_fallthru
      _
    // Predicated region
    $region18: #{tpu_custom_call.1} parent=1 // pred_check
      _
    $region19: #{tpu_custom_call.1} parent=1 // pred_check_branch
      %44 = sbr.rel (0) target = $region21
    $region20: #{tpu_custom_call.1} parent=1 // pred_region
      %45 = dma.done [#allocation6], 1024
    $region21: #{tpu_custom_call.1} parent=1 // pred_fallthru
      _
    %47 = vst [vmem:[#allocation7] sm:$0x1] 0
    %48 = vst [vmem:[#allocation8] sm:$0x1] 0.0
    %v49 = vld [vmem:[#allocation2] sm:$0xff]
    %v50 = vld [vmem:[#allocation2 + $0x8] sm:$0xff]
    %v51 = vld [vmem:[#allocation2 + $0x10] sm:$0xff]
    %v52 = vld [vmem:[#allocation2 + $0x18] sm:$0xff]
    %v53 = vld [vmem:[#allocation2 + $0x20] sm:$0xff]
    %v54 = vld [vmem:[#allocation2 + $0x28] sm:$0xff]
    %v55 = vld [vmem:[#allocation2 + $0x30] sm:$0xff]
    %v56 = vld [vmem:[#allocation2 + $0x38] sm:$0xff]
    %v57 = vld [vmem:[#allocation2 + $0x40] sm:$0xff]
    %v58 = vld [vmem:[#allocation2 + $0x48] sm:$0xff]
    %v59 = vld [vmem:[#allocation2 + $0x50] sm:$0xff]
    %v60 = vld [vmem:[#allocation2 + $0x58] sm:$0xff]
    %v61 = vld [vmem:[#allocation2 + $0x60] sm:$0xff]
    %v62 = vld [vmem:[#allocation2 + $0x68] sm:$0xff]
    %v63 = vld [vmem:[#allocation2 + $0x70] sm:$0xff]
    %v64 = vld [vmem:[#allocation2 + $0x78] sm:$0xff]
    %v65 = vld [vmem:[#allocation2 + $0x80] sm:$0xf]
    %v66 = vld [vmem:[#allocation2 + $0x88] sm:$0xf]
    %v67 = vld [vmem:[#allocation2 + $0x90] sm:$0xf]
    %v68 = vld [vmem:[#allocation2 + $0x98] sm:$0xf]
    %v69 = vld [vmem:[#allocation2 + $0xa0] sm:$0xf]
    %v70 = vld [vmem:[#allocation2 + $0xa8] sm:$0xf]
    %v71 = vld [vmem:[#allocation2 + $0xb0] sm:$0xf]
    %v72 = vld [vmem:[#allocation2 + $0xb8] sm:$0xf]
    %v73 = vld [vmem:[#allocation2 + $0xc0] sm:$0xf]
    %v74 = vld [vmem:[#allocation2 + $0xc8] sm:$0xf]
    %v75 = vld [vmem:[#allocation2 + $0xd0] sm:$0xf]
    %v76 = vld [vmem:[#allocation2 + $0xd8] sm:$0xf]
    %v77 = vld [vmem:[#allocation2 + $0xe0] sm:$0xf]
    %v78 = vld [vmem:[#allocation2 + $0xe8] sm:$0xf]
    %v79 = vld [vmem:[#allocation2 + $0xf0] sm:$0xf]
    %v80 = vld [vmem:[#allocation2 + $0xf8] sm:$0xf]
    %v81 = vld [vmem:[#allocation2 + $0x100] sm:$0xf]
    %v82 = vld [vmem:[#allocation2 + $0x108] sm:$0xf]
    %v83 = vld [vmem:[#allocation2 + $0x110] sm:$0xf]
    %v84 = vld [vmem:[#allocation2 + $0x118] sm:$0xf]
    %v85 = vld [vmem:[#allocation2 + $0x120] sm:$0xf]
    %v86 = vld [vmem:[#allocation2 + $0x128] sm:$0xf]
    %v87 = vld [vmem:[#allocation2 + $0x130] sm:$0xf]
    %v88 = vld [vmem:[#allocation2 + $0x138] sm:$0xf]
    %v89 = vld [vmem:[#allocation5] ss:$8 sm:$0x3]
    %v90 = vld [vmem:[#allocation5 + $0x10] ss:$0 sm:$0xff]
    %v91 = vld [vmem:[#allocation5 + $0x20] ss:$0 sm:$0xff]
    %v92 = vld [vmem:[#allocation5 + $0x30] ss:$0 sm:$0xff]
    %v93 = vlaneseq
    %v94 = vand.u32 %v93, 127
    %v95 = vld [vmem:[%s0] sm:$0xff]
    %96 = vset.pattern.permute.xlu0 0
    %97 = vperm.xlu0 %96, %v95
    %v98 = vpop.permute.xlu0 %97
    %vm99 = vcmp.eq.s32.totalorder %v98, %v94
    %v100 = vsel %vm99, 1, 0
    %v101 = vcvt.s32.f32 %v100
    %v102 = vpack.c.bf16 %v101, %v101
    %v111 = vunpack.c.l.b16 %v57
    %v112 = vunpack.c.h.b16 %v57
    %v113 = vunpack.c.l.b16 %v58
    %v114 = vunpack.c.h.b16 %v58
    %v115 = vunpack.c.l.b16 %v59
    %v116 = vunpack.c.h.b16 %v59
    %v117 = vunpack.c.l.b16 %v60
    %v118 = vunpack.c.h.b16 %v60
    %v119 = vunpack.c.l.b16 %v61
    %v120 = vunpack.c.h.b16 %v61
    %v121 = vunpack.c.l.b16 %v62
    %v122 = vunpack.c.h.b16 %v62
    %v123 = vunpack.c.l.b16 %v63
    %v124 = vunpack.c.h.b16 %v63
    %v125 = vunpack.c.l.b16 %v64
    %v126 = vunpack.c.h.b16 %v64
    %v127 = vpack.c.b16 %v113, %v111
    %v128 = vpack.c.b16 %v114, %v112
    %v129 = vpack.c.b16 %v117, %v115
    %v130 = vpack.c.b16 %v118, %v116
    %v131 = vpack.c.b16 %v121, %v119
    %v132 = vpack.c.b16 %v122, %v120
    %v133 = vpack.c.b16 %v125, %v123
    %v134 = vpack.c.b16 %v126, %v124
    %vm143 = vcmask 523264
    %v145 = vsel %vm143, %v102, 0
    %147 = vmatprep.subr.bf16.mxu0 %v128
    %148 = vmatpush1.bf16.msra.mxu0 %v127
    %149 = vmatprep.subr.bf16.mxu0 %v130
    %150 = vmatpush1.bf16.msra.mxu0 %v129
    %151 = vmatprep.subr.bf16.mxu0 %v132
    %152 = vmatpush1.bf16.msra.mxu0 %v131
    %153 = vmatprep.subr.bf16.mxu0 %v134
    %154 = vmatpush1.bf16.msra.mxu0 %v133
    %155 = vmatprep.subr.bf16.mxu0 0
    %156 = vmatpush1.bf16.msra.mxu0 0
    %157 = vmatprep.subr.bf16.mxu0 0
    %158 = vmatpush1.bf16.msra.mxu0 0
    %159 = vmatprep.subr.bf16.mxu0 0
    %160 = vmatpush1.bf16.msra.mxu0 0
    %161 = vmatprep.subr.bf16.mxu0 0
    %162 = vmatpush1.bf16.msra.mxu0 0
    %163 = vmatprep.subr.bf16.mxu0 0
    %164 = vmatpush1.bf16.msra.mxu0 0
    %165 = vmatprep.subr.bf16.mxu0 0
    %166 = vmatpush1.bf16.msra.mxu0 0
    %167 = vmatprep.subr.bf16.mxu0 0
    %168 = vmatpush1.bf16.msra.mxu0 0
    %169 = vmatprep.subr.bf16.mxu0 0
    %170 = vmatpush1.bf16.msra.mxu0 0
    %171 = vmatprep.subr.bf16.mxu0 0
    %172 = vmatpush1.bf16.msra.mxu0 0
    %173 = vmatprep.subr.bf16.mxu0 0
    %174 = vmatpush1.bf16.msra.mxu0 0
    %175 = vmatprep.subr.bf16.mxu0 0
    %176 = vmatpush1.bf16.msra.mxu0 0
    %177 = vmatprep.subr.bf16.mxu0 0
    %178 = vmatpush1.bf16.msra.mxu0 0
    %179 = vmatprep.mubr.bf16.mxu0 0
    %180 = vmatmul.mubr.bf16.gmra.mrb[0].mxu0 %v145
    %v181 = vpop.f32.mrb[0].mxu0
    %v182 = vadd.f32 0.0, %v181
    %v183 = vpop.f32.mrb[0].mxu0
    %v184 = vadd.f32 0.0, %v183
    %v185 = vpop.f32.mrb[0].mxu0
    %v186 = vpop.f32.mrb[0].mxu0
    %187 = vdwg.mxu0
    %v188 = vpack.c.bf16 0.0, 0.0
    %v197 = vunpack.c.l.b16 %v49
    %v198 = vunpack.c.h.b16 %v49
    %v199 = vunpack.c.l.b16 %v50
    %v200 = vunpack.c.h.b16 %v50
    %v201 = vunpack.c.l.b16 %v51
    %v202 = vunpack.c.h.b16 %v51
    %v203 = vunpack.c.l.b16 %v52
    %v204 = vunpack.c.h.b16 %v52
    %v205 = vunpack.c.l.b16 %v53
    %v206 = vunpack.c.h.b16 %v53
    %v207 = vunpack.c.l.b16 %v54
    %v208 = vunpack.c.h.b16 %v54
    %v209 = vunpack.c.l.b16 %v55
    %v210 = vunpack.c.h.b16 %v55
    %v211 = vunpack.c.l.b16 %v56
    %v212 = vunpack.c.h.b16 %v56
    %v213 = vpack.c.b16 %v199, %v197
    %v214 = vpack.c.b16 %v200, %v198
    %v215 = vpack.c.b16 %v203, %v201
    %v216 = vpack.c.b16 %v204, %v202
    %v217 = vpack.c.b16 %v207, %v205
    %v218 = vpack.c.b16 %v208, %v206
    %v219 = vpack.c.b16 %v211, %v209
    %v220 = vpack.c.b16 %v212, %v210
    %v230 = vlaneseq
    %v231 = vshrl.u32 %v230, 7
    %v232 = vsub.s32 0, %v231
    %v233 = vrot.slane %v89, %v232
    %v234 = vlaneseq
    %v235 = vshrl.u32 %v234, 7
    %v236 = vsub.s32 1, %v235
    %v237 = vrot.slane %v89, %v236
    %v241 = vsel %vm143, %v188, 0
    %243 = vmatprep.subr.bf16.mxu0 %v214
    %244 = vmatpush1.bf16.msra.mxu0 %v213
    %245 = vmatprep.subr.bf16.mxu0 %v216
    %246 = vmatpush1.bf16.msra.mxu0 %v215
    %247 = vmatprep.subr.bf16.mxu0 %v218
    %248 = vmatpush1.bf16.msra.mxu0 %v217
    %249 = vmatprep.subr.bf16.mxu0 %v220
    %250 = vmatpush1.bf16.msra.mxu0 %v219
    %251 = vmatprep.subr.bf16.mxu0 0
    %252 = vmatpush1.bf16.msra.mxu0 0
    %253 = vmatprep.subr.bf16.mxu0 0
    %254 = vmatpush1.bf16.msra.mxu0 0
    %255 = vmatprep.subr.bf16.mxu0 0
    %256 = vmatpush1.bf16.msra.mxu0 0
    %257 = vmatprep.subr.bf16.mxu0 0
    %258 = vmatpush1.bf16.msra.mxu0 0
    %259 = vmatprep.subr.bf16.mxu0 0
    %260 = vmatpush1.bf16.msra.mxu0 0
    %261 = vmatprep.subr.bf16.mxu0 0
    %262 = vmatpush1.bf16.msra.mxu0 0
    %263 = vmatprep.subr.bf16.mxu0 0
    %264 = vmatpush1.bf16.msra.mxu0 0
    %265 = vmatprep.subr.bf16.mxu0 0
    %266 = vmatpush1.bf16.msra.mxu0 0
    %267 = vmatprep.subr.bf16.mxu0 0
    %268 = vmatpush1.bf16.msra.mxu0 0
    %269 = vmatprep.subr.bf16.mxu0 0
    %270 = vmatpush1.bf16.msra.mxu0 0
    %271 = vmatprep.subr.bf16.mxu0 0
    %272 = vmatpush1.bf16.msra.mxu0 0
    %273 = vmatprep.subr.bf16.mxu0 0
    %274 = vmatpush1.bf16.msra.mxu0 0
    %275 = vmatprep.mubr.bf16.mxu0 0
    %276 = vmatmul.mubr.bf16.gmra.mrb[0].mxu0 %v241
    %v277 = vpop.f32.mrb[0].mxu0
    %v278 = vadd.f32 %v233, %v277
    %v279 = vpop.f32.mrb[0].mxu0
    %v280 = vadd.f32 %v237, %v279
    %v281 = vpop.f32.mrb[0].mxu0
    %v282 = vpop.f32.mrb[0].mxu0
    %283 = vdwg.mxu0
    %v284 = vadd.f32 %v278, %v182
    %v286 = vrot.slane %v184, 7
    %v288 = vadd.f32 %v280, %v286
    %v289 = vxor.u32 %v284, 2147483648
    %v290 = vmul.f32 %v289, 1.442695
    %v291 = vpow.pop %v290
    %v292 = vadd.f32 %v291, 1.0
    %v293 = vrcp.pop %v292
    %v294 = vmul.f32 1.0, %v293
    %296 = vrot.lane.b32.xlu0 %v284, 32
    %v297 = vpop.permute.xlu0 %296
    %v299 = vmul.f32 %v294, %v297
    %301 = vrot.lane.b32.xlu0 %v299, 64
    %v302 = vpop.permute.xlu0 %301
    %v304 = vadd.f32 %v284, %v302
    %v305 = vtanh.pop %v304
    %v306 = vsub.f32 1.0, %v294
    %308 = vrot.lane.b32.xlu0 %v305, 96
    %v309 = vpop.permute.xlu0 %308
    %v311 = vmul.f32 %v306, %v309
    %v312 = vmul.f32 %v294, 0.0
    %v313 = vadd.f32 %v311, %v312
    %v314 = vxor.u32 %v288, 2147483648
    %v315 = vmul.f32 %v314, 1.442695
    %v316 = vpow.pop %v315
    %v317 = vadd.f32 %v316, 1.0
    %v318 = vrcp.pop %v317
    %v319 = vmul.f32 1.0, %v318
    %321 = vrot.lane.b32.xlu0 %v288, 32
    %v322 = vpop.permute.xlu0 %321
    %v324 = vmul.f32 %v319, %v322
    %326 = vrot.lane.b32.xlu0 %v324, 64
    %v327 = vpop.permute.xlu0 %326
    %v329 = vadd.f32 %v288, %v327
    %v330 = vtanh.pop %v329
    %v331 = vsub.f32 1.0, %v319
    %333 = vrot.lane.b32.xlu0 %v330, 96
    %v334 = vpop.permute.xlu0 %333
    %v336 = vmul.f32 %v331, %v334
    %v337 = vmul.f32 %v319, 0.0
    %v338 = vadd.f32 %v336, %v337
    %340 = vrot.lane.b32.xlu0 %v313, 96
    %v341 = vpop.permute.xlu0 %340
    %vm343 = vcmask 261120
    %v344 = vsel %vm343, %v341, %v338
    %v345 = vpack.c.bf16 %v344, %v344
    %v347 = vsel %vm143, %v345, 0
    %349 = vmatprep.subr.bf16.mxu0 %v214
    %350 = vmatpush1.bf16.msra.mxu0 %v213
    %351 = vmatprep.subr.bf16.mxu0 %v216
    %352 = vmatpush1.bf16.msra.mxu0 %v215
    %353 = vmatprep.subr.bf16.mxu0 %v218
    %354 = vmatpush1.bf16.msra.mxu0 %v217
    %355 = vmatprep.subr.bf16.mxu0 %v220
    %356 = vmatpush1.bf16.msra.mxu0 %v219
    %357 = vmatprep.subr.bf16.mxu0 0
    %358 = vmatpush1.bf16.msra.mxu0 0
    %359 = vmatprep.subr.bf16.mxu0 0
    %360 = vmatpush1.bf16.msra.mxu0 0
    %361 = vmatprep.subr.bf16.mxu0 0
    %362 = vmatpush1.bf16.msra.mxu0 0
    %363 = vmatprep.subr.bf16.mxu0 0
    %364 = vmatpush1.bf16.msra.mxu0 0
    %365 = vmatprep.subr.bf16.mxu0 0
    %366 = vmatpush1.bf16.msra.mxu0 0
    %367 = vmatprep.subr.bf16.mxu0 0
    %368 = vmatpush1.bf16.msra.mxu0 0
    %369 = vmatprep.subr.bf16.mxu0 0
    %370 = vmatpush1.bf16.msra.mxu0 0
    %371 = vmatprep.subr.bf16.mxu0 0
    %372 = vmatpush1.bf16.msra.mxu0 0
    %373 = vmatprep.subr.bf16.mxu0 0
    %374 = vmatpush1.bf16.msra.mxu0 0
    %375 = vmatprep.subr.bf16.mxu0 0
    %376 = vmatpush1.bf16.msra.mxu0 0
    %377 = vmatprep.subr.bf16.mxu0 0
    %378 = vmatpush1.bf16.msra.mxu0 0
    %379 = vmatprep.subr.bf16.mxu0 0
    %380 = vmatpush1.bf16.msra.mxu0 0
    %381 = vmatprep.mubr.bf16.mxu0 0
    %382 = vmatmul.mubr.bf16.gmra.mrb[0].mxu0 %v347
    %v383 = vpop.f32.mrb[0].mxu0
    %v384 = vadd.f32 %v233, %v383
    %v385 = vpop.f32.mrb[0].mxu0
    %v386 = vadd.f32 %v237, %v385
    %v387 = vpop.f32.mrb[0].mxu0
    %v388 = vpop.f32.mrb[0].mxu0
    %389 = vdwg.mxu0
    %v391 = vrot.slane %v182, 1
    %v393 = vadd.f32 %v384, %v391
    %v394 = vrot.slane %v184, 6
    %v396 = vadd.f32 %v386, %v394
    %v397 = vxor.u32 %v393, 2147483648
    %v398 = vmul.f32 %v397, 1.442695
    %v399 = vpow.pop %v398
    %v400 = vadd.f32 %v399, 1.0
    %v401 = vrcp.pop %v400
    %v402 = vmul.f32 1.0, %v401
    %404 = vrot.lane.b32.xlu0 %v393, 32
    %v405 = vpop.permute.xlu0 %404
    %v407 = vmul.f32 %v402, %v405
    %409 = vrot.lane.b32.xlu0 %v407, 64
    %v410 = vpop.permute.xlu0 %409
    %v412 = vadd.f32 %v393, %v410
    %v413 = vtanh.pop %v412
    %v414 = vsub.f32 1.0, %v402
    %416 = vrot.lane.b32.xlu0 %v413, 96
    %v417 = vpop.permute.xlu0 %416
    %v419 = vmul.f32 %v414, %v417
    %v420 = vmul.f32 %v402, %v313
    %v421 = vadd.f32 %v419, %v420
    %v422 = vxor.u32 %v396, 2147483648
    %v423 = vmul.f32 %v422, 1.442695
    %v424 = vpow.pop %v423
    %v425 = vadd.f32 %v424, 1.0
    %v426 = vrcp.pop %v425
    %v427 = vmul.f32 1.0, %v426
    %429 = vrot.lane.b32.xlu0 %v396, 32
    %v430 = vpop.permute.xlu0 %429
    %v432 = vmul.f32 %v427, %v430
    %434 = vrot.lane.b32.xlu0 %v432, 64
    %v435 = vpop.permute.xlu0 %434
    %v437 = vadd.f32 %v396, %v435
    %v438 = vtanh.pop %v437
    %v439 = vsub.f32 1.0, %v427
    %441 = vrot.lane.b32.xlu0 %v438, 96
    %v442 = vpop.permute.xlu0 %441
    %v444 = vmul.f32 %v439, %v442
    %v445 = vmul.f32 %v427, %v338
    %v446 = vadd.f32 %v444, %v445
    %448 = vrot.lane.b32.xlu0 %v421, 96
    %v449 = vpop.permute.xlu0 %448
    %v451 = vsel %vm343, %v449, %v446
    %v452 = vpack.c.bf16 %v451, %v451
    %v454 = vsel %vm143, %v452, 0
    %456 = vmatprep.subr.bf16.mxu0 %v214
    %457 = vmatpush1.bf16.msra.mxu0 %v213
    %458 = vmatprep.subr.bf16.mxu0 %v216
    %459 = vmatpush1.bf16.msra.mxu0 %v215
    %460 = vmatprep.subr.bf16.mxu0 %v218
    %461 = vmatpush1.bf16.msra.mxu0 %v217
    %462 = vmatprep.subr.bf16.mxu0 %v220
    %463 = vmatpush1.bf16.msra.mxu0 %v219
    %464 = vmatprep.subr.bf16.mxu0 0
    %465 = vmatpush1.bf16.msra.mxu0 0
    %466 = vmatprep.subr.bf16.mxu0 0
    %467 = vmatpush1.bf16.msra.mxu0 0
    %468 = vmatprep.subr.bf16.mxu0 0
    %469 = vmatpush1.bf16.msra.mxu0 0
    %470 = vmatprep.subr.bf16.mxu0 0
    %471 = vmatpush1.bf16.msra.mxu0 0
    %472 = vmatprep.subr.bf16.mxu0 0
    %473 = vmatpush1.bf16.msra.mxu0 0
    %474 = vmatprep.subr.bf16.mxu0 0
    %475 = vmatpush1.bf16.msra.mxu0 0
    %476 = vmatprep.subr.bf16.mxu0 0
    %477 = vmatpush1.bf16.msra.mxu0 0
    %478 = vmatprep.subr.bf16.mxu0 0
    %479 = vmatpush1.bf16.msra.mxu0 0
    %480 = vmatprep.subr.bf16.mxu0 0
    %481 = vmatpush1.bf16.msra.mxu0 0
    %482 = vmatprep.subr.bf16.mxu0 0
    %483 = vmatpush1.bf16.msra.mxu0 0
    %484 = vmatprep.subr.bf16.mxu0 0
    %485 = vmatpush1.bf16.msra.mxu0 0
    %486 = vmatprep.subr.bf16.mxu0 0
    %487 = vmatpush1.bf16.msra.mxu0 0
    %488 = vmatprep.mubr.bf16.mxu0 0
    %489 = vmatmul.mubr.bf16.gmra.mrb[0].mxu0 %v454
    %v490 = vpop.f32.mrb[0].mxu0
    %v491 = vadd.f32 %v233, %v490
    %v492 = vpop.f32.mrb[0].mxu0
    %v493 = vadd.f32 %v237, %v492
    %v494 = vpop.f32.mrb[0].mxu0
    %v495 = vpop.f32.mrb[0].mxu0
    %496 = vdwg.mxu0
    %v497 = vrot.slane %v182, 2
    %v499 = vadd.f32 %v491, %v497
    %v500 = vrot.slane %v184, 5
    %v502 = vadd.f32 %v493, %v500
    %v503 = vxor.u32 %v499, 2147483648
    %v504 = vmul.f32 %v503, 1.442695
    %v505 = vpow.pop %v504
    %v506 = vadd.f32 %v505, 1.0
    %v507 = vrcp.pop %v506
    %v508 = vmul.f32 1.0, %v507
    %510 = vrot.lane.b32.xlu0 %v499, 32
    %v511 = vpop.permute.xlu0 %510
    %v513 = vmul.f32 %v508, %v511
    %515 = vrot.lane.b32.xlu0 %v513, 64
    %v516 = vpop.permute.xlu0 %515
    %v518 = vadd.f32 %v499, %v516
    %v519 = vtanh.pop %v518
    %v520 = vsub.f32 1.0, %v508
    %522 = vrot.lane.b32.xlu0 %v519, 96
    %v523 = vpop.permute.xlu0 %522
    %v525 = vmul.f32 %v520, %v523
    %v526 = vmul.f32 %v508, %v421
    %v527 = vadd.f32 %v525, %v526
    %v528 = vxor.u32 %v502, 2147483648
    %v529 = vmul.f32 %v528, 1.442695
    %v530 = vpow.pop %v529
    %v531 = vadd.f32 %v530, 1.0
    %v532 = vrcp.pop %v531
    %v533 = vmul.f32 1.0, %v532
    %535 = vrot.lane.b32.xlu0 %v502, 32
    %v536 = vpop.permute.xlu0 %535
    %v538 = vmul.f32 %v533, %v536
    %540 = vrot.lane.b32.xlu0 %v538, 64
    %v541 = vpop.permute.xlu0 %540
    %v543 = vadd.f32 %v502, %v541
    %v544 = vtanh.pop %v543
    %v545 = vsub.f32 1.0, %v533
    %547 = vrot.lane.b32.xlu0 %v544, 96
    %v548 = vpop.permute.xlu0 %547
    %v550 = vmul.f32 %v545, %v548
    %v551 = vmul.f32 %v533, %v446
    %v552 = vadd.f32 %v550, %v551
    %554 = vrot.lane.b32.xlu0 %v527, 96
    %v555 = vpop.permute.xlu0 %554
    %v557 = vsel %vm343, %v555, %v552
    %v558 = vpack.c.bf16 %v557, %v557
    %v560 = vsel %vm143, %v558, 0
    %562 = vmatprep.subr.bf16.mxu0 %v214
    %563 = vmatpush1.bf16.msra.mxu0 %v213
    %564 = vmatprep.subr.bf16.mxu0 %v216
    %565 = vmatpush1.bf16.msra.mxu0 %v215
    %566 = vmatprep.subr.bf16.mxu0 %v218
    %567 = vmatpush1.bf16.msra.mxu0 %v217
    %568 = vmatprep.subr.bf16.mxu0 %v220
    %569 = vmatpush1.bf16.msra.mxu0 %v219
    %570 = vmatprep.subr.bf16.mxu0 0
    %571 = vmatpush1.bf16.msra.mxu0 0
    %572 = vmatprep.subr.bf16.mxu0 0
    %573 = vmatpush1.bf16.msra.mxu0 0
    %574 = vmatprep.subr.bf16.mxu0 0
    %575 = vmatpush1.bf16.msra.mxu0 0
    %576 = vmatprep.subr.bf16.mxu0 0
    %577 = vmatpush1.bf16.msra.mxu0 0
    %578 = vmatprep.subr.bf16.mxu0 0
    %579 = vmatpush1.bf16.msra.mxu0 0
    %580 = vmatprep.subr.bf16.mxu0 0
    %581 = vmatpush1.bf16.msra.mxu0 0
    %582 = vmatprep.subr.bf16.mxu0 0
    %583 = vmatpush1.bf16.msra.mxu0 0
    %584 = vmatprep.subr.bf16.mxu0 0
    %585 = vmatpush1.bf16.msra.mxu0 0
    %586 = vmatprep.subr.bf16.mxu0 0
    %587 = vmatpush1.bf16.msra.mxu0 0
    %588 = vmatprep.subr.bf16.mxu0 0
    %589 = vmatpush1.bf16.msra.mxu0 0
    %590 = vmatprep.subr.bf16.mxu0 0
    %591 = vmatpush1.bf16.msra.mxu0 0
    %592 = vmatprep.subr.bf16.mxu0 0
    %593 = vmatpush1.bf16.msra.mxu0 0
    %594 = vmatprep.mubr.bf16.mxu0 0
    %595 = vmatmul.mubr.bf16.gmra.mrb[0].mxu0 %v560
    %v596 = vpop.f32.mrb[0].mxu0
    %v597 = vadd.f32 %v233, %v596
    %v598 = vpop.f32.mrb[0].mxu0
    %v599 = vadd.f32 %v237, %v598
    %v600 = vpop.f32.mrb[0].mxu0
    %v601 = vpop.f32.mrb[0].mxu0
    %602 = vdwg.mxu0
    %v603 = vrot.slane %v182, 3
    %v605 = vadd.f32 %v597, %v603
    %v606 = vrot.slane %v184, 4
    %v608 = vadd.f32 %v599, %v606
    %v609 = vxor.u32 %v605, 2147483648
    %v610 = vmul.f32 %v609, 1.442695
    %v611 = vpow.pop %v610
    %v612 = vadd.f32 %v611, 1.0
    %v613 = vrcp.pop %v612
    %v614 = vmul.f32 1.0, %v613
    %616 = vrot.lane.b32.xlu0 %v605, 32
    %v617 = vpop.permute.xlu0 %616
    %v619 = vmul.f32 %v614, %v617
    %621 = vrot.lane.b32.xlu0 %v619, 64
    %v622 = vpop.permute.xlu0 %621
    %v624 = vadd.f32 %v605, %v622
    %v625 = vtanh.pop %v624
    %v626 = vsub.f32 1.0, %v614
    %628 = vrot.lane.b32.xlu0 %v625, 96
    %v629 = vpop.permute.xlu0 %628
    %v631 = vmul.f32 %v626, %v629
    %v632 = vmul.f32 %v614, %v527
    %v633 = vadd.f32 %v631, %v632
    %v634 = vxor.u32 %v608, 2147483648
    %v635 = vmul.f32 %v634, 1.442695
    %v636 = vpow.pop %v635
    %v637 = vadd.f32 %v636, 1.0
    %v638 = vrcp.pop %v637
    %v639 = vmul.f32 1.0, %v638
    %641 = vrot.lane.b32.xlu0 %v608, 32
    %v642 = vpop.permute.xlu0 %641
    %v644 = vmul.f32 %v639, %v642
    %646 = vrot.lane.b32.xlu0 %v644, 64
    %v647 = vpop.permute.xlu0 %646
    %v649 = vadd.f32 %v608, %v647
    %v650 = vtanh.pop %v649
    %v651 = vsub.f32 1.0, %v639
    %653 = vrot.lane.b32.xlu0 %v650, 96
    %v654 = vpop.permute.xlu0 %653
    %v656 = vmul.f32 %v651, %v654
    %v657 = vmul.f32 %v639, %v552
    %v658 = vadd.f32 %v656, %v657
    %660 = vrot.lane.b32.xlu0 %v633, 96
    %v661 = vpop.permute.xlu0 %660
    %v663 = vsel %vm343, %v661, %v658
    %v664 = vpack.c.bf16 %v663, %v663
    %v666 = vsel %vm143, %v664, 0
    %668 = vmatprep.subr.bf16.mxu0 %v214
    %669 = vmatpush1.bf16.msra.mxu0 %v213
    %670 = vmatprep.subr.bf16.mxu0 %v216
    %671 = vmatpush1.bf16.msra.mxu0 %v215
    %672 = vmatprep.subr.bf16.mxu0 %v218
    %673 = vmatpush1.bf16.msra.mxu0 %v217
    %674 = vmatprep.subr.bf16.mxu0 %v220
    %675 = vmatpush1.bf16.msra.mxu0 %v219
    %676 = vmatprep.subr.bf16.mxu0 0
    %677 = vmatpush1.bf16.msra.mxu0 0
    %678 = vmatprep.subr.bf16.mxu0 0
    %679 = vmatpush1.bf16.msra.mxu0 0
    %680 = vmatprep.subr.bf16.mxu0 0
    %681 = vmatpush1.bf16.msra.mxu0 0
    %682 = vmatprep.subr.bf16.mxu0 0
    %683 = vmatpush1.bf16.msra.mxu0 0
    %684 = vmatprep.subr.bf16.mxu0 0
    %685 = vmatpush1.bf16.msra.mxu0 0
    %686 = vmatprep.subr.bf16.mxu0 0
    %687 = vmatpush1.bf16.msra.mxu0 0
    %688 = vmatprep.subr.bf16.mxu0 0
    %689 = vmatpush1.bf16.msra.mxu0 0
    %690 = vmatprep.subr.bf16.mxu0 0
    %691 = vmatpush1.bf16.msra.mxu0 0
    %692 = vmatprep.subr.bf16.mxu0 0
    %693 = vmatpush1.bf16.msra.mxu0 0
    %694 = vmatprep.subr.bf16.mxu0 0
    %695 = vmatpush1.bf16.msra.mxu0 0
    %696 = vmatprep.subr.bf16.mxu0 0
    %697 = vmatpush1.bf16.msra.mxu0 0
    %698 = vmatprep.subr.bf16.mxu0 0
    %699 = vmatpush1.bf16.msra.mxu0 0
    %700 = vmatprep.mubr.bf16.mxu0 0
    %701 = vmatmul.mubr.bf16.gmra.mrb[0].mxu0 %v666
    %v702 = vpop.f32.mrb[0].mxu0
    %v703 = vadd.f32 %v233, %v702
    %v704 = vpop.f32.mrb[0].mxu0
    %v705 = vadd.f32 %v237, %v704
    %v706 = vpop.f32.mrb[0].mxu0
    %v707 = vpop.f32.mrb[0].mxu0
    %708 = vdwg.mxu0
    %v709 = vrot.slane %v182, 4
    %v711 = vadd.f32 %v703, %v709
    %v712 = vrot.slane %v184, 3
    %v714 = vadd.f32 %v705, %v712
    %v715 = vxor.u32 %v711, 2147483648
    %v716 = vmul.f32 %v715, 1.442695
    %v717 = vpow.pop %v716
    %v718 = vadd.f32 %v717, 1.0
    %v719 = vrcp.pop %v718
    %v720 = vmul.f32 1.0, %v719
    %722 = vrot.lane.b32.xlu0 %v711, 32
    %v723 = vpop.permute.xlu0 %722
    %v725 = vmul.f32 %v720, %v723
    %727 = vrot.lane.b32.xlu0 %v725, 64
    %v728 = vpop.permute.xlu0 %727
    %v730 = vadd.f32 %v711, %v728
    %v731 = vtanh.pop %v730
    %v732 = vsub.f32 1.0, %v720
    %734 = vrot.lane.b32.xlu0 %v731, 96
    %v735 = vpop.permute.xlu0 %734
    %v737 = vmul.f32 %v732, %v735
    %v738 = vmul.f32 %v720, %v633
    %v739 = vadd.f32 %v737, %v738
    %v740 = vxor.u32 %v714, 2147483648
    %v741 = vmul.f32 %v740, 1.442695
    %v742 = vpow.pop %v741
    %v743 = vadd.f32 %v742, 1.0
    %v744 = vrcp.pop %v743
    %v745 = vmul.f32 1.0, %v744
    %747 = vrot.lane.b32.xlu0 %v714, 32
    %v748 = vpop.permute.xlu0 %747
    %v750 = vmul.f32 %v745, %v748
    %752 = vrot.lane.b32.xlu0 %v750, 64
    %v753 = vpop.permute.xlu0 %752
    %v755 = vadd.f32 %v714, %v753
    %v756 = vtanh.pop %v755
    %v757 = vsub.f32 1.0, %v745
    %759 = vrot.lane.b32.xlu0 %v756, 96
    %v760 = vpop.permute.xlu0 %759
    %v762 = vmul.f32 %v757, %v760
    %v763 = vmul.f32 %v745, %v658
    %v764 = vadd.f32 %v762, %v763
    %766 = vrot.lane.b32.xlu0 %v739, 96
    %v767 = vpop.permute.xlu0 %766
    %v769 = vsel %vm343, %v767, %v764
    %v770 = vpack.c.bf16 %v769, %v769
    %v772 = vsel %vm143, %v770, 0
    %774 = vmatprep.subr.bf16.mxu0 %v214
    %775 = vmatpush1.bf16.msra.mxu0 %v213
    %776 = vmatprep.subr.bf16.mxu0 %v216
    %777 = vmatpush1.bf16.msra.mxu0 %v215
    %778 = vmatprep.subr.bf16.mxu0 %v218
    %779 = vmatpush1.bf16.msra.mxu0 %v217
    %780 = vmatprep.subr.bf16.mxu0 %v220
    %781 = vmatpush1.bf16.msra.mxu0 %v219
    %782 = vmatprep.subr.bf16.mxu0 0
    %783 = vmatpush1.bf16.msra.mxu0 0
    %784 = vmatprep.subr.bf16.mxu0 0
    %785 = vmatpush1.bf16.msra.mxu0 0
    %786 = vmatprep.subr.bf16.mxu0 0
    %787 = vmatpush1.bf16.msra.mxu0 0
    %788 = vmatprep.subr.bf16.mxu0 0
    %789 = vmatpush1.bf16.msra.mxu0 0
    %790 = vmatprep.subr.bf16.mxu0 0
    %791 = vmatpush1.bf16.msra.mxu0 0
    %792 = vmatprep.subr.bf16.mxu0 0
    %793 = vmatpush1.bf16.msra.mxu0 0
    %794 = vmatprep.subr.bf16.mxu0 0
    %795 = vmatpush1.bf16.msra.mxu0 0
    %796 = vmatprep.subr.bf16.mxu0 0
    %797 = vmatpush1.bf16.msra.mxu0 0
    %798 = vmatprep.subr.bf16.mxu0 0
    %799 = vmatpush1.bf16.msra.mxu0 0
    %800 = vmatprep.subr.bf16.mxu0 0
    %801 = vmatpush1.bf16.msra.mxu0 0
    %802 = vmatprep.subr.bf16.mxu0 0
    %803 = vmatpush1.bf16.msra.mxu0 0
    %804 = vmatprep.subr.bf16.mxu0 0
    %805 = vmatpush1.bf16.msra.mxu0 0
    %806 = vmatprep.mubr.bf16.mxu0 0
    %807 = vmatmul.mubr.bf16.gmra.mrb[0].mxu0 %v772
    %v808 = vpop.f32.mrb[0].mxu0
    %v809 = vadd.f32 %v233, %v808
    %v810 = vpop.f32.mrb[0].mxu0
    %v811 = vadd.f32 %v237, %v810
    %v812 = vpop.f32.mrb[0].mxu0
    %v813 = vpop.f32.mrb[0].mxu0
    %814 = vdwg.mxu0
    %v815 = vrot.slane %v182, 5
    %v817 = vadd.f32 %v809, %v815
    %v818 = vrot.slane %v184, 2
    %v820 = vadd.f32 %v811, %v818
    %v821 = vxor.u32 %v817, 2147483648
    %v822 = vmul.f32 %v821, 1.442695
    %v823 = vpow.pop %v822
    %v824 = vadd.f32 %v823, 1.0
    %v825 = vrcp.pop %v824
    %v826 = vmul.f32 1.0, %v825
    %828 = vrot.lane.b32.xlu0 %v817, 32
    %v829 = vpop.permute.xlu0 %828
    %v831 = vmul.f32 %v826, %v829
    %833 = vrot.lane.b32.xlu0 %v831, 64
    %v834 = vpop.permute.xlu0 %833
    %v836 = vadd.f32 %v817, %v834
    %v837 = vtanh.pop %v836
    %v838 = vsub.f32 1.0, %v826
    %840 = vrot.lane.b32.xlu0 %v837, 96
    %v841 = vpop.permute.xlu0 %840
    %v843 = vmul.f32 %v838, %v841
    %v844 = vmul.f32 %v826, %v739
    %v845 = vadd.f32 %v843, %v844
    %v846 = vxor.u32 %v820, 2147483648
    %v847 = vmul.f32 %v846, 1.442695
    %v848 = vpow.pop %v847
    %v849 = vadd.f32 %v848, 1.0
    %v850 = vrcp.pop %v849
    %v851 = vmul.f32 1.0, %v850
    %853 = vrot.lane.b32.xlu0 %v820, 32
    %v854 = vpop.permute.xlu0 %853
    %v856 = vmul.f32 %v851, %v854
    %858 = vrot.lane.b32.xlu0 %v856, 64
    %v859 = vpop.permute.xlu0 %858
    %v861 = vadd.f32 %v820, %v859
    %v862 = vtanh.pop %v861
    %v863 = vsub.f32 1.0, %v851
    %865 = vrot.lane.b32.xlu0 %v862, 96
    %v866 = vpop.permute.xlu0 %865
    %v868 = vmul.f32 %v863, %v866
    %v869 = vmul.f32 %v851, %v764
    %v870 = vadd.f32 %v868, %v869
    %872 = vrot.lane.b32.xlu0 %v845, 96
    %v873 = vpop.permute.xlu0 %872
    %v875 = vsel %vm343, %v873, %v870
    %v876 = vpack.c.bf16 %v875, %v875
    %v878 = vsel %vm143, %v876, 0
    %880 = vmatprep.subr.bf16.mxu0 %v214
    %881 = vmatpush1.bf16.msra.mxu0 %v213
    %882 = vmatprep.subr.bf16.mxu0 %v216
    %883 = vmatpush1.bf16.msra.mxu0 %v215
    %884 = vmatprep.subr.bf16.mxu0 %v218
    %885 = vmatpush1.bf16.msra.mxu0 %v217
    %886 = vmatprep.subr.bf16.mxu0 %v220
    %887 = vmatpush1.bf16.msra.mxu0 %v219
    %888 = vmatprep.subr.bf16.mxu0 0
    %889 = vmatpush1.bf16.msra.mxu0 0
    %890 = vmatprep.subr.bf16.mxu0 0
    %891 = vmatpush1.bf16.msra.mxu0 0
    %892 = vmatprep.subr.bf16.mxu0 0
    %893 = vmatpush1.bf16.msra.mxu0 0
    %894 = vmatprep.subr.bf16.mxu0 0
    %895 = vmatpush1.bf16.msra.mxu0 0
    %896 = vmatprep.subr.bf16.mxu0 0
    %897 = vmatpush1.bf16.msra.mxu0 0
    %898 = vmatprep.subr.bf16.mxu0 0
    %899 = vmatpush1.bf16.msra.mxu0 0
    %900 = vmatprep.subr.bf16.mxu0 0
    %901 = vmatpush1.bf16.msra.mxu0 0
    %902 = vmatprep.subr.bf16.mxu0 0
    %903 = vmatpush1.bf16.msra.mxu0 0
    %904 = vmatprep.subr.bf16.mxu0 0
    %905 = vmatpush1.bf16.msra.mxu0 0
    %906 = vmatprep.subr.bf16.mxu0 0
    %907 = vmatpush1.bf16.msra.mxu0 0
    %908 = vmatprep.subr.bf16.mxu0 0
    %909 = vmatpush1.bf16.msra.mxu0 0
    %910 = vmatprep.subr.bf16.mxu0 0
    %911 = vmatpush1.bf16.msra.mxu0 0
    %912 = vmatprep.mubr.bf16.mxu0 0
    %913 = vmatmul.mubr.bf16.gmra.mrb[0].mxu0 %v878
    %v914 = vpop.f32.mrb[0].mxu0
    %v915 = vadd.f32 %v233, %v914
    %v916 = vpop.f32.mrb[0].mxu0
    %v917 = vadd.f32 %v237, %v916
    %v918 = vpop.f32.mrb[0].mxu0
    %v919 = vpop.f32.mrb[0].mxu0
    %920 = vdwg.mxu0
    %v921 = vrot.slane %v182, 6
    %v923 = vadd.f32 %v915, %v921
    %v924 = vrot.slane %v184, 1
    %v926 = vadd.f32 %v917, %v924
    %v927 = vxor.u32 %v923, 2147483648
    %v928 = vmul.f32 %v927, 1.442695
    %v929 = vpow.pop %v928
    %v930 = vadd.f32 %v929, 1.0
    %v931 = vrcp.pop %v930
    %v932 = vmul.f32 1.0, %v931
    %934 = vrot.lane.b32.xlu0 %v923, 32
    %v935 = vpop.permute.xlu0 %934
    %v937 = vmul.f32 %v932, %v935
    %939 = vrot.lane.b32.xlu0 %v937, 64
    %v940 = vpop.permute.xlu0 %939
    %v942 = vadd.f32 %v923, %v940
    %v943 = vtanh.pop %v942
    %v944 = vsub.f32 1.0, %v932
    %946 = vrot.lane.b32.xlu0 %v943, 96
    %v947 = vpop.permute.xlu0 %946
    %v949 = vmul.f32 %v944, %v947
    %v950 = vmul.f32 %v932, %v845
    %v951 = vadd.f32 %v949, %v950
    %v952 = vxor.u32 %v926, 2147483648
    %v953 = vmul.f32 %v952, 1.442695
    %v954 = vpow.pop %v953
    %v955 = vadd.f32 %v954, 1.0
    %v956 = vrcp.pop %v955
    %v957 = vmul.f32 1.0, %v956
    %959 = vrot.lane.b32.xlu0 %v926, 32
    %v960 = vpop.permute.xlu0 %959
    %v962 = vmul.f32 %v957, %v960
    %964 = vrot.lane.b32.xlu0 %v962, 64
    %v965 = vpop.permute.xlu0 %964
    %v967 = vadd.f32 %v926, %v965
    %v968 = vtanh.pop %v967
    %v969 = vsub.f32 1.0, %v957
    %971 = vrot.lane.b32.xlu0 %v968, 96
    %v972 = vpop.permute.xlu0 %971
    %v974 = vmul.f32 %v969, %v972
    %v975 = vmul.f32 %v957, %v870
    %v976 = vadd.f32 %v974, %v975
    %978 = vrot.lane.b32.xlu0 %v951, 96
    %v979 = vpop.permute.xlu0 %978
    %v981 = vsel %vm343, %v979, %v976
    %v982 = vpack.c.bf16 %v981, %v981
    %v984 = vsel %vm143, %v982, 0
    %986 = vmatprep.subr.bf16.mxu0 %v214
    %987 = vmatpush1.bf16.msra.mxu0 %v213
    %988 = vmatprep.subr.bf16.mxu0 %v216
    %989 = vmatpush1.bf16.msra.mxu0 %v215
    %990 = vmatprep.subr.bf16.mxu0 %v218
    %991 = vmatpush1.bf16.msra.mxu0 %v217
    %992 = vmatprep.subr.bf16.mxu0 %v220
    %993 = vmatpush1.bf16.msra.mxu0 %v219
    %994 = vmatprep.subr.bf16.mxu0 0
    %995 = vmatpush1.bf16.msra.mxu0 0
    %996 = vmatprep.subr.bf16.mxu0 0
    %997 = vmatpush1.bf16.msra.mxu0 0
    %998 = vmatprep.subr.bf16.mxu0 0
    %999 = vmatpush1.bf16.msra.mxu0 0
    %1000 = vmatprep.subr.bf16.mxu0 0
    %1001 = vmatpush1.bf16.msra.mxu0 0
    %1002 = vmatprep.subr.bf16.mxu0 0
    %1003 = vmatpush1.bf16.msra.mxu0 0
    %1004 = vmatprep.subr.bf16.mxu0 0
    %1005 = vmatpush1.bf16.msra.mxu0 0
    %1006 = vmatprep.subr.bf16.mxu0 0
    %1007 = vmatpush1.bf16.msra.mxu0 0
    %1008 = vmatprep.subr.bf16.mxu0 0
    %1009 = vmatpush1.bf16.msra.mxu0 0
    %1010 = vmatprep.subr.bf16.mxu0 0
    %1011 = vmatpush1.bf16.msra.mxu0 0
    %1012 = vmatprep.subr.bf16.mxu0 0
    %1013 = vmatpush1.bf16.msra.mxu0 0
    %1014 = vmatprep.subr.bf16.mxu0 0
    %1015 = vmatpush1.bf16.msra.mxu0 0
    %1016 = vmatprep.subr.bf16.mxu0 0
    %1017 = vmatpush1.bf16.msra.mxu0 0
    %1018 = vmatprep.mubr.bf16.mxu0 0
    %1019 = vmatmul.mubr.bf16.gmra.mrb[0].mxu0 %v984
    %v1020 = vpop.f32.mrb[0].mxu0
    %v1021 = vadd.f32 %v233, %v1020
    %v1022 = vpop.f32.mrb[0].mxu0
    %v1023 = vadd.f32 %v237, %v1022
    %v1024 = vpop.f32.mrb[0].mxu0
    %v1025 = vpop.f32.mrb[0].mxu0
    %1026 = vdwg.mxu0
    %v1027 = vrot.slane %v182, 7
    %v1029 = vadd.f32 %v1021, %v1027
    %v1030 = vadd.f32 %v1023, %v184
    %v1031 = vxor.u32 %v1029, 2147483648
    %v1032 = vmul.f32 %v1031, 1.442695
    %v1033 = vpow.pop %v1032
    %v1034 = vadd.f32 %v1033, 1.0
    %v1035 = vrcp.pop %v1034
    %v1036 = vmul.f32 1.0, %v1035
    %1038 = vrot.lane.b32.xlu0 %v1029, 32
    %v1039 = vpop.permute.xlu0 %1038
    %v1041 = vmul.f32 %v1036, %v1039
    %1043 = vrot.lane.b32.xlu0 %v1041, 64
    %v1044 = vpop.permute.xlu0 %1043
    %v1046 = vadd.f32 %v1029, %v1044
    %v1047 = vtanh.pop %v1046
    %v1048 = vsub.f32 1.0, %v1036
    %1050 = vrot.lane.b32.xlu0 %v1047, 96
    %v1051 = vpop.permute.xlu0 %1050
    %v1053 = vmul.f32 %v1048, %v1051
    %v1054 = vmul.f32 %v1036, %v951
    %v1055 = vadd.f32 %v1053, %v1054
    %v1056 = vxor.u32 %v1030, 2147483648
    %v1057 = vmul.f32 %v1056, 1.442695
    %v1058 = vpow.pop %v1057
    %v1059 = vadd.f32 %v1058, 1.0
    %v1060 = vrcp.pop %v1059
    %v1061 = vmul.f32 1.0, %v1060
    %1063 = vrot.lane.b32.xlu0 %v1030, 32
    %v1064 = vpop.permute.xlu0 %1063
    %v1066 = vmul.f32 %v1061, %v1064
    %1068 = vrot.lane.b32.xlu0 %v1066, 64
    %v1069 = vpop.permute.xlu0 %1068
    %v1071 = vadd.f32 %v1030, %v1069
    %v1072 = vtanh.pop %v1071
    %v1073 = vsub.f32 1.0, %v1061
    %1075 = vrot.lane.b32.xlu0 %v1072, 96
    %v1076 = vpop.permute.xlu0 %1075
    %v1078 = vmul.f32 %v1073, %v1076
    %v1079 = vmul.f32 %v1061, %v976
    %v1080 = vadd.f32 %v1078, %v1079
    %v1081 = vadd.f32 %v313, %v1080
    %v1082 = vadd.f32 %v421, %v976
    %v1083 = vadd.f32 %v527, %v870
    %v1084 = vadd.f32 %v633, %v764
    %v1085 = vadd.f32 %v739, %v658
    %v1086 = vadd.f32 %v845, %v552
    %v1087 = vadd.f32 %v951, %v446
    %v1088 = vadd.f32 %v1055, %v338
    %v1090 = vrot.slane %v1082, 7
    %v1093 = vrot.slane %v1083, 6
    %v1096 = vrot.slane %v1084, 5
    %v1099 = vrot.slane %v1085, 4
    %v1102 = vrot.slane %v1086, 3
    %v1105 = vrot.slane %v1087, 2
    %v1108 = vrot.slane %v1088, 1
    %vm1110 = vcmask 1040384
    %v1111 = vsel %vm1110, %v1081, %v1090
    %vm1112 = vcmask 1041408
    %v1113 = vsel %vm1112, %v1111, %v1093
    %vm1114 = vcmask 1042432
    %v1115 = vsel %vm1114, %v1113, %v1096
    %vm1116 = vcmask 1043456
    %v1117 = vsel %vm1116, %v1115, %v1099
    %vm1118 = vcmask 1044480
    %v1119 = vsel %vm1118, %v1117, %v1102
    %vm1120 = vcmask 1045504
    %v1121 = vsel %vm1120, %v1119, %v1105
    %vm1122 = vcmask 1046528
    %v1123 = vsel %vm1122, %v1121, %v1108
    %v1124 = vpack.c.bf16 %v1123, %v1123
    %1126 = vrot.lane.b32.xlu0 %v1123, 96
    %v1127 = vpop.permute.xlu0 %1126
    %1129 = vxpose.xlu0.b32.start [1/16] %v1127, 128
    %1130 = vxpose.xlu0.b32.cont [2/16] 0.0, 128
    %1131 = vxpose.xlu0.b32.cont [3/16] 0.0, 128
    %1132 = vxpose.xlu0.b32.cont [4/16] 0.0, 128
    %1133 = vxpose.xlu0.b32.cont [5/16] 0.0, 128
    %1134 = vxpose.xlu0.b32.cont [6/16] 0.0, 128
    %1135 = vxpose.xlu0.b32.cont [7/16] 0.0, 128
    %1136 = vxpose.xlu0.b32.cont [8/16] 0.0, 128
    %1137 = vxpose.xlu0.b32.cont [9/16] 0.0, 128
    %1138 = vxpose.xlu0.b32.cont [10/16] 0.0, 128
    %1139 = vxpose.xlu0.b32.cont [11/16] 0.0, 128
    %1140 = vxpose.xlu0.b32.cont [12/16] 0.0, 128
    %1141 = vxpose.xlu0.b32.cont [13/16] 0.0, 128
    %1142 = vxpose.xlu0.b32.cont [14/16] 0.0, 128
    %1143 = vxpose.xlu0.b32.cont [15/16] 0.0, 128
    %1144 = vxpose.xlu0.b32.end [16/16] 0.0, 128
    %v1145 = vpop.trf.xlu0
    %v1146 = vpop.trf.xlu0
    %v1147 = vpop.trf.xlu0
    %v1148 = vpop.trf.xlu0
    %v1149 = vpop.trf.xlu0
    %v1150 = vpop.trf.xlu0
    %v1151 = vpop.trf.xlu0
    %v1152 = vpop.trf.xlu0
    %v1153 = vpop.trf.xlu0
    %v1154 = vpop.trf.xlu0
    %v1155 = vpop.trf.xlu0
    %v1156 = vpop.trf.xlu0
    %v1157 = vpop.trf.xlu0
    %v1158 = vpop.trf.xlu0
    %v1159 = vpop.trf.xlu0
    %v1160 = vpop.trf.xlu0
    %v1161 = vpack.c.bf16 %v1146, %v1145
    %v1162 = vpack.c.bf16 %v1148, %v1147
    %vm1163 = vcmp.eq.s32.totalorder %v94, 1
    %v1164 = vsel %vm1163, 1, 0
    %v1165 = vcvt.s32.f32 %v1164
    %v1166 = vpack.c.bf16 %v1165, %v1165
    %v1167 = vpack.c.bf16 %v1055, %v1055
    %1169 = vrot.lane.b32.xlu0 %v1167, 96
    %v1170 = vpop.permute.xlu0 %1169
    %v1175 = vunpack.c.l.b16 %v73
    %v1176 = vunpack.c.l.b16 %v74
    %v1177 = vunpack.c.l.b16 %v75
    %v1178 = vunpack.c.l.b16 %v76
    %v1179 = vpack.c.b16 %v1176, %v1175
    %v1180 = vpack.c.b16 %v1178, %v1177
    %v1184 = vsel %vm343, %v1170, 0
    %1186 = vmatprep.subr.bf16.mxu0 0
    %1187 = vmatpush1.bf16.msra.mxu0 %v1179
    %1188 = vmatprep.subr.bf16.mxu0 0
    %1189 = vmatpush1.bf16.msra.mxu0 %v1180
    %1190 = vmatprep.subr.bf16.mxu0 0
    %1191 = vmatpush1.bf16.msra.mxu0 0
    %1192 = vmatprep.subr.bf16.mxu0 0
    %1193 = vmatpush1.bf16.msra.mxu0 0
    %1194 = vmatprep.subr.bf16.mxu0 0
    %1195 = vmatpush1.bf16.msra.mxu0 0
    %1196 = vmatprep.subr.bf16.mxu0 0
    %1197 = vmatpush1.bf16.msra.mxu0 0
    %1198 = vmatprep.subr.bf16.mxu0 0
    %1199 = vmatpush1.bf16.msra.mxu0 0
    %1200 = vmatprep.subr.bf16.mxu0 0
    %1201 = vmatpush1.bf16.msra.mxu0 0
    %1202 = vmatprep.subr.bf16.mxu0 0
    %1203 = vmatpush1.bf16.msra.mxu0 0
    %1204 = vmatprep.subr.bf16.mxu0 0
    %1205 = vmatpush1.bf16.msra.mxu0 0
    %1206 = vmatprep.subr.bf16.mxu0 0
    %1207 = vmatpush1.bf16.msra.mxu0 0
    %1208 = vmatprep.subr.bf16.mxu0 0
    %1209 = vmatpush1.bf16.msra.mxu0 0
    %1210 = vmatprep.subr.bf16.mxu0 0
    %1211 = vmatpush1.bf16.msra.mxu0 0
    %1212 = vmatprep.subr.bf16.mxu0 0
    %1213 = vmatpush1.bf16.msra.mxu0 0
    %1214 = vmatprep.subr.bf16.mxu0 0
    %1215 = vmatpush1.bf16.msra.mxu0 0
    %1216 = vmatprep.subr.bf16.mxu0 0
    %1217 = vmatpush1.bf16.msra.mxu0 0
    %1218 = vmatprep.mubr.bf16.mxu0 0
    %1219 = vmatmul.mubr.bf16.gmra.mrb[0].mxu0 %v1184
    %v1220 = vpop.f32.mrb[0].mxu0
    %v1221 = vadd.f32 0.0, %v1220
    %v1222 = vpop.f32.mrb[0].mxu0
    %v1223 = vpop.f32.mrb[0].mxu0
    %v1224 = vpop.f32.mrb[0].mxu0
    %1225 = vdwg.mxu0
    %v1234 = vunpack.c.l.b16 %v65
    %v1235 = vunpack.c.l.b16 %v66
    %v1236 = vunpack.c.l.b16 %v67
    %v1237 = vunpack.c.l.b16 %v68
    %v1238 = vunpack.c.l.b16 %v69
    %v1239 = vunpack.c.l.b16 %v70
    %v1240 = vunpack.c.l.b16 %v71
    %v1241 = vunpack.c.l.b16 %v72
    %v1242 = vpack.c.b16 %v1235, %v1234
    %v1243 = vpack.c.b16 %v1237, %v1236
    %v1244 = vpack.c.b16 %v1239, %v1238
    %v1245 = vpack.c.b16 %v1241, %v1240
    %v1251 = vsel %vm143, %v1166, 0
    %1253 = vmatprep.subr.bf16.mxu0 0
    %1254 = vmatpush1.bf16.msra.mxu0 %v1242
    %1255 = vmatprep.subr.bf16.mxu0 0
    %1256 = vmatpush1.bf16.msra.mxu0 %v1243
    %1257 = vmatprep.subr.bf16.mxu0 0
    %1258 = vmatpush1.bf16.msra.mxu0 %v1244
    %1259 = vmatprep.subr.bf16.mxu0 0
    %1260 = vmatpush1.bf16.msra.mxu0 %v1245
    %1261 = vmatprep.subr.bf16.mxu0 0
    %1262 = vmatpush1.bf16.msra.mxu0 0
    %1263 = vmatprep.subr.bf16.mxu0 0
    %1264 = vmatpush1.bf16.msra.mxu0 0
    %1265 = vmatprep.subr.bf16.mxu0 0
    %1266 = vmatpush1.bf16.msra.mxu0 0
    %1267 = vmatprep.subr.bf16.mxu0 0
    %1268 = vmatpush1.bf16.msra.mxu0 0
    %1269 = vmatprep.subr.bf16.mxu0 0
    %1270 = vmatpush1.bf16.msra.mxu0 0
    %1271 = vmatprep.subr.bf16.mxu0 0
    %1272 = vmatpush1.bf16.msra.mxu0 0
    %1273 = vmatprep.subr.bf16.mxu0 0
    %1274 = vmatpush1.bf16.msra.mxu0 0
    %1275 = vmatprep.subr.bf16.mxu0 0
    %1276 = vmatpush1.bf16.msra.mxu0 0
    %1277 = vmatprep.subr.bf16.mxu0 0
    %1278 = vmatpush1.bf16.msra.mxu0 0
    %1279 = vmatprep.subr.bf16.mxu0 0
    %1280 = vmatpush1.bf16.msra.mxu0 0
    %1281 = vmatprep.subr.bf16.mxu0 0
    %1282 = vmatpush1.bf16.msra.mxu0 0
    %1283 = vmatprep.subr.bf16.mxu0 0
    %1284 = vmatpush1.bf16.msra.mxu0 0
    %1285 = vmatprep.mubr.bf16.mxu0 0
    %1286 = vmatmul.mubr.bf16.gmra.mrb[0].mxu0 %v1251
    %v1287 = vpop.f32.mrb[0].mxu0
    %v1288 = vadd.f32 %v1221, %v1287
    %v1289 = vpop.f32.mrb[0].mxu0
    %v1290 = vpop.f32.mrb[0].mxu0
    %v1291 = vpop.f32.mrb[0].mxu0
    %1292 = vdwg.mxu0
    %v1293 = vadd.f32 %v1288, %v90
    %v1294 = vxor.u32 %v1293, 2147483648
    %v1295 = vmul.f32 %v1294, 1.442695
    %v1296 = vpow.pop %v1295
    %v1297 = vadd.f32 %v1296, 1.0
    %v1298 = vrcp.pop %v1297
    %v1299 = vmul.f32 1.0, %v1298
    %1301 = vrot.lane.b32.xlu0 %v1293, 32
    %v1302 = vpop.permute.xlu0 %1301
    %v1304 = vmul.f32 %v1299, %v1302
    %1306 = vrot.lane.b32.xlu0 %v1304, 64
    %v1307 = vpop.permute.xlu0 %1306
    %v1309 = vadd.f32 %v1293, %v1307
    %v1310 = vtanh.pop %v1309
    %v1311 = vsub.f32 1.0, %v1299
    %1313 = vrot.lane.b32.xlu0 %v1310, 96
    %v1314 = vpop.permute.xlu0 %1313
    %v1316 = vmul.f32 %v1311, %v1314
    %v1317 = vmul.f32 %v1299, %v1055
    %v1318 = vadd.f32 %v1316, %v1317
    %v1319 = vpack.c.bf16 %v1318, %v1318
    %1321 = vrot.lane.b32.xlu0 %v1319, 96
    %v1322 = vpop.permute.xlu0 %1321
    %v1324 = vsel %vm343, %v1322, 0
    %1326 = vmatprep.subr.bf16.mxu0 0
    %1327 = vmatpush1.bf16.msra.mxu0 %v1161
    %1328 = vmatprep.subr.bf16.mxu0 0
    %1329 = vmatpush1.bf16.msra.mxu0 %v1162
    %1330 = vmatprep.subr.bf16.mxu0 0
    %1331 = vmatpush1.bf16.msra.mxu0 0
    %1332 = vmatprep.subr.bf16.mxu0 0
    %1333 = vmatpush1.bf16.msra.mxu0 0
    %1334 = vmatprep.subr.bf16.mxu0 0
    %1335 = vmatpush1.bf16.msra.mxu0 0
    %1336 = vmatprep.subr.bf16.mxu0 0
    %1337 = vmatpush1.bf16.msra.mxu0 0
    %1338 = vmatprep.subr.bf16.mxu0 0
    %1339 = vmatpush1.bf16.msra.mxu0 0
    %1340 = vmatprep.subr.bf16.mxu0 0
    %1341 = vmatpush1.bf16.msra.mxu0 0
    %1342 = vmatprep.subr.bf16.mxu0 0
    %1343 = vmatpush1.bf16.msra.mxu0 0
    %1344 = vmatprep.subr.bf16.mxu0 0
    %1345 = vmatpush1.bf16.msra.mxu0 0
    %1346 = vmatprep.subr.bf16.mxu0 0
    %1347 = vmatpush1.bf16.msra.mxu0 0
    %1348 = vmatprep.subr.bf16.mxu0 0
    %1349 = vmatpush1.bf16.msra.mxu0 0
    %1350 = vmatprep.subr.bf16.mxu0 0
    %1351 = vmatpush1.bf16.msra.mxu0 0
    %1352 = vmatprep.subr.bf16.mxu0 0
    %1353 = vmatpush1.bf16.msra.mxu0 0
    %1354 = vmatprep.subr.bf16.mxu0 0
    %1355 = vmatpush1.bf16.msra.mxu0 0
    %1356 = vmatprep.subr.bf16.mxu0 0
    %1357 = vmatpush1.bf16.msra.mxu0 0
    %1358 = vmatprep.mubr.bf16.mxu0 0
    %1359 = vmatmul.mubr.bf16.gmra.mrb[0].mxu0 %v1324
    %v1360 = vpop.f32.mrb[0].mxu0
    %v1361 = vadd.f32 0.0, %v1360
    %v1362 = vpop.f32.mrb[0].mxu0
    %v1363 = vpop.f32.mrb[0].mxu0
    %v1364 = vpop.f32.mrb[0].mxu0
    %1365 = vdwg.mxu0
    %vm1366 = vcmask 57344
    %v1367 = vsel %vm1366, %v1361, -inf
    %1368 = vmax.xlane.f32.xlu0 %v1367
    %v1369 = vpop.xlane.xlu0 %1368
    %v1370 = vsub.f32 %v1361, %v1369
    %v1371 = vmul.f32 %v1370, 1.442695
    %v1372 = vpow.pop %v1371
    %v1373 = vsel %vm1366, %v1372, 0.0
    %1374 = vadd.xlane.f32.xlu0 %v1373
    %v1375 = vpop.xlane.xlu0 %1374
    %v1376 = vrcp.pop %v1375
    %v1377 = vmul.f32 %v1372, %v1376
    %v1378 = vpack.c.bf16 %v1377, %v1377
    %1380 = vrot.lane.b32.xlu0 %v1124, 96
    %v1381 = vpop.permute.xlu0 %1380
    %vm1382 = vcmask 64512
    %v1384 = vsel %vm1382, %v1378, 0
    %v1387 = vsel %vm1116, %v1381, 0
    %1389 = vmatprep.subr.bf16.mxu0 0
    %1390 = vmatpush1.bf16.msra.mxu0 %v1387
    %1391 = vmatprep.subr.bf16.mxu0 0
    %1392 = vmatpush1.bf16.msra.mxu0 0
    %1393 = vmatprep.subr.bf16.mxu0 0
    %1394 = vmatpush1.bf16.msra.mxu0 0
    %1395 = vmatprep.subr.bf16.mxu0 0
    %1396 = vmatpush1.bf16.msra.mxu0 0
    %1397 = vmatprep.subr.bf16.mxu0 0
    %1398 = vmatpush1.bf16.msra.mxu0 0
    %1399 = vmatprep.subr.bf16.mxu0 0
    %1400 = vmatpush1.bf16.msra.mxu0 0
    %1401 = vmatprep.subr.bf16.mxu0 0
    %1402 = vmatpush1.bf16.msra.mxu0 0
    %1403 = vmatprep.subr.bf16.mxu0 0
    %1404 = vmatpush1.bf16.msra.mxu0 0
    %1405 = vmatprep.subr.bf16.mxu0 0
    %1406 = vmatpush1.bf16.msra.mxu0 0
    %1407 = vmatprep.subr.bf16.mxu0 0
    %1408 = vmatpush1.bf16.msra.mxu0 0
    %1409 = vmatprep.subr.bf16.mxu0 0
    %1410 = vmatpush1.bf16.msra.mxu0 0
    %1411 = vmatprep.subr.bf16.mxu0 0
    %1412 = vmatpush1.bf16.msra.mxu0 0
    %1413 = vmatprep.subr.bf16.mxu0 0
    %1414 = vmatpush1.bf16.msra.mxu0 0
    %1415 = vmatprep.subr.bf16.mxu0 0
    %1416 = vmatpush1.bf16.msra.mxu0 0
    %1417 = vmatprep.subr.bf16.mxu0 0
    %1418 = vmatpush1.bf16.msra.mxu0 0
    %1419 = vmatprep.subr.bf16.mxu0 0
    %1420 = vmatpush1.bf16.msra.mxu0 0
    %1421 = vmatprep.mubr.bf16.mxu0 0
    %1422 = vmatmul.mubr.bf16.gmra.mrb[0].mxu0 %v1384
    %v1423 = vpop.f32.mrb[0].mxu0
    %v1424 = vadd.f32 0.0, %v1423
    %v1425 = vpop.f32.mrb[0].mxu0
    %v1426 = vpop.f32.mrb[0].mxu0
    %v1427 = vpop.f32.mrb[0].mxu0
    %1428 = vdwg.mxu0
    %1430 = vrot.lane.b32.xlu0 %v1318, 96
    %v1431 = vpop.permute.xlu0 %1430
    %1434 = vrot.lane.b32.xlu0 %v1424, 32
    %v1435 = vpop.permute.xlu0 %1434
    %v1437 = vsel %vm343, %v1431, %v1435
    %v1438 = vpack.c.bf16 %v1437, %v1437
    %v1447 = vunpack.c.l.b16 %v77
    %v1448 = vunpack.c.l.b16 %v78
    %v1449 = vunpack.c.l.b16 %v79
    %v1450 = vunpack.c.l.b16 %v80
    %v1451 = vunpack.c.l.b16 %v81
    %v1452 = vunpack.c.l.b16 %v82
    %v1453 = vunpack.c.l.b16 %v83
    %v1454 = vunpack.c.l.b16 %v84
    %v1455 = vpack.c.b16 %v1448, %v1447
    %v1456 = vpack.c.b16 %v1450, %v1449
    %v1457 = vpack.c.b16 %v1452, %v1451
    %v1458 = vpack.c.b16 %v1454, %v1453
    %v1464 = vsel %vm143, %v1438, 0
    %1466 = vmatprep.subr.bf16.mxu0 0
    %1467 = vmatpush1.bf16.msra.mxu0 %v1455
    %1468 = vmatprep.subr.bf16.mxu0 0
    %1469 = vmatpush1.bf16.msra.mxu0 %v1456
    %1470 = vmatprep.subr.bf16.mxu0 0
    %1471 = vmatpush1.bf16.msra.mxu0 %v1457
    %1472 = vmatprep.subr.bf16.mxu0 0
    %1473 = vmatpush1.bf16.msra.mxu0 %v1458
    %1474 = vmatprep.subr.bf16.mxu0 0
    %1475 = vmatpush1.bf16.msra.mxu0 0
    %1476 = vmatprep.subr.bf16.mxu0 0
    %1477 = vmatpush1.bf16.msra.mxu0 0
    %1478 = vmatprep.subr.bf16.mxu0 0
    %1479 = vmatpush1.bf16.msra.mxu0 0
    %1480 = vmatprep.subr.bf16.mxu0 0
    %1481 = vmatpush1.bf16.msra.mxu0 0
    %1482 = vmatprep.subr.bf16.mxu0 0
    %1483 = vmatpush1.bf16.msra.mxu0 0
    %1484 = vmatprep.subr.bf16.mxu0 0
    %1485 = vmatpush1.bf16.msra.mxu0 0
    %1486 = vmatprep.subr.bf16.mxu0 0
    %1487 = vmatpush1.bf16.msra.mxu0 0
    %1488 = vmatprep.subr.bf16.mxu0 0
    %1489 = vmatpush1.bf16.msra.mxu0 0
    %1490 = vmatprep.subr.bf16.mxu0 0
    %1491 = vmatpush1.bf16.msra.mxu0 0
    %1492 = vmatprep.subr.bf16.mxu0 0
    %1493 = vmatpush1.bf16.msra.mxu0 0
    %1494 = vmatprep.subr.bf16.mxu0 0
    %1495 = vmatpush1.bf16.msra.mxu0 0
    %1496 = vmatprep.subr.bf16.mxu0 0
    %1497 = vmatpush1.bf16.msra.mxu0 0
    %1498 = vmatprep.mubr.bf16.mxu0 0
    %1499 = vmatmul.mubr.bf16.gmra.mrb[0].mxu0 %v1464
    %v1500 = vpop.f32.mrb[0].mxu0
    %v1501 = vadd.f32 %v91, %v1500
    %v1502 = vpop.f32.mrb[0].mxu0
    %v1503 = vpop.f32.mrb[0].mxu0
    %v1504 = vpop.f32.mrb[0].mxu0
    %1505 = vdwg.mxu0
    %v1506 = vtanh.pop %v1501
    %v1507 = vpack.c.bf16 %v1506, %v1506
    %v1512 = vunpack.c.l.b16 %v85
    %v1513 = vunpack.c.l.b16 %v86
    %v1514 = vunpack.c.l.b16 %v87
    %v1515 = vunpack.c.l.b16 %v88
    %v1516 = vpack.c.b16 %v1513, %v1512
    %v1517 = vpack.c.b16 %v1515, %v1514
    %v1521 = vsel %vm343, %v1507, 0
    %1523 = vmatprep.subr.bf16.mxu0 0
    %1524 = vmatpush1.bf16.msra.mxu0 %v1516
    %1525 = vmatprep.subr.bf16.mxu0 0
    %1526 = vmatpush1.bf16.msra.mxu0 %v1517
    %1527 = vmatprep.subr.bf16.mxu0 0
    %1528 = vmatpush1.bf16.msra.mxu0 0
    %1529 = vmatprep.subr.bf16.mxu0 0
    %1530 = vmatpush1.bf16.msra.mxu0 0
    %1531 = vmatprep.subr.bf16.mxu0 0
    %1532 = vmatpush1.bf16.msra.mxu0 0
    %1533 = vmatprep.subr.bf16.mxu0 0
    %1534 = vmatpush1.bf16.msra.mxu0 0
    %1535 = vmatprep.subr.bf16.mxu0 0
    %1536 = vmatpush1.bf16.msra.mxu0 0
    %1537 = vmatprep.subr.bf16.mxu0 0
    %1538 = vmatpush1.bf16.msra.mxu0 0
    %1539 = vmatprep.subr.bf16.mxu0 0
    %1540 = vmatpush1.bf16.msra.mxu0 0
    %1541 = vmatprep.subr.bf16.mxu0 0
    %1542 = vmatpush1.bf16.msra.mxu0 0
    %1543 = vmatprep.subr.bf16.mxu0 0
    %1544 = vmatpush1.bf16.msra.mxu0 0
    %1545 = vmatprep.subr.bf16.mxu0 0
    %1546 = vmatpush1.bf16.msra.mxu0 0
    %1547 = vmatprep.subr.bf16.mxu0 0
    %1548 = vmatpush1.bf16.msra.mxu0 0
    %1549 = vmatprep.subr.bf16.mxu0 0
    %1550 = vmatpush1.bf16.msra.mxu0 0
    %1551 = vmatprep.subr.bf16.mxu0 0
    %1552 = vmatpush1.bf16.msra.mxu0 0
    %1553 = vmatprep.subr.bf16.mxu0 0
    %1554 = vmatpush1.bf16.msra.mxu0 0
    %1555 = vmatprep.mubr.bf16.mxu0 0
    %1556 = vmatmul.mubr.bf16.gmra.mrb[0].mxu0 %v1521
    %v1557 = vpop.f32.mrb[0].mxu0
    %v1558 = vadd.f32 %v92, %v1557
    %v1559 = vpop.f32.mrb[0].mxu0
    %v1560 = vpop.f32.mrb[0].mxu0
    %v1561 = vpop.f32.mrb[0].mxu0
    %1562 = vdwg.mxu0
    %vm1563 = vcmask 516096
    %v1564 = vsel %vm1563, %v1558, -inf
    %1565 = vmax.xlane.f32.xlu0 %v1564
    %v1566 = vpop.xlane.xlu0 %1565
    %vm1567 = vcmp.eq.f32.partialorder %v1558, %v1566
    %v1568 = vsel %vm1567, %v94, 64
    %v1569 = vsel %vm1563, %v1568, 2147483647
    %v1570 = vand.u32 %v1569, 65535
    %v1571 = vshra.s32 %v1569, 16
    %v1572 = vcvt.s32.f32 %v1570
    %v1573 = vcvt.s32.f32 %v1571
    %1574 = vmin.xlane.f32.xlu0 %v1573
    %v1575 = vpop.xlane.xlu0 %1574
    %vm1576 = vcmp.eq.f32.partialorder %v1573, %v1575
    %v1577 = vsel %vm1576, %v1572, inf
    %1578 = vmin.xlane.f32.xlu0 %v1577
    %v1579 = vpop.xlane.xlu0 %1578
    %v1580 = vcvt.f32.s32 %v1579
    %v1581 = vcvt.f32.s32 %v1575
    %v1582 = vshll.u32 %v1581, 16
    %v1583 = vadd.s32 %v1582, %v1580
    %v1584 = vsub.f32 %v1558, %v1566
    %v1585 = vmul.f32 %v1584, 1.442695
    %v1586 = vpow.pop %v1585
    %v1587 = vsel %vm1563, %v1586, 0.0
    %1588 = vadd.xlane.f32.xlu0 %v1587
    %v1589 = vpop.xlane.xlu0 %1588
    %v1590 = vrcp.pop %v1589
    %v1591 = vmul.f32 1.0, %v1590
    %vm1592 = vcmask 0
    %1593 = vst.msk [vmem:[#allocation7] sm:$0x1] %vm1592, %v1583
    %1594 = vst.msk [vmem:[#allocation8] sm:$0x1] %vm1592, %v1591
    %v1595 = vsel %vm1567, 1, 0
    %v1596 = vcvt.s32.f32 %v1595
    %v1597 = vpack.c.bf16 %v1596, %v1596
    %1598 = vmatprep.subr.bf16.mxu0 0
    %1599 = vmatpush1.bf16.msra.mxu0 %v1179
    %1600 = vmatprep.subr.bf16.mxu0 0
    %1601 = vmatpush1.bf16.msra.mxu0 %v1180
    %1602 = vmatprep.subr.bf16.mxu0 0
    %1603 = vmatpush1.bf16.msra.mxu0 0
    %1604 = vmatprep.subr.bf16.mxu0 0
    %1605 = vmatpush1.bf16.msra.mxu0 0
    %1606 = vmatprep.subr.bf16.mxu0 0
    %1607 = vmatpush1.bf16.msra.mxu0 0
    %1608 = vmatprep.subr.bf16.mxu0 0
    %1609 = vmatpush1.bf16.msra.mxu0 0
    %1610 = vmatprep.subr.bf16.mxu0 0
    %1611 = vmatpush1.bf16.msra.mxu0 0
    %1612 = vmatprep.subr.bf16.mxu0 0
    %1613 = vmatpush1.bf16.msra.mxu0 0
    %1614 = vmatprep.subr.bf16.mxu0 0
    %1615 = vmatpush1.bf16.msra.mxu0 0
    %1616 = vmatprep.subr.bf16.mxu0 0
    %1617 = vmatpush1.bf16.msra.mxu0 0
    %1618 = vmatprep.subr.bf16.mxu0 0
    %1619 = vmatpush1.bf16.msra.mxu0 0
    %1620 = vmatprep.subr.bf16.mxu0 0
    %1621 = vmatpush1.bf16.msra.mxu0 0
    %1622 = vmatprep.subr.bf16.mxu0 0
    %1623 = vmatpush1.bf16.msra.mxu0 0
    %1624 = vmatprep.subr.bf16.mxu0 0
    %1625 = vmatpush1.bf16.msra.mxu0 0
    %1626 = vmatprep.subr.bf16.mxu0 0
    %1627 = vmatpush1.bf16.msra.mxu0 0
    %1628 = vmatprep.subr.bf16.mxu0 0
    %1629 = vmatpush1.bf16.msra.mxu0 0
    %1630 = vmatprep.mubr.bf16.mxu0 0
    %1631 = vmatmul.mubr.bf16.gmra.mrb[0].mxu0 %v1324
    %v1632 = vpop.f32.mrb[0].mxu0
    %v1633 = vadd.f32 0.0, %v1632
    %v1634 = vpop.f32.mrb[0].mxu0
    %v1635 = vpop.f32.mrb[0].mxu0
    %v1636 = vpop.f32.mrb[0].mxu0
    %1637 = vdwg.mxu0
    %v1639 = vsel %vm143, %v1597, 0
    %1641 = vmatprep.subr.bf16.mxu0 0
    %1642 = vmatpush1.bf16.msra.mxu0 %v1242
    %1643 = vmatprep.subr.bf16.mxu0 0
    %1644 = vmatpush1.bf16.msra.mxu0 %v1243
    %1645 = vmatprep.subr.bf16.mxu0 0
    %1646 = vmatpush1.bf16.msra.mxu0 %v1244
    %1647 = vmatprep.subr.bf16.mxu0 0
    %1648 = vmatpush1.bf16.msra.mxu0 %v1245
    %1649 = vmatprep.subr.bf16.mxu0 0
    %1650 = vmatpush1.bf16.msra.mxu0 0
    %1651 = vmatprep.subr.bf16.mxu0 0
    %1652 = vmatpush1.bf16.msra.mxu0 0
    %1653 = vmatprep.subr.bf16.mxu0 0
    %1654 = vmatpush1.bf16.msra.mxu0 0
    %1655 = vmatprep.subr.bf16.mxu0 0
    %1656 = vmatpush1.bf16.msra.mxu0 0
    %1657 = vmatprep.subr.bf16.mxu0 0
    %1658 = vmatpush1.bf16.msra.mxu0 0
    %1659 = vmatprep.subr.bf16.mxu0 0
    %1660 = vmatpush1.bf16.msra.mxu0 0
    %1661 = vmatprep.subr.bf16.mxu0 0
    %1662 = vmatpush1.bf16.msra.mxu0 0
    %1663 = vmatprep.subr.bf16.mxu0 0
    %1664 = vmatpush1.bf16.msra.mxu0 0
    %1665 = vmatprep.subr.bf16.mxu0 0
    %1666 = vmatpush1.bf16.msra.mxu0 0
    %1667 = vmatprep.subr.bf16.mxu0 0
    %1668 = vmatpush1.bf16.msra.mxu0 0
    %1669 = vmatprep.subr.bf16.mxu0 0
    %1670 = vmatpush1.bf16.msra.mxu0 0
    %1671 = vmatprep.subr.bf16.mxu0 0
    %1672 = vmatpush1.bf16.msra.mxu0 0
    %1673 = vmatprep.mubr.bf16.mxu0 0
    %1674 = vmatmul.mubr.bf16.gmra.mrb[0].mxu0 %v1639
    %v1675 = vpop.f32.mrb[0].mxu0
    %v1676 = vadd.f32 %v1633, %v1675
    %v1677 = vpop.f32.mrb[0].mxu0
    %v1678 = vpop.f32.mrb[0].mxu0
    %v1679 = vpop.f32.mrb[0].mxu0
    %1680 = vdwg.mxu0
    %v1681 = vadd.f32 %v1676, %v90
    %v1682 = vxor.u32 %v1681, 2147483648
    %v1683 = vmul.f32 %v1682, 1.442695
    %v1684 = vpow.pop %v1683
    %v1685 = vadd.f32 %v1684, 1.0
    %v1686 = vrcp.pop %v1685
    %v1687 = vmul.f32 1.0, %v1686
    %1689 = vrot.lane.b32.xlu0 %v1681, 32
    %v1690 = vpop.permute.xlu0 %1689
    %v1692 = vmul.f32 %v1687, %v1690
    %1694 = vrot.lane.b32.xlu0 %v1692, 64
    %v1695 = vpop.permute.xlu0 %1694
    %v1697 = vadd.f32 %v1681, %v1695
    %v1698 = vtanh.pop %v1697
    %v1699 = vsub.f32 1.0, %v1687
    %1701 = vrot.lane.b32.xlu0 %v1698, 96
    %v1702 = vpop.permute.xlu0 %1701
    %v1704 = vmul.f32 %v1699, %v1702
    %v1705 = vmul.f32 %v1687, %v1318
    %v1706 = vadd.f32 %v1704, %v1705
    %v1707 = vpack.c.bf16 %v1706, %v1706
    %1709 = vrot.lane.b32.xlu0 %v1707, 96
    %v1710 = vpop.permute.xlu0 %1709
    %v1712 = vsel %vm343, %v1710, 0
    %1714 = vmatprep.subr.bf16.mxu0 0
    %1715 = vmatpush1.bf16.msra.mxu0 %v1161
    %1716 = vmatprep.subr.bf16.mxu0 0
    %1717 = vmatpush1.bf16.msra.mxu0 %v1162
    %1718 = vmatprep.subr.bf16.mxu0 0
    %1719 = vmatpush1.bf16.msra.mxu0 0
    %1720 = vmatprep.subr.bf16.mxu0 0
    %1721 = vmatpush1.bf16.msra.mxu0 0
    %1722 = vmatprep.subr.bf16.mxu0 0
    %1723 = vmatpush1.bf16.msra.mxu0 0
    %1724 = vmatprep.subr.bf16.mxu0 0
    %1725 = vmatpush1.bf16.msra.mxu0 0
    %1726 = vmatprep.subr.bf16.mxu0 0
    %1727 = vmatpush1.bf16.msra.mxu0 0
    %1728 = vmatprep.subr.bf16.mxu0 0
    %1729 = vmatpush1.bf16.msra.mxu0 0
    %1730 = vmatprep.subr.bf16.mxu0 0
    %1731 = vmatpush1.bf16.msra.mxu0 0
    %1732 = vmatprep.subr.bf16.mxu0 0
    %1733 = vmatpush1.bf16.msra.mxu0 0
    %1734 = vmatprep.subr.bf16.mxu0 0
    %1735 = vmatpush1.bf16.msra.mxu0 0
    %1736 = vmatprep.subr.bf16.mxu0 0
    %1737 = vmatpush1.bf16.msra.mxu0 0
    %1738 = vmatprep.subr.bf16.mxu0 0
    %1739 = vmatpush1.bf16.msra.mxu0 0
    %1740 = vmatprep.subr.bf16.mxu0 0
    %1741 = vmatpush1.bf16.msra.mxu0 0
    %1742 = vmatprep.subr.bf16.mxu0 0
    %1743 = vmatpush1.bf16.msra.mxu0 0
    %1744 = vmatprep.subr.bf16.mxu0 0
    %1745 = vmatpush1.bf16.msra.mxu0 0
    %1746 = vmatprep.mubr.bf16.mxu0 0
    %1747 = vmatmul.mubr.bf16.gmra.mrb[0].mxu0 %v1712
    %v1748 = vpop.f32.mrb[0].mxu0
    %v1749 = vadd.f32 0.0, %v1748
    %v1750 = vpop.f32.mrb[0].mxu0
    %v1751 = vpop.f32.mrb[0].mxu0
    %v1752 = vpop.f32.mrb[0].mxu0
    %1753 = vdwg.mxu0
    %v1754 = vsel %vm1366, %v1749, -inf
    %1755 = vmax.xlane.f32.xlu0 %v1754
    %v1756 = vpop.xlane.xlu0 %1755
    %v1757 = vsub.f32 %v1749, %v1756
    %v1758 = vmul.f32 %v1757, 1.442695
    %v1759 = vpow.pop %v1758
    %v1760 = vsel %vm1366, %v1759, 0.0
    %1761 = vadd.xlane.f32.xlu0 %v1760
    %v1762 = vpop.xlane.xlu0 %1761
    %v1763 = vrcp.pop %v1762
    %v1764 = vmul.f32 %v1759, %v1763
    %v1765 = vpack.c.bf16 %v1764, %v1764
    %v1767 = vsel %vm1382, %v1765, 0
    %1769 = vmatprep.subr.bf16.mxu0 0
    %1770 = vmatpush1.bf16.msra.mxu0 %v1387
    %1771 = vmatprep.subr.bf16.mxu0 0
    %1772 = vmatpush1.bf16.msra.mxu0 0
    %1773 = vmatprep.subr.bf16.mxu0 0
    %1774 = vmatpush1.bf16.msra.mxu0 0
    %1775 = vmatprep.subr.bf16.mxu0 0
    %1776 = vmatpush1.bf16.msra.mxu0 0
    %1777 = vmatprep.subr.bf16.mxu0 0
    %1778 = vmatpush1.bf16.msra.mxu0 0
    %1779 = vmatprep.subr.bf16.mxu0 0
    %1780 = vmatpush1.bf16.msra.mxu0 0
    %1781 = vmatprep.subr.bf16.mxu0 0
    %1782 = vmatpush1.bf16.msra.mxu0 0
    %1783 = vmatprep.subr.bf16.mxu0 0
    %1784 = vmatpush1.bf16.msra.mxu0 0
    %1785 = vmatprep.subr.bf16.mxu0 0
    %1786 = vmatpush1.bf16.msra.mxu0 0
    %1787 = vmatprep.subr.bf16.mxu0 0
    %1788 = vmatpush1.bf16.msra.mxu0 0
    %1789 = vmatprep.subr.bf16.mxu0 0
    %1790 = vmatpush1.bf16.msra.mxu0 0
    %1791 = vmatprep.subr.bf16.mxu0 0
    %1792 = vmatpush1.bf16.msra.mxu0 0
    %1793 = vmatprep.subr.bf16.mxu0 0
    %1794 = vmatpush1.bf16.msra.mxu0 0
    %1795 = vmatprep.subr.bf16.mxu0 0
    %1796 = vmatpush1.bf16.msra.mxu0 0
    %1797 = vmatprep.subr.bf16.mxu0 0
    %1798 = vmatpush1.bf16.msra.mxu0 0
    %1799 = vmatprep.subr.bf16.mxu0 0
    %1800 = vmatpush1.bf16.msra.mxu0 0
    %1801 = vmatprep.mubr.bf16.mxu0 0
    %1802 = vmatmul.mubr.bf16.gmra.mrb[0].mxu0 %v1767
    %v1803 = vpop.f32.mrb[0].mxu0
    %v1804 = vadd.f32 0.0, %v1803
    %v1805 = vpop.f32.mrb[0].mxu0
    %v1806 = vpop.f32.mrb[0].mxu0
    %v1807 = vpop.f32.mrb[0].mxu0
    %1808 = vdwg.mxu0
    %1810 = vrot.lane.b32.xlu0 %v1706, 96
    %v1811 = vpop.permute.xlu0 %1810
    %1814 = vrot.lane.b32.xlu0 %v1804, 32
    %v1815 = vpop.permute.xlu0 %1814
    %v1817 = vsel %vm343, %v1811, %v1815
    %v1818 = vpack.c.bf16 %v1817, %v1817
    %v1820 = vsel %vm143, %v1818, 0
    %1822 = vmatprep.subr.bf16.mxu0 0
    %1823 = vmatpush1.bf16.msra.mxu0 %v1455
    %1824 = vmatprep.subr.bf16.mxu0 0
    %1825 = vmatpush1.bf16.msra.mxu0 %v1456
    %1826 = vmatprep.subr.bf16.mxu0 0
    %1827 = vmatpush1.bf16.msra.mxu0 %v1457
    %1828 = vmatprep.subr.bf16.mxu0 0
    %1829 = vmatpush1.bf16.msra.mxu0 %v1458
    %1830 = vmatprep.subr.bf16.mxu0 0
    %1831 = vmatpush1.bf16.msra.mxu0 0
    %1832 = vmatprep.subr.bf16.mxu0 0
    %1833 = vmatpush1.bf16.msra.mxu0 0
    %1834 = vmatprep.subr.bf16.mxu0 0
    %1835 = vmatpush1.bf16.msra.mxu0 0
    %1836 = vmatprep.subr.bf16.mxu0 0
    %1837 = vmatpush1.bf16.msra.mxu0 0
    %1838 = vmatprep.subr.bf16.mxu0 0
    %1839 = vmatpush1.bf16.msra.mxu0 0
    %1840 = vmatprep.subr.bf16.mxu0 0
    %1841 = vmatpush1.bf16.msra.mxu0 0
    %1842 = vmatprep.subr.bf16.mxu0 0
    %1843 = vmatpush1.bf16.msra.mxu0 0
    %1844 = vmatprep.subr.bf16.mxu0 0
    %1845 = vmatpush1.bf16.msra.mxu0 0
    %1846 = vmatprep.subr.bf16.mxu0 0
    %1847 = vmatpush1.bf16.msra.mxu0 0
    %1848 = vmatprep.subr.bf16.mxu0 0
    %1849 = vmatpush1.bf16.msra.mxu0 0
    %1850 = vmatprep.subr.bf16.mxu0 0
    %1851 = vmatpush1.bf16.msra.mxu0 0
    %1852 = vmatprep.subr.bf16.mxu0 0
    %1853 = vmatpush1.bf16.msra.mxu0 0
    %1854 = vmatprep.mubr.bf16.mxu0 0
    %1855 = vmatmul.mubr.bf16.gmra.mrb[0].mxu0 %v1820
    %v1856 = vpop.f32.mrb[0].mxu0
    %v1857 = vadd.f32 %v91, %v1856
    %v1858 = vpop.f32.mrb[0].mxu0
    %v1859 = vpop.f32.mrb[0].mxu0
    %v1860 = vpop.f32.mrb[0].mxu0
    %1861 = vdwg.mxu0
    %v1862 = vtanh.pop %v1857
    %v1863 = vpack.c.bf16 %v1862, %v1862
    %v1865 = vsel %vm343, %v1863, 0
    %1867 = vmatprep.subr.bf16.mxu0 0
    %1868 = vmatpush1.bf16.msra.mxu0 %v1516
    %1869 = vmatprep.subr.bf16.mxu0 0
    %1870 = vmatpush1.bf16.msra.mxu0 %v1517
    %1871 = vmatprep.subr.bf16.mxu0 0
    %1872 = vmatpush1.bf16.msra.mxu0 0
    %1873 = vmatprep.subr.bf16.mxu0 0
    %1874 = vmatpush1.bf16.msra.mxu0 0
    %1875 = vmatprep.subr.bf16.mxu0 0
    %1876 = vmatpush1.bf16.msra.mxu0 0
    %1877 = vmatprep.subr.bf16.mxu0 0
    %1878 = vmatpush1.bf16.msra.mxu0 0
    %1879 = vmatprep.subr.bf16.mxu0 0
    %1880 = vmatpush1.bf16.msra.mxu0 0
    %1881 = vmatprep.subr.bf16.mxu0 0
    %1882 = vmatpush1.bf16.msra.mxu0 0
    %1883 = vmatprep.subr.bf16.mxu0 0
    %1884 = vmatpush1.bf16.msra.mxu0 0
    %1885 = vmatprep.subr.bf16.mxu0 0
    %1886 = vmatpush1.bf16.msra.mxu0 0
    %1887 = vmatprep.subr.bf16.mxu0 0
    %1888 = vmatpush1.bf16.msra.mxu0 0
    %1889 = vmatprep.subr.bf16.mxu0 0
    %1890 = vmatpush1.bf16.msra.mxu0 0
    %1891 = vmatprep.subr.bf16.mxu0 0
    %1892 = vmatpush1.bf16.msra.mxu0 0
    %1893 = vmatprep.subr.bf16.mxu0 0
    %1894 = vmatpush1.bf16.msra.mxu0 0
    %1895 = vmatprep.subr.bf16.mxu0 0
    %1896 = vmatpush1.bf16.msra.mxu0 0
    %1897 = vmatprep.subr.bf16.mxu0 0
    %1898 = vmatpush1.bf16.msra.mxu0 0
    %1899 = vmatprep.mubr.bf16.mxu0 0
    %1900 = vmatmul.mubr.bf16.gmra.mrb[0].mxu0 %v1865
    %v1901 = vpop.f32.mrb[0].mxu0
    %v1902 = vadd.f32 %v92, %v1901
    %v1903 = vpop.f32.mrb[0].mxu0
    %v1904 = vpop.f32.mrb[0].mxu0
    %v1905 = vpop.f32.mrb[0].mxu0
    %1906 = vdwg.mxu0
    %v1907 = vsel %vm1563, %v1902, -inf
    %1908 = vmax.xlane.f32.xlu0 %v1907
    %v1909 = vpop.xlane.xlu0 %1908
    %vm1910 = vcmp.eq.f32.partialorder %v1902, %v1909
    %v1911 = vsel %vm1910, %v94, 64
    %v1912 = vsel %vm1563, %v1911, 2147483647
    %v1913 = vand.u32 %v1912, 65535
    %v1914 = vshra.s32 %v1912, 16
    %v1915 = vcvt.s32.f32 %v1913
    %v1916 = vcvt.s32.f32 %v1914
    %1917 = vmin.xlane.f32.xlu0 %v1916
    %v1918 = vpop.xlane.xlu0 %1917
    %vm1919 = vcmp.eq.f32.partialorder %v1916, %v1918
    %v1920 = vsel %vm1919, %v1915, inf
    %1921 = vmin.xlane.f32.xlu0 %v1920
    %v1922 = vpop.xlane.xlu0 %1921
    %v1923 = vcvt.f32.s32 %v1922
    %v1924 = vcvt.f32.s32 %v1918
    %v1925 = vshll.u32 %v1924, 16
    %v1926 = vadd.s32 %v1925, %v1923
    %v1927 = vsub.f32 %v1902, %v1909
    %v1928 = vmul.f32 %v1927, 1.442695
    %v1929 = vpow.pop %v1928
    %v1930 = vsel %vm1563, %v1929, 0.0
    %1931 = vadd.xlane.f32.xlu0 %v1930
    %v1932 = vpop.xlane.xlu0 %1931
    %v1933 = vrcp.pop %v1932
    %v1934 = vmul.f32 1.0, %v1933
    %vm1935 = vcmask 8200
    %1936 = vst.msk [vmem:[#allocation7] sm:$0x1] %vm1935, %v1926
    %1937 = vst.msk [vmem:[#allocation8] sm:$0x1] %vm1935, %v1934
    %v1938 = vsel %vm1910, 1, 0
    %v1939 = vcvt.s32.f32 %v1938
    %v1940 = vpack.c.bf16 %v1939, %v1939
    %1941 = vmatprep.subr.bf16.mxu0 0
    %1942 = vmatpush1.bf16.msra.mxu0 %v1179
    %1943 = vmatprep.subr.bf16.mxu0 0
    %1944 = vmatpush1.bf16.msra.mxu0 %v1180
    %1945 = vmatprep.subr.bf16.mxu0 0
    %1946 = vmatpush1.bf16.msra.mxu0 0
    %1947 = vmatprep.subr.bf16.mxu0 0
    %1948 = vmatpush1.bf16.msra.mxu0 0
    %1949 = vmatprep.subr.bf16.mxu0 0
    %1950 = vmatpush1.bf16.msra.mxu0 0
    %1951 = vmatprep.subr.bf16.mxu0 0
    %1952 = vmatpush1.bf16.msra.mxu0 0
    %1953 = vmatprep.subr.bf16.mxu0 0
    %1954 = vmatpush1.bf16.msra.mxu0 0
    %1955 = vmatprep.subr.bf16.mxu0 0
    %1956 = vmatpush1.bf16.msra.mxu0 0
    %1957 = vmatprep.subr.bf16.mxu0 0
    %1958 = vmatpush1.bf16.msra.mxu0 0
    %1959 = vmatprep.subr.bf16.mxu0 0
    %1960 = vmatpush1.bf16.msra.mxu0 0
    %1961 = vmatprep.subr.bf16.mxu0 0
    %1962 = vmatpush1.bf16.msra.mxu0 0
    %1963 = vmatprep.subr.bf16.mxu0 0
    %1964 = vmatpush1.bf16.msra.mxu0 0
    %1965 = vmatprep.subr.bf16.mxu0 0
    %1966 = vmatpush1.bf16.msra.mxu0 0
    %1967 = vmatprep.subr.bf16.mxu0 0
    %1968 = vmatpush1.bf16.msra.mxu0 0
    %1969 = vmatprep.subr.bf16.mxu0 0
    %1970 = vmatpush1.bf16.msra.mxu0 0
    %1971 = vmatprep.subr.bf16.mxu0 0
    %1972 = vmatpush1.bf16.msra.mxu0 0
    %1973 = vmatprep.mubr.bf16.mxu0 0
    %1974 = vmatmul.mubr.bf16.gmra.mrb[0].mxu0 %v1712
    %v1975 = vpop.f32.mrb[0].mxu0
    %v1976 = vadd.f32 0.0, %v1975
    %v1977 = vpop.f32.mrb[0].mxu0
    %v1978 = vpop.f32.mrb[0].mxu0
    %v1979 = vpop.f32.mrb[0].mxu0
    %1980 = vdwg.mxu0
    %v1982 = vsel %vm143, %v1940, 0
    %1984 = vmatprep.subr.bf16.mxu0 0
    %1985 = vmatpush1.bf16.msra.mxu0 %v1242
    %1986 = vmatprep.subr.bf16.mxu0 0
    %1987 = vmatpush1.bf16.msra.mxu0 %v1243
    %1988 = vmatprep.subr.bf16.mxu0 0
    %1989 = vmatpush1.bf16.msra.mxu0 %v1244
    %1990 = vmatprep.subr.bf16.mxu0 0
    %1991 = vmatpush1.bf16.msra.mxu0 %v1245
    %1992 = vmatprep.subr.bf16.mxu0 0
    %1993 = vmatpush1.bf16.msra.mxu0 0
    %1994 = vmatprep.subr.bf16.mxu0 0
    %1995 = vmatpush1.bf16.msra.mxu0 0
    %1996 = vmatprep.subr.bf16.mxu0 0
    %1997 = vmatpush1.bf16.msra.mxu0 0
    %1998 = vmatprep.subr.bf16.mxu0 0
    %1999 = vmatpush1.bf16.msra.mxu0 0
    %2000 = vmatprep.subr.bf16.mxu0 0
    %2001 = vmatpush1.bf16.msra.mxu0 0
    %2002 = vmatprep.subr.bf16.mxu0 0
    %2003 = vmatpush1.bf16.msra.mxu0 0
    %2004 = vmatprep.subr.bf16.mxu0 0
    %2005 = vmatpush1.bf16.msra.mxu0 0
    %2006 = vmatprep.subr.bf16.mxu0 0
    %2007 = vmatpush1.bf16.msra.mxu0 0
    %2008 = vmatprep.subr.bf16.mxu0 0
    %2009 = vmatpush1.bf16.msra.mxu0 0
    %2010 = vmatprep.subr.bf16.mxu0 0
    %2011 = vmatpush1.bf16.msra.mxu0 0
    %2012 = vmatprep.subr.bf16.mxu0 0
    %2013 = vmatpush1.bf16.msra.mxu0 0
    %2014 = vmatprep.subr.bf16.mxu0 0
    %2015 = vmatpush1.bf16.msra.mxu0 0
    %2016 = vmatprep.mubr.bf16.mxu0 0
    %2017 = vmatmul.mubr.bf16.gmra.mrb[0].mxu0 %v1982
    %v2018 = vpop.f32.mrb[0].mxu0
    %v2019 = vadd.f32 %v1976, %v2018
    %v2020 = vpop.f32.mrb[0].mxu0
    %v2021 = vpop.f32.mrb[0].mxu0
    %v2022 = vpop.f32.mrb[0].mxu0
    %2023 = vdwg.mxu0
    %v2024 = vadd.f32 %v2019, %v90
    %v2025 = vxor.u32 %v2024, 2147483648
    %v2026 = vmul.f32 %v2025, 1.442695
    %v2027 = vpow.pop %v2026
    %v2028 = vadd.f32 %v2027, 1.0
    %v2029 = vrcp.pop %v2028
    %v2030 = vmul.f32 1.0, %v2029
    %2032 = vrot.lane.b32.xlu0 %v2024, 32
    %v2033 = vpop.permute.xlu0 %2032
    %v2035 = vmul.f32 %v2030, %v2033
    %2037 = vrot.lane.b32.xlu0 %v2035, 64
    %v2038 = vpop.permute.xlu0 %2037
    %v2040 = vadd.f32 %v2024, %v2038
    %v2041 = vtanh.pop %v2040
    %v2042 = vsub.f32 1.0, %v2030
    %2044 = vrot.lane.b32.xlu0 %v2041, 96
    %v2045 = vpop.permute.xlu0 %2044
    %v2047 = vmul.f32 %v2042, %v2045
    %v2048 = vmul.f32 %v2030, %v1706
    %v2049 = vadd.f32 %v2047, %v2048
    %v2050 = vpack.c.bf16 %v2049, %v2049
    %2052 = vrot.lane.b32.xlu0 %v2050, 96
    %v2053 = vpop.permute.xlu0 %2052
    %v2055 = vsel %vm343, %v2053, 0
    %2057 = vmatprep.subr.bf16.mxu0 0
    %2058 = vmatpush1.bf16.msra.mxu0 %v1161
    %2059 = vmatprep.subr.bf16.mxu0 0
    %2060 = vmatpush1.bf16.msra.mxu0 %v1162
    %2061 = vmatprep.subr.bf16.mxu0 0
    %2062 = vmatpush1.bf16.msra.mxu0 0
    %2063 = vmatprep.subr.bf16.mxu0 0
    %2064 = vmatpush1.bf16.msra.mxu0 0
    %2065 = vmatprep.subr.bf16.mxu0 0
    %2066 = vmatpush1.bf16.msra.mxu0 0
    %2067 = vmatprep.subr.bf16.mxu0 0
    %2068 = vmatpush1.bf16.msra.mxu0 0
    %2069 = vmatprep.subr.bf16.mxu0 0
    %2070 = vmatpush1.bf16.msra.mxu0 0
    %2071 = vmatprep.subr.bf16.mxu0 0
    %2072 = vmatpush1.bf16.msra.mxu0 0
    %2073 = vmatprep.subr.bf16.mxu0 0
    %2074 = vmatpush1.bf16.msra.mxu0 0
    %2075 = vmatprep.subr.bf16.mxu0 0
    %2076 = vmatpush1.bf16.msra.mxu0 0
    %2077 = vmatprep.subr.bf16.mxu0 0
    %2078 = vmatpush1.bf16.msra.mxu0 0
    %2079 = vmatprep.subr.bf16.mxu0 0
    %2080 = vmatpush1.bf16.msra.mxu0 0
    %2081 = vmatprep.subr.bf16.mxu0 0
    %2082 = vmatpush1.bf16.msra.mxu0 0
    %2083 = vmatprep.subr.bf16.mxu0 0
    %2084 = vmatpush1.bf16.msra.mxu0 0
    %2085 = vmatprep.subr.bf16.mxu0 0
    %2086 = vmatpush1.bf16.msra.mxu0 0
    %2087 = vmatprep.subr.bf16.mxu0 0
    %2088 = vmatpush1.bf16.msra.mxu0 0
    %2089 = vmatprep.mubr.bf16.mxu0 0
    %2090 = vmatmul.mubr.bf16.gmra.mrb[0].mxu0 %v2055
    %v2091 = vpop.f32.mrb[0].mxu0
    %v2092 = vadd.f32 0.0, %v2091
    %v2093 = vpop.f32.mrb[0].mxu0
    %v2094 = vpop.f32.mrb[0].mxu0
    %v2095 = vpop.f32.mrb[0].mxu0
    %2096 = vdwg.mxu0
    %v2097 = vsel %vm1366, %v2092, -inf
    %2098 = vmax.xlane.f32.xlu0 %v2097
    %v2099 = vpop.xlane.xlu0 %2098
    %v2100 = vsub.f32 %v2092, %v2099
    %v2101 = vmul.f32 %v2100, 1.442695
    %v2102 = vpow.pop %v2101
    %v2103 = vsel %vm1366, %v2102, 0.0
    %2104 = vadd.xlane.f32.xlu0 %v2103
    %v2105 = vpop.xlane.xlu0 %2104
    %v2106 = vrcp.pop %v2105
    %v2107 = vmul.f32 %v2102, %v2106
    %v2108 = vpack.c.bf16 %v2107, %v2107
    %v2110 = vsel %vm1382, %v2108, 0
    %2112 = vmatprep.subr.bf16.mxu0 0
    %2113 = vmatpush1.bf16.msra.mxu0 %v1387
    %2114 = vmatprep.subr.bf16.mxu0 0
    %2115 = vmatpush1.bf16.msra.mxu0 0
    %2116 = vmatprep.subr.bf16.mxu0 0
    %2117 = vmatpush1.bf16.msra.mxu0 0
    %2118 = vmatprep.subr.bf16.mxu0 0
    %2119 = vmatpush1.bf16.msra.mxu0 0
    %2120 = vmatprep.subr.bf16.mxu0 0
    %2121 = vmatpush1.bf16.msra.mxu0 0
    %2122 = vmatprep.subr.bf16.mxu0 0
    %2123 = vmatpush1.bf16.msra.mxu0 0
    %2124 = vmatprep.subr.bf16.mxu0 0
    %2125 = vmatpush1.bf16.msra.mxu0 0
    %2126 = vmatprep.subr.bf16.mxu0 0
    %2127 = vmatpush1.bf16.msra.mxu0 0
    %2128 = vmatprep.subr.bf16.mxu0 0
    %2129 = vmatpush1.bf16.msra.mxu0 0
    %2130 = vmatprep.subr.bf16.mxu0 0
    %2131 = vmatpush1.bf16.msra.mxu0 0
    %2132 = vmatprep.subr.bf16.mxu0 0
    %2133 = vmatpush1.bf16.msra.mxu0 0
    %2134 = vmatprep.subr.bf16.mxu0 0
    %2135 = vmatpush1.bf16.msra.mxu0 0
    %2136 = vmatprep.subr.bf16.mxu0 0
    %2137 = vmatpush1.bf16.msra.mxu0 0
    %2138 = vmatprep.subr.bf16.mxu0 0
    %2139 = vmatpush1.bf16.msra.mxu0 0
    %2140 = vmatprep.subr.bf16.mxu0 0
    %2141 = vmatpush1.bf16.msra.mxu0 0
    %2142 = vmatprep.subr.bf16.mxu0 0
    %2143 = vmatpush1.bf16.msra.mxu0 0
    %2144 = vmatprep.mubr.bf16.mxu0 0
    %2145 = vmatmul.mubr.bf16.gmra.mrb[0].mxu0 %v2110
    %v2146 = vpop.f32.mrb[0].mxu0
    %v2147 = vadd.f32 0.0, %v2146
    %v2148 = vpop.f32.mrb[0].mxu0
    %v2149 = vpop.f32.mrb[0].mxu0
    %v2150 = vpop.f32.mrb[0].mxu0
    %2151 = vdwg.mxu0
    %2153 = vrot.lane.b32.xlu0 %v2049, 96
    %v2154 = vpop.permute.xlu0 %2153
    %2157 = vrot.lane.b32.xlu0 %v2147, 32
    %v2158 = vpop.permute.xlu0 %2157
    %v2160 = vsel %vm343, %v2154, %v2158
    %v2161 = vpack.c.bf16 %v2160, %v2160
    %v2163 = vsel %vm143, %v2161, 0
    %2165 = vmatprep.subr.bf16.mxu0 0
    %2166 = vmatpush1.bf16.msra.mxu0 %v1455
    %2167 = vmatprep.subr.bf16.mxu0 0
    %2168 = vmatpush1.bf16.msra.mxu0 %v1456
    %2169 = vmatprep.subr.bf16.mxu0 0
    %2170 = vmatpush1.bf16.msra.mxu0 %v1457
    %2171 = vmatprep.subr.bf16.mxu0 0
    %2172 = vmatpush1.bf16.msra.mxu0 %v1458
    %2173 = vmatprep.subr.bf16.mxu0 0
    %2174 = vmatpush1.bf16.msra.mxu0 0
    %2175 = vmatprep.subr.bf16.mxu0 0
    %2176 = vmatpush1.bf16.msra.mxu0 0
    %2177 = vmatprep.subr.bf16.mxu0 0
    %2178 = vmatpush1.bf16.msra.mxu0 0
    %2179 = vmatprep.subr.bf16.mxu0 0
    %2180 = vmatpush1.bf16.msra.mxu0 0
    %2181 = vmatprep.subr.bf16.mxu0 0
    %2182 = vmatpush1.bf16.msra.mxu0 0
    %2183 = vmatprep.subr.bf16.mxu0 0
    %2184 = vmatpush1.bf16.msra.mxu0 0
    %2185 = vmatprep.subr.bf16.mxu0 0
    %2186 = vmatpush1.bf16.msra.mxu0 0
    %2187 = vmatprep.subr.bf16.mxu0 0
    %2188 = vmatpush1.bf16.msra.mxu0 0
    %2189 = vmatprep.subr.bf16.mxu0 0
    %2190 = vmatpush1.bf16.msra.mxu0 0
    %2191 = vmatprep.subr.bf16.mxu0 0
    %2192 = vmatpush1.bf16.msra.mxu0 0
    %2193 = vmatprep.subr.bf16.mxu0 0
    %2194 = vmatpush1.bf16.msra.mxu0 0
    %2195 = vmatprep.subr.bf16.mxu0 0
    %2196 = vmatpush1.bf16.msra.mxu0 0
    %2197 = vmatprep.mubr.bf16.mxu0 0
    %2198 = vmatmul.mubr.bf16.gmra.mrb[0].mxu0 %v2163
    %v2199 = vpop.f32.mrb[0].mxu0
    %v2200 = vadd.f32 %v91, %v2199
    %v2201 = vpop.f32.mrb[0].mxu0
    %v2202 = vpop.f32.mrb[0].mxu0
    %v2203 = vpop.f32.mrb[0].mxu0
    %2204 = vdwg.mxu0
    %v2205 = vtanh.pop %v2200
    %v2206 = vpack.c.bf16 %v2205, %v2205
    %v2208 = vsel %vm343, %v2206, 0
    %2210 = vmatprep.subr.bf16.mxu0 0
    %2211 = vmatpush1.bf16.msra.mxu0 %v1516
    %2212 = vmatprep.subr.bf16.mxu0 0
    %2213 = vmatpush1.bf16.msra.mxu0 %v1517
    %2214 = vmatprep.subr.bf16.mxu0 0
    %2215 = vmatpush1.bf16.msra.mxu0 0
    %2216 = vmatprep.subr.bf16.mxu0 0
    %2217 = vmatpush1.bf16.msra.mxu0 0
    %2218 = vmatprep.subr.bf16.mxu0 0
    %2219 = vmatpush1.bf16.msra.mxu0 0
    %2220 = vmatprep.subr.bf16.mxu0 0
    %2221 = vmatpush1.bf16.msra.mxu0 0
    %2222 = vmatprep.subr.bf16.mxu0 0
    %2223 = vmatpush1.bf16.msra.mxu0 0
    %2224 = vmatprep.subr.bf16.mxu0 0
    %2225 = vmatpush1.bf16.msra.mxu0 0
    %2226 = vmatprep.subr.bf16.mxu0 0
    %2227 = vmatpush1.bf16.msra.mxu0 0
    %2228 = vmatprep.subr.bf16.mxu0 0
    %2229 = vmatpush1.bf16.msra.mxu0 0
    %2230 = vmatprep.subr.bf16.mxu0 0
    %2231 = vmatpush1.bf16.msra.mxu0 0
    %2232 = vmatprep.subr.bf16.mxu0 0
    %2233 = vmatpush1.bf16.msra.mxu0 0
    %2234 = vmatprep.subr.bf16.mxu0 0
    %2235 = vmatpush1.bf16.msra.mxu0 0
    %2236 = vmatprep.subr.bf16.mxu0 0
    %2237 = vmatpush1.bf16.msra.mxu0 0
    %2238 = vmatprep.subr.bf16.mxu0 0
    %2239 = vmatpush1.bf16.msra.mxu0 0
    %2240 = vmatprep.subr.bf16.mxu0 0
    %2241 = vmatpush1.bf16.msra.mxu0 0
    %2242 = vmatprep.mubr.bf16.mxu0 0
    %2243 = vmatmul.mubr.bf16.gmra.mrb[0].mxu0 %v2208
    %v2244 = vpop.f32.mrb[0].mxu0
    %v2245 = vadd.f32 %v92, %v2244
    %v2246 = vpop.f32.mrb[0].mxu0
    %v2247 = vpop.f32.mrb[0].mxu0
    %v2248 = vpop.f32.mrb[0].mxu0
    %2249 = vdwg.mxu0
    %v2250 = vsel %vm1563, %v2245, -inf
    %2251 = vmax.xlane.f32.xlu0 %v2250
    %v2252 = vpop.xlane.xlu0 %2251
    %vm2253 = vcmp.eq.f32.partialorder %v2245, %v2252
    %v2254 = vsel %vm2253, %v94, 64
    %v2255 = vsel %vm1563, %v2254, 2147483647
    %v2256 = vand.u32 %v2255, 65535
    %v2257 = vshra.s32 %v2255, 16
    %v2258 = vcvt.s32.f32 %v2256
    %v2259 = vcvt.s32.f32 %v2257
    %2260 = vmin.xlane.f32.xlu0 %v2259
    %v2261 = vpop.xlane.xlu0 %2260
    %vm2262 = vcmp.eq.f32.partialorder %v2259, %v2261
    %v2263 = vsel %vm2262, %v2258, inf
    %2264 = vmin.xlane.f32.xlu0 %v2263
    %v2265 = vpop.xlane.xlu0 %2264
    %v2266 = vcvt.f32.s32 %v2265
    %v2267 = vcvt.f32.s32 %v2261
    %v2268 = vshll.u32 %v2267, 16
    %v2269 = vadd.s32 %v2268, %v2266
    %v2270 = vsub.f32 %v2245, %v2252
    %v2271 = vmul.f32 %v2270, 1.442695
    %v2272 = vpow.pop %v2271
    %v2273 = vsel %vm1563, %v2272, 0.0
    %2274 = vadd.xlane.f32.xlu0 %v2273
    %v2275 = vpop.xlane.xlu0 %2274
    %v2276 = vrcp.pop %v2275
    %v2277 = vmul.f32 1.0, %v2276
    %vm2278 = vcmask 16400
    %2279 = vst.msk [vmem:[#allocation7] sm:$0x1] %vm2278, %v2269
    %2280 = vst.msk [vmem:[#allocation8] sm:$0x1] %vm2278, %v2277
    %v2281 = vsel %vm2253, 1, 0
    %v2282 = vcvt.s32.f32 %v2281
    %v2283 = vpack.c.bf16 %v2282, %v2282
    %2284 = vmatprep.subr.bf16.mxu0 0
    %2285 = vmatpush1.bf16.msra.mxu0 %v1179
    %2286 = vmatprep.subr.bf16.mxu0 0
    %2287 = vmatpush1.bf16.msra.mxu0 %v1180
    %2288 = vmatprep.subr.bf16.mxu0 0
    %2289 = vmatpush1.bf16.msra.mxu0 0
    %2290 = vmatprep.subr.bf16.mxu0 0
    %2291 = vmatpush1.bf16.msra.mxu0 0
    %2292 = vmatprep.subr.bf16.mxu0 0
    %2293 = vmatpush1.bf16.msra.mxu0 0
    %2294 = vmatprep.subr.bf16.mxu0 0
    %2295 = vmatpush1.bf16.msra.mxu0 0
    %2296 = vmatprep.subr.bf16.mxu0 0
    %2297 = vmatpush1.bf16.msra.mxu0 0
    %2298 = vmatprep.subr.bf16.mxu0 0
    %2299 = vmatpush1.bf16.msra.mxu0 0
    %2300 = vmatprep.subr.bf16.mxu0 0
    %2301 = vmatpush1.bf16.msra.mxu0 0
    %2302 = vmatprep.subr.bf16.mxu0 0
    %2303 = vmatpush1.bf16.msra.mxu0 0
    %2304 = vmatprep.subr.bf16.mxu0 0
    %2305 = vmatpush1.bf16.msra.mxu0 0
    %2306 = vmatprep.subr.bf16.mxu0 0
    %2307 = vmatpush1.bf16.msra.mxu0 0
    %2308 = vmatprep.subr.bf16.mxu0 0
    %2309 = vmatpush1.bf16.msra.mxu0 0
    %2310 = vmatprep.subr.bf16.mxu0 0
    %2311 = vmatpush1.bf16.msra.mxu0 0
    %2312 = vmatprep.subr.bf16.mxu0 0
    %2313 = vmatpush1.bf16.msra.mxu0 0
    %2314 = vmatprep.subr.bf16.mxu0 0
    %2315 = vmatpush1.bf16.msra.mxu0 0
    %2316 = vmatprep.mubr.bf16.mxu0 0
    %2317 = vmatmul.mubr.bf16.gmra.mrb[0].mxu0 %v2055
    %v2318 = vpop.f32.mrb[0].mxu0
    %v2319 = vadd.f32 0.0, %v2318
    %v2320 = vpop.f32.mrb[0].mxu0
    %v2321 = vpop.f32.mrb[0].mxu0
    %v2322 = vpop.f32.mrb[0].mxu0
    %2323 = vdwg.mxu0
    %v2325 = vsel %vm143, %v2283, 0
    %2327 = vmatprep.subr.bf16.mxu0 0
    %2328 = vmatpush1.bf16.msra.mxu0 %v1242
    %2329 = vmatprep.subr.bf16.mxu0 0
    %2330 = vmatpush1.bf16.msra.mxu0 %v1243
    %2331 = vmatprep.subr.bf16.mxu0 0
    %2332 = vmatpush1.bf16.msra.mxu0 %v1244
    %2333 = vmatprep.subr.bf16.mxu0 0
    %2334 = vmatpush1.bf16.msra.mxu0 %v1245
    %2335 = vmatprep.subr.bf16.mxu0 0
    %2336 = vmatpush1.bf16.msra.mxu0 0
    %2337 = vmatprep.subr.bf16.mxu0 0
    %2338 = vmatpush1.bf16.msra.mxu0 0
    %2339 = vmatprep.subr.bf16.mxu0 0
    %2340 = vmatpush1.bf16.msra.mxu0 0
    %2341 = vmatprep.subr.bf16.mxu0 0
    %2342 = vmatpush1.bf16.msra.mxu0 0
    %2343 = vmatprep.subr.bf16.mxu0 0
    %2344 = vmatpush1.bf16.msra.mxu0 0
    %2345 = vmatprep.subr.bf16.mxu0 0
    %2346 = vmatpush1.bf16.msra.mxu0 0
    %2347 = vmatprep.subr.bf16.mxu0 0
    %2348 = vmatpush1.bf16.msra.mxu0 0
    %2349 = vmatprep.subr.bf16.mxu0 0
    %2350 = vmatpush1.bf16.msra.mxu0 0
    %2351 = vmatprep.subr.bf16.mxu0 0
    %2352 = vmatpush1.bf16.msra.mxu0 0
    %2353 = vmatprep.subr.bf16.mxu0 0
    %2354 = vmatpush1.bf16.msra.mxu0 0
    %2355 = vmatprep.subr.bf16.mxu0 0
    %2356 = vmatpush1.bf16.msra.mxu0 0
    %2357 = vmatprep.subr.bf16.mxu0 0
    %2358 = vmatpush1.bf16.msra.mxu0 0
    %2359 = vmatprep.mubr.bf16.mxu0 0
    %2360 = vmatmul.mubr.bf16.gmra.mrb[0].mxu0 %v2325
    %v2361 = vpop.f32.mrb[0].mxu0
    %v2362 = vadd.f32 %v2319, %v2361
    %v2363 = vpop.f32.mrb[0].mxu0
    %v2364 = vpop.f32.mrb[0].mxu0
    %v2365 = vpop.f32.mrb[0].mxu0
    %2366 = vdwg.mxu0
    %v2367 = vadd.f32 %v2362, %v90
    %v2368 = vxor.u32 %v2367, 2147483648
    %v2369 = vmul.f32 %v2368, 1.442695
    %v2370 = vpow.pop %v2369
    %v2371 = vadd.f32 %v2370, 1.0
    %v2372 = vrcp.pop %v2371
    %v2373 = vmul.f32 1.0, %v2372
    %2375 = vrot.lane.b32.xlu0 %v2367, 32
    %v2376 = vpop.permute.xlu0 %2375
    %v2378 = vmul.f32 %v2373, %v2376
    %2380 = vrot.lane.b32.xlu0 %v2378, 64
    %v2381 = vpop.permute.xlu0 %2380
    %v2383 = vadd.f32 %v2367, %v2381
    %v2384 = vtanh.pop %v2383
    %v2385 = vsub.f32 1.0, %v2373
    %2387 = vrot.lane.b32.xlu0 %v2384, 96
    %v2388 = vpop.permute.xlu0 %2387
    %v2390 = vmul.f32 %v2385, %v2388
    %v2391 = vmul.f32 %v2373, %v2049
    %v2392 = vadd.f32 %v2390, %v2391
    %v2393 = vpack.c.bf16 %v2392, %v2392
    %2395 = vrot.lane.b32.xlu0 %v2393, 96
    %v2396 = vpop.permute.xlu0 %2395
    %v2398 = vsel %vm343, %v2396, 0
    %2400 = vmatprep.subr.bf16.mxu0 0
    %2401 = vmatpush1.bf16.msra.mxu0 %v1161
    %2402 = vmatprep.subr.bf16.mxu0 0
    %2403 = vmatpush1.bf16.msra.mxu0 %v1162
    %2404 = vmatprep.subr.bf16.mxu0 0
    %2405 = vmatpush1.bf16.msra.mxu0 0
    %2406 = vmatprep.subr.bf16.mxu0 0
    %2407 = vmatpush1.bf16.msra.mxu0 0
    %2408 = vmatprep.subr.bf16.mxu0 0
    %2409 = vmatpush1.bf16.msra.mxu0 0
    %2410 = vmatprep.subr.bf16.mxu0 0
    %2411 = vmatpush1.bf16.msra.mxu0 0
    %2412 = vmatprep.subr.bf16.mxu0 0
    %2413 = vmatpush1.bf16.msra.mxu0 0
    %2414 = vmatprep.subr.bf16.mxu0 0
    %2415 = vmatpush1.bf16.msra.mxu0 0
    %2416 = vmatprep.subr.bf16.mxu0 0
    %2417 = vmatpush1.bf16.msra.mxu0 0
    %2418 = vmatprep.subr.bf16.mxu0 0
    %2419 = vmatpush1.bf16.msra.mxu0 0
    %2420 = vmatprep.subr.bf16.mxu0 0
    %2421 = vmatpush1.bf16.msra.mxu0 0
    %2422 = vmatprep.subr.bf16.mxu0 0
    %2423 = vmatpush1.bf16.msra.mxu0 0
    %2424 = vmatprep.subr.bf16.mxu0 0
    %2425 = vmatpush1.bf16.msra.mxu0 0
    %2426 = vmatprep.subr.bf16.mxu0 0
    %2427 = vmatpush1.bf16.msra.mxu0 0
    %2428 = vmatprep.subr.bf16.mxu0 0
    %2429 = vmatpush1.bf16.msra.mxu0 0
    %2430 = vmatprep.subr.bf16.mxu0 0
    %2431 = vmatpush1.bf16.msra.mxu0 0
    %2432 = vmatprep.mubr.bf16.mxu0 0
    %2433 = vmatmul.mubr.bf16.gmra.mrb[0].mxu0 %v2398
    %v2434 = vpop.f32.mrb[0].mxu0
    %v2435 = vadd.f32 0.0, %v2434
    %v2436 = vpop.f32.mrb[0].mxu0
    %v2437 = vpop.f32.mrb[0].mxu0
    %v2438 = vpop.f32.mrb[0].mxu0
    %2439 = vdwg.mxu0
    %v2440 = vsel %vm1366, %v2435, -inf
    %2441 = vmax.xlane.f32.xlu0 %v2440
    %v2442 = vpop.xlane.xlu0 %2441
    %v2443 = vsub.f32 %v2435, %v2442
    %v2444 = vmul.f32 %v2443, 1.442695
    %v2445 = vpow.pop %v2444
    %v2446 = vsel %vm1366, %v2445, 0.0
    %2447 = vadd.xlane.f32.xlu0 %v2446
    %v2448 = vpop.xlane.xlu0 %2447
    %v2449 = vrcp.pop %v2448
    %v2450 = vmul.f32 %v2445, %v2449
    %v2451 = vpack.c.bf16 %v2450, %v2450
    %v2453 = vsel %vm1382, %v2451, 0
    %2455 = vmatprep.subr.bf16.mxu0 0
    %2456 = vmatpush1.bf16.msra.mxu0 %v1387
    %2457 = vmatprep.subr.bf16.mxu0 0
    %2458 = vmatpush1.bf16.msra.mxu0 0
    %2459 = vmatprep.subr.bf16.mxu0 0
    %2460 = vmatpush1.bf16.msra.mxu0 0
    %2461 = vmatprep.subr.bf16.mxu0 0
    %2462 = vmatpush1.bf16.msra.mxu0 0
    %2463 = vmatprep.subr.bf16.mxu0 0
    %2464 = vmatpush1.bf16.msra.mxu0 0
    %2465 = vmatprep.subr.bf16.mxu0 0
    %2466 = vmatpush1.bf16.msra.mxu0 0
    %2467 = vmatprep.subr.bf16.mxu0 0
    %2468 = vmatpush1.bf16.msra.mxu0 0
    %2469 = vmatprep.subr.bf16.mxu0 0
    %2470 = vmatpush1.bf16.msra.mxu0 0
    %2471 = vmatprep.subr.bf16.mxu0 0
    %2472 = vmatpush1.bf16.msra.mxu0 0
    %2473 = vmatprep.subr.bf16.mxu0 0
    %2474 = vmatpush1.bf16.msra.mxu0 0
    %2475 = vmatprep.subr.bf16.mxu0 0
    %2476 = vmatpush1.bf16.msra.mxu0 0
    %2477 = vmatprep.subr.bf16.mxu0 0
    %2478 = vmatpush1.bf16.msra.mxu0 0
    %2479 = vmatprep.subr.bf16.mxu0 0
    %2480 = vmatpush1.bf16.msra.mxu0 0
    %2481 = vmatprep.subr.bf16.mxu0 0
    %2482 = vmatpush1.bf16.msra.mxu0 0
    %2483 = vmatprep.subr.bf16.mxu0 0
    %2484 = vmatpush1.bf16.msra.mxu0 0
    %2485 = vmatprep.subr.bf16.mxu0 0
    %2486 = vmatpush1.bf16.msra.mxu0 0
    %2487 = vmatprep.mubr.bf16.mxu0 0
    %2488 = vmatmul.mubr.bf16.gmra.mrb[0].mxu0 %v2453
    %v2489 = vpop.f32.mrb[0].mxu0
    %v2490 = vadd.f32 0.0, %v2489
    %v2491 = vpop.f32.mrb[0].mxu0
    %v2492 = vpop.f32.mrb[0].mxu0
    %v2493 = vpop.f32.mrb[0].mxu0
    %2494 = vdwg.mxu0
    %2496 = vrot.lane.b32.xlu0 %v2392, 96
    %v2497 = vpop.permute.xlu0 %2496
    %2500 = vrot.lane.b32.xlu0 %v2490, 32
    %v2501 = vpop.permute.xlu0 %2500
    %v2503 = vsel %vm343, %v2497, %v2501
    %v2504 = vpack.c.bf16 %v2503, %v2503
    %v2506 = vsel %vm143, %v2504, 0
    %2508 = vmatprep.subr.bf16.mxu0 0
    %2509 = vmatpush1.bf16.msra.mxu0 %v1455
    %2510 = vmatprep.subr.bf16.mxu0 0
    %2511 = vmatpush1.bf16.msra.mxu0 %v1456
    %2512 = vmatprep.subr.bf16.mxu0 0
    %2513 = vmatpush1.bf16.msra.mxu0 %v1457
    %2514 = vmatprep.subr.bf16.mxu0 0
    %2515 = vmatpush1.bf16.msra.mxu0 %v1458
    %2516 = vmatprep.subr.bf16.mxu0 0
    %2517 = vmatpush1.bf16.msra.mxu0 0
    %2518 = vmatprep.subr.bf16.mxu0 0
    %2519 = vmatpush1.bf16.msra.mxu0 0
    %2520 = vmatprep.subr.bf16.mxu0 0
    %2521 = vmatpush1.bf16.msra.mxu0 0
    %2522 = vmatprep.subr.bf16.mxu0 0
    %2523 = vmatpush1.bf16.msra.mxu0 0
    %2524 = vmatprep.subr.bf16.mxu0 0
    %2525 = vmatpush1.bf16.msra.mxu0 0
    %2526 = vmatprep.subr.bf16.mxu0 0
    %2527 = vmatpush1.bf16.msra.mxu0 0
    %2528 = vmatprep.subr.bf16.mxu0 0
    %2529 = vmatpush1.bf16.msra.mxu0 0
    %2530 = vmatprep.subr.bf16.mxu0 0
    %2531 = vmatpush1.bf16.msra.mxu0 0
    %2532 = vmatprep.subr.bf16.mxu0 0
    %2533 = vmatpush1.bf16.msra.mxu0 0
    %2534 = vmatprep.subr.bf16.mxu0 0
    %2535 = vmatpush1.bf16.msra.mxu0 0
    %2536 = vmatprep.subr.bf16.mxu0 0
    %2537 = vmatpush1.bf16.msra.mxu0 0
    %2538 = vmatprep.subr.bf16.mxu0 0
    %2539 = vmatpush1.bf16.msra.mxu0 0
    %2540 = vmatprep.mubr.bf16.mxu0 0
    %2541 = vmatmul.mubr.bf16.gmra.mrb[0].mxu0 %v2506
    %v2542 = vpop.f32.mrb[0].mxu0
    %v2543 = vadd.f32 %v91, %v2542
    %v2544 = vpop.f32.mrb[0].mxu0
    %v2545 = vpop.f32.mrb[0].mxu0
    %v2546 = vpop.f32.mrb[0].mxu0
    %2547 = vdwg.mxu0
    %v2548 = vtanh.pop %v2543
    %v2549 = vpack.c.bf16 %v2548, %v2548
    %v2551 = vsel %vm343, %v2549, 0
    %2553 = vmatprep.subr.bf16.mxu0 0
    %2554 = vmatpush1.bf16.msra.mxu0 %v1516
    %2555 = vmatprep.subr.bf16.mxu0 0
    %2556 = vmatpush1.bf16.msra.mxu0 %v1517
    %2557 = vmatprep.subr.bf16.mxu0 0
    %2558 = vmatpush1.bf16.msra.mxu0 0
    %2559 = vmatprep.subr.bf16.mxu0 0
    %2560 = vmatpush1.bf16.msra.mxu0 0
    %2561 = vmatprep.subr.bf16.mxu0 0
    %2562 = vmatpush1.bf16.msra.mxu0 0
    %2563 = vmatprep.subr.bf16.mxu0 0
    %2564 = vmatpush1.bf16.msra.mxu0 0
    %2565 = vmatprep.subr.bf16.mxu0 0
    %2566 = vmatpush1.bf16.msra.mxu0 0
    %2567 = vmatprep.subr.bf16.mxu0 0
    %2568 = vmatpush1.bf16.msra.mxu0 0
    %2569 = vmatprep.subr.bf16.mxu0 0
    %2570 = vmatpush1.bf16.msra.mxu0 0
    %2571 = vmatprep.subr.bf16.mxu0 0
    %2572 = vmatpush1.bf16.msra.mxu0 0
    %2573 = vmatprep.subr.bf16.mxu0 0
    %2574 = vmatpush1.bf16.msra.mxu0 0
    %2575 = vmatprep.subr.bf16.mxu0 0
    %2576 = vmatpush1.bf16.msra.mxu0 0
    %2577 = vmatprep.subr.bf16.mxu0 0
    %2578 = vmatpush1.bf16.msra.mxu0 0
    %2579 = vmatprep.subr.bf16.mxu0 0
    %2580 = vmatpush1.bf16.msra.mxu0 0
    %2581 = vmatprep.subr.bf16.mxu0 0
    %2582 = vmatpush1.bf16.msra.mxu0 0
    %2583 = vmatprep.subr.bf16.mxu0 0
    %2584 = vmatpush1.bf16.msra.mxu0 0
    %2585 = vmatprep.mubr.bf16.mxu0 0
    %2586 = vmatmul.mubr.bf16.gmra.mrb[0].mxu0 %v2551
    %v2587 = vpop.f32.mrb[0].mxu0
    %v2588 = vadd.f32 %v92, %v2587
    %v2589 = vpop.f32.mrb[0].mxu0
    %v2590 = vpop.f32.mrb[0].mxu0
    %v2591 = vpop.f32.mrb[0].mxu0
    %2592 = vdwg.mxu0
    %v2593 = vsel %vm1563, %v2588, -inf
    %2594 = vmax.xlane.f32.xlu0 %v2593
    %v2595 = vpop.xlane.xlu0 %2594
    %vm2596 = vcmp.eq.f32.partialorder %v2588, %v2595
    %v2597 = vsel %vm2596, %v94, 64
    %v2598 = vsel %vm1563, %v2597, 2147483647
    %v2599 = vand.u32 %v2598, 65535
    %v2600 = vshra.s32 %v2598, 16
    %v2601 = vcvt.s32.f32 %v2599
    %v2602 = vcvt.s32.f32 %v2600
    %2603 = vmin.xlane.f32.xlu0 %v2602
    %v2604 = vpop.xlane.xlu0 %2603
    %vm2605 = vcmp.eq.f32.partialorder %v2602, %v2604
    %v2606 = vsel %vm2605, %v2601, inf
    %2607 = vmin.xlane.f32.xlu0 %v2606
    %v2608 = vpop.xlane.xlu0 %2607
    %v2609 = vcvt.f32.s32 %v2608
    %v2610 = vcvt.f32.s32 %v2604
    %v2611 = vshll.u32 %v2610, 16
    %v2612 = vadd.s32 %v2611, %v2609
    %v2613 = vsub.f32 %v2588, %v2595
    %v2614 = vmul.f32 %v2613, 1.442695
    %v2615 = vpow.pop %v2614
    %v2616 = vsel %vm1563, %v2615, 0.0
    %2617 = vadd.xlane.f32.xlu0 %v2616
    %v2618 = vpop.xlane.xlu0 %2617
    %v2619 = vrcp.pop %v2618
    %v2620 = vmul.f32 1.0, %v2619
    %vm2621 = vcmask 24600
    %2622 = vst.msk [vmem:[#allocation7] sm:$0x1] %vm2621, %v2612
    %2623 = vst.msk [vmem:[#allocation8] sm:$0x1] %vm2621, %v2620
    %v2624 = vsel %vm2596, 1, 0
    %v2625 = vcvt.s32.f32 %v2624
    %v2626 = vpack.c.bf16 %v2625, %v2625
    %2627 = vmatprep.subr.bf16.mxu0 0
    %2628 = vmatpush1.bf16.msra.mxu0 %v1179
    %2629 = vmatprep.subr.bf16.mxu0 0
    %2630 = vmatpush1.bf16.msra.mxu0 %v1180
    %2631 = vmatprep.subr.bf16.mxu0 0
    %2632 = vmatpush1.bf16.msra.mxu0 0
    %2633 = vmatprep.subr.bf16.mxu0 0
    %2634 = vmatpush1.bf16.msra.mxu0 0
    %2635 = vmatprep.subr.bf16.mxu0 0
    %2636 = vmatpush1.bf16.msra.mxu0 0
    %2637 = vmatprep.subr.bf16.mxu0 0
    %2638 = vmatpush1.bf16.msra.mxu0 0
    %2639 = vmatprep.subr.bf16.mxu0 0
    %2640 = vmatpush1.bf16.msra.mxu0 0
    %2641 = vmatprep.subr.bf16.mxu0 0
    %2642 = vmatpush1.bf16.msra.mxu0 0
    %2643 = vmatprep.subr.bf16.mxu0 0
    %2644 = vmatpush1.bf16.msra.mxu0 0
    %2645 = vmatprep.subr.bf16.mxu0 0
    %2646 = vmatpush1.bf16.msra.mxu0 0
    %2647 = vmatprep.subr.bf16.mxu0 0
    %2648 = vmatpush1.bf16.msra.mxu0 0
    %2649 = vmatprep.subr.bf16.mxu0 0
    %2650 = vmatpush1.bf16.msra.mxu0 0
    %2651 = vmatprep.subr.bf16.mxu0 0
    %2652 = vmatpush1.bf16.msra.mxu0 0
    %2653 = vmatprep.subr.bf16.mxu0 0
    %2654 = vmatpush1.bf16.msra.mxu0 0
    %2655 = vmatprep.subr.bf16.mxu0 0
    %2656 = vmatpush1.bf16.msra.mxu0 0
    %2657 = vmatprep.subr.bf16.mxu0 0
    %2658 = vmatpush1.bf16.msra.mxu0 0
    %2659 = vmatprep.mubr.bf16.mxu0 0
    %2660 = vmatmul.mubr.bf16.gmra.mrb[0].mxu0 %v2398
    %v2661 = vpop.f32.mrb[0].mxu0
    %v2662 = vadd.f32 0.0, %v2661
    %v2663 = vpop.f32.mrb[0].mxu0
    %v2664 = vpop.f32.mrb[0].mxu0
    %v2665 = vpop.f32.mrb[0].mxu0
    %2666 = vdwg.mxu0
    %v2668 = vsel %vm143, %v2626, 0
    %2670 = vmatprep.subr.bf16.mxu0 0
    %2671 = vmatpush1.bf16.msra.mxu0 %v1242
    %2672 = vmatprep.subr.bf16.mxu0 0
    %2673 = vmatpush1.bf16.msra.mxu0 %v1243
    %2674 = vmatprep.subr.bf16.mxu0 0
    %2675 = vmatpush1.bf16.msra.mxu0 %v1244
    %2676 = vmatprep.subr.bf16.mxu0 0
    %2677 = vmatpush1.bf16.msra.mxu0 %v1245
    %2678 = vmatprep.subr.bf16.mxu0 0
    %2679 = vmatpush1.bf16.msra.mxu0 0
    %2680 = vmatprep.subr.bf16.mxu0 0
    %2681 = vmatpush1.bf16.msra.mxu0 0
    %2682 = vmatprep.subr.bf16.mxu0 0
    %2683 = vmatpush1.bf16.msra.mxu0 0
    %2684 = vmatprep.subr.bf16.mxu0 0
    %2685 = vmatpush1.bf16.msra.mxu0 0
    %2686 = vmatprep.subr.bf16.mxu0 0
    %2687 = vmatpush1.bf16.msra.mxu0 0
    %2688 = vmatprep.subr.bf16.mxu0 0
    %2689 = vmatpush1.bf16.msra.mxu0 0
    %2690 = vmatprep.subr.bf16.mxu0 0
    %2691 = vmatpush1.bf16.msra.mxu0 0
    %2692 = vmatprep.subr.bf16.mxu0 0
    %2693 = vmatpush1.bf16.msra.mxu0 0
    %2694 = vmatprep.subr.bf16.mxu0 0
    %2695 = vmatpush1.bf16.msra.mxu0 0
    %2696 = vmatprep.subr.bf16.mxu0 0
    %2697 = vmatpush1.bf16.msra.mxu0 0
    %2698 = vmatprep.subr.bf16.mxu0 0
    %2699 = vmatpush1.bf16.msra.mxu0 0
    %2700 = vmatprep.subr.bf16.mxu0 0
    %2701 = vmatpush1.bf16.msra.mxu0 0
    %2702 = vmatprep.mubr.bf16.mxu0 0
    %2703 = vmatmul.mubr.bf16.gmra.mrb[0].mxu0 %v2668
    %v2704 = vpop.f32.mrb[0].mxu0
    %v2705 = vadd.f32 %v2662, %v2704
    %v2706 = vpop.f32.mrb[0].mxu0
    %v2707 = vpop.f32.mrb[0].mxu0
    %v2708 = vpop.f32.mrb[0].mxu0
    %2709 = vdwg.mxu0
    %v2710 = vadd.f32 %v2705, %v90
    %v2711 = vxor.u32 %v2710, 2147483648
    %v2712 = vmul.f32 %v2711, 1.442695
    %v2713 = vpow.pop %v2712
    %v2714 = vadd.f32 %v2713, 1.0
    %v2715 = vrcp.pop %v2714
    %v2716 = vmul.f32 1.0, %v2715
    %2718 = vrot.lane.b32.xlu0 %v2710, 32
    %v2719 = vpop.permute.xlu0 %2718
    %v2721 = vmul.f32 %v2716, %v2719
    %2723 = vrot.lane.b32.xlu0 %v2721, 64
    %v2724 = vpop.permute.xlu0 %2723
    %v2726 = vadd.f32 %v2710, %v2724
    %v2727 = vtanh.pop %v2726
    %v2728 = vsub.f32 1.0, %v2716
    %2730 = vrot.lane.b32.xlu0 %v2727, 96
    %v2731 = vpop.permute.xlu0 %2730
    %v2733 = vmul.f32 %v2728, %v2731
    %v2734 = vmul.f32 %v2716, %v2392
    %v2735 = vadd.f32 %v2733, %v2734
    %v2736 = vpack.c.bf16 %v2735, %v2735
    %2738 = vrot.lane.b32.xlu0 %v2736, 96
    %v2739 = vpop.permute.xlu0 %2738
    %v2741 = vsel %vm343, %v2739, 0
    %2743 = vmatprep.subr.bf16.mxu0 0
    %2744 = vmatpush1.bf16.msra.mxu0 %v1161
    %2745 = vmatprep.subr.bf16.mxu0 0
    %2746 = vmatpush1.bf16.msra.mxu0 %v1162
    %2747 = vmatprep.subr.bf16.mxu0 0
    %2748 = vmatpush1.bf16.msra.mxu0 0
    %2749 = vmatprep.subr.bf16.mxu0 0
    %2750 = vmatpush1.bf16.msra.mxu0 0
    %2751 = vmatprep.subr.bf16.mxu0 0
    %2752 = vmatpush1.bf16.msra.mxu0 0
    %2753 = vmatprep.subr.bf16.mxu0 0
    %2754 = vmatpush1.bf16.msra.mxu0 0
    %2755 = vmatprep.subr.bf16.mxu0 0
    %2756 = vmatpush1.bf16.msra.mxu0 0
    %2757 = vmatprep.subr.bf16.mxu0 0
    %2758 = vmatpush1.bf16.msra.mxu0 0
    %2759 = vmatprep.subr.bf16.mxu0 0
    %2760 = vmatpush1.bf16.msra.mxu0 0
    %2761 = vmatprep.subr.bf16.mxu0 0
    %2762 = vmatpush1.bf16.msra.mxu0 0
    %2763 = vmatprep.subr.bf16.mxu0 0
    %2764 = vmatpush1.bf16.msra.mxu0 0
    %2765 = vmatprep.subr.bf16.mxu0 0
    %2766 = vmatpush1.bf16.msra.mxu0 0
    %2767 = vmatprep.subr.bf16.mxu0 0
    %2768 = vmatpush1.bf16.msra.mxu0 0
    %2769 = vmatprep.subr.bf16.mxu0 0
    %2770 = vmatpush1.bf16.msra.mxu0 0
    %2771 = vmatprep.subr.bf16.mxu0 0
    %2772 = vmatpush1.bf16.msra.mxu0 0
    %2773 = vmatprep.subr.bf16.mxu0 0
    %2774 = vmatpush1.bf16.msra.mxu0 0
    %2775 = vmatprep.mubr.bf16.mxu0 0
    %2776 = vmatmul.mubr.bf16.gmra.mrb[0].mxu0 %v2741
    %v2777 = vpop.f32.mrb[0].mxu0
    %v2778 = vadd.f32 0.0, %v2777
    %v2779 = vpop.f32.mrb[0].mxu0
    %v2780 = vpop.f32.mrb[0].mxu0
    %v2781 = vpop.f32.mrb[0].mxu0
    %2782 = vdwg.mxu0
    %v2783 = vsel %vm1366, %v2778, -inf
    %2784 = vmax.xlane.f32.xlu0 %v2783
    %v2785 = vpop.xlane.xlu0 %2784
    %v2786 = vsub.f32 %v2778, %v2785
    %v2787 = vmul.f32 %v2786, 1.442695
    %v2788 = vpow.pop %v2787
    %v2789 = vsel %vm1366, %v2788, 0.0
    %2790 = vadd.xlane.f32.xlu0 %v2789
    %v2791 = vpop.xlane.xlu0 %2790
    %v2792 = vrcp.pop %v2791
    %v2793 = vmul.f32 %v2788, %v2792
    %v2794 = vpack.c.bf16 %v2793, %v2793
    %v2796 = vsel %vm1382, %v2794, 0
    %2798 = vmatprep.subr.bf16.mxu0 0
    %2799 = vmatpush1.bf16.msra.mxu0 %v1387
    %2800 = vmatprep.subr.bf16.mxu0 0
    %2801 = vmatpush1.bf16.msra.mxu0 0
    %2802 = vmatprep.subr.bf16.mxu0 0
    %2803 = vmatpush1.bf16.msra.mxu0 0
    %2804 = vmatprep.subr.bf16.mxu0 0
    %2805 = vmatpush1.bf16.msra.mxu0 0
    %2806 = vmatprep.subr.bf16.mxu0 0
    %2807 = vmatpush1.bf16.msra.mxu0 0
    %2808 = vmatprep.subr.bf16.mxu0 0
    %2809 = vmatpush1.bf16.msra.mxu0 0
    %2810 = vmatprep.subr.bf16.mxu0 0
    %2811 = vmatpush1.bf16.msra.mxu0 0
    %2812 = vmatprep.subr.bf16.mxu0 0
    %2813 = vmatpush1.bf16.msra.mxu0 0
    %2814 = vmatprep.subr.bf16.mxu0 0
    %2815 = vmatpush1.bf16.msra.mxu0 0
    %2816 = vmatprep.subr.bf16.mxu0 0
    %2817 = vmatpush1.bf16.msra.mxu0 0
    %2818 = vmatprep.subr.bf16.mxu0 0
    %2819 = vmatpush1.bf16.msra.mxu0 0
    %2820 = vmatprep.subr.bf16.mxu0 0
    %2821 = vmatpush1.bf16.msra.mxu0 0
    %2822 = vmatprep.subr.bf16.mxu0 0
    %2823 = vmatpush1.bf16.msra.mxu0 0
    %2824 = vmatprep.subr.bf16.mxu0 0
    %2825 = vmatpush1.bf16.msra.mxu0 0
    %2826 = vmatprep.subr.bf16.mxu0 0
    %2827 = vmatpush1.bf16.msra.mxu0 0
    %2828 = vmatprep.subr.bf16.mxu0 0
    %2829 = vmatpush1.bf16.msra.mxu0 0
    %2830 = vmatprep.mubr.bf16.mxu0 0
    %2831 = vmatmul.mubr.bf16.gmra.mrb[0].mxu0 %v2796
    %v2832 = vpop.f32.mrb[0].mxu0
    %v2833 = vadd.f32 0.0, %v2832
    %v2834 = vpop.f32.mrb[0].mxu0
    %v2835 = vpop.f32.mrb[0].mxu0
    %v2836 = vpop.f32.mrb[0].mxu0
    %2837 = vdwg.mxu0
    %2839 = vrot.lane.b32.xlu0 %v2735, 96
    %v2840 = vpop.permute.xlu0 %2839
    %2843 = vrot.lane.b32.xlu0 %v2833, 32
    %v2844 = vpop.permute.xlu0 %2843
    %v2846 = vsel %vm343, %v2840, %v2844
    %v2847 = vpack.c.bf16 %v2846, %v2846
    %v2849 = vsel %vm143, %v2847, 0
    %2851 = vmatprep.subr.bf16.mxu0 0
    %2852 = vmatpush1.bf16.msra.mxu0 %v1455
    %2853 = vmatprep.subr.bf16.mxu0 0
    %2854 = vmatpush1.bf16.msra.mxu0 %v1456
    %2855 = vmatprep.subr.bf16.mxu0 0
    %2856 = vmatpush1.bf16.msra.mxu0 %v1457
    %2857 = vmatprep.subr.bf16.mxu0 0
    %2858 = vmatpush1.bf16.msra.mxu0 %v1458
    %2859 = vmatprep.subr.bf16.mxu0 0
    %2860 = vmatpush1.bf16.msra.mxu0 0
    %2861 = vmatprep.subr.bf16.mxu0 0
    %2862 = vmatpush1.bf16.msra.mxu0 0
    %2863 = vmatprep.subr.bf16.mxu0 0
    %2864 = vmatpush1.bf16.msra.mxu0 0
    %2865 = vmatprep.subr.bf16.mxu0 0
    %2866 = vmatpush1.bf16.msra.mxu0 0
    %2867 = vmatprep.subr.bf16.mxu0 0
    %2868 = vmatpush1.bf16.msra.mxu0 0
    %2869 = vmatprep.subr.bf16.mxu0 0
    %2870 = vmatpush1.bf16.msra.mxu0 0
    %2871 = vmatprep.subr.bf16.mxu0 0
    %2872 = vmatpush1.bf16.msra.mxu0 0
    %2873 = vmatprep.subr.bf16.mxu0 0
    %2874 = vmatpush1.bf16.msra.mxu0 0
    %2875 = vmatprep.subr.bf16.mxu0 0
    %2876 = vmatpush1.bf16.msra.mxu0 0
    %2877 = vmatprep.subr.bf16.mxu0 0
    %2878 = vmatpush1.bf16.msra.mxu0 0
    %2879 = vmatprep.subr.bf16.mxu0 0
    %2880 = vmatpush1.bf16.msra.mxu0 0
    %2881 = vmatprep.subr.bf16.mxu0 0
    %2882 = vmatpush1.bf16.msra.mxu0 0
    %2883 = vmatprep.mubr.bf16.mxu0 0
    %2884 = vmatmul.mubr.bf16.gmra.mrb[0].mxu0 %v2849
    %v2885 = vpop.f32.mrb[0].mxu0
    %v2886 = vadd.f32 %v91, %v2885
    %v2887 = vpop.f32.mrb[0].mxu0
    %v2888 = vpop.f32.mrb[0].mxu0
    %v2889 = vpop.f32.mrb[0].mxu0
    %2890 = vdwg.mxu0
    %v2891 = vtanh.pop %v2886
    %v2892 = vpack.c.bf16 %v2891, %v2891
    %v2894 = vsel %vm343, %v2892, 0
    %2896 = vmatprep.subr.bf16.mxu0 0
    %2897 = vmatpush1.bf16.msra.mxu0 %v1516
    %2898 = vmatprep.subr.bf16.mxu0 0
    %2899 = vmatpush1.bf16.msra.mxu0 %v1517
    %2900 = vmatprep.subr.bf16.mxu0 0
    %2901 = vmatpush1.bf16.msra.mxu0 0
    %2902 = vmatprep.subr.bf16.mxu0 0
    %2903 = vmatpush1.bf16.msra.mxu0 0
    %2904 = vmatprep.subr.bf16.mxu0 0
    %2905 = vmatpush1.bf16.msra.mxu0 0
    %2906 = vmatprep.subr.bf16.mxu0 0
    %2907 = vmatpush1.bf16.msra.mxu0 0
    %2908 = vmatprep.subr.bf16.mxu0 0
    %2909 = vmatpush1.bf16.msra.mxu0 0
    %2910 = vmatprep.subr.bf16.mxu0 0
    %2911 = vmatpush1.bf16.msra.mxu0 0
    %2912 = vmatprep.subr.bf16.mxu0 0
    %2913 = vmatpush1.bf16.msra.mxu0 0
    %2914 = vmatprep.subr.bf16.mxu0 0
    %2915 = vmatpush1.bf16.msra.mxu0 0
    %2916 = vmatprep.subr.bf16.mxu0 0
    %2917 = vmatpush1.bf16.msra.mxu0 0
    %2918 = vmatprep.subr.bf16.mxu0 0
    %2919 = vmatpush1.bf16.msra.mxu0 0
    %2920 = vmatprep.subr.bf16.mxu0 0
    %2921 = vmatpush1.bf16.msra.mxu0 0
    %2922 = vmatprep.subr.bf16.mxu0 0
    %2923 = vmatpush1.bf16.msra.mxu0 0
    %2924 = vmatprep.subr.bf16.mxu0 0
    %2925 = vmatpush1.bf16.msra.mxu0 0
    %2926 = vmatprep.subr.bf16.mxu0 0
    %2927 = vmatpush1.bf16.msra.mxu0 0
    %2928 = vmatprep.mubr.bf16.mxu0 0
    %2929 = vmatmul.mubr.bf16.gmra.mrb[0].mxu0 %v2894
    %v2930 = vpop.f32.mrb[0].mxu0
    %v2931 = vadd.f32 %v92, %v2930
    %v2932 = vpop.f32.mrb[0].mxu0
    %v2933 = vpop.f32.mrb[0].mxu0
    %v2934 = vpop.f32.mrb[0].mxu0
    %2935 = vdwg.mxu0
    %v2936 = vsel %vm1563, %v2931, -inf
    %2937 = vmax.xlane.f32.xlu0 %v2936
    %v2938 = vpop.xlane.xlu0 %2937
    %vm2939 = vcmp.eq.f32.partialorder %v2931, %v2938
    %v2940 = vsel %vm2939, %v94, 64
    %v2941 = vsel %vm1563, %v2940, 2147483647
    %v2942 = vand.u32 %v2941, 65535
    %v2943 = vshra.s32 %v2941, 16
    %v2944 = vcvt.s32.f32 %v2942
    %v2945 = vcvt.s32.f32 %v2943
    %2946 = vmin.xlane.f32.xlu0 %v2945
    %v2947 = vpop.xlane.xlu0 %2946
    %vm2948 = vcmp.eq.f32.partialorder %v2945, %v2947
    %v2949 = vsel %vm2948, %v2944, inf
    %2950 = vmin.xlane.f32.xlu0 %v2949
    %v2951 = vpop.xlane.xlu0 %2950
    %v2952 = vcvt.f32.s32 %v2951
    %v2953 = vcvt.f32.s32 %v2947
    %v2954 = vshll.u32 %v2953, 16
    %v2955 = vadd.s32 %v2954, %v2952
    %v2956 = vsub.f32 %v2931, %v2938
    %v2957 = vmul.f32 %v2956, 1.442695
    %v2958 = vpow.pop %v2957
    %v2959 = vsel %vm1563, %v2958, 0.0
    %2960 = vadd.xlane.f32.xlu0 %v2959
    %v2961 = vpop.xlane.xlu0 %2960
    %v2962 = vrcp.pop %v2961
    %v2963 = vmul.f32 1.0, %v2962
    %vm2964 = vcmask 32800
    %2965 = vst.msk [vmem:[#allocation7] sm:$0x1] %vm2964, %v2955
    %2966 = vst.msk [vmem:[#allocation8] sm:$0x1] %vm2964, %v2963
    %v2967 = vsel %vm2939, 1, 0
    %v2968 = vcvt.s32.f32 %v2967
    %v2969 = vpack.c.bf16 %v2968, %v2968
    %2970 = vmatprep.subr.bf16.mxu0 0
    %2971 = vmatpush1.bf16.msra.mxu0 %v1179
    %2972 = vmatprep.subr.bf16.mxu0 0
    %2973 = vmatpush1.bf16.msra.mxu0 %v1180
    %2974 = vmatprep.subr.bf16.mxu0 0
    %2975 = vmatpush1.bf16.msra.mxu0 0
    %2976 = vmatprep.subr.bf16.mxu0 0
    %2977 = vmatpush1.bf16.msra.mxu0 0
    %2978 = vmatprep.subr.bf16.mxu0 0
    %2979 = vmatpush1.bf16.msra.mxu0 0
    %2980 = vmatprep.subr.bf16.mxu0 0
    %2981 = vmatpush1.bf16.msra.mxu0 0
    %2982 = vmatprep.subr.bf16.mxu0 0
    %2983 = vmatpush1.bf16.msra.mxu0 0
    %2984 = vmatprep.subr.bf16.mxu0 0
    %2985 = vmatpush1.bf16.msra.mxu0 0
    %2986 = vmatprep.subr.bf16.mxu0 0
    %2987 = vmatpush1.bf16.msra.mxu0 0
    %2988 = vmatprep.subr.bf16.mxu0 0
    %2989 = vmatpush1.bf16.msra.mxu0 0
    %2990 = vmatprep.subr.bf16.mxu0 0
    %2991 = vmatpush1.bf16.msra.mxu0 0
    %2992 = vmatprep.subr.bf16.mxu0 0
    %2993 = vmatpush1.bf16.msra.mxu0 0
    %2994 = vmatprep.subr.bf16.mxu0 0
    %2995 = vmatpush1.bf16.msra.mxu0 0
    %2996 = vmatprep.subr.bf16.mxu0 0
    %2997 = vmatpush1.bf16.msra.mxu0 0
    %2998 = vmatprep.subr.bf16.mxu0 0
    %2999 = vmatpush1.bf16.msra.mxu0 0
    %3000 = vmatprep.subr.bf16.mxu0 0
    %3001 = vmatpush1.bf16.msra.mxu0 0
    %3002 = vmatprep.mubr.bf16.mxu0 0
    %3003 = vmatmul.mubr.bf16.gmra.mrb[0].mxu0 %v2741
    %v3004 = vpop.f32.mrb[0].mxu0
    %v3005 = vadd.f32 0.0, %v3004
    %v3006 = vpop.f32.mrb[0].mxu0
    %v3007 = vpop.f32.mrb[0].mxu0
    %v3008 = vpop.f32.mrb[0].mxu0
    %3009 = vdwg.mxu0
    %v3011 = vsel %vm143, %v2969, 0
    %3013 = vmatprep.subr.bf16.mxu0 0
    %3014 = vmatpush1.bf16.msra.mxu0 %v1242
    %3015 = vmatprep.subr.bf16.mxu0 0
    %3016 = vmatpush1.bf16.msra.mxu0 %v1243
    %3017 = vmatprep.subr.bf16.mxu0 0
    %3018 = vmatpush1.bf16.msra.mxu0 %v1244
    %3019 = vmatprep.subr.bf16.mxu0 0
    %3020 = vmatpush1.bf16.msra.mxu0 %v1245
    %3021 = vmatprep.subr.bf16.mxu0 0
    %3022 = vmatpush1.bf16.msra.mxu0 0
    %3023 = vmatprep.subr.bf16.mxu0 0
    %3024 = vmatpush1.bf16.msra.mxu0 0
    %3025 = vmatprep.subr.bf16.mxu0 0
    %3026 = vmatpush1.bf16.msra.mxu0 0
    %3027 = vmatprep.subr.bf16.mxu0 0
    %3028 = vmatpush1.bf16.msra.mxu0 0
    %3029 = vmatprep.subr.bf16.mxu0 0
    %3030 = vmatpush1.bf16.msra.mxu0 0
    %3031 = vmatprep.subr.bf16.mxu0 0
    %3032 = vmatpush1.bf16.msra.mxu0 0
    %3033 = vmatprep.subr.bf16.mxu0 0
    %3034 = vmatpush1.bf16.msra.mxu0 0
    %3035 = vmatprep.subr.bf16.mxu0 0
    %3036 = vmatpush1.bf16.msra.mxu0 0
    %3037 = vmatprep.subr.bf16.mxu0 0
    %3038 = vmatpush1.bf16.msra.mxu0 0
    %3039 = vmatprep.subr.bf16.mxu0 0
    %3040 = vmatpush1.bf16.msra.mxu0 0
    %3041 = vmatprep.subr.bf16.mxu0 0
    %3042 = vmatpush1.bf16.msra.mxu0 0
    %3043 = vmatprep.subr.bf16.mxu0 0
    %3044 = vmatpush1.bf16.msra.mxu0 0
    %3045 = vmatprep.mubr.bf16.mxu0 0
    %3046 = vmatmul.mubr.bf16.gmra.mrb[0].mxu0 %v3011
    %v3047 = vpop.f32.mrb[0].mxu0
    %v3048 = vadd.f32 %v3005, %v3047
    %v3049 = vpop.f32.mrb[0].mxu0
    %v3050 = vpop.f32.mrb[0].mxu0
    %v3051 = vpop.f32.mrb[0].mxu0
    %3052 = vdwg.mxu0
    %v3053 = vadd.f32 %v3048, %v90
    %v3054 = vxor.u32 %v3053, 2147483648
    %v3055 = vmul.f32 %v3054, 1.442695
    %v3056 = vpow.pop %v3055
    %v3057 = vadd.f32 %v3056, 1.0
    %v3058 = vrcp.pop %v3057
    %v3059 = vmul.f32 1.0, %v3058
    %3061 = vrot.lane.b32.xlu0 %v3053, 32
    %v3062 = vpop.permute.xlu0 %3061
    %v3064 = vmul.f32 %v3059, %v3062
    %3066 = vrot.lane.b32.xlu0 %v3064, 64
    %v3067 = vpop.permute.xlu0 %3066
    %v3069 = vadd.f32 %v3053, %v3067
    %v3070 = vtanh.pop %v3069
    %v3071 = vsub.f32 1.0, %v3059
    %3073 = vrot.lane.b32.xlu0 %v3070, 96
    %v3074 = vpop.permute.xlu0 %3073
    %v3076 = vmul.f32 %v3071, %v3074
    %v3077 = vmul.f32 %v3059, %v2735
    %v3078 = vadd.f32 %v3076, %v3077
    %v3079 = vpack.c.bf16 %v3078, %v3078
    %3081 = vrot.lane.b32.xlu0 %v3079, 96
    %v3082 = vpop.permute.xlu0 %3081
    %v3084 = vsel %vm343, %v3082, 0
    %3086 = vmatprep.subr.bf16.mxu0 0
    %3087 = vmatpush1.bf16.msra.mxu0 %v1161
    %3088 = vmatprep.subr.bf16.mxu0 0
    %3089 = vmatpush1.bf16.msra.mxu0 %v1162
    %3090 = vmatprep.subr.bf16.mxu0 0
    %3091 = vmatpush1.bf16.msra.mxu0 0
    %3092 = vmatprep.subr.bf16.mxu0 0
    %3093 = vmatpush1.bf16.msra.mxu0 0
    %3094 = vmatprep.subr.bf16.mxu0 0
    %3095 = vmatpush1.bf16.msra.mxu0 0
    %3096 = vmatprep.subr.bf16.mxu0 0
    %3097 = vmatpush1.bf16.msra.mxu0 0
    %3098 = vmatprep.subr.bf16.mxu0 0
    %3099 = vmatpush1.bf16.msra.mxu0 0
    %3100 = vmatprep.subr.bf16.mxu0 0
    %3101 = vmatpush1.bf16.msra.mxu0 0
    %3102 = vmatprep.subr.bf16.mxu0 0
    %3103 = vmatpush1.bf16.msra.mxu0 0
    %3104 = vmatprep.subr.bf16.mxu0 0
    %3105 = vmatpush1.bf16.msra.mxu0 0
    %3106 = vmatprep.subr.bf16.mxu0 0
    %3107 = vmatpush1.bf16.msra.mxu0 0
    %3108 = vmatprep.subr.bf16.mxu0 0
    %3109 = vmatpush1.bf16.msra.mxu0 0
    %3110 = vmatprep.subr.bf16.mxu0 0
    %3111 = vmatpush1.bf16.msra.mxu0 0
    %3112 = vmatprep.subr.bf16.mxu0 0
    %3113 = vmatpush1.bf16.msra.mxu0 0
    %3114 = vmatprep.subr.bf16.mxu0 0
    %3115 = vmatpush1.bf16.msra.mxu0 0
    %3116 = vmatprep.subr.bf16.mxu0 0
    %3117 = vmatpush1.bf16.msra.mxu0 0
    %3118 = vmatprep.mubr.bf16.mxu0 0
    %3119 = vmatmul.mubr.bf16.gmra.mrb[0].mxu0 %v3084
    %v3120 = vpop.f32.mrb[0].mxu0
    %v3121 = vadd.f32 0.0, %v3120
    %v3122 = vpop.f32.mrb[0].mxu0
    %v3123 = vpop.f32.mrb[0].mxu0
    %v3124 = vpop.f32.mrb[0].mxu0
    %3125 = vdwg.mxu0
    %v3126 = vsel %vm1366, %v3121, -inf
    %3127 = vmax.xlane.f32.xlu0 %v3126
    %v3128 = vpop.xlane.xlu0 %3127
    %v3129 = vsub.f32 %v3121, %v3128
    %v3130 = vmul.f32 %v3129, 1.442695
    %v3131 = vpow.pop %v3130
    %v3132 = vsel %vm1366, %v3131, 0.0
    %3133 = vadd.xlane.f32.xlu0 %v3132
    %v3134 = vpop.xlane.xlu0 %3133
    %v3135 = vrcp.pop %v3134
    %v3136 = vmul.f32 %v3131, %v3135
    %v3137 = vpack.c.bf16 %v3136, %v3136
    %v3139 = vsel %vm1382, %v3137, 0
    %3141 = vmatprep.subr.bf16.mxu0 0
    %3142 = vmatpush1.bf16.msra.mxu0 %v1387
    %3143 = vmatprep.subr.bf16.mxu0 0
    %3144 = vmatpush1.bf16.msra.mxu0 0
    %3145 = vmatprep.subr.bf16.mxu0 0
    %3146 = vmatpush1.bf16.msra.mxu0 0
    %3147 = vmatprep.subr.bf16.mxu0 0
    %3148 = vmatpush1.bf16.msra.mxu0 0
    %3149 = vmatprep.subr.bf16.mxu0 0
    %3150 = vmatpush1.bf16.msra.mxu0 0
    %3151 = vmatprep.subr.bf16.mxu0 0
    %3152 = vmatpush1.bf16.msra.mxu0 0
    %3153 = vmatprep.subr.bf16.mxu0 0
    %3154 = vmatpush1.bf16.msra.mxu0 0
    %3155 = vmatprep.subr.bf16.mxu0 0
    %3156 = vmatpush1.bf16.msra.mxu0 0
    %3157 = vmatprep.subr.bf16.mxu0 0
    %3158 = vmatpush1.bf16.msra.mxu0 0
    %3159 = vmatprep.subr.bf16.mxu0 0
    %3160 = vmatpush1.bf16.msra.mxu0 0
    %3161 = vmatprep.subr.bf16.mxu0 0
    %3162 = vmatpush1.bf16.msra.mxu0 0
    %3163 = vmatprep.subr.bf16.mxu0 0
    %3164 = vmatpush1.bf16.msra.mxu0 0
    %3165 = vmatprep.subr.bf16.mxu0 0
    %3166 = vmatpush1.bf16.msra.mxu0 0
    %3167 = vmatprep.subr.bf16.mxu0 0
    %3168 = vmatpush1.bf16.msra.mxu0 0
    %3169 = vmatprep.subr.bf16.mxu0 0
    %3170 = vmatpush1.bf16.msra.mxu0 0
    %3171 = vmatprep.subr.bf16.mxu0 0
    %3172 = vmatpush1.bf16.msra.mxu0 0
    %3173 = vmatprep.mubr.bf16.mxu0 0
    %3174 = vmatmul.mubr.bf16.gmra.mrb[0].mxu0 %v3139
    %v3175 = vpop.f32.mrb[0].mxu0
    %v3176 = vadd.f32 0.0, %v3175
    %v3177 = vpop.f32.mrb[0].mxu0
    %v3178 = vpop.f32.mrb[0].mxu0
    %v3179 = vpop.f32.mrb[0].mxu0
    %3180 = vdwg.mxu0
    %3182 = vrot.lane.b32.xlu0 %v3078, 96
    %v3183 = vpop.permute.xlu0 %3182
    %3186 = vrot.lane.b32.xlu0 %v3176, 32
    %v3187 = vpop.permute.xlu0 %3186
    %v3189 = vsel %vm343, %v3183, %v3187
    %v3190 = vpack.c.bf16 %v3189, %v3189
    %v3192 = vsel %vm143, %v3190, 0
    %3194 = vmatprep.subr.bf16.mxu0 0
    %3195 = vmatpush1.bf16.msra.mxu0 %v1455
    %3196 = vmatprep.subr.bf16.mxu0 0
    %3197 = vmatpush1.bf16.msra.mxu0 %v1456
    %3198 = vmatprep.subr.bf16.mxu0 0
    %3199 = vmatpush1.bf16.msra.mxu0 %v1457
    %3200 = vmatprep.subr.bf16.mxu0 0
    %3201 = vmatpush1.bf16.msra.mxu0 %v1458
    %3202 = vmatprep.subr.bf16.mxu0 0
    %3203 = vmatpush1.bf16.msra.mxu0 0
    %3204 = vmatprep.subr.bf16.mxu0 0
    %3205 = vmatpush1.bf16.msra.mxu0 0
    %3206 = vmatprep.subr.bf16.mxu0 0
    %3207 = vmatpush1.bf16.msra.mxu0 0
    %3208 = vmatprep.subr.bf16.mxu0 0
    %3209 = vmatpush1.bf16.msra.mxu0 0
    %3210 = vmatprep.subr.bf16.mxu0 0
    %3211 = vmatpush1.bf16.msra.mxu0 0
    %3212 = vmatprep.subr.bf16.mxu0 0
    %3213 = vmatpush1.bf16.msra.mxu0 0
    %3214 = vmatprep.subr.bf16.mxu0 0
    %3215 = vmatpush1.bf16.msra.mxu0 0
    %3216 = vmatprep.subr.bf16.mxu0 0
    %3217 = vmatpush1.bf16.msra.mxu0 0
    %3218 = vmatprep.subr.bf16.mxu0 0
    %3219 = vmatpush1.bf16.msra.mxu0 0
    %3220 = vmatprep.subr.bf16.mxu0 0
    %3221 = vmatpush1.bf16.msra.mxu0 0
    %3222 = vmatprep.subr.bf16.mxu0 0
    %3223 = vmatpush1.bf16.msra.mxu0 0
    %3224 = vmatprep.subr.bf16.mxu0 0
    %3225 = vmatpush1.bf16.msra.mxu0 0
    %3226 = vmatprep.mubr.bf16.mxu0 0
    %3227 = vmatmul.mubr.bf16.gmra.mrb[0].mxu0 %v3192
    %v3228 = vpop.f32.mrb[0].mxu0
    %v3229 = vadd.f32 %v91, %v3228
    %v3230 = vpop.f32.mrb[0].mxu0
    %v3231 = vpop.f32.mrb[0].mxu0
    %v3232 = vpop.f32.mrb[0].mxu0
    %3233 = vdwg.mxu0
    %v3234 = vtanh.pop %v3229
    %v3235 = vpack.c.bf16 %v3234, %v3234
    %v3237 = vsel %vm343, %v3235, 0
    %3239 = vmatprep.subr.bf16.mxu0 0
    %3240 = vmatpush1.bf16.msra.mxu0 %v1516
    %3241 = vmatprep.subr.bf16.mxu0 0
    %3242 = vmatpush1.bf16.msra.mxu0 %v1517
    %3243 = vmatprep.subr.bf16.mxu0 0
    %3244 = vmatpush1.bf16.msra.mxu0 0
    %3245 = vmatprep.subr.bf16.mxu0 0
    %3246 = vmatpush1.bf16.msra.mxu0 0
    %3247 = vmatprep.subr.bf16.mxu0 0
    %3248 = vmatpush1.bf16.msra.mxu0 0
    %3249 = vmatprep.subr.bf16.mxu0 0
    %3250 = vmatpush1.bf16.msra.mxu0 0
    %3251 = vmatprep.subr.bf16.mxu0 0
    %3252 = vmatpush1.bf16.msra.mxu0 0
    %3253 = vmatprep.subr.bf16.mxu0 0
    %3254 = vmatpush1.bf16.msra.mxu0 0
    %3255 = vmatprep.subr.bf16.mxu0 0
    %3256 = vmatpush1.bf16.msra.mxu0 0
    %3257 = vmatprep.subr.bf16.mxu0 0
    %3258 = vmatpush1.bf16.msra.mxu0 0
    %3259 = vmatprep.subr.bf16.mxu0 0
    %3260 = vmatpush1.bf16.msra.mxu0 0
    %3261 = vmatprep.subr.bf16.mxu0 0
    %3262 = vmatpush1.bf16.msra.mxu0 0
    %3263 = vmatprep.subr.bf16.mxu0 0
    %3264 = vmatpush1.bf16.msra.mxu0 0
    %3265 = vmatprep.subr.bf16.mxu0 0
    %3266 = vmatpush1.bf16.msra.mxu0 0
    %3267 = vmatprep.subr.bf16.mxu0 0
    %3268 = vmatpush1.bf16.msra.mxu0 0
    %3269 = vmatprep.subr.bf16.mxu0 0
    %3270 = vmatpush1.bf16.msra.mxu0 0
    %3271 = vmatprep.mubr.bf16.mxu0 0
    %3272 = vmatmul.mubr.bf16.gmra.mrb[0].mxu0 %v3237
    %v3273 = vpop.f32.mrb[0].mxu0
    %v3274 = vadd.f32 %v92, %v3273
    %v3275 = vpop.f32.mrb[0].mxu0
    %v3276 = vpop.f32.mrb[0].mxu0
    %v3277 = vpop.f32.mrb[0].mxu0
    %3278 = vdwg.mxu0
    %v3279 = vsel %vm1563, %v3274, -inf
    %3280 = vmax.xlane.f32.xlu0 %v3279
    %v3281 = vpop.xlane.xlu0 %3280
    %vm3282 = vcmp.eq.f32.partialorder %v3274, %v3281
    %v3283 = vsel %vm3282, %v94, 64
    %v3284 = vsel %vm1563, %v3283, 2147483647
    %v3285 = vand.u32 %v3284, 65535
    %v3286 = vshra.s32 %v3284, 16
    %v3287 = vcvt.s32.f32 %v3285
    %v3288 = vcvt.s32.f32 %v3286
    %3289 = vmin.xlane.f32.xlu0 %v3288
    %v3290 = vpop.xlane.xlu0 %3289
    %vm3291 = vcmp.eq.f32.partialorder %v3288, %v3290
    %v3292 = vsel %vm3291, %v3287, inf
    %3293 = vmin.xlane.f32.xlu0 %v3292
    %v3294 = vpop.xlane.xlu0 %3293
    %v3295 = vcvt.f32.s32 %v3294
    %v3296 = vcvt.f32.s32 %v3290
    %v3297 = vshll.u32 %v3296, 16
    %v3298 = vadd.s32 %v3297, %v3295
    %v3299 = vsub.f32 %v3274, %v3281
    %v3300 = vmul.f32 %v3299, 1.442695
    %v3301 = vpow.pop %v3300
    %v3302 = vsel %vm1563, %v3301, 0.0
    %3303 = vadd.xlane.f32.xlu0 %v3302
    %v3304 = vpop.xlane.xlu0 %3303
    %v3305 = vrcp.pop %v3304
    %v3306 = vmul.f32 1.0, %v3305
    %vm3307 = vcmask 41000
    %3308 = vst.msk [vmem:[#allocation7] sm:$0x1] %vm3307, %v3298
    %3309 = vst.msk [vmem:[#allocation8] sm:$0x1] %vm3307, %v3306
    %v3310 = vsel %vm3282, 1, 0
    %v3311 = vcvt.s32.f32 %v3310
    %v3312 = vpack.c.bf16 %v3311, %v3311
    %3313 = vmatprep.subr.bf16.mxu0 0
    %3314 = vmatpush1.bf16.msra.mxu0 %v1179
    %3315 = vmatprep.subr.bf16.mxu0 0
    %3316 = vmatpush1.bf16.msra.mxu0 %v1180
    %3317 = vmatprep.subr.bf16.mxu0 0
    %3318 = vmatpush1.bf16.msra.mxu0 0
    %3319 = vmatprep.subr.bf16.mxu0 0
    %3320 = vmatpush1.bf16.msra.mxu0 0
    %3321 = vmatprep.subr.bf16.mxu0 0
    %3322 = vmatpush1.bf16.msra.mxu0 0
    %3323 = vmatprep.subr.bf16.mxu0 0
    %3324 = vmatpush1.bf16.msra.mxu0 0
    %3325 = vmatprep.subr.bf16.mxu0 0
    %3326 = vmatpush1.bf16.msra.mxu0 0
    %3327 = vmatprep.subr.bf16.mxu0 0
    %3328 = vmatpush1.bf16.msra.mxu0 0
    %3329 = vmatprep.subr.bf16.mxu0 0
    %3330 = vmatpush1.bf16.msra.mxu0 0
    %3331 = vmatprep.subr.bf16.mxu0 0
    %3332 = vmatpush1.bf16.msra.mxu0 0
    %3333 = vmatprep.subr.bf16.mxu0 0
    %3334 = vmatpush1.bf16.msra.mxu0 0
    %3335 = vmatprep.subr.bf16.mxu0 0
    %3336 = vmatpush1.bf16.msra.mxu0 0
    %3337 = vmatprep.subr.bf16.mxu0 0
    %3338 = vmatpush1.bf16.msra.mxu0 0
    %3339 = vmatprep.subr.bf16.mxu0 0
    %3340 = vmatpush1.bf16.msra.mxu0 0
    %3341 = vmatprep.subr.bf16.mxu0 0
    %3342 = vmatpush1.bf16.msra.mxu0 0
    %3343 = vmatprep.subr.bf16.mxu0 0
    %3344 = vmatpush1.bf16.msra.mxu0 0
    %3345 = vmatprep.mubr.bf16.mxu0 0
    %3346 = vmatmul.mubr.bf16.gmra.mrb[0].mxu0 %v3084
    %v3347 = vpop.f32.mrb[0].mxu0
    %v3348 = vadd.f32 0.0, %v3347
    %v3349 = vpop.f32.mrb[0].mxu0
    %v3350 = vpop.f32.mrb[0].mxu0
    %v3351 = vpop.f32.mrb[0].mxu0
    %3352 = vdwg.mxu0
    %v3354 = vsel %vm143, %v3312, 0
    %3356 = vmatprep.subr.bf16.mxu0 0
    %3357 = vmatpush1.bf16.msra.mxu0 %v1242
    %3358 = vmatprep.subr.bf16.mxu0 0
    %3359 = vmatpush1.bf16.msra.mxu0 %v1243
    %3360 = vmatprep.subr.bf16.mxu0 0
    %3361 = vmatpush1.bf16.msra.mxu0 %v1244
    %3362 = vmatprep.subr.bf16.mxu0 0
    %3363 = vmatpush1.bf16.msra.mxu0 %v1245
    %3364 = vmatprep.subr.bf16.mxu0 0
    %3365 = vmatpush1.bf16.msra.mxu0 0
    %3366 = vmatprep.subr.bf16.mxu0 0
    %3367 = vmatpush1.bf16.msra.mxu0 0
    %3368 = vmatprep.subr.bf16.mxu0 0
    %3369 = vmatpush1.bf16.msra.mxu0 0
    %3370 = vmatprep.subr.bf16.mxu0 0
    %3371 = vmatpush1.bf16.msra.mxu0 0
    %3372 = vmatprep.subr.bf16.mxu0 0
    %3373 = vmatpush1.bf16.msra.mxu0 0
    %3374 = vmatprep.subr.bf16.mxu0 0
    %3375 = vmatpush1.bf16.msra.mxu0 0
    %3376 = vmatprep.subr.bf16.mxu0 0
    %3377 = vmatpush1.bf16.msra.mxu0 0
    %3378 = vmatprep.subr.bf16.mxu0 0
    %3379 = vmatpush1.bf16.msra.mxu0 0
    %3380 = vmatprep.subr.bf16.mxu0 0
    %3381 = vmatpush1.bf16.msra.mxu0 0
    %3382 = vmatprep.subr.bf16.mxu0 0
    %3383 = vmatpush1.bf16.msra.mxu0 0
    %3384 = vmatprep.subr.bf16.mxu0 0
    %3385 = vmatpush1.bf16.msra.mxu0 0
    %3386 = vmatprep.subr.bf16.mxu0 0
    %3387 = vmatpush1.bf16.msra.mxu0 0
    %3388 = vmatprep.mubr.bf16.mxu0 0
    %3389 = vmatmul.mubr.bf16.gmra.mrb[0].mxu0 %v3354
    %v3390 = vpop.f32.mrb[0].mxu0
    %v3391 = vadd.f32 %v3348, %v3390
    %v3392 = vpop.f32.mrb[0].mxu0
    %v3393 = vpop.f32.mrb[0].mxu0
    %v3394 = vpop.f32.mrb[0].mxu0
    %3395 = vdwg.mxu0
    %v3396 = vadd.f32 %v3391, %v90
    %v3397 = vxor.u32 %v3396, 2147483648
    %v3398 = vmul.f32 %v3397, 1.442695
    %v3399 = vpow.pop %v3398
    %v3400 = vadd.f32 %v3399, 1.0
    %v3401 = vrcp.pop %v3400
    %v3402 = vmul.f32 1.0, %v3401
    %3404 = vrot.lane.b32.xlu0 %v3396, 32
    %v3405 = vpop.permute.xlu0 %3404
    %v3407 = vmul.f32 %v3402, %v3405
    %3409 = vrot.lane.b32.xlu0 %v3407, 64
    %v3410 = vpop.permute.xlu0 %3409
    %v3412 = vadd.f32 %v3396, %v3410
    %v3413 = vtanh.pop %v3412
    %v3414 = vsub.f32 1.0, %v3402
    %3416 = vrot.lane.b32.xlu0 %v3413, 96
    %v3417 = vpop.permute.xlu0 %3416
    %v3419 = vmul.f32 %v3414, %v3417
    %v3420 = vmul.f32 %v3402, %v3078
    %v3421 = vadd.f32 %v3419, %v3420
    %v3422 = vpack.c.bf16 %v3421, %v3421
    %3424 = vrot.lane.b32.xlu0 %v3422, 96
    %v3425 = vpop.permute.xlu0 %3424
    %v3427 = vsel %vm343, %v3425, 0
    %3429 = vmatprep.subr.bf16.mxu0 0
    %3430 = vmatpush1.bf16.msra.mxu0 %v1161
    %3431 = vmatprep.subr.bf16.mxu0 0
    %3432 = vmatpush1.bf16.msra.mxu0 %v1162
    %3433 = vmatprep.subr.bf16.mxu0 0
    %3434 = vmatpush1.bf16.msra.mxu0 0
    %3435 = vmatprep.subr.bf16.mxu0 0
    %3436 = vmatpush1.bf16.msra.mxu0 0
    %3437 = vmatprep.subr.bf16.mxu0 0
    %3438 = vmatpush1.bf16.msra.mxu0 0
    %3439 = vmatprep.subr.bf16.mxu0 0
    %3440 = vmatpush1.bf16.msra.mxu0 0
    %3441 = vmatprep.subr.bf16.mxu0 0
    %3442 = vmatpush1.bf16.msra.mxu0 0
    %3443 = vmatprep.subr.bf16.mxu0 0
    %3444 = vmatpush1.bf16.msra.mxu0 0
    %3445 = vmatprep.subr.bf16.mxu0 0
    %3446 = vmatpush1.bf16.msra.mxu0 0
    %3447 = vmatprep.subr.bf16.mxu0 0
    %3448 = vmatpush1.bf16.msra.mxu0 0
    %3449 = vmatprep.subr.bf16.mxu0 0
    %3450 = vmatpush1.bf16.msra.mxu0 0
    %3451 = vmatprep.subr.bf16.mxu0 0
    %3452 = vmatpush1.bf16.msra.mxu0 0
    %3453 = vmatprep.subr.bf16.mxu0 0
    %3454 = vmatpush1.bf16.msra.mxu0 0
    %3455 = vmatprep.subr.bf16.mxu0 0
    %3456 = vmatpush1.bf16.msra.mxu0 0
    %3457 = vmatprep.subr.bf16.mxu0 0
    %3458 = vmatpush1.bf16.msra.mxu0 0
    %3459 = vmatprep.subr.bf16.mxu0 0
    %3460 = vmatpush1.bf16.msra.mxu0 0
    %3461 = vmatprep.mubr.bf16.mxu0 0
    %3462 = vmatmul.mubr.bf16.gmra.mrb[0].mxu0 %v3427
    %v3463 = vpop.f32.mrb[0].mxu0
    %v3464 = vadd.f32 0.0, %v3463
    %v3465 = vpop.f32.mrb[0].mxu0
    %v3466 = vpop.f32.mrb[0].mxu0
    %v3467 = vpop.f32.mrb[0].mxu0
    %3468 = vdwg.mxu0
    %v3469 = vsel %vm1366, %v3464, -inf
    %3470 = vmax.xlane.f32.xlu0 %v3469
    %v3471 = vpop.xlane.xlu0 %3470
    %v3472 = vsub.f32 %v3464, %v3471
    %v3473 = vmul.f32 %v3472, 1.442695
    %v3474 = vpow.pop %v3473
    %v3475 = vsel %vm1366, %v3474, 0.0
    %3476 = vadd.xlane.f32.xlu0 %v3475
    %v3477 = vpop.xlane.xlu0 %3476
    %v3478 = vrcp.pop %v3477
    %v3479 = vmul.f32 %v3474, %v3478
    %v3480 = vpack.c.bf16 %v3479, %v3479
    %v3482 = vsel %vm1382, %v3480, 0
    %3484 = vmatprep.subr.bf16.mxu0 0
    %3485 = vmatpush1.bf16.msra.mxu0 %v1387
    %3486 = vmatprep.subr.bf16.mxu0 0
    %3487 = vmatpush1.bf16.msra.mxu0 0
    %3488 = vmatprep.subr.bf16.mxu0 0
    %3489 = vmatpush1.bf16.msra.mxu0 0
    %3490 = vmatprep.subr.bf16.mxu0 0
    %3491 = vmatpush1.bf16.msra.mxu0 0
    %3492 = vmatprep.subr.bf16.mxu0 0
    %3493 = vmatpush1.bf16.msra.mxu0 0
    %3494 = vmatprep.subr.bf16.mxu0 0
    %3495 = vmatpush1.bf16.msra.mxu0 0
    %3496 = vmatprep.subr.bf16.mxu0 0
    %3497 = vmatpush1.bf16.msra.mxu0 0
    %3498 = vmatprep.subr.bf16.mxu0 0
    %3499 = vmatpush1.bf16.msra.mxu0 0
    %3500 = vmatprep.subr.bf16.mxu0 0
    %3501 = vmatpush1.bf16.msra.mxu0 0
    %3502 = vmatprep.subr.bf16.mxu0 0
    %3503 = vmatpush1.bf16.msra.mxu0 0
    %3504 = vmatprep.subr.bf16.mxu0 0
    %3505 = vmatpush1.bf16.msra.mxu0 0
    %3506 = vmatprep.subr.bf16.mxu0 0
    %3507 = vmatpush1.bf16.msra.mxu0 0
    %3508 = vmatprep.subr.bf16.mxu0 0
    %3509 = vmatpush1.bf16.msra.mxu0 0
    %3510 = vmatprep.subr.bf16.mxu0 0
    %3511 = vmatpush1.bf16.msra.mxu0 0
    %3512 = vmatprep.subr.bf16.mxu0 0
    %3513 = vmatpush1.bf16.msra.mxu0 0
    %3514 = vmatprep.subr.bf16.mxu0 0
    %3515 = vmatpush1.bf16.msra.mxu0 0
    %3516 = vmatprep.mubr.bf16.mxu0 0
    %3517 = vmatmul.mubr.bf16.gmra.mrb[0].mxu0 %v3482
    %v3518 = vpop.f32.mrb[0].mxu0
    %v3519 = vadd.f32 0.0, %v3518
    %v3520 = vpop.f32.mrb[0].mxu0
    %v3521 = vpop.f32.mrb[0].mxu0
    %v3522 = vpop.f32.mrb[0].mxu0
    %3523 = vdwg.mxu0
    %3525 = vrot.lane.b32.xlu0 %v3421, 96
    %v3526 = vpop.permute.xlu0 %3525
    %3529 = vrot.lane.b32.xlu0 %v3519, 32
    %v3530 = vpop.permute.xlu0 %3529
    %v3532 = vsel %vm343, %v3526, %v3530
    %v3533 = vpack.c.bf16 %v3532, %v3532
    %v3535 = vsel %vm143, %v3533, 0
    %3537 = vmatprep.subr.bf16.mxu0 0
    %3538 = vmatpush1.bf16.msra.mxu0 %v1455
    %3539 = vmatprep.subr.bf16.mxu0 0
    %3540 = vmatpush1.bf16.msra.mxu0 %v1456
    %3541 = vmatprep.subr.bf16.mxu0 0
    %3542 = vmatpush1.bf16.msra.mxu0 %v1457
    %3543 = vmatprep.subr.bf16.mxu0 0
    %3544 = vmatpush1.bf16.msra.mxu0 %v1458
    %3545 = vmatprep.subr.bf16.mxu0 0
    %3546 = vmatpush1.bf16.msra.mxu0 0
    %3547 = vmatprep.subr.bf16.mxu0 0
    %3548 = vmatpush1.bf16.msra.mxu0 0
    %3549 = vmatprep.subr.bf16.mxu0 0
    %3550 = vmatpush1.bf16.msra.mxu0 0
    %3551 = vmatprep.subr.bf16.mxu0 0
    %3552 = vmatpush1.bf16.msra.mxu0 0
    %3553 = vmatprep.subr.bf16.mxu0 0
    %3554 = vmatpush1.bf16.msra.mxu0 0
    %3555 = vmatprep.subr.bf16.mxu0 0
    %3556 = vmatpush1.bf16.msra.mxu0 0
    %3557 = vmatprep.subr.bf16.mxu0 0
    %3558 = vmatpush1.bf16.msra.mxu0 0
    %3559 = vmatprep.subr.bf16.mxu0 0
    %3560 = vmatpush1.bf16.msra.mxu0 0
    %3561 = vmatprep.subr.bf16.mxu0 0
    %3562 = vmatpush1.bf16.msra.mxu0 0
    %3563 = vmatprep.subr.bf16.mxu0 0
    %3564 = vmatpush1.bf16.msra.mxu0 0
    %3565 = vmatprep.subr.bf16.mxu0 0
    %3566 = vmatpush1.bf16.msra.mxu0 0
    %3567 = vmatprep.subr.bf16.mxu0 0
    %3568 = vmatpush1.bf16.msra.mxu0 0
    %3569 = vmatprep.mubr.bf16.mxu0 0
    %3570 = vmatmul.mubr.bf16.gmra.mrb[0].mxu0 %v3535
    %v3571 = vpop.f32.mrb[0].mxu0
    %v3572 = vadd.f32 %v91, %v3571
    %v3573 = vpop.f32.mrb[0].mxu0
    %v3574 = vpop.f32.mrb[0].mxu0
    %v3575 = vpop.f32.mrb[0].mxu0
    %3576 = vdwg.mxu0
    %v3577 = vtanh.pop %v3572
    %v3578 = vpack.c.bf16 %v3577, %v3577
    %v3580 = vsel %vm343, %v3578, 0
    %3582 = vmatprep.subr.bf16.mxu0 0
    %3583 = vmatpush1.bf16.msra.mxu0 %v1516
    %3584 = vmatprep.subr.bf16.mxu0 0
    %3585 = vmatpush1.bf16.msra.mxu0 %v1517
    %3586 = vmatprep.subr.bf16.mxu0 0
    %3587 = vmatpush1.bf16.msra.mxu0 0
    %3588 = vmatprep.subr.bf16.mxu0 0
    %3589 = vmatpush1.bf16.msra.mxu0 0
    %3590 = vmatprep.subr.bf16.mxu0 0
    %3591 = vmatpush1.bf16.msra.mxu0 0
    %3592 = vmatprep.subr.bf16.mxu0 0
    %3593 = vmatpush1.bf16.msra.mxu0 0
    %3594 = vmatprep.subr.bf16.mxu0 0
    %3595 = vmatpush1.bf16.msra.mxu0 0
    %3596 = vmatprep.subr.bf16.mxu0 0
    %3597 = vmatpush1.bf16.msra.mxu0 0
    %3598 = vmatprep.subr.bf16.mxu0 0
    %3599 = vmatpush1.bf16.msra.mxu0 0
    %3600 = vmatprep.subr.bf16.mxu0 0
    %3601 = vmatpush1.bf16.msra.mxu0 0
    %3602 = vmatprep.subr.bf16.mxu0 0
    %3603 = vmatpush1.bf16.msra.mxu0 0
    %3604 = vmatprep.subr.bf16.mxu0 0
    %3605 = vmatpush1.bf16.msra.mxu0 0
    %3606 = vmatprep.subr.bf16.mxu0 0
    %3607 = vmatpush1.bf16.msra.mxu0 0
    %3608 = vmatprep.subr.bf16.mxu0 0
    %3609 = vmatpush1.bf16.msra.mxu0 0
    %3610 = vmatprep.subr.bf16.mxu0 0
    %3611 = vmatpush1.bf16.msra.mxu0 0
    %3612 = vmatprep.subr.bf16.mxu0 0
    %3613 = vmatpush1.bf16.msra.mxu0 0
    %3614 = vmatprep.mubr.bf16.mxu0 0
    %3615 = vmatmul.mubr.bf16.gmra.mrb[0].mxu0 %v3580
    %v3616 = vpop.f32.mrb[0].mxu0
    %v3617 = vadd.f32 %v92, %v3616
    %v3618 = vpop.f32.mrb[0].mxu0
    %v3619 = vpop.f32.mrb[0].mxu0
    %v3620 = vpop.f32.mrb[0].mxu0
    %3621 = vdwg.mxu0
    %v3622 = vsel %vm1563, %v3617, -inf
    %3623 = vmax.xlane.f32.xlu0 %v3622
    %v3624 = vpop.xlane.xlu0 %3623
    %vm3625 = vcmp.eq.f32.partialorder %v3617, %v3624
    %v3626 = vsel %vm3625, %v94, 64
    %v3627 = vsel %vm1563, %v3626, 2147483647
    %v3628 = vand.u32 %v3627, 65535
    %v3629 = vshra.s32 %v3627, 16
    %v3630 = vcvt.s32.f32 %v3628
    %v3631 = vcvt.s32.f32 %v3629
    %3632 = vmin.xlane.f32.xlu0 %v3631
    %v3633 = vpop.xlane.xlu0 %3632
    %vm3634 = vcmp.eq.f32.partialorder %v3631, %v3633
    %v3635 = vsel %vm3634, %v3630, inf
    %3636 = vmin.xlane.f32.xlu0 %v3635
    %v3637 = vpop.xlane.xlu0 %3636
    %v3638 = vcvt.f32.s32 %v3637
    %v3639 = vcvt.f32.s32 %v3633
    %v3640 = vshll.u32 %v3639, 16
    %v3641 = vadd.s32 %v3640, %v3638
    %v3642 = vsub.f32 %v3617, %v3624
    %v3643 = vmul.f32 %v3642, 1.442695
    %v3644 = vpow.pop %v3643
    %v3645 = vsel %vm1563, %v3644, 0.0
    %3646 = vadd.xlane.f32.xlu0 %v3645
    %v3647 = vpop.xlane.xlu0 %3646
    %v3648 = vrcp.pop %v3647
    %v3649 = vmul.f32 1.0, %v3648
    %vm3650 = vcmask 49200
    %3651 = vst.msk [vmem:[#allocation7] sm:$0x1] %vm3650, %v3641
    %3652 = vst.msk [vmem:[#allocation8] sm:$0x1] %vm3650, %v3649
    %v3653 = vsel %vm3625, 1, 0
    %v3654 = vcvt.s32.f32 %v3653
    %v3655 = vpack.c.bf16 %v3654, %v3654
    %3656 = vmatprep.subr.bf16.mxu0 0
    %3657 = vmatpush1.bf16.msra.mxu0 %v1179
    %3658 = vmatprep.subr.bf16.mxu0 0
    %3659 = vmatpush1.bf16.msra.mxu0 %v1180
    %3660 = vmatprep.subr.bf16.mxu0 0
    %3661 = vmatpush1.bf16.msra.mxu0 0
    %3662 = vmatprep.subr.bf16.mxu0 0
    %3663 = vmatpush1.bf16.msra.mxu0 0
    %3664 = vmatprep.subr.bf16.mxu0 0
    %3665 = vmatpush1.bf16.msra.mxu0 0
    %3666 = vmatprep.subr.bf16.mxu0 0
    %3667 = vmatpush1.bf16.msra.mxu0 0
    %3668 = vmatprep.subr.bf16.mxu0 0
    %3669 = vmatpush1.bf16.msra.mxu0 0
    %3670 = vmatprep.subr.bf16.mxu0 0
    %3671 = vmatpush1.bf16.msra.mxu0 0
    %3672 = vmatprep.subr.bf16.mxu0 0
    %3673 = vmatpush1.bf16.msra.mxu0 0
    %3674 = vmatprep.subr.bf16.mxu0 0
    %3675 = vmatpush1.bf16.msra.mxu0 0
    %3676 = vmatprep.subr.bf16.mxu0 0
    %3677 = vmatpush1.bf16.msra.mxu0 0
    %3678 = vmatprep.subr.bf16.mxu0 0
    %3679 = vmatpush1.bf16.msra.mxu0 0
    %3680 = vmatprep.subr.bf16.mxu0 0
    %3681 = vmatpush1.bf16.msra.mxu0 0
    %3682 = vmatprep.subr.bf16.mxu0 0
    %3683 = vmatpush1.bf16.msra.mxu0 0
    %3684 = vmatprep.subr.bf16.mxu0 0
    %3685 = vmatpush1.bf16.msra.mxu0 0
    %3686 = vmatprep.subr.bf16.mxu0 0
    %3687 = vmatpush1.bf16.msra.mxu0 0
    %3688 = vmatprep.mubr.bf16.mxu0 0
    %3689 = vmatmul.mubr.bf16.gmra.mrb[0].mxu0 %v3427
    %v3690 = vpop.f32.mrb[0].mxu0
    %v3691 = vadd.f32 0.0, %v3690
    %v3692 = vpop.f32.mrb[0].mxu0
    %v3693 = vpop.f32.mrb[0].mxu0
    %v3694 = vpop.f32.mrb[0].mxu0
    %3695 = vdwg.mxu0
    %v3697 = vsel %vm143, %v3655, 0
    %3699 = vmatprep.subr.bf16.mxu0 0
    %3700 = vmatpush1.bf16.msra.mxu0 %v1242
    %3701 = vmatprep.subr.bf16.mxu0 0
    %3702 = vmatpush1.bf16.msra.mxu0 %v1243
    %3703 = vmatprep.subr.bf16.mxu0 0
    %3704 = vmatpush1.bf16.msra.mxu0 %v1244
    %3705 = vmatprep.subr.bf16.mxu0 0
    %3706 = vmatpush1.bf16.msra.mxu0 %v1245
    %3707 = vmatprep.subr.bf16.mxu0 0
    %3708 = vmatpush1.bf16.msra.mxu0 0
    %3709 = vmatprep.subr.bf16.mxu0 0
    %3710 = vmatpush1.bf16.msra.mxu0 0
    %3711 = vmatprep.subr.bf16.mxu0 0
    %3712 = vmatpush1.bf16.msra.mxu0 0
    %3713 = vmatprep.subr.bf16.mxu0 0
    %3714 = vmatpush1.bf16.msra.mxu0 0
    %3715 = vmatprep.subr.bf16.mxu0 0
    %3716 = vmatpush1.bf16.msra.mxu0 0
    %3717 = vmatprep.subr.bf16.mxu0 0
    %3718 = vmatpush1.bf16.msra.mxu0 0
    %3719 = vmatprep.subr.bf16.mxu0 0
    %3720 = vmatpush1.bf16.msra.mxu0 0
    %3721 = vmatprep.subr.bf16.mxu0 0
    %3722 = vmatpush1.bf16.msra.mxu0 0
    %3723 = vmatprep.subr.bf16.mxu0 0
    %3724 = vmatpush1.bf16.msra.mxu0 0
    %3725 = vmatprep.subr.bf16.mxu0 0
    %3726 = vmatpush1.bf16.msra.mxu0 0
    %3727 = vmatprep.subr.bf16.mxu0 0
    %3728 = vmatpush1.bf16.msra.mxu0 0
    %3729 = vmatprep.subr.bf16.mxu0 0
    %3730 = vmatpush1.bf16.msra.mxu0 0
    %3731 = vmatprep.mubr.bf16.mxu0 0
    %3732 = vmatmul.mubr.bf16.gmra.mrb[0].mxu0 %v3697
    %v3733 = vpop.f32.mrb[0].mxu0
    %v3734 = vadd.f32 %v3691, %v3733
    %v3735 = vpop.f32.mrb[0].mxu0
    %v3736 = vpop.f32.mrb[0].mxu0
    %v3737 = vpop.f32.mrb[0].mxu0
    %3738 = vdwg.mxu0
    %v3739 = vadd.f32 %v3734, %v90
    %v3740 = vxor.u32 %v3739, 2147483648
    %v3741 = vmul.f32 %v3740, 1.442695
    %v3742 = vpow.pop %v3741
    %v3743 = vadd.f32 %v3742, 1.0
    %v3744 = vrcp.pop %v3743
    %v3745 = vmul.f32 1.0, %v3744
    %3747 = vrot.lane.b32.xlu0 %v3739, 32
    %v3748 = vpop.permute.xlu0 %3747
    %v3750 = vmul.f32 %v3745, %v3748
    %3752 = vrot.lane.b32.xlu0 %v3750, 64
    %v3753 = vpop.permute.xlu0 %3752
    %v3755 = vadd.f32 %v3739, %v3753
    %v3756 = vtanh.pop %v3755
    %v3757 = vsub.f32 1.0, %v3745
    %3759 = vrot.lane.b32.xlu0 %v3756, 96
    %v3760 = vpop.permute.xlu0 %3759
    %v3762 = vmul.f32 %v3757, %v3760
    %v3763 = vmul.f32 %v3745, %v3421
    %v3764 = vadd.f32 %v3762, %v3763
    %v3765 = vpack.c.bf16 %v3764, %v3764
    %3767 = vrot.lane.b32.xlu0 %v3765, 96
    %v3768 = vpop.permute.xlu0 %3767
    %v3770 = vsel %vm343, %v3768, 0
    %3772 = vmatprep.subr.bf16.mxu0 0
    %3773 = vmatpush1.bf16.msra.mxu0 %v1161
    %3774 = vmatprep.subr.bf16.mxu0 0
    %3775 = vmatpush1.bf16.msra.mxu0 %v1162
    %3776 = vmatprep.subr.bf16.mxu0 0
    %3777 = vmatpush1.bf16.msra.mxu0 0
    %3778 = vmatprep.subr.bf16.mxu0 0
    %3779 = vmatpush1.bf16.msra.mxu0 0
    %3780 = vmatprep.subr.bf16.mxu0 0
    %3781 = vmatpush1.bf16.msra.mxu0 0
    %3782 = vmatprep.subr.bf16.mxu0 0
    %3783 = vmatpush1.bf16.msra.mxu0 0
    %3784 = vmatprep.subr.bf16.mxu0 0
    %3785 = vmatpush1.bf16.msra.mxu0 0
    %3786 = vmatprep.subr.bf16.mxu0 0
    %3787 = vmatpush1.bf16.msra.mxu0 0
    %3788 = vmatprep.subr.bf16.mxu0 0
    %3789 = vmatpush1.bf16.msra.mxu0 0
    %3790 = vmatprep.subr.bf16.mxu0 0
    %3791 = vmatpush1.bf16.msra.mxu0 0
    %3792 = vmatprep.subr.bf16.mxu0 0
    %3793 = vmatpush1.bf16.msra.mxu0 0
    %3794 = vmatprep.subr.bf16.mxu0 0
    %3795 = vmatpush1.bf16.msra.mxu0 0
    %3796 = vmatprep.subr.bf16.mxu0 0
    %3797 = vmatpush1.bf16.msra.mxu0 0
    %3798 = vmatprep.subr.bf16.mxu0 0
    %3799 = vmatpush1.bf16.msra.mxu0 0
    %3800 = vmatprep.subr.bf16.mxu0 0
    %3801 = vmatpush1.bf16.msra.mxu0 0
    %3802 = vmatprep.subr.bf16.mxu0 0
    %3803 = vmatpush1.bf16.msra.mxu0 0
    %3804 = vmatprep.mubr.bf16.mxu0 0
    %3805 = vmatmul.mubr.bf16.gmra.mrb[0].mxu0 %v3770
    %v3806 = vpop.f32.mrb[0].mxu0
    %v3807 = vadd.f32 0.0, %v3806
    %v3808 = vpop.f32.mrb[0].mxu0
    %v3809 = vpop.f32.mrb[0].mxu0
    %v3810 = vpop.f32.mrb[0].mxu0
    %3811 = vdwg.mxu0
    %v3812 = vsel %vm1366, %v3807, -inf
    %3813 = vmax.xlane.f32.xlu0 %v3812
    %v3814 = vpop.xlane.xlu0 %3813
    %v3815 = vsub.f32 %v3807, %v3814
    %v3816 = vmul.f32 %v3815, 1.442695
    %v3817 = vpow.pop %v3816
    %v3818 = vsel %vm1366, %v3817, 0.0
    %3819 = vadd.xlane.f32.xlu0 %v3818
    %v3820 = vpop.xlane.xlu0 %3819
    %v3821 = vrcp.pop %v3820
    %v3822 = vmul.f32 %v3817, %v3821
    %v3823 = vpack.c.bf16 %v3822, %v3822
    %v3825 = vsel %vm1382, %v3823, 0
    %3827 = vmatprep.subr.bf16.mxu0 0
    %3828 = vmatpush1.bf16.msra.mxu0 %v1387
    %3829 = vmatprep.subr.bf16.mxu0 0
    %3830 = vmatpush1.bf16.msra.mxu0 0
    %3831 = vmatprep.subr.bf16.mxu0 0
    %3832 = vmatpush1.bf16.msra.mxu0 0
    %3833 = vmatprep.subr.bf16.mxu0 0
    %3834 = vmatpush1.bf16.msra.mxu0 0
    %3835 = vmatprep.subr.bf16.mxu0 0
    %3836 = vmatpush1.bf16.msra.mxu0 0
    %3837 = vmatprep.subr.bf16.mxu0 0
    %3838 = vmatpush1.bf16.msra.mxu0 0
    %3839 = vmatprep.subr.bf16.mxu0 0
    %3840 = vmatpush1.bf16.msra.mxu0 0
    %3841 = vmatprep.subr.bf16.mxu0 0
    %3842 = vmatpush1.bf16.msra.mxu0 0
    %3843 = vmatprep.subr.bf16.mxu0 0
    %3844 = vmatpush1.bf16.msra.mxu0 0
    %3845 = vmatprep.subr.bf16.mxu0 0
    %3846 = vmatpush1.bf16.msra.mxu0 0
    %3847 = vmatprep.subr.bf16.mxu0 0
    %3848 = vmatpush1.bf16.msra.mxu0 0
    %3849 = vmatprep.subr.bf16.mxu0 0
    %3850 = vmatpush1.bf16.msra.mxu0 0
    %3851 = vmatprep.subr.bf16.mxu0 0
    %3852 = vmatpush1.bf16.msra.mxu0 0
    %3853 = vmatprep.subr.bf16.mxu0 0
    %3854 = vmatpush1.bf16.msra.mxu0 0
    %3855 = vmatprep.subr.bf16.mxu0 0
    %3856 = vmatpush1.bf16.msra.mxu0 0
    %3857 = vmatprep.subr.bf16.mxu0 0
    %3858 = vmatpush1.bf16.msra.mxu0 0
    %3859 = vmatprep.mubr.bf16.mxu0 0
    %3860 = vmatmul.mubr.bf16.gmra.mrb[0].mxu0 %v3825
    %v3861 = vpop.f32.mrb[0].mxu0
    %v3862 = vadd.f32 0.0, %v3861
    %v3863 = vpop.f32.mrb[0].mxu0
    %v3864 = vpop.f32.mrb[0].mxu0
    %v3865 = vpop.f32.mrb[0].mxu0
    %3866 = vdwg.mxu0
    %3868 = vrot.lane.b32.xlu0 %v3764, 96
    %v3869 = vpop.permute.xlu0 %3868
    %3872 = vrot.lane.b32.xlu0 %v3862, 32
    %v3873 = vpop.permute.xlu0 %3872
    %v3875 = vsel %vm343, %v3869, %v3873
    %v3876 = vpack.c.bf16 %v3875, %v3875
    %v3878 = vsel %vm143, %v3876, 0
    %3880 = vmatprep.subr.bf16.mxu0 0
    %3881 = vmatpush1.bf16.msra.mxu0 %v1455
    %3882 = vmatprep.subr.bf16.mxu0 0
    %3883 = vmatpush1.bf16.msra.mxu0 %v1456
    %3884 = vmatprep.subr.bf16.mxu0 0
    %3885 = vmatpush1.bf16.msra.mxu0 %v1457
    %3886 = vmatprep.subr.bf16.mxu0 0
    %3887 = vmatpush1.bf16.msra.mxu0 %v1458
    %3888 = vmatprep.subr.bf16.mxu0 0
    %3889 = vmatpush1.bf16.msra.mxu0 0
    %3890 = vmatprep.subr.bf16.mxu0 0
    %3891 = vmatpush1.bf16.msra.mxu0 0
    %3892 = vmatprep.subr.bf16.mxu0 0
    %3893 = vmatpush1.bf16.msra.mxu0 0
    %3894 = vmatprep.subr.bf16.mxu0 0
    %3895 = vmatpush1.bf16.msra.mxu0 0
    %3896 = vmatprep.subr.bf16.mxu0 0
    %3897 = vmatpush1.bf16.msra.mxu0 0
    %3898 = vmatprep.subr.bf16.mxu0 0
    %3899 = vmatpush1.bf16.msra.mxu0 0
    %3900 = vmatprep.subr.bf16.mxu0 0
    %3901 = vmatpush1.bf16.msra.mxu0 0
    %3902 = vmatprep.subr.bf16.mxu0 0
    %3903 = vmatpush1.bf16.msra.mxu0 0
    %3904 = vmatprep.subr.bf16.mxu0 0
    %3905 = vmatpush1.bf16.msra.mxu0 0
    %3906 = vmatprep.subr.bf16.mxu0 0
    %3907 = vmatpush1.bf16.msra.mxu0 0
    %3908 = vmatprep.subr.bf16.mxu0 0
    %3909 = vmatpush1.bf16.msra.mxu0 0
    %3910 = vmatprep.subr.bf16.mxu0 0
    %3911 = vmatpush1.bf16.msra.mxu0 0
    %3912 = vmatprep.mubr.bf16.mxu0 0
    %3913 = vmatmul.mubr.bf16.gmra.mrb[0].mxu0 %v3878
    %v3914 = vpop.f32.mrb[0].mxu0
    %v3915 = vadd.f32 %v91, %v3914
    %v3916 = vpop.f32.mrb[0].mxu0
    %v3917 = vpop.f32.mrb[0].mxu0
    %v3918 = vpop.f32.mrb[0].mxu0
    %3919 = vdwg.mxu0
    %v3920 = vtanh.pop %v3915
    %v3921 = vpack.c.bf16 %v3920, %v3920
    %v3923 = vsel %vm343, %v3921, 0
    %3925 = vmatprep.subr.bf16.mxu0 0
    %3926 = vmatpush1.bf16.msra.mxu0 %v1516
    %3927 = vmatprep.subr.bf16.mxu0 0
    %3928 = vmatpush1.bf16.msra.mxu0 %v1517
    %3929 = vmatprep.subr.bf16.mxu0 0
    %3930 = vmatpush1.bf16.msra.mxu0 0
    %3931 = vmatprep.subr.bf16.mxu0 0
    %3932 = vmatpush1.bf16.msra.mxu0 0
    %3933 = vmatprep.subr.bf16.mxu0 0
    %3934 = vmatpush1.bf16.msra.mxu0 0
    %3935 = vmatprep.subr.bf16.mxu0 0
    %3936 = vmatpush1.bf16.msra.mxu0 0
    %3937 = vmatprep.subr.bf16.mxu0 0
    %3938 = vmatpush1.bf16.msra.mxu0 0
    %3939 = vmatprep.subr.bf16.mxu0 0
    %3940 = vmatpush1.bf16.msra.mxu0 0
    %3941 = vmatprep.subr.bf16.mxu0 0
    %3942 = vmatpush1.bf16.msra.mxu0 0
    %3943 = vmatprep.subr.bf16.mxu0 0
    %3944 = vmatpush1.bf16.msra.mxu0 0
    %3945 = vmatprep.subr.bf16.mxu0 0
    %3946 = vmatpush1.bf16.msra.mxu0 0
    %3947 = vmatprep.subr.bf16.mxu0 0
    %3948 = vmatpush1.bf16.msra.mxu0 0
    %3949 = vmatprep.subr.bf16.mxu0 0
    %3950 = vmatpush1.bf16.msra.mxu0 0
    %3951 = vmatprep.subr.bf16.mxu0 0
    %3952 = vmatpush1.bf16.msra.mxu0 0
    %3953 = vmatprep.subr.bf16.mxu0 0
    %3954 = vmatpush1.bf16.msra.mxu0 0
    %3955 = vmatprep.subr.bf16.mxu0 0
    %3956 = vmatpush1.bf16.msra.mxu0 0
    %3957 = vmatprep.mubr.bf16.mxu0 0
    %3958 = vmatmul.mubr.bf16.gmra.mrb[0].mxu0 %v3923
    %v3959 = vpop.f32.mrb[0].mxu0
    %v3960 = vadd.f32 %v92, %v3959
    %v3961 = vpop.f32.mrb[0].mxu0
    %v3962 = vpop.f32.mrb[0].mxu0
    %v3963 = vpop.f32.mrb[0].mxu0
    %3964 = vdwg.mxu0
    %v3965 = vsel %vm1563, %v3960, -inf
    %3966 = vmax.xlane.f32.xlu0 %v3965
    %v3967 = vpop.xlane.xlu0 %3966
    %vm3968 = vcmp.eq.f32.partialorder %v3960, %v3967
    %v3969 = vsel %vm3968, %v94, 64
    %v3970 = vsel %vm1563, %v3969, 2147483647
    %v3971 = vand.u32 %v3970, 65535
    %v3972 = vshra.s32 %v3970, 16
    %v3973 = vcvt.s32.f32 %v3971
    %v3974 = vcvt.s32.f32 %v3972
    %3975 = vmin.xlane.f32.xlu0 %v3974
    %v3976 = vpop.xlane.xlu0 %3975
    %vm3977 = vcmp.eq.f32.partialorder %v3974, %v3976
    %v3978 = vsel %vm3977, %v3973, inf
    %3979 = vmin.xlane.f32.xlu0 %v3978
    %v3980 = vpop.xlane.xlu0 %3979
    %v3981 = vcvt.f32.s32 %v3980
    %v3982 = vcvt.f32.s32 %v3976
    %v3983 = vshll.u32 %v3982, 16
    %v3984 = vadd.s32 %v3983, %v3981
    %v3985 = vsub.f32 %v3960, %v3967
    %v3986 = vmul.f32 %v3985, 1.442695
    %v3987 = vpow.pop %v3986
    %v3988 = vsel %vm1563, %v3987, 0.0
    %3989 = vadd.xlane.f32.xlu0 %v3988
    %v3990 = vpop.xlane.xlu0 %3989
    %v3991 = vrcp.pop %v3990
    %v3992 = vmul.f32 1.0, %v3991
    %vm3993 = vcmask 57400
    %3994 = vst.msk [vmem:[#allocation7] sm:$0x1] %vm3993, %v3984
    %3995 = vst.msk [vmem:[#allocation8] sm:$0x1] %vm3993, %v3992
    %v3996 = vsel %vm3968, 1, 0
    %v3997 = vcvt.s32.f32 %v3996
    %v3998 = vpack.c.bf16 %v3997, %v3997
    %3999 = vmatprep.subr.bf16.mxu0 0
    %4000 = vmatpush1.bf16.msra.mxu0 %v1179
    %4001 = vmatprep.subr.bf16.mxu0 0
    %4002 = vmatpush1.bf16.msra.mxu0 %v1180
    %4003 = vmatprep.subr.bf16.mxu0 0
    %4004 = vmatpush1.bf16.msra.mxu0 0
    %4005 = vmatprep.subr.bf16.mxu0 0
    %4006 = vmatpush1.bf16.msra.mxu0 0
    %4007 = vmatprep.subr.bf16.mxu0 0
    %4008 = vmatpush1.bf16.msra.mxu0 0
    %4009 = vmatprep.subr.bf16.mxu0 0
    %4010 = vmatpush1.bf16.msra.mxu0 0
    %4011 = vmatprep.subr.bf16.mxu0 0
    %4012 = vmatpush1.bf16.msra.mxu0 0
    %4013 = vmatprep.subr.bf16.mxu0 0
    %4014 = vmatpush1.bf16.msra.mxu0 0
    %4015 = vmatprep.subr.bf16.mxu0 0
    %4016 = vmatpush1.bf16.msra.mxu0 0
    %4017 = vmatprep.subr.bf16.mxu0 0
    %4018 = vmatpush1.bf16.msra.mxu0 0
    %4019 = vmatprep.subr.bf16.mxu0 0
    %4020 = vmatpush1.bf16.msra.mxu0 0
    %4021 = vmatprep.subr.bf16.mxu0 0
    %4022 = vmatpush1.bf16.msra.mxu0 0
    %4023 = vmatprep.subr.bf16.mxu0 0
    %4024 = vmatpush1.bf16.msra.mxu0 0
    %4025 = vmatprep.subr.bf16.mxu0 0
    %4026 = vmatpush1.bf16.msra.mxu0 0
    %4027 = vmatprep.subr.bf16.mxu0 0
    %4028 = vmatpush1.bf16.msra.mxu0 0
    %4029 = vmatprep.subr.bf16.mxu0 0
    %4030 = vmatpush1.bf16.msra.mxu0 0
    %4031 = vmatprep.mubr.bf16.mxu0 0
    %4032 = vmatmul.mubr.bf16.gmra.mrb[0].mxu0 %v3770
    %v4033 = vpop.f32.mrb[0].mxu0
    %v4034 = vadd.f32 0.0, %v4033
    %v4035 = vpop.f32.mrb[0].mxu0
    %v4036 = vpop.f32.mrb[0].mxu0
    %v4037 = vpop.f32.mrb[0].mxu0
    %4038 = vdwg.mxu0
    %v4040 = vsel %vm143, %v3998, 0
    %4042 = vmatprep.subr.bf16.mxu0 0
    %4043 = vmatpush1.bf16.msra.mxu0 %v1242
    %4044 = vmatprep.subr.bf16.mxu0 0
    %4045 = vmatpush1.bf16.msra.mxu0 %v1243
    %4046 = vmatprep.subr.bf16.mxu0 0
    %4047 = vmatpush1.bf16.msra.mxu0 %v1244
    %4048 = vmatprep.subr.bf16.mxu0 0
    %4049 = vmatpush1.bf16.msra.mxu0 %v1245
    %4050 = vmatprep.subr.bf16.mxu0 0
    %4051 = vmatpush1.bf16.msra.mxu0 0
    %4052 = vmatprep.subr.bf16.mxu0 0
    %4053 = vmatpush1.bf16.msra.mxu0 0
    %4054 = vmatprep.subr.bf16.mxu0 0
    %4055 = vmatpush1.bf16.msra.mxu0 0
    %4056 = vmatprep.subr.bf16.mxu0 0
    %4057 = vmatpush1.bf16.msra.mxu0 0
    %4058 = vmatprep.subr.bf16.mxu0 0
    %4059 = vmatpush1.bf16.msra.mxu0 0
    %4060 = vmatprep.subr.bf16.mxu0 0
    %4061 = vmatpush1.bf16.msra.mxu0 0
    %4062 = vmatprep.subr.bf16.mxu0 0
    %4063 = vmatpush1.bf16.msra.mxu0 0
    %4064 = vmatprep.subr.bf16.mxu0 0
    %4065 = vmatpush1.bf16.msra.mxu0 0
    %4066 = vmatprep.subr.bf16.mxu0 0
    %4067 = vmatpush1.bf16.msra.mxu0 0
    %4068 = vmatprep.subr.bf16.mxu0 0
    %4069 = vmatpush1.bf16.msra.mxu0 0
    %4070 = vmatprep.subr.bf16.mxu0 0
    %4071 = vmatpush1.bf16.msra.mxu0 0
    %4072 = vmatprep.subr.bf16.mxu0 0
    %4073 = vmatpush1.bf16.msra.mxu0 0
    %4074 = vmatprep.mubr.bf16.mxu0 0
    %4075 = vmatmul.mubr.bf16.gmra.mrb[0].mxu0 %v4040
    %v4076 = vpop.f32.mrb[0].mxu0
    %v4077 = vadd.f32 %v4034, %v4076
    %v4078 = vpop.f32.mrb[0].mxu0
    %v4079 = vpop.f32.mrb[0].mxu0
    %v4080 = vpop.f32.mrb[0].mxu0
    %4081 = vdwg.mxu0
    %v4082 = vadd.f32 %v4077, %v90
    %v4083 = vxor.u32 %v4082, 2147483648
    %v4084 = vmul.f32 %v4083, 1.442695
    %v4085 = vpow.pop %v4084
    %v4086 = vadd.f32 %v4085, 1.0
    %v4087 = vrcp.pop %v4086
    %v4088 = vmul.f32 1.0, %v4087
    %4090 = vrot.lane.b32.xlu0 %v4082, 32
    %v4091 = vpop.permute.xlu0 %4090
    %v4093 = vmul.f32 %v4088, %v4091
    %4095 = vrot.lane.b32.xlu0 %v4093, 64
    %v4096 = vpop.permute.xlu0 %4095
    %v4098 = vadd.f32 %v4082, %v4096
    %v4099 = vtanh.pop %v4098
    %v4100 = vsub.f32 1.0, %v4088
    %4102 = vrot.lane.b32.xlu0 %v4099, 96
    %v4103 = vpop.permute.xlu0 %4102
    %v4105 = vmul.f32 %v4100, %v4103
    %v4106 = vmul.f32 %v4088, %v3764
    %v4107 = vadd.f32 %v4105, %v4106
    %v4108 = vpack.c.bf16 %v4107, %v4107
    %4110 = vrot.lane.b32.xlu0 %v4108, 96
    %v4111 = vpop.permute.xlu0 %4110
    %v4113 = vsel %vm343, %v4111, 0
    %4115 = vmatprep.subr.bf16.mxu0 0
    %4116 = vmatpush1.bf16.msra.mxu0 %v1161
    %4117 = vmatprep.subr.bf16.mxu0 0
    %4118 = vmatpush1.bf16.msra.mxu0 %v1162
    %4119 = vmatprep.subr.bf16.mxu0 0
    %4120 = vmatpush1.bf16.msra.mxu0 0
    %4121 = vmatprep.subr.bf16.mxu0 0
    %4122 = vmatpush1.bf16.msra.mxu0 0
    %4123 = vmatprep.subr.bf16.mxu0 0
    %4124 = vmatpush1.bf16.msra.mxu0 0
    %4125 = vmatprep.subr.bf16.mxu0 0
    %4126 = vmatpush1.bf16.msra.mxu0 0
    %4127 = vmatprep.subr.bf16.mxu0 0
    %4128 = vmatpush1.bf16.msra.mxu0 0
    %4129 = vmatprep.subr.bf16.mxu0 0
    %4130 = vmatpush1.bf16.msra.mxu0 0
    %4131 = vmatprep.subr.bf16.mxu0 0
    %4132 = vmatpush1.bf16.msra.mxu0 0
    %4133 = vmatprep.subr.bf16.mxu0 0
    %4134 = vmatpush1.bf16.msra.mxu0 0
    %4135 = vmatprep.subr.bf16.mxu0 0
    %4136 = vmatpush1.bf16.msra.mxu0 0
    %4137 = vmatprep.subr.bf16.mxu0 0
    %4138 = vmatpush1.bf16.msra.mxu0 0
    %4139 = vmatprep.subr.bf16.mxu0 0
    %4140 = vmatpush1.bf16.msra.mxu0 0
    %4141 = vmatprep.subr.bf16.mxu0 0
    %4142 = vmatpush1.bf16.msra.mxu0 0
    %4143 = vmatprep.subr.bf16.mxu0 0
    %4144 = vmatpush1.bf16.msra.mxu0 0
    %4145 = vmatprep.subr.bf16.mxu0 0
    %4146 = vmatpush1.bf16.msra.mxu0 0
    %4147 = vmatprep.mubr.bf16.mxu0 0
    %4148 = vmatmul.mubr.bf16.gmra.mrb[0].mxu0 %v4113
    %v4149 = vpop.f32.mrb[0].mxu0
    %v4150 = vadd.f32 0.0, %v4149
    %v4151 = vpop.f32.mrb[0].mxu0
    %v4152 = vpop.f32.mrb[0].mxu0
    %v4153 = vpop.f32.mrb[0].mxu0
    %4154 = vdwg.mxu0
    %v4155 = vsel %vm1366, %v4150, -inf
    %4156 = vmax.xlane.f32.xlu0 %v4155
    %v4157 = vpop.xlane.xlu0 %4156
    %v4158 = vsub.f32 %v4150, %v4157
    %v4159 = vmul.f32 %v4158, 1.442695
    %v4160 = vpow.pop %v4159
    %v4161 = vsel %vm1366, %v4160, 0.0
    %4162 = vadd.xlane.f32.xlu0 %v4161
    %v4163 = vpop.xlane.xlu0 %4162
    %v4164 = vrcp.pop %v4163
    %v4165 = vmul.f32 %v4160, %v4164
    %v4166 = vpack.c.bf16 %v4165, %v4165
    %v4168 = vsel %vm1382, %v4166, 0
    %4170 = vmatprep.subr.bf16.mxu0 0
    %4171 = vmatpush1.bf16.msra.mxu0 %v1387
    %4172 = vmatprep.subr.bf16.mxu0 0
    %4173 = vmatpush1.bf16.msra.mxu0 0
    %4174 = vmatprep.subr.bf16.mxu0 0
    %4175 = vmatpush1.bf16.msra.mxu0 0
    %4176 = vmatprep.subr.bf16.mxu0 0
    %4177 = vmatpush1.bf16.msra.mxu0 0
    %4178 = vmatprep.subr.bf16.mxu0 0
    %4179 = vmatpush1.bf16.msra.mxu0 0
    %4180 = vmatprep.subr.bf16.mxu0 0
    %4181 = vmatpush1.bf16.msra.mxu0 0
    %4182 = vmatprep.subr.bf16.mxu0 0
    %4183 = vmatpush1.bf16.msra.mxu0 0
    %4184 = vmatprep.subr.bf16.mxu0 0
    %4185 = vmatpush1.bf16.msra.mxu0 0
    %4186 = vmatprep.subr.bf16.mxu0 0
    %4187 = vmatpush1.bf16.msra.mxu0 0
    %4188 = vmatprep.subr.bf16.mxu0 0
    %4189 = vmatpush1.bf16.msra.mxu0 0
    %4190 = vmatprep.subr.bf16.mxu0 0
    %4191 = vmatpush1.bf16.msra.mxu0 0
    %4192 = vmatprep.subr.bf16.mxu0 0
    %4193 = vmatpush1.bf16.msra.mxu0 0
    %4194 = vmatprep.subr.bf16.mxu0 0
    %4195 = vmatpush1.bf16.msra.mxu0 0
    %4196 = vmatprep.subr.bf16.mxu0 0
    %4197 = vmatpush1.bf16.msra.mxu0 0
    %4198 = vmatprep.subr.bf16.mxu0 0
    %4199 = vmatpush1.bf16.msra.mxu0 0
    %4200 = vmatprep.subr.bf16.mxu0 0
    %4201 = vmatpush1.bf16.msra.mxu0 0
    %4202 = vmatprep.mubr.bf16.mxu0 0
    %4203 = vmatmul.mubr.bf16.gmra.mrb[0].mxu0 %v4168
    %v4204 = vpop.f32.mrb[0].mxu0
    %v4205 = vadd.f32 0.0, %v4204
    %v4206 = vpop.f32.mrb[0].mxu0
    %v4207 = vpop.f32.mrb[0].mxu0
    %v4208 = vpop.f32.mrb[0].mxu0
    %4209 = vdwg.mxu0
    %4211 = vrot.lane.b32.xlu0 %v4107, 96
    %v4212 = vpop.permute.xlu0 %4211
    %4215 = vrot.lane.b32.xlu0 %v4205, 32
    %v4216 = vpop.permute.xlu0 %4215
    %v4218 = vsel %vm343, %v4212, %v4216
    %v4219 = vpack.c.bf16 %v4218, %v4218
    %v4221 = vsel %vm143, %v4219, 0
    %4223 = vmatprep.subr.bf16.mxu0 0
    %4224 = vmatpush1.bf16.msra.mxu0 %v1455
    %4225 = vmatprep.subr.bf16.mxu0 0
    %4226 = vmatpush1.bf16.msra.mxu0 %v1456
    %4227 = vmatprep.subr.bf16.mxu0 0
    %4228 = vmatpush1.bf16.msra.mxu0 %v1457
    %4229 = vmatprep.subr.bf16.mxu0 0
    %4230 = vmatpush1.bf16.msra.mxu0 %v1458
    %4231 = vmatprep.subr.bf16.mxu0 0
    %4232 = vmatpush1.bf16.msra.mxu0 0
    %4233 = vmatprep.subr.bf16.mxu0 0
    %4234 = vmatpush1.bf16.msra.mxu0 0
    %4235 = vmatprep.subr.bf16.mxu0 0
    %4236 = vmatpush1.bf16.msra.mxu0 0
    %4237 = vmatprep.subr.bf16.mxu0 0
    %4238 = vmatpush1.bf16.msra.mxu0 0
    %4239 = vmatprep.subr.bf16.mxu0 0
    %4240 = vmatpush1.bf16.msra.mxu0 0
    %4241 = vmatprep.subr.bf16.mxu0 0
    %4242 = vmatpush1.bf16.msra.mxu0 0
    %4243 = vmatprep.subr.bf16.mxu0 0
    %4244 = vmatpush1.bf16.msra.mxu0 0
    %4245 = vmatprep.subr.bf16.mxu0 0
    %4246 = vmatpush1.bf16.msra.mxu0 0
    %4247 = vmatprep.subr.bf16.mxu0 0
    %4248 = vmatpush1.bf16.msra.mxu0 0
    %4249 = vmatprep.subr.bf16.mxu0 0
    %4250 = vmatpush1.bf16.msra.mxu0 0
    %4251 = vmatprep.subr.bf16.mxu0 0
    %4252 = vmatpush1.bf16.msra.mxu0 0
    %4253 = vmatprep.subr.bf16.mxu0 0
    %4254 = vmatpush1.bf16.msra.mxu0 0
    %4255 = vmatprep.mubr.bf16.mxu0 0
    %4256 = vmatmul.mubr.bf16.gmra.mrb[0].mxu0 %v4221
    %v4257 = vpop.f32.mrb[0].mxu0
    %v4258 = vadd.f32 %v91, %v4257
    %v4259 = vpop.f32.mrb[0].mxu0
    %v4260 = vpop.f32.mrb[0].mxu0
    %v4261 = vpop.f32.mrb[0].mxu0
    %4262 = vdwg.mxu0
    %v4263 = vtanh.pop %v4258
    %v4264 = vpack.c.bf16 %v4263, %v4263
    %v4266 = vsel %vm343, %v4264, 0
    %4268 = vmatprep.subr.bf16.mxu0 0
    %4269 = vmatpush1.bf16.msra.mxu0 %v1516
    %4270 = vmatprep.subr.bf16.mxu0 0
    %4271 = vmatpush1.bf16.msra.mxu0 %v1517
    %4272 = vmatprep.subr.bf16.mxu0 0
    %4273 = vmatpush1.bf16.msra.mxu0 0
    %4274 = vmatprep.subr.bf16.mxu0 0
    %4275 = vmatpush1.bf16.msra.mxu0 0
    %4276 = vmatprep.subr.bf16.mxu0 0
    %4277 = vmatpush1.bf16.msra.mxu0 0
    %4278 = vmatprep.subr.bf16.mxu0 0
    %4279 = vmatpush1.bf16.msra.mxu0 0
    %4280 = vmatprep.subr.bf16.mxu0 0
    %4281 = vmatpush1.bf16.msra.mxu0 0
    %4282 = vmatprep.subr.bf16.mxu0 0
    %4283 = vmatpush1.bf16.msra.mxu0 0
    %4284 = vmatprep.subr.bf16.mxu0 0
    %4285 = vmatpush1.bf16.msra.mxu0 0
    %4286 = vmatprep.subr.bf16.mxu0 0
    %4287 = vmatpush1.bf16.msra.mxu0 0
    %4288 = vmatprep.subr.bf16.mxu0 0
    %4289 = vmatpush1.bf16.msra.mxu0 0
    %4290 = vmatprep.subr.bf16.mxu0 0
    %4291 = vmatpush1.bf16.msra.mxu0 0
    %4292 = vmatprep.subr.bf16.mxu0 0
    %4293 = vmatpush1.bf16.msra.mxu0 0
    %4294 = vmatprep.subr.bf16.mxu0 0
    %4295 = vmatpush1.bf16.msra.mxu0 0
    %4296 = vmatprep.subr.bf16.mxu0 0
    %4297 = vmatpush1.bf16.msra.mxu0 0
    %4298 = vmatprep.subr.bf16.mxu0 0
    %4299 = vmatpush1.bf16.msra.mxu0 0
    %4300 = vmatprep.mubr.bf16.mxu0 0
    %4301 = vmatmul.mubr.bf16.gmra.mrb[0].mxu0 %v4266
    %v4302 = vpop.f32.mrb[0].mxu0
    %v4303 = vadd.f32 %v92, %v4302
    %v4304 = vpop.f32.mrb[0].mxu0
    %v4305 = vpop.f32.mrb[0].mxu0
    %v4306 = vpop.f32.mrb[0].mxu0
    %4307 = vdwg.mxu0
    %v4308 = vsel %vm1563, %v4303, -inf
    %4309 = vmax.xlane.f32.xlu0 %v4308
    %v4310 = vpop.xlane.xlu0 %4309
    %vm4311 = vcmp.eq.f32.partialorder %v4303, %v4310
    %v4312 = vsel %vm4311, %v94, 64
    %v4313 = vsel %vm1563, %v4312, 2147483647
    %v4314 = vand.u32 %v4313, 65535
    %v4315 = vshra.s32 %v4313, 16
    %v4316 = vcvt.s32.f32 %v4314
    %v4317 = vcvt.s32.f32 %v4315
    %4318 = vmin.xlane.f32.xlu0 %v4317
    %v4319 = vpop.xlane.xlu0 %4318
    %vm4320 = vcmp.eq.f32.partialorder %v4317, %v4319
    %v4321 = vsel %vm4320, %v4316, inf
    %4322 = vmin.xlane.f32.xlu0 %v4321
    %v4323 = vpop.xlane.xlu0 %4322
    %v4324 = vcvt.f32.s32 %v4323
    %v4325 = vcvt.f32.s32 %v4319
    %v4326 = vshll.u32 %v4325, 16
    %v4327 = vadd.s32 %v4326, %v4324
    %v4328 = vsub.f32 %v4303, %v4310
    %v4329 = vmul.f32 %v4328, 1.442695
    %v4330 = vpow.pop %v4329
    %v4331 = vsel %vm1563, %v4330, 0.0
    %4332 = vadd.xlane.f32.xlu0 %v4331
    %v4333 = vpop.xlane.xlu0 %4332
    %v4334 = vrcp.pop %v4333
    %v4335 = vmul.f32 1.0, %v4334
    %vm4336 = vcmask 65600
    %4337 = vst.msk [vmem:[#allocation7] sm:$0x1] %vm4336, %v4327
    %4338 = vst.msk [vmem:[#allocation8] sm:$0x1] %vm4336, %v4335
    %v4339 = vsel %vm4311, 1, 0
    %v4340 = vcvt.s32.f32 %v4339
    %v4341 = vpack.c.bf16 %v4340, %v4340
    %4342 = vmatprep.subr.bf16.mxu0 0
    %4343 = vmatpush1.bf16.msra.mxu0 %v1179
    %4344 = vmatprep.subr.bf16.mxu0 0
    %4345 = vmatpush1.bf16.msra.mxu0 %v1180
    %4346 = vmatprep.subr.bf16.mxu0 0
    %4347 = vmatpush1.bf16.msra.mxu0 0
    %4348 = vmatprep.subr.bf16.mxu0 0
    %4349 = vmatpush1.bf16.msra.mxu0 0
    %4350 = vmatprep.subr.bf16.mxu0 0
    %4351 = vmatpush1.bf16.msra.mxu0 0
    %4352 = vmatprep.subr.bf16.mxu0 0
    %4353 = vmatpush1.bf16.msra.mxu0 0
    %4354 = vmatprep.subr.bf16.mxu0 0
    %4355 = vmatpush1.bf16.msra.mxu0 0
    %4356 = vmatprep.subr.bf16.mxu0 0
    %4357 = vmatpush1.bf16.msra.mxu0 0
    %4358 = vmatprep.subr.bf16.mxu0 0
    %4359 = vmatpush1.bf16.msra.mxu0 0
    %4360 = vmatprep.subr.bf16.mxu0 0
    %4361 = vmatpush1.bf16.msra.mxu0 0
    %4362 = vmatprep.subr.bf16.mxu0 0
    %4363 = vmatpush1.bf16.msra.mxu0 0
    %4364 = vmatprep.subr.bf16.mxu0 0
    %4365 = vmatpush1.bf16.msra.mxu0 0
    %4366 = vmatprep.subr.bf16.mxu0 0
    %4367 = vmatpush1.bf16.msra.mxu0 0
    %4368 = vmatprep.subr.bf16.mxu0 0
    %4369 = vmatpush1.bf16.msra.mxu0 0
    %4370 = vmatprep.subr.bf16.mxu0 0
    %4371 = vmatpush1.bf16.msra.mxu0 0
    %4372 = vmatprep.subr.bf16.mxu0 0
    %4373 = vmatpush1.bf16.msra.mxu0 0
    %4374 = vmatprep.mubr.bf16.mxu0 0
    %4375 = vmatmul.mubr.bf16.gmra.mrb[0].mxu0 %v4113
    %v4376 = vpop.f32.mrb[0].mxu0
    %v4377 = vadd.f32 0.0, %v4376
    %v4378 = vpop.f32.mrb[0].mxu0
    %v4379 = vpop.f32.mrb[0].mxu0
    %v4380 = vpop.f32.mrb[0].mxu0
    %4381 = vdwg.mxu0
    %v4383 = vsel %vm143, %v4341, 0
    %4385 = vmatprep.subr.bf16.mxu0 0
    %4386 = vmatpush1.bf16.msra.mxu0 %v1242
    %4387 = vmatprep.subr.bf16.mxu0 0
    %4388 = vmatpush1.bf16.msra.mxu0 %v1243
    %4389 = vmatprep.subr.bf16.mxu0 0
    %4390 = vmatpush1.bf16.msra.mxu0 %v1244
    %4391 = vmatprep.subr.bf16.mxu0 0
    %4392 = vmatpush1.bf16.msra.mxu0 %v1245
    %4393 = vmatprep.subr.bf16.mxu0 0
    %4394 = vmatpush1.bf16.msra.mxu0 0
    %4395 = vmatprep.subr.bf16.mxu0 0
    %4396 = vmatpush1.bf16.msra.mxu0 0
    %4397 = vmatprep.subr.bf16.mxu0 0
    %4398 = vmatpush1.bf16.msra.mxu0 0
    %4399 = vmatprep.subr.bf16.mxu0 0
    %4400 = vmatpush1.bf16.msra.mxu0 0
    %4401 = vmatprep.subr.bf16.mxu0 0
    %4402 = vmatpush1.bf16.msra.mxu0 0
    %4403 = vmatprep.subr.bf16.mxu0 0
    %4404 = vmatpush1.bf16.msra.mxu0 0
    %4405 = vmatprep.subr.bf16.mxu0 0
    %4406 = vmatpush1.bf16.msra.mxu0 0
    %4407 = vmatprep.subr.bf16.mxu0 0
    %4408 = vmatpush1.bf16.msra.mxu0 0
    %4409 = vmatprep.subr.bf16.mxu0 0
    %4410 = vmatpush1.bf16.msra.mxu0 0
    %4411 = vmatprep.subr.bf16.mxu0 0
    %4412 = vmatpush1.bf16.msra.mxu0 0
    %4413 = vmatprep.subr.bf16.mxu0 0
    %4414 = vmatpush1.bf16.msra.mxu0 0
    %4415 = vmatprep.subr.bf16.mxu0 0
    %4416 = vmatpush1.bf16.msra.mxu0 0
    %4417 = vmatprep.mubr.bf16.mxu0 0
    %4418 = vmatmul.mubr.bf16.gmra.mrb[0].mxu0 %v4383
    %v4419 = vpop.f32.mrb[0].mxu0
    %v4420 = vadd.f32 %v4377, %v4419
    %v4421 = vpop.f32.mrb[0].mxu0
    %v4422 = vpop.f32.mrb[0].mxu0
    %v4423 = vpop.f32.mrb[0].mxu0
    %4424 = vdwg.mxu0
    %v4425 = vadd.f32 %v4420, %v90
    %v4426 = vxor.u32 %v4425, 2147483648
    %v4427 = vmul.f32 %v4426, 1.442695
    %v4428 = vpow.pop %v4427
    %v4429 = vadd.f32 %v4428, 1.0
    %v4430 = vrcp.pop %v4429
    %v4431 = vmul.f32 1.0, %v4430
    %4433 = vrot.lane.b32.xlu0 %v4425, 32
    %v4434 = vpop.permute.xlu0 %4433
    %v4436 = vmul.f32 %v4431, %v4434
    %4438 = vrot.lane.b32.xlu0 %v4436, 64
    %v4439 = vpop.permute.xlu0 %4438
    %v4441 = vadd.f32 %v4425, %v4439
    %v4442 = vtanh.pop %v4441
    %v4443 = vsub.f32 1.0, %v4431
    %4445 = vrot.lane.b32.xlu0 %v4442, 96
    %v4446 = vpop.permute.xlu0 %4445
    %v4448 = vmul.f32 %v4443, %v4446
    %v4449 = vmul.f32 %v4431, %v4107
    %v4450 = vadd.f32 %v4448, %v4449
    %v4451 = vpack.c.bf16 %v4450, %v4450
    %4453 = vrot.lane.b32.xlu0 %v4451, 96
    %v4454 = vpop.permute.xlu0 %4453
    %v4456 = vsel %vm343, %v4454, 0
    %4458 = vmatprep.subr.bf16.mxu0 0
    %4459 = vmatpush1.bf16.msra.mxu0 %v1161
    %4460 = vmatprep.subr.bf16.mxu0 0
    %4461 = vmatpush1.bf16.msra.mxu0 %v1162
    %4462 = vmatprep.subr.bf16.mxu0 0
    %4463 = vmatpush1.bf16.msra.mxu0 0
    %4464 = vmatprep.subr.bf16.mxu0 0
    %4465 = vmatpush1.bf16.msra.mxu0 0
    %4466 = vmatprep.subr.bf16.mxu0 0
    %4467 = vmatpush1.bf16.msra.mxu0 0
    %4468 = vmatprep.subr.bf16.mxu0 0
    %4469 = vmatpush1.bf16.msra.mxu0 0
    %4470 = vmatprep.subr.bf16.mxu0 0
    %4471 = vmatpush1.bf16.msra.mxu0 0
    %4472 = vmatprep.subr.bf16.mxu0 0
    %4473 = vmatpush1.bf16.msra.mxu0 0
    %4474 = vmatprep.subr.bf16.mxu0 0
    %4475 = vmatpush1.bf16.msra.mxu0 0
    %4476 = vmatprep.subr.bf16.mxu0 0
    %4477 = vmatpush1.bf16.msra.mxu0 0
    %4478 = vmatprep.subr.bf16.mxu0 0
    %4479 = vmatpush1.bf16.msra.mxu0 0
    %4480 = vmatprep.subr.bf16.mxu0 0
    %4481 = vmatpush1.bf16.msra.mxu0 0
    %4482 = vmatprep.subr.bf16.mxu0 0
    %4483 = vmatpush1.bf16.msra.mxu0 0
    %4484 = vmatprep.subr.bf16.mxu0 0
    %4485 = vmatpush1.bf16.msra.mxu0 0
    %4486 = vmatprep.subr.bf16.mxu0 0
    %4487 = vmatpush1.bf16.msra.mxu0 0
    %4488 = vmatprep.subr.bf16.mxu0 0
    %4489 = vmatpush1.bf16.msra.mxu0 0
    %4490 = vmatprep.mubr.bf16.mxu0 0
    %4491 = vmatmul.mubr.bf16.gmra.mrb[0].mxu0 %v4456
    %v4492 = vpop.f32.mrb[0].mxu0
    %v4493 = vadd.f32 0.0, %v4492
    %v4494 = vpop.f32.mrb[0].mxu0
    %v4495 = vpop.f32.mrb[0].mxu0
    %v4496 = vpop.f32.mrb[0].mxu0
    %4497 = vdwg.mxu0
    %v4498 = vsel %vm1366, %v4493, -inf
    %4499 = vmax.xlane.f32.xlu0 %v4498
    %v4500 = vpop.xlane.xlu0 %4499
    %v4501 = vsub.f32 %v4493, %v4500
    %v4502 = vmul.f32 %v4501, 1.442695
    %v4503 = vpow.pop %v4502
    %v4504 = vsel %vm1366, %v4503, 0.0
    %4505 = vadd.xlane.f32.xlu0 %v4504
    %v4506 = vpop.xlane.xlu0 %4505
    %v4507 = vrcp.pop %v4506
    %v4508 = vmul.f32 %v4503, %v4507
    %v4509 = vpack.c.bf16 %v4508, %v4508
    %v4511 = vsel %vm1382, %v4509, 0
    %4513 = vmatprep.subr.bf16.mxu0 0
    %4514 = vmatpush1.bf16.msra.mxu0 %v1387
    %4515 = vmatprep.subr.bf16.mxu0 0
    %4516 = vmatpush1.bf16.msra.mxu0 0
    %4517 = vmatprep.subr.bf16.mxu0 0
    %4518 = vmatpush1.bf16.msra.mxu0 0
    %4519 = vmatprep.subr.bf16.mxu0 0
    %4520 = vmatpush1.bf16.msra.mxu0 0
    %4521 = vmatprep.subr.bf16.mxu0 0
    %4522 = vmatpush1.bf16.msra.mxu0 0
    %4523 = vmatprep.subr.bf16.mxu0 0
    %4524 = vmatpush1.bf16.msra.mxu0 0
    %4525 = vmatprep.subr.bf16.mxu0 0
    %4526 = vmatpush1.bf16.msra.mxu0 0
    %4527 = vmatprep.subr.bf16.mxu0 0
    %4528 = vmatpush1.bf16.msra.mxu0 0
    %4529 = vmatprep.subr.bf16.mxu0 0
    %4530 = vmatpush1.bf16.msra.mxu0 0
    %4531 = vmatprep.subr.bf16.mxu0 0
    %4532 = vmatpush1.bf16.msra.mxu0 0
    %4533 = vmatprep.subr.bf16.mxu0 0
    %4534 = vmatpush1.bf16.msra.mxu0 0
    %4535 = vmatprep.subr.bf16.mxu0 0
    %4536 = vmatpush1.bf16.msra.mxu0 0
    %4537 = vmatprep.subr.bf16.mxu0 0
    %4538 = vmatpush1.bf16.msra.mxu0 0
    %4539 = vmatprep.subr.bf16.mxu0 0
    %4540 = vmatpush1.bf16.msra.mxu0 0
    %4541 = vmatprep.subr.bf16.mxu0 0
    %4542 = vmatpush1.bf16.msra.mxu0 0
    %4543 = vmatprep.subr.bf16.mxu0 0
    %4544 = vmatpush1.bf16.msra.mxu0 0
    %4545 = vmatprep.mubr.bf16.mxu0 0
    %4546 = vmatmul.mubr.bf16.gmra.mrb[0].mxu0 %v4511
    %v4547 = vpop.f32.mrb[0].mxu0
    %v4548 = vadd.f32 0.0, %v4547
    %v4549 = vpop.f32.mrb[0].mxu0
    %v4550 = vpop.f32.mrb[0].mxu0
    %v4551 = vpop.f32.mrb[0].mxu0
    %4552 = vdwg.mxu0
    %4554 = vrot.lane.b32.xlu0 %v4450, 96
    %v4555 = vpop.permute.xlu0 %4554
    %4558 = vrot.lane.b32.xlu0 %v4548, 32
    %v4559 = vpop.permute.xlu0 %4558
    %v4561 = vsel %vm343, %v4555, %v4559
    %v4562 = vpack.c.bf16 %v4561, %v4561
    %v4564 = vsel %vm143, %v4562, 0
    %4566 = vmatprep.subr.bf16.mxu0 0
    %4567 = vmatpush1.bf16.msra.mxu0 %v1455
    %4568 = vmatprep.subr.bf16.mxu0 0
    %4569 = vmatpush1.bf16.msra.mxu0 %v1456
    %4570 = vmatprep.subr.bf16.mxu0 0
    %4571 = vmatpush1.bf16.msra.mxu0 %v1457
    %4572 = vmatprep.subr.bf16.mxu0 0
    %4573 = vmatpush1.bf16.msra.mxu0 %v1458
    %4574 = vmatprep.subr.bf16.mxu0 0
    %4575 = vmatpush1.bf16.msra.mxu0 0
    %4576 = vmatprep.subr.bf16.mxu0 0
    %4577 = vmatpush1.bf16.msra.mxu0 0
    %4578 = vmatprep.subr.bf16.mxu0 0
    %4579 = vmatpush1.bf16.msra.mxu0 0
    %4580 = vmatprep.subr.bf16.mxu0 0
    %4581 = vmatpush1.bf16.msra.mxu0 0
    %4582 = vmatprep.subr.bf16.mxu0 0
    %4583 = vmatpush1.bf16.msra.mxu0 0
    %4584 = vmatprep.subr.bf16.mxu0 0
    %4585 = vmatpush1.bf16.msra.mxu0 0
    %4586 = vmatprep.subr.bf16.mxu0 0
    %4587 = vmatpush1.bf16.msra.mxu0 0
    %4588 = vmatprep.subr.bf16.mxu0 0
    %4589 = vmatpush1.bf16.msra.mxu0 0
    %4590 = vmatprep.subr.bf16.mxu0 0
    %4591 = vmatpush1.bf16.msra.mxu0 0
    %4592 = vmatprep.subr.bf16.mxu0 0
    %4593 = vmatpush1.bf16.msra.mxu0 0
    %4594 = vmatprep.subr.bf16.mxu0 0
    %4595 = vmatpush1.bf16.msra.mxu0 0
    %4596 = vmatprep.subr.bf16.mxu0 0
    %4597 = vmatpush1.bf16.msra.mxu0 0
    %4598 = vmatprep.mubr.bf16.mxu0 0
    %4599 = vmatmul.mubr.bf16.gmra.mrb[0].mxu0 %v4564
    %v4600 = vpop.f32.mrb[0].mxu0
    %v4601 = vadd.f32 %v91, %v4600
    %v4602 = vpop.f32.mrb[0].mxu0
    %v4603 = vpop.f32.mrb[0].mxu0
    %v4604 = vpop.f32.mrb[0].mxu0
    %4605 = vdwg.mxu0
    %v4606 = vtanh.pop %v4601
    %v4607 = vpack.c.bf16 %v4606, %v4606
    %v4609 = vsel %vm343, %v4607, 0
    %4611 = vmatprep.subr.bf16.mxu0 0
    %4612 = vmatpush1.bf16.msra.mxu0 %v1516
    %4613 = vmatprep.subr.bf16.mxu0 0
    %4614 = vmatpush1.bf16.msra.mxu0 %v1517
    %4615 = vmatprep.subr.bf16.mxu0 0
    %4616 = vmatpush1.bf16.msra.mxu0 0
    %4617 = vmatprep.subr.bf16.mxu0 0
    %4618 = vmatpush1.bf16.msra.mxu0 0
    %4619 = vmatprep.subr.bf16.mxu0 0
    %4620 = vmatpush1.bf16.msra.mxu0 0
    %4621 = vmatprep.subr.bf16.mxu0 0
    %4622 = vmatpush1.bf16.msra.mxu0 0
    %4623 = vmatprep.subr.bf16.mxu0 0
    %4624 = vmatpush1.bf16.msra.mxu0 0
    %4625 = vmatprep.subr.bf16.mxu0 0
    %4626 = vmatpush1.bf16.msra.mxu0 0
    %4627 = vmatprep.subr.bf16.mxu0 0
    %4628 = vmatpush1.bf16.msra.mxu0 0
    %4629 = vmatprep.subr.bf16.mxu0 0
    %4630 = vmatpush1.bf16.msra.mxu0 0
    %4631 = vmatprep.subr.bf16.mxu0 0
    %4632 = vmatpush1.bf16.msra.mxu0 0
    %4633 = vmatprep.subr.bf16.mxu0 0
    %4634 = vmatpush1.bf16.msra.mxu0 0
    %4635 = vmatprep.subr.bf16.mxu0 0
    %4636 = vmatpush1.bf16.msra.mxu0 0
    %4637 = vmatprep.subr.bf16.mxu0 0
    %4638 = vmatpush1.bf16.msra.mxu0 0
    %4639 = vmatprep.subr.bf16.mxu0 0
    %4640 = vmatpush1.bf16.msra.mxu0 0
    %4641 = vmatprep.subr.bf16.mxu0 0
    %4642 = vmatpush1.bf16.msra.mxu0 0
    %4643 = vmatprep.mubr.bf16.mxu0 0
    %4644 = vmatmul.mubr.bf16.gmra.mrb[0].mxu0 %v4609
    %v4645 = vpop.f32.mrb[0].mxu0
    %v4646 = vadd.f32 %v92, %v4645
    %v4647 = vpop.f32.mrb[0].mxu0
    %v4648 = vpop.f32.mrb[0].mxu0
    %v4649 = vpop.f32.mrb[0].mxu0
    %4650 = vdwg.mxu0
    %v4651 = vsel %vm1563, %v4646, -inf
    %4652 = vmax.xlane.f32.xlu0 %v4651
    %v4653 = vpop.xlane.xlu0 %4652
    %vm4654 = vcmp.eq.f32.partialorder %v4646, %v4653
    %v4655 = vsel %vm4654, %v94, 64
    %v4656 = vsel %vm1563, %v4655, 2147483647
    %v4657 = vand.u32 %v4656, 65535
    %v4658 = vshra.s32 %v4656, 16
    %v4659 = vcvt.s32.f32 %v4657
    %v4660 = vcvt.s32.f32 %v4658
    %4661 = vmin.xlane.f32.xlu0 %v4660
    %v4662 = vpop.xlane.xlu0 %4661
    %vm4663 = vcmp.eq.f32.partialorder %v4660, %v4662
    %v4664 = vsel %vm4663, %v4659, inf
    %4665 = vmin.xlane.f32.xlu0 %v4664
    %v4666 = vpop.xlane.xlu0 %4665
    %v4667 = vcvt.f32.s32 %v4666
    %v4668 = vcvt.f32.s32 %v4662
    %v4669 = vshll.u32 %v4668, 16
    %v4670 = vadd.s32 %v4669, %v4667
    %v4671 = vsub.f32 %v4646, %v4653
    %v4672 = vmul.f32 %v4671, 1.442695
    %v4673 = vpow.pop %v4672
    %v4674 = vsel %vm1563, %v4673, 0.0
    %4675 = vadd.xlane.f32.xlu0 %v4674
    %v4676 = vpop.xlane.xlu0 %4675
    %v4677 = vrcp.pop %v4676
    %v4678 = vmul.f32 1.0, %v4677
    %vm4679 = vcmask 73800
    %4680 = vst.msk [vmem:[#allocation7] sm:$0x1] %vm4679, %v4670
    %4681 = vst.msk [vmem:[#allocation8] sm:$0x1] %vm4679, %v4678
    // Predicated region
    $region22: #{tpu_custom_call.1} parent=1 // pred_check
      _
    $region23: #{tpu_custom_call.1} parent=1 // pred_check_branch
      %4683 = sbr.rel (0) target = $region25
    $region24: #{tpu_custom_call.1} parent=1 // pred_region
      %s4685 = ssub.s32 16, 16
      %4686 = vsyncadd [#allocation4], %s4685
      %s4688 = sshll.u32 [#allocation7], 4
      %s4689 = int_to_ptr.vmem [resolvable:$true] %s4688
      %4691 = dma.vmem_to_hbm [thread:$0]  %s4689, 16, %s3, [#allocation4]
    $region25: #{tpu_custom_call.1} parent=1 // pred_fallthru
      _
    // Predicated region
    $region26: #{tpu_custom_call.1} parent=1 // pred_check
      _
    $region27: #{tpu_custom_call.1} parent=1 // pred_check_branch
      %4693 = sbr.rel (0) target = $region29
    $region28: #{tpu_custom_call.1} parent=1 // pred_region
      %s4695 = ssub.s32 16, 16
      %4696 = vsyncadd [#allocation9], %s4695
      %s4698 = sshll.u32 [#allocation8], 4
      %s4699 = int_to_ptr.vmem [resolvable:$true] %s4698
      %4701 = dma.vmem_to_hbm [thread:$0]  %s4699, 16, %s4, [#allocation9]
    $region29: #{tpu_custom_call.1} parent=1 // pred_fallthru
      _
    // Predicated region
    $region30: #{tpu_custom_call.1} parent=1 // pred_check
      _
    $region31: #{tpu_custom_call.1} parent=1 // pred_check_branch
      %4703 = sbr.rel (0) target = $region33
    $region32: #{tpu_custom_call.1} parent=1 // pred_region
      %4704 = dma.done [#allocation4], 16
    $region33: #{tpu_custom_call.1} parent=1 // pred_fallthru
      _
    // Predicated region
    $region34: #{tpu_custom_call.1} parent=1 // pred_check
      _
    $region35: #{tpu_custom_call.1} parent=1 // pred_check_branch
      %4706 = sbr.rel (0) target = $region37
    $region36: #{tpu_custom_call.1} parent=1 // pred_region
      %4707 = dma.done [#allocation9], 16
    $region37: #{tpu_custom_call.1} parent=1 // pred_fallthru
      _
    %4708 = vsyncpa [#allocation3], 1
    %4709 = vsyncpa [#allocation6], 1
    %4710 = vsyncpa [#allocation4], 1
    %4711 = vsyncpa [#allocation9], 1

</llo_original>
